<compile_context>
chip_gen: v6e
topology: v6e:2x2x1
jax: 0.10.0
libtpu: 0.0.40
codegen_flags: <defaults>
</compile_context>

<pallas_src>
import functools
import math

import jax
import jax.numpy as jnp
from jax.experimental import pallas as pl
from jax.experimental.pallas import tpu as pltpu

LANE = 128


def _pad_up(c, m):
    return (c + m - 1) // m * m


def _vmem_limit_bytes():
    """Generation-conditional scoped-VMEM limit (128-MiB parts: 96 MiB, v7x: 48 MiB)."""
    cap = 64 * 1024 * 1024
    try:
        cap = int(getattr(pltpu.get_tpu_info(), "vmem_capacity_bytes", cap))
    except Exception:
        pass
    return int(min(cap * 3 // 4, 96 * 1024 * 1024))


# ------------------------------ in-kernel helpers ----------------------------

def _pool2x2_flat(a, rows, width):
    """2x2 average pool of a row-major flattened (rows*width, C) f32 array.

    Returns (rows//2, width//2, C).  Only reshapes / static slices / adds, so
    Mosaic lowers it without gathers or strided selects.
    """
    c = a.shape[-1]
    a = a.reshape(rows // 2, 2, width, c)
    a = a[:, 0] + a[:, 1]                              # sum adjacent rows
    a = a.reshape((rows // 2) * (width // 2), 2, c)
    a = a[:, 0] + a[:, 1]                              # sum adjacent columns
    return a.reshape(rows // 2, width // 2, c) * 0.25


# --------------------------------- the kernel --------------------------------

def _resblock_kernel(xp_ref, w1_ref, w2_ref, ws_ref, o_ref, p1pad_ref,
                     *, H, W, cin, cout, neg, post):
    H2, W2 = H // 2, W // 2
    Wp, W2p = W + 4, W2 + 2
    inv_sqrt2 = 1.0 / math.sqrt(2.0)

    # ---- conv1: 3x3 / pad 1 / LeakyReLU / *1.4 ------------------------------
    # Contiguous flat tap windows: element m = r*Wp + c of tap (i, j) is
    # xpad[r+i, c+j]; output columns c >= W are junk and are discarded after
    # the fused pool.  9 bf16 MXU matmuls accumulate into one f32 accumulator
    # (on v7x this maps onto in-place MRB accumulation).
    acc1 = jnp.zeros((H * Wp, cin), jnp.float32)
    for t in range(9):
        i, j = divmod(t, 3)
        win = xp_ref[pl.ds(i * Wp + j, H * Wp), :]                 # (H*Wp, cin) bf16
        acc1 = acc1 + jnp.dot(win, w1_ref[t], preferred_element_type=jnp.float32)
    y1 = jnp.where(acc1 >= 0.0, acc1, neg * acc1) * post

    # ---- fused 2x2 average pool of the conv1 activation ---------------------
    p1 = _pool2x2_flat(y1, H, Wp)                                  # (H2, W2+2, cin)
    col = jax.lax.broadcasted_iota(jnp.int32, p1.shape, 1)
    p1 = jnp.where(col < W2, p1, 0.0)                              # zero 2 junk cols

    # ---- in-kernel halo pad of the pooled activation (VMEM scratch) ---------
    # Zero the scratch once per step, then ONE contiguous store writes the
    # interior; the zeroed junk columns land exactly on the halo cells.
    p1pad_ref[...] = jnp.zeros_like(p1pad_ref)
    p1pad_ref[pl.ds(W2p + 1, H2 * W2p), :] = p1.reshape(H2 * W2p, cin)

    # ---- fused 2x2 average pool of the input (skip branch) ------------------
    # The identity-tap window is x plus all-zero halo columns, so pooling it
    # gives the exact AvgPool2d(2,2) of x without re-reading HBM.
    xw = xp_ref[pl.ds(Wp + 1, H * Wp), :].astype(jnp.float32)
    px = _pool2x2_flat(xw, H, Wp)[:, :W2, :]
    px = px.reshape(H2 * W2, cin).astype(jnp.bfloat16)

    # ---- conv2: 3x3 / pad 1 / LeakyReLU / *1.4 on the pooled activation -----
    acc2 = jnp.zeros((H2 * W2p, cout), jnp.float32)
    for t in range(9):
        i, j = divmod(t, 3)
        win = p1pad_ref[pl.ds(i * W2p + j, H2 * W2p), :].astype(jnp.bfloat16)
        acc2 = acc2 + jnp.dot(win, w2_ref[t], preferred_element_type=jnp.float32)
    y2 = jnp.where(acc2 >= 0.0, acc2, neg * acc2) * post
    y2 = y2.reshape(H2, W2p, cout)[:, :W2, :].reshape(H2 * W2, cout)

    # ---- skip: 1x1 conv * 1.4, residual combine / sqrt(2) -------------------
    skip = jnp.dot(px, ws_ref[...], preferred_element_type=jnp.float32) * post
    o_ref[...] = ((y2 + skip) * inv_sqrt2).astype(o_ref.dtype)


# ------------------------------ layout helpers -------------------------------

def _fold_conv3x3(w_oihw, scale, cinp, coutp):
    # OIHW -> (tap, Cin, Cout): every per-tap contraction is over Cin (lane
    # aligned); zero-pad Cin/Cout to lane multiples for dense vregs/stores.
    o, i, _, _ = w_oihw.shape
    w = (w_oihw * scale).transpose(2, 3, 1, 0).reshape(9, i, o)
    w = jnp.pad(w, ((0, 0), (0, cinp - i), (0, coutp - o)))
    return w.astype(jnp.bfloat16)


def _fold_conv1x1(w_oihw, scale, cinp, coutp):
    o, i, _, _ = w_oihw.shape
    w = (w_oihw * scale).reshape(o, i).T
    w = jnp.pad(w, ((0, cinp - i), (0, coutp - o)))
    return w.astype(jnp.bfloat16)


# --------------------------------- ResBlock ----------------------------------

def init_resblock_params(key, in_channel, out_channel):
    k1, k2, k3 = jax.random.split(key, 3)
    return {
        "conv1_w": jax.random.normal(k1, (in_channel, in_channel, 3, 3), jnp.float32),
        "conv2_w": jax.random.normal(k2, (out_channel, in_channel, 3, 3), jnp.float32),
        "skip_w": jax.random.normal(k3, (out_channel, in_channel, 1, 1), jnp.float32),
    }


def resblock_forward(params, x_nchw):
    w1, w2, ws = params["conv1_w"], params["conv2_w"], params["skip_w"]
    in_ch, out_ch = w1.shape[1], w2.shape[0]
    n, _, H, W = x_nchw.shape
    assert H % 2 == 0 and W % 2 == 0
    H2, W2 = H // 2, W // 2
    Wp, W2p = W + 4, W2 + 2
    cinp, coutp = _pad_up(in_ch, LANE), _pad_up(out_ch, LANE)

    # One fused layout pass: NCHW -> NHWC, channel pad to a lane multiple, the
    # 3x3 halo pad (top 1 / bottom 2 / left 1 / right 3, so every flat tap
    # window stays in bounds) and the bf16 cast.  The halo rides along with
    # the layout copy that is required anyway.
    x = jnp.transpose(x_nchw, (0, 2, 3, 1))
    x = jnp.pad(x, ((0, 0), (1, 2), (1, 3), (0, cinp - in_ch)))
    xflat = x.astype(jnp.bfloat16).reshape(n, (H + 3) * Wp, cinp)

    w1m = _fold_conv3x3(w1, 1.0 / math.sqrt(in_ch * 9), cinp, cinp)
    w2m = _fold_conv3x3(w2, 1.0 / math.sqrt(in_ch * 9), cinp, coutp)
    wsm = _fold_conv1x1(ws, 1.0 / math.sqrt(in_ch * 1), cinp, coutp)

    kernel = functools.partial(_resblock_kernel, H=H, W=W, cin=cinp, cout=coutp,
                               neg=0.2, post=1.4)

    # Weights have a constant index_map (fetched once); single-buffer them so
    # the second copy's VMEM goes to activation tiles instead.
    def wspec(shape):
        return pl.BlockSpec(shape, lambda b: (0,) * len(shape),
                            pipeline_mode=pl.Buffered(1))

    out_flat = pl.pallas_call(
        kernel,
        out_shape=jax.ShapeDtypeStruct((n, H2 * W2, coutp), jnp.bfloat16),
        grid=(n,),
        in_specs=[
            pl.BlockSpec((None, (H + 3) * Wp, cinp), lambda b: (b, 0, 0)),
            wspec((9, cinp, cinp)),
            wspec((9, cinp, coutp)),
            wspec((cinp, coutp)),
        ],
        out_specs=pl.BlockSpec((None, H2 * W2, coutp), lambda b: (b, 0, 0)),
        scratch_shapes=[pltpu.VMEM(((H2 + 3) * W2p, cinp), jnp.float32)],
        compiler_params=pltpu.CompilerParams(
            dimension_semantics=("parallel",),
            vmem_limit_bytes=_vmem_limit_bytes()),
    )(xflat, w1m, w2m, wsm)

    # Trailing layout glue required by the module's NCHW contract.
    out = out_flat.reshape(n, H2, W2, coutp)[..., :out_ch].astype(jnp.float32)
    return jnp.transpose(out, (0, 3, 1, 2))


# ---------------------------- pure-JAX reference ------------------------------

def resblock_reference(params, x_nchw):
    in_ch = params["conv1_w"].shape[1]

    def conv(v, w, scale, pad):
        return jax.lax.conv_general_dilated(
            v, w * scale, window_strides=(1, 1),
            padding=[(pad, pad), (pad, pad)],
            dimension_numbers=("NCHW", "OIHW", "NCHW"))

    def lrelu(v):
        return jnp.where(v >= 0, v, 0.2 * v)

    def pool(v):
        n, c, h, w = v.shape
        return v.reshape(n, c, h // 2, 2, w // 2, 2).mean(axis=(3, 5))

    y1 = lrelu(conv(x_nchw, params["conv1_w"], 1.0 / math.sqrt(in_ch * 9), 1)) * 1.4
    y2 = lrelu(conv(pool(y1), params["conv2_w"], 1.0 / math.sqrt(in_ch * 9), 1)) * 1.4
    sk = conv(pool(x_nchw), params["skip_w"], 1.0 / math.sqrt(in_ch * 1), 0) * 1.4
    return (y2 + sk) / math.sqrt(2.0)


if __name__ == "__main__":
    batch, in_ch, out_ch, size = 2, 32, 64, 16
    key = jax.random.PRNGKey(0)
    pkey, xkey = jax.random.split(key)
    params = init_resblock_params(pkey, in_ch, out_ch)
    x = jax.random.normal(xkey, (batch, in_ch, size, size), jnp.float32)

    out = jax.jit(resblock_forward)(params, x)
    jax.block_until_ready(out)
    assert out.shape == (batch, out_ch, size // 2, size // 2), out.shape

    # Loose correctness check vs. a pure-JAX f32 reference (kernel uses bf16
    # MXU operands with f32 accumulation and a bf16 output store).
    ref = resblock_reference(params, x)
    rel = float(jnp.linalg.norm(out - ref) / jnp.linalg.norm(ref))
    assert rel < 0.05, f"relative error too large: {rel}"
    print("KERNEL_OK")
</pallas_src>

<mosaic_0001>
module attributes {stable_mosaic.version = 11 : i64} {
  func.func @_resblock_kernel(%arg0: i32, %arg1: memref<1x380x128xbf16, #tpu.memory_space<vmem>>, %arg2: memref<9x128x128xbf16, #tpu.memory_space<vmem>>, %arg3: memref<9x128x128xbf16, #tpu.memory_space<vmem>>, %arg4: memref<128x128xbf16, #tpu.memory_space<vmem>>, %arg5: memref<1x64x128xbf16, #tpu.memory_space<vmem>>, %arg6: memref<110x128xf32, #tpu.memory_space<vmem>>) attributes {dimension_semantics = [#tpu.dimension_semantics<parallel>], iteration_bounds = array<i64: 2>, scalar_prefetch = 0 : i64, scratch_operands = 1 : i64, tpu.core_type = #tpu.core_type<tc>, window_params = [{transform_indices = @transform_0, window_bounds = array<i64: 1, 380, 128>}, {pipeline_mode = #tpu.pipeline_mode<synchronous>, transform_indices = @transform_1, window_bounds = array<i64: 9, 128, 128>}, {pipeline_mode = #tpu.pipeline_mode<synchronous>, transform_indices = @transform_2, window_bounds = array<i64: 9, 128, 128>}, {pipeline_mode = #tpu.pipeline_mode<synchronous>, transform_indices = @transform_3, window_bounds = array<i64: 128, 128>}, {transform_indices = @transform_4, window_bounds = array<i64: 1, 64, 128>}]} {
    %cst = arith.constant 0.000000e+00 : f32
    %0 = vector.broadcast %cst : f32 to vector<320x128xf32>
    %c0 = arith.constant 0 : index
    %c0_0 = arith.constant 0 : index
    %c0_1 = arith.constant 0 : index
    %1 = vector.load %arg1[%c0, %c0_0, %c0_1] : memref<1x380x128xbf16, #tpu.memory_space<vmem>>, vector<1x320x128xbf16>
    %2 = vector.shape_cast %1 : vector<1x320x128xbf16> to vector<320x128xbf16>
    %c0_2 = arith.constant 0 : index
    %c0_3 = arith.constant 0 : index
    %c0_4 = arith.constant 0 : index
    %3 = vector.load %arg2[%c0_2, %c0_3, %c0_4] : memref<9x128x128xbf16, #tpu.memory_space<vmem>>, vector<1x128x128xbf16>
    %4 = vector.shape_cast %3 : vector<1x128x128xbf16> to vector<128x128xbf16>
    %cst_5 = arith.constant dense<0.000000e+00> : vector<320x128xf32>
    %5 = tpu.matmul %2, %4, %cst_5 {dimension_numbers = #tpu.dot_dimension_numbers<[1], [0], [0], [1], [0, 0, 1, 1], [], []>} : vector<320x128xbf16>, vector<128x128xbf16>, vector<320x128xf32> -> vector<320x128xf32>
    %6 = arith.addf %0, %5 : vector<320x128xf32>
    %c0_6 = arith.constant 0 : index
    %c1 = arith.constant 1 : index
    %c0_7 = arith.constant 0 : index
    %7 = vector.load %arg1[%c0_6, %c1, %c0_7] : memref<1x380x128xbf16, #tpu.memory_space<vmem>>, vector<1x320x128xbf16>
    %8 = vector.shape_cast %7 : vector<1x320x128xbf16> to vector<320x128xbf16>
    %c1_8 = arith.constant 1 : index
    %c0_9 = arith.constant 0 : index
    %c0_10 = arith.constant 0 : index
    %9 = vector.load %arg2[%c1_8, %c0_9, %c0_10] : memref<9x128x128xbf16, #tpu.memory_space<vmem>>, vector<1x128x128xbf16>
    %10 = vector.shape_cast %9 : vector<1x128x128xbf16> to vector<128x128xbf16>
    %cst_11 = arith.constant dense<0.000000e+00> : vector<320x128xf32>
    %11 = tpu.matmul %8, %10, %cst_11 {dimension_numbers = #tpu.dot_dimension_numbers<[1], [0], [0], [1], [0, 0, 1, 1], [], []>} : vector<320x128xbf16>, vector<128x128xbf16>, vector<320x128xf32> -> vector<320x128xf32>
    %12 = arith.addf %6, %11 : vector<320x128xf32>
    %c0_12 = arith.constant 0 : index
    %c2 = arith.constant 2 : index
    %c0_13 = arith.constant 0 : index
    %13 = vector.load %arg1[%c0_12, %c2, %c0_13] : memref<1x380x128xbf16, #tpu.memory_space<vmem>>, vector<1x320x128xbf16>
    %14 = vector.shape_cast %13 : vector<1x320x128xbf16> to vector<320x128xbf16>
    %c2_14 = arith.constant 2 : index
    %c0_15 = arith.constant 0 : index
    %c0_16 = arith.constant 0 : index
    %15 = vector.load %arg2[%c2_14, %c0_15, %c0_16] : memref<9x128x128xbf16, #tpu.memory_space<vmem>>, vector<1x128x128xbf16>
    %16 = vector.shape_cast %15 : vector<1x128x128xbf16> to vector<128x128xbf16>
    %cst_17 = arith.constant dense<0.000000e+00> : vector<320x128xf32>
    %17 = tpu.matmul %14, %16, %cst_17 {dimension_numbers = #tpu.dot_dimension_numbers<[1], [0], [0], [1], [0, 0, 1, 1], [], []>} : vector<320x128xbf16>, vector<128x128xbf16>, vector<320x128xf32> -> vector<320x128xf32>
    %18 = arith.addf %12, %17 : vector<320x128xf32>
    %c0_18 = arith.constant 0 : index
    %c20 = arith.constant 20 : index
    %c0_19 = arith.constant 0 : index
    %19 = vector.load %arg1[%c0_18, %c20, %c0_19] : memref<1x380x128xbf16, #tpu.memory_space<vmem>>, vector<1x320x128xbf16>
    %20 = vector.shape_cast %19 : vector<1x320x128xbf16> to vector<320x128xbf16>
    %c3 = arith.constant 3 : index
    %c0_20 = arith.constant 0 : index
    %c0_21 = arith.constant 0 : index
    %21 = vector.load %arg2[%c3, %c0_20, %c0_21] : memref<9x128x128xbf16, #tpu.memory_space<vmem>>, vector<1x128x128xbf16>
    %22 = vector.shape_cast %21 : vector<1x128x128xbf16> to vector<128x128xbf16>
    %cst_22 = arith.constant dense<0.000000e+00> : vector<320x128xf32>
    %23 = tpu.matmul %20, %22, %cst_22 {dimension_numbers = #tpu.dot_dimension_numbers<[1], [0], [0], [1], [0, 0, 1, 1], [], []>} : vector<320x128xbf16>, vector<128x128xbf16>, vector<320x128xf32> -> vector<320x128xf32>
    %24 = arith.addf %18, %23 : vector<320x128xf32>
    %c0_23 = arith.constant 0 : index
    %c21 = arith.constant 21 : index
    %c0_24 = arith.constant 0 : index
    %25 = vector.load %arg1[%c0_23, %c21, %c0_24] : memref<1x380x128xbf16, #tpu.memory_space<vmem>>, vector<1x320x128xbf16>
    %26 = vector.shape_cast %25 : vector<1x320x128xbf16> to vector<320x128xbf16>
    %c4 = arith.constant 4 : index
    %c0_25 = arith.constant 0 : index
    %c0_26 = arith.constant 0 : index
    %27 = vector.load %arg2[%c4, %c0_25, %c0_26] : memref<9x128x128xbf16, #tpu.memory_space<vmem>>, vector<1x128x128xbf16>
    %28 = vector.shape_cast %27 : vector<1x128x128xbf16> to vector<128x128xbf16>
    %cst_27 = arith.constant dense<0.000000e+00> : vector<320x128xf32>
    %29 = tpu.matmul %26, %28, %cst_27 {dimension_numbers = #tpu.dot_dimension_numbers<[1], [0], [0], [1], [0, 0, 1, 1], [], []>} : vector<320x128xbf16>, vector<128x128xbf16>, vector<320x128xf32> -> vector<320x128xf32>
    %30 = arith.addf %24, %29 : vector<320x128xf32>
    %c0_28 = arith.constant 0 : index
    %c22 = arith.constant 22 : index
    %c0_29 = arith.constant 0 : index
    %31 = vector.load %arg1[%c0_28, %c22, %c0_29] : memref<1x380x128xbf16, #tpu.memory_space<vmem>>, vector<1x320x128xbf16>
    %32 = vector.shape_cast %31 : vector<1x320x128xbf16> to vector<320x128xbf16>
    %c5 = arith.constant 5 : index
    %c0_30 = arith.constant 0 : index
    %c0_31 = arith.constant 0 : index
    %33 = vector.load %arg2[%c5, %c0_30, %c0_31] : memref<9x128x128xbf16, #tpu.memory_space<vmem>>, vector<1x128x128xbf16>
    %34 = vector.shape_cast %33 : vector<1x128x128xbf16> to vector<128x128xbf16>
    %cst_32 = arith.constant dense<0.000000e+00> : vector<320x128xf32>
    %35 = tpu.matmul %32, %34, %cst_32 {dimension_numbers = #tpu.dot_dimension_numbers<[1], [0], [0], [1], [0, 0, 1, 1], [], []>} : vector<320x128xbf16>, vector<128x128xbf16>, vector<320x128xf32> -> vector<320x128xf32>
    %36 = arith.addf %30, %35 : vector<320x128xf32>
    %c0_33 = arith.constant 0 : index
    %c40 = arith.constant 40 : index
    %c0_34 = arith.constant 0 : index
    %37 = vector.load %arg1[%c0_33, %c40, %c0_34] : memref<1x380x128xbf16, #tpu.memory_space<vmem>>, vector<1x320x128xbf16>
    %38 = vector.shape_cast %37 : vector<1x320x128xbf16> to vector<320x128xbf16>
    %c6 = arith.constant 6 : index
    %c0_35 = arith.constant 0 : index
    %c0_36 = arith.constant 0 : index
    %39 = vector.load %arg2[%c6, %c0_35, %c0_36] : memref<9x128x128xbf16, #tpu.memory_space<vmem>>, vector<1x128x128xbf16>
    %40 = vector.shape_cast %39 : vector<1x128x128xbf16> to vector<128x128xbf16>
    %cst_37 = arith.constant dense<0.000000e+00> : vector<320x128xf32>
    %41 = tpu.matmul %38, %40, %cst_37 {dimension_numbers = #tpu.dot_dimension_numbers<[1], [0], [0], [1], [0, 0, 1, 1], [], []>} : vector<320x128xbf16>, vector<128x128xbf16>, vector<320x128xf32> -> vector<320x128xf32>
    %42 = arith.addf %36, %41 : vector<320x128xf32>
    %c0_38 = arith.constant 0 : index
    %c41 = arith.constant 41 : index
    %c0_39 = arith.constant 0 : index
    %43 = vector.load %arg1[%c0_38, %c41, %c0_39] : memref<1x380x128xbf16, #tpu.memory_space<vmem>>, vector<1x320x128xbf16>
    %44 = vector.shape_cast %43 : vector<1x320x128xbf16> to vector<320x128xbf16>
    %c7 = arith.constant 7 : index
    %c0_40 = arith.constant 0 : index
    %c0_41 = arith.constant 0 : index
    %45 = vector.load %arg2[%c7, %c0_40, %c0_41] : memref<9x128x128xbf16, #tpu.memory_space<vmem>>, vector<1x128x128xbf16>
    %46 = vector.shape_cast %45 : vector<1x128x128xbf16> to vector<128x128xbf16>
    %cst_42 = arith.constant dense<0.000000e+00> : vector<320x128xf32>
    %47 = tpu.matmul %44, %46, %cst_42 {dimension_numbers = #tpu.dot_dimension_numbers<[1], [0], [0], [1], [0, 0, 1, 1], [], []>} : vector<320x128xbf16>, vector<128x128xbf16>, vector<320x128xf32> -> vector<320x128xf32>
    %48 = arith.addf %42, %47 : vector<320x128xf32>
    %c0_43 = arith.constant 0 : index
    %c42 = arith.constant 42 : index
    %c0_44 = arith.constant 0 : index
    %49 = vector.load %arg1[%c0_43, %c42, %c0_44] : memref<1x380x128xbf16, #tpu.memory_space<vmem>>, vector<1x320x128xbf16>
    %50 = vector.shape_cast %49 : vector<1x320x128xbf16> to vector<320x128xbf16>
    %c8 = arith.constant 8 : index
    %c0_45 = arith.constant 0 : index
    %c0_46 = arith.constant 0 : index
    %51 = vector.load %arg2[%c8, %c0_45, %c0_46] : memref<9x128x128xbf16, #tpu.memory_space<vmem>>, vector<1x128x128xbf16>
    %52 = vector.shape_cast %51 : vector<1x128x128xbf16> to vector<128x128xbf16>
    %cst_47 = arith.constant dense<0.000000e+00> : vector<320x128xf32>
    %53 = tpu.matmul %50, %52, %cst_47 {dimension_numbers = #tpu.dot_dimension_numbers<[1], [0], [0], [1], [0, 0, 1, 1], [], []>} : vector<320x128xbf16>, vector<128x128xbf16>, vector<320x128xf32> -> vector<320x128xf32>
    %54 = arith.addf %48, %53 : vector<320x128xf32>
    %cst_48 = arith.constant 0.000000e+00 : f32
    %55 = vector.broadcast %cst_48 : f32 to vector<320x128xf32>
    %56 = arith.cmpf oge, %54, %55 : vector<320x128xf32>
    %cst_49 = arith.constant 2.000000e-01 : f32
    %57 = vector.broadcast %cst_49 : f32 to vector<320x128xf32>
    %58 = arith.mulf %57, %54 : vector<320x128xf32>
    %59 = arith.select %56, %54, %58 : vector<320x128xi1>, vector<320x128xf32>
    %cst_50 = arith.constant 1.400000e+00 : f32
    %60 = vector.broadcast %cst_50 : f32 to vector<320x128xf32>
    %61 = arith.mulf %59, %60 : vector<320x128xf32>
    %62 = vector.shape_cast %61 : vector<320x128xf32> to vector<8x2x20x128xf32>
    %63 = vector.extract_strided_slice %62 {offsets = [0, 0, 0, 0], sizes = [8, 1, 20, 128], strides = [1, 1, 1, 1]} : vector<8x2x20x128xf32> to vector<8x1x20x128xf32>
    %64 = vector.shape_cast %63 : vector<8x1x20x128xf32> to vector<8x20x128xf32>
    %65 = vector.extract_strided_slice %62 {offsets = [0, 1, 0, 0], sizes = [8, 1, 20, 128], strides = [1, 1, 1, 1]} : vector<8x2x20x128xf32> to vector<8x1x20x128xf32>
    %66 = vector.shape_cast %65 : vector<8x1x20x128xf32> to vector<8x20x128xf32>
    %67 = arith.addf %64, %66 : vector<8x20x128xf32>
    %68 = vector.shape_cast %67 : vector<8x20x128xf32> to vector<80x2x128xf32>
    %69 = vector.extract_strided_slice %68 {offsets = [0, 0, 0], sizes = [80, 1, 128], strides = [1, 1, 1]} : vector<80x2x128xf32> to vector<80x1x128xf32>
    %70 = vector.shape_cast %69 : vector<80x1x128xf32> to vector<80x128xf32>
    %71 = vector.extract_strided_slice %68 {offsets = [0, 1, 0], sizes = [80, 1, 128], strides = [1, 1, 1]} : vector<80x2x128xf32> to vector<80x1x128xf32>
    %72 = vector.shape_cast %71 : vector<80x1x128xf32> to vector<80x128xf32>
    %73 = arith.addf %70, %72 : vector<80x128xf32>
    %74 = vector.shape_cast %73 : vector<80x128xf32> to vector<8x10x128xf32>
    %cst_51 = arith.constant 2.500000e-01 : f32
    %75 = vector.broadcast %cst_51 : f32 to vector<8x10x128xf32>
    %76 = arith.mulf %74, %75 : vector<8x10x128xf32>
    %77 = tpu.iota {dimensions = array<i32: 1>} : vector<8x10x128xi32>
    %c8_i32 = arith.constant 8 : i32
    %78 = vector.broadcast %c8_i32 : i32 to vector<8x10x128xi32>
    %79 = arith.cmpi slt, %77, %78 : vector<8x10x128xi32>
    %cst_52 = arith.constant 0.000000e+00 : f32
    %80 = vector.broadcast %cst_52 : f32 to vector<8x10x128xf32>
    %81 = arith.select %79, %76, %80 : vector<8x10x128xi1>, vector<8x10x128xf32>
    %cst_53 = arith.constant 0.000000e+00 : f32
    %82 = vector.broadcast %cst_53 : f32 to vector<110x128xf32>
    %c0_54 = arith.constant 0 : index
    %c0_55 = arith.constant 0 : index
    %83 = vector.load %arg6[%c0_54, %c0_55] : memref<110x128xf32, #tpu.memory_space<vmem>>, vector<110x128xf32>
    tpu.vector_store %arg6[%c0_54, %c0_55], %82 {strides = array<i32>} : memref<110x128xf32, #tpu.memory_space<vmem>>, vector<110x128xf32>,
    %84 = vector.shape_cast %81 : vector<8x10x128xf32> to vector<80x128xf32>
    %c11 = arith.constant 11 : index
    %c0_56 = arith.constant 0 : index
    %85 = vector.load %arg6[%c11, %c0_56] : memref<110x128xf32, #tpu.memory_space<vmem>>, vector<80x128xf32>
    tpu.vector_store %arg6[%c11, %c0_56], %84 {strides = array<i32>} : memref<110x128xf32, #tpu.memory_space<vmem>>, vector<80x128xf32>,
    %c0_57 = arith.constant 0 : index
    %c21_58 = arith.constant 21 : index
    %c0_59 = arith.constant 0 : index
    %86 = vector.load %arg1[%c0_57, %c21_58, %c0_59] : memref<1x380x128xbf16, #tpu.memory_space<vmem>>, vector<1x320x128xbf16>
    %87 = vector.shape_cast %86 : vector<1x320x128xbf16> to vector<320x128xbf16>
    %88 = arith.extf %87 : vector<320x128xbf16> to vector<320x128xf32>
    %89 = vector.shape_cast %88 : vector<320x128xf32> to vector<8x2x20x128xf32>
    %90 = vector.extract_strided_slice %89 {offsets = [0, 0, 0, 0], sizes = [8, 1, 20, 128], strides = [1, 1, 1, 1]} : vector<8x2x20x128xf32> to vector<8x1x20x128xf32>
    %91 = vector.shape_cast %90 : vector<8x1x20x128xf32> to vector<8x20x128xf32>
    %92 = vector.extract_strided_slice %89 {offsets = [0, 1, 0, 0], sizes = [8, 1, 20, 128], strides = [1, 1, 1, 1]} : vector<8x2x20x128xf32> to vector<8x1x20x128xf32>
    %93 = vector.shape_cast %92 : vector<8x1x20x128xf32> to vector<8x20x128xf32>
    %94 = arith.addf %91, %93 : vector<8x20x128xf32>
    %95 = vector.shape_cast %94 : vector<8x20x128xf32> to vector<80x2x128xf32>
    %96 = vector.extract_strided_slice %95 {offsets = [0, 0, 0], sizes = [80, 1, 128], strides = [1, 1, 1]} : vector<80x2x128xf32> to vector<80x1x128xf32>
    %97 = vector.shape_cast %96 : vector<80x1x128xf32> to vector<80x128xf32>
    %98 = vector.extract_strided_slice %95 {offsets = [0, 1, 0], sizes = [80, 1, 128], strides = [1, 1, 1]} : vector<80x2x128xf32> to vector<80x1x128xf32>
    %99 = vector.shape_cast %98 : vector<80x1x128xf32> to vector<80x128xf32>
    %100 = arith.addf %97, %99 : vector<80x128xf32>
    %101 = vector.shape_cast %100 : vector<80x128xf32> to vector<8x10x128xf32>
    %cst_60 = arith.constant 2.500000e-01 : f32
    %102 = vector.broadcast %cst_60 : f32 to vector<8x10x128xf32>
    %103 = arith.mulf %101, %102 : vector<8x10x128xf32>
    %104 = vector.extract_strided_slice %103 {offsets = [0, 0, 0], sizes = [8, 8, 128], strides = [1, 1, 1]} : vector<8x10x128xf32> to vector<8x8x128xf32>
    %105 = vector.shape_cast %104 : vector<8x8x128xf32> to vector<64x128xf32>
    %106 = arith.truncf %105 : vector<64x128xf32> to vector<64x128xbf16>
    %cst_61 = arith.constant 0.000000e+00 : f32
    %107 = vector.broadcast %cst_61 : f32 to vector<80x128xf32>
    %c0_62 = arith.constant 0 : index
    %c0_63 = arith.constant 0 : index
    %108 = vector.load %arg6[%c0_62, %c0_63] : memref<110x128xf32, #tpu.memory_space<vmem>>, vector<80x128xf32>
    %109 = arith.truncf %108 : vector<80x128xf32> to vector<80x128xbf16>
    %c0_64 = arith.constant 0 : index
    %c0_65 = arith.constant 0 : index
    %c0_66 = arith.constant 0 : index
    %110 = vector.load %arg3[%c0_64, %c0_65, %c0_66] : memref<9x128x128xbf16, #tpu.memory_space<vmem>>, vector<1x128x128xbf16>
    %111 = vector.shape_cast %110 : vector<1x128x128xbf16> to vector<128x128xbf16>
    %cst_67 = arith.constant dense<0.000000e+00> : vector<80x128xf32>
    %112 = tpu.matmul %109, %111, %cst_67 {dimension_numbers = #tpu.dot_dimension_numbers<[1], [0], [0], [1], [0, 0, 1, 1], [], []>} : vector<80x128xbf16>, vector<128x128xbf16>, vector<80x128xf32> -> vector<80x128xf32>
    %113 = arith.addf %107, %112 : vector<80x128xf32>
    %c1_68 = arith.constant 1 : index
    %c0_69 = arith.constant 0 : index
    %114 = vector.load %arg6[%c1_68, %c0_69] : memref<110x128xf32, #tpu.memory_space<vmem>>, vector<80x128xf32>
    %115 = arith.truncf %114 : vector<80x128xf32> to vector<80x128xbf16>
    %c1_70 = arith.constant 1 : index
    %c0_71 = arith.constant 0 : index
    %c0_72 = arith.constant 0 : index
    %116 = vector.load %arg3[%c1_70, %c0_71, %c0_72] : memref<9x128x128xbf16, #tpu.memory_space<vmem>>, vector<1x128x128xbf16>
    %117 = vector.shape_cast %116 : vector<1x128x128xbf16> to vector<128x128xbf16>
    %cst_73 = arith.constant dense<0.000000e+00> : vector<80x128xf32>
    %118 = tpu.matmul %115, %117, %cst_73 {dimension_numbers = #tpu.dot_dimension_numbers<[1], [0], [0], [1], [0, 0, 1, 1], [], []>} : vector<80x128xbf16>, vector<128x128xbf16>, vector<80x128xf32> -> vector<80x128xf32>
    %119 = arith.addf %113, %118 : vector<80x128xf32>
    %c2_74 = arith.constant 2 : index
    %c0_75 = arith.constant 0 : index
    %120 = vector.load %arg6[%c2_74, %c0_75] : memref<110x128xf32, #tpu.memory_space<vmem>>, vector<80x128xf32>
    %121 = arith.truncf %120 : vector<80x128xf32> to vector<80x128xbf16>
    %c2_76 = arith.constant 2 : index
    %c0_77 = arith.constant 0 : index
    %c0_78 = arith.constant 0 : index
    %122 = vector.load %arg3[%c2_76, %c0_77, %c0_78] : memref<9x128x128xbf16, #tpu.memory_space<vmem>>, vector<1x128x128xbf16>
    %123 = vector.shape_cast %122 : vector<1x128x128xbf16> to vector<128x128xbf16>
    %cst_79 = arith.constant dense<0.000000e+00> : vector<80x128xf32>
    %124 = tpu.matmul %121, %123, %cst_79 {dimension_numbers = #tpu.dot_dimension_numbers<[1], [0], [0], [1], [0, 0, 1, 1], [], []>} : vector<80x128xbf16>, vector<128x128xbf16>, vector<80x128xf32> -> vector<80x128xf32>
    %125 = arith.addf %119, %124 : vector<80x128xf32>
    %c10 = arith.constant 10 : index
    %c0_80 = arith.constant 0 : index
    %126 = vector.load %arg6[%c10, %c0_80] : memref<110x128xf32, #tpu.memory_space<vmem>>, vector<80x128xf32>
    %127 = arith.truncf %126 : vector<80x128xf32> to vector<80x128xbf16>
    %c3_81 = arith.constant 3 : index
    %c0_82 = arith.constant 0 : index
    %c0_83 = arith.constant 0 : index
    %128 = vector.load %arg3[%c3_81, %c0_82, %c0_83] : memref<9x128x128xbf16, #tpu.memory_space<vmem>>, vector<1x128x128xbf16>
    %129 = vector.shape_cast %128 : vector<1x128x128xbf16> to vector<128x128xbf16>
    %cst_84 = arith.constant dense<0.000000e+00> : vector<80x128xf32>
    %130 = tpu.matmul %127, %129, %cst_84 {dimension_numbers = #tpu.dot_dimension_numbers<[1], [0], [0], [1], [0, 0, 1, 1], [], []>} : vector<80x128xbf16>, vector<128x128xbf16>, vector<80x128xf32> -> vector<80x128xf32>
    %131 = arith.addf %125, %130 : vector<80x128xf32>
    %c11_85 = arith.constant 11 : index
    %c0_86 = arith.constant 0 : index
    %132 = vector.load %arg6[%c11_85, %c0_86] : memref<110x128xf32, #tpu.memory_space<vmem>>, vector<80x128xf32>
    %133 = arith.truncf %132 : vector<80x128xf32> to vector<80x128xbf16>
    %c4_87 = arith.constant 4 : index
    %c0_88 = arith.constant 0 : index
    %c0_89 = arith.constant 0 : index
    %134 = vector.load %arg3[%c4_87, %c0_88, %c0_89] : memref<9x128x128xbf16, #tpu.memory_space<vmem>>, vector<1x128x128xbf16>
    %135 = vector.shape_cast %134 : vector<1x128x128xbf16> to vector<128x128xbf16>
    %cst_90 = arith.constant dense<0.000000e+00> : vector<80x128xf32>
    %136 = tpu.matmul %133, %135, %cst_90 {dimension_numbers = #tpu.dot_dimension_numbers<[1], [0], [0], [1], [0, 0, 1, 1], [], []>} : vector<80x128xbf16>, vector<128x128xbf16>, vector<80x128xf32> -> vector<80x128xf32>
    %137 = arith.addf %131, %136 : vector<80x128xf32>
    %c12 = arith.constant 12 : index
    %c0_91 = arith.constant 0 : index
    %138 = vector.load %arg6[%c12, %c0_91] : memref<110x128xf32, #tpu.memory_space<vmem>>, vector<80x128xf32>
    %139 = arith.truncf %138 : vector<80x128xf32> to vector<80x128xbf16>
    %c5_92 = arith.constant 5 : index
    %c0_93 = arith.constant 0 : index
    %c0_94 = arith.constant 0 : index
    %140 = vector.load %arg3[%c5_92, %c0_93, %c0_94] : memref<9x128x128xbf16, #tpu.memory_space<vmem>>, vector<1x128x128xbf16>
    %141 = vector.shape_cast %140 : vector<1x128x128xbf16> to vector<128x128xbf16>
    %cst_95 = arith.constant dense<0.000000e+00> : vector<80x128xf32>
    %142 = tpu.matmul %139, %141, %cst_95 {dimension_numbers = #tpu.dot_dimension_numbers<[1], [0], [0], [1], [0, 0, 1, 1], [], []>} : vector<80x128xbf16>, vector<128x128xbf16>, vector<80x128xf32> -> vector<80x128xf32>
    %143 = arith.addf %137, %142 : vector<80x128xf32>
    %c20_96 = arith.constant 20 : index
    %c0_97 = arith.constant 0 : index
    %144 = vector.load %arg6[%c20_96, %c0_97] : memref<110x128xf32, #tpu.memory_space<vmem>>, vector<80x128xf32>
    %145 = arith.truncf %144 : vector<80x128xf32> to vector<80x128xbf16>
    %c6_98 = arith.constant 6 : index
    %c0_99 = arith.constant 0 : index
    %c0_100 = arith.constant 0 : index
    %146 = vector.load %arg3[%c6_98, %c0_99, %c0_100] : memref<9x128x128xbf16, #tpu.memory_space<vmem>>, vector<1x128x128xbf16>
    %147 = vector.shape_cast %146 : vector<1x128x128xbf16> to vector<128x128xbf16>
    %cst_101 = arith.constant dense<0.000000e+00> : vector<80x128xf32>
    %148 = tpu.matmul %145, %147, %cst_101 {dimension_numbers = #tpu.dot_dimension_numbers<[1], [0], [0], [1], [0, 0, 1, 1], [], []>} : vector<80x128xbf16>, vector<128x128xbf16>, vector<80x128xf32> -> vector<80x128xf32>
    %149 = arith.addf %143, %148 : vector<80x128xf32>
    %c21_102 = arith.constant 21 : index
    %c0_103 = arith.constant 0 : index
    %150 = vector.load %arg6[%c21_102, %c0_103] : memref<110x128xf32, #tpu.memory_space<vmem>>, vector<80x128xf32>
    %151 = arith.truncf %150 : vector<80x128xf32> to vector<80x128xbf16>
    %c7_104 = arith.constant 7 : index
    %c0_105 = arith.constant 0 : index
    %c0_106 = arith.constant 0 : index
    %152 = vector.load %arg3[%c7_104, %c0_105, %c0_106] : memref<9x128x128xbf16, #tpu.memory_space<vmem>>, vector<1x128x128xbf16>
    %153 = vector.shape_cast %152 : vector<1x128x128xbf16> to vector<128x128xbf16>
    %cst_107 = arith.constant dense<0.000000e+00> : vector<80x128xf32>
    %154 = tpu.matmul %151, %153, %cst_107 {dimension_numbers = #tpu.dot_dimension_numbers<[1], [0], [0], [1], [0, 0, 1, 1], [], []>} : vector<80x128xbf16>, vector<128x128xbf16>, vector<80x128xf32> -> vector<80x128xf32>
    %155 = arith.addf %149, %154 : vector<80x128xf32>
    %c22_108 = arith.constant 22 : index
    %c0_109 = arith.constant 0 : index
    %156 = vector.load %arg6[%c22_108, %c0_109] : memref<110x128xf32, #tpu.memory_space<vmem>>, vector<80x128xf32>
    %157 = arith.truncf %156 : vector<80x128xf32> to vector<80x128xbf16>
    %c8_110 = arith.constant 8 : index
    %c0_111 = arith.constant 0 : index
    %c0_112 = arith.constant 0 : index
    %158 = vector.load %arg3[%c8_110, %c0_111, %c0_112] : memref<9x128x128xbf16, #tpu.memory_space<vmem>>, vector<1x128x128xbf16>
    %159 = vector.shape_cast %158 : vector<1x128x128xbf16> to vector<128x128xbf16>
    %cst_113 = arith.constant dense<0.000000e+00> : vector<80x128xf32>
    %160 = tpu.matmul %157, %159, %cst_113 {dimension_numbers = #tpu.dot_dimension_numbers<[1], [0], [0], [1], [0, 0, 1, 1], [], []>} : vector<80x128xbf16>, vector<128x128xbf16>, vector<80x128xf32> -> vector<80x128xf32>
    %161 = arith.addf %155, %160 : vector<80x128xf32>
    %cst_114 = arith.constant 0.000000e+00 : f32
    %162 = vector.broadcast %cst_114 : f32 to vector<80x128xf32>
    %163 = arith.cmpf oge, %161, %162 : vector<80x128xf32>
    %cst_115 = arith.constant 2.000000e-01 : f32
    %164 = vector.broadcast %cst_115 : f32 to vector<80x128xf32>
    %165 = arith.mulf %164, %161 : vector<80x128xf32>
    %166 = arith.select %163, %161, %165 : vector<80x128xi1>, vector<80x128xf32>
    %cst_116 = arith.constant 1.400000e+00 : f32
    %167 = vector.broadcast %cst_116 : f32 to vector<80x128xf32>
    %168 = arith.mulf %166, %167 : vector<80x128xf32>
    %169 = vector.shape_cast %168 : vector<80x128xf32> to vector<8x10x128xf32>
    %170 = vector.extract_strided_slice %169 {offsets = [0, 0, 0], sizes = [8, 8, 128], strides = [1, 1, 1]} : vector<8x10x128xf32> to vector<8x8x128xf32>
    %171 = vector.shape_cast %170 : vector<8x8x128xf32> to vector<64x128xf32>
    %c0_117 = arith.constant 0 : index
    %c0_118 = arith.constant 0 : index
    %172 = vector.load %arg4[%c0_117, %c0_118] : memref<128x128xbf16, #tpu.memory_space<vmem>>, vector<128x128xbf16>
    %cst_119 = arith.constant dense<0.000000e+00> : vector<64x128xf32>
    %173 = tpu.matmul %106, %172, %cst_119 {dimension_numbers = #tpu.dot_dimension_numbers<[1], [0], [0], [1], [0, 0, 1, 1], [], []>} : vector<64x128xbf16>, vector<128x128xbf16>, vector<64x128xf32> -> vector<64x128xf32>
    %cst_120 = arith.constant 1.400000e+00 : f32
    %174 = vector.broadcast %cst_120 : f32 to vector<64x128xf32>
    %175 = arith.mulf %173, %174 : vector<64x128xf32>
    %176 = arith.addf %171, %175 : vector<64x128xf32>
    %cst_121 = arith.constant 0.707106769 : f32
    %177 = vector.broadcast %cst_121 : f32 to vector<64x128xf32>
    %178 = arith.mulf %176, %177 : vector<64x128xf32>
    %179 = arith.truncf %178 : vector<64x128xf32> to vector<64x128xbf16>
    %c0_122 = arith.constant 0 : index
    %c0_123 = arith.constant 0 : index
    %c0_124 = arith.constant 0 : index
    %180 = vector.load %arg5[%c0_122, %c0_123, %c0_124] : memref<1x64x128xbf16, #tpu.memory_space<vmem>>, vector<1x64x128xbf16>
    %181 = vector.shape_cast %180 : vector<1x64x128xbf16> to vector<64x128xbf16>
    %182 = vector.shape_cast %179 : vector<64x128xbf16> to vector<1x64x128xbf16>
    tpu.vector_store %arg5[%c0_122, %c0_123, %c0_124], %182 {strides = array<i32>} : memref<1x64x128xbf16, #tpu.memory_space<vmem>>, vector<1x64x128xbf16>,
    return
  }
  func.func @transform_0(%arg0: i32) -> (i32, i32, i32) {
    %c0_i32 = arith.constant 0 : i32
    %c0_i32_0 = arith.constant 0 : i32
    %c0_i32_1 = arith.constant 0 : i32
    return %arg0, %c0_i32, %c0_i32_0 : i32, i32, i32
  }
  func.func @transform_1(%arg0: i32) -> (i32, i32, i32) {
    %c0_i32 = arith.constant 0 : i32
    %c0_i32_0 = arith.constant 0 : i32
    %c0_i32_1 = arith.constant 0 : i32
    %c0_i32_2 = arith.constant 0 : i32
    return %c0_i32, %c0_i32_0, %c0_i32_1 : i32, i32, i32
  }
  func.func @transform_2(%arg0: i32) -> (i32, i32, i32) {
    %c0_i32 = arith.constant 0 : i32
    %c0_i32_0 = arith.constant 0 : i32
    %c0_i32_1 = arith.constant 0 : i32
    %c0_i32_2 = arith.constant 0 : i32
    return %c0_i32, %c0_i32_0, %c0_i32_1 : i32, i32, i32
  }
  func.func @transform_3(%arg0: i32) -> (i32, i32) {
    %c0_i32 = arith.constant 0 : i32
    %c0_i32_0 = arith.constant 0 : i32
    %c0_i32_1 = arith.constant 0 : i32
    return %c0_i32, %c0_i32_0 : i32, i32
  }
  func.func @transform_4(%arg0: i32) -> (i32, i32, i32) {
    %c0_i32 = arith.constant 0 : i32
    %c0_i32_0 = arith.constant 0 : i32
    %c0_i32_1 = arith.constant 0 : i32
    return %arg0, %c0_i32, %c0_i32_0 : i32, i32, i32
  }
}

</mosaic_0001>

<llo_original>
// kernel: resblock_forward.1
$region0: #{resblock_forward.1}
  #allocation0 [shape = 'u32[]', space=smem, size = 0x4, offset = 0x4, fixed_abs, tag = 'smem constant byte address 0x4 - core index']
  #allocation1 [shape = 'u32[144,128]{1,0:T(1,128)}', space=vmem, size = 0x12000, scoped, tag = 'internal scratch']
  #allocation2 [shape = 'f32[110,128]{1,0:T(8,128)}', space=vmem, size = 0xe000, scoped, tag = 'scratch operand']
  %s0 = inlined_call_operand.vmem [shape: bf16[2,380,128], index: 0, kind: input, shape index: {}]
  %s1 = inlined_call_operand.vmem [shape: bf16[9,128,128], index: 1, kind: input, shape index: {}]
  %s2 = inlined_call_operand.vmem [shape: bf16[9,128,128], index: 2, kind: input, shape index: {}]
  %s3 = inlined_call_operand.vmem [shape: bf16[128,128], index: 3, kind: input, shape index: {}]
  %s4 = inlined_call_operand.vmem [shape: bf16[2,64,128], index: 4, kind: output, shape index: {}]
  %s5 = sld [smem:[#allocation0]]
  $region49: #{resblock_forward.1} parent=0
    _
  %s7 = ssub.s32 1, %s5
  %s8 = scalar_select 0, %s7, %s5
  loop: start=0, step=1, limit=4
  $region2: #{resblock_forward.1} parent=0 // loop_pre_header
    _
  $region3: #{resblock_forward.1} parent=0 // loop_header
    %s10 = sphi 0, %s14
    %p11 = scmp.ge.s32.totalorder %s10, 4
    %s20 = sphi 0, %s22
    %s23 = sphi 0, %s20
    %s24 = sphi 0, %s23
    %s40 = sphi 0, %s24
    %s44 = sphi 0, %s44
    %s46 = sphi 0, %s44
    %s47 = sphi 0, %s46
    %s61 = sphi 0, %s47
    %s65 = sphi 0, %s65
    %s67 = sphi 0, %s65
    %s68 = sphi 0, %s67
    %s82 = sphi 0, %s68
    %s86 = sphi 0, %s86
    %s88 = sphi 0, %s86
    %s89 = sphi 0, %s88
    %s103 = sphi 0, %s89
    %s109 = sphi 0, %s111
    %s112 = sphi 0, %s109
    %s113 = sphi 0, %s112
    %s129 = sphi 0, %s113
  $region4: #{resblock_forward.1} parent=0 // loop_header_branch
    %13 = sbr.rel (%p11) target = $region8
  $region5: #{resblock_forward.1} parent=0 // loop_body
    %s15 = ssub.s32 %s10, 1
    %s16 = ssub.s32 %s10, 2
    %s17 = sadd.s32 %s10, 1
    %s18 = ssub.s32 %s10, %s17
    %p19 = scmp.eq.s32.totalorder %s18, 0
    %s21 = sadd.s32 %s20, 1
    %s22 = scalar_select %p19, %s20, %s21
    %p25 = pneg %p19
    %p26 = scmp.eq.s32.totalorder %s10, 1
    %p27 = por %p25, %p26
    %p28 = scmp.ne.s32.totalorder %s20, %s23
    %p29 = scmp.eq.s32.totalorder %s10, 0
    %p30 = por %p28, %p29
    %p31 = scmp.ne.s32.totalorder %s20, %s23
    %p32 = scmp.eq.s32.totalorder %s15, 1
    %p33 = por %p31, %p32
    %p34 = scmp.ne.s32.totalorder %s23, %s24
    %p35 = scmp.eq.s32.totalorder %s15, 0
    %p36 = por %p34, %p35
    %p37 = scmp.ne.s32.totalorder %s23, %s24
    %p38 = scmp.eq.s32.totalorder %s16, 1
    %p39 = por %p37, %p38
    %p41 = scmp.ne.s32.totalorder %s24, %s40
    %p42 = scmp.eq.s32.totalorder %s16, 0
    %p43 = por %p41, %p42
    %s45 = sadd.s32 %s44, 1
    %p48 = scmp.eq.s32.totalorder %s10, 1
    %p49 = scmp.ne.s32.totalorder %s44, %s46
    %p50 = scmp.eq.s32.totalorder %s10, 0
    %p51 = por %p49, %p50
    %p52 = scmp.ne.s32.totalorder %s44, %s46
    %p53 = scmp.eq.s32.totalorder %s15, 1
    %p54 = por %p52, %p53
    %p55 = scmp.ne.s32.totalorder %s46, %s47
    %p56 = scmp.eq.s32.totalorder %s15, 0
    %p57 = por %p55, %p56
    %p58 = scmp.ne.s32.totalorder %s46, %s47
    %p59 = scmp.eq.s32.totalorder %s16, 1
    %p60 = por %p58, %p59
    %p62 = scmp.ne.s32.totalorder %s47, %s61
    %p63 = scmp.eq.s32.totalorder %s16, 0
    %p64 = por %p62, %p63
    %s66 = sadd.s32 %s65, 1
    %p69 = scmp.eq.s32.totalorder %s10, 1
    %p70 = scmp.ne.s32.totalorder %s65, %s67
    %p71 = scmp.eq.s32.totalorder %s10, 0
    %p72 = por %p70, %p71
    %p73 = scmp.ne.s32.totalorder %s65, %s67
    %p74 = scmp.eq.s32.totalorder %s15, 1
    %p75 = por %p73, %p74
    %p76 = scmp.ne.s32.totalorder %s67, %s68
    %p77 = scmp.eq.s32.totalorder %s15, 0
    %p78 = por %p76, %p77
    %p79 = scmp.ne.s32.totalorder %s67, %s68
    %p80 = scmp.eq.s32.totalorder %s16, 1
    %p81 = por %p79, %p80
    %p83 = scmp.ne.s32.totalorder %s68, %s82
    %p84 = scmp.eq.s32.totalorder %s16, 0
    %p85 = por %p83, %p84
    %s87 = sadd.s32 %s86, 1
    %p90 = scmp.eq.s32.totalorder %s10, 1
    %p91 = scmp.ne.s32.totalorder %s86, %s88
    %p92 = scmp.eq.s32.totalorder %s10, 0
    %p93 = por %p91, %p92
    %p94 = scmp.ne.s32.totalorder %s86, %s88
    %p95 = scmp.eq.s32.totalorder %s15, 1
    %p96 = por %p94, %p95
    %p97 = scmp.ne.s32.totalorder %s88, %s89
    %p98 = scmp.eq.s32.totalorder %s15, 0
    %p99 = por %p97, %p98
    %p100 = scmp.ne.s32.totalorder %s88, %s89
    %p101 = scmp.eq.s32.totalorder %s16, 1
    %p102 = por %p100, %p101
    %p104 = scmp.ne.s32.totalorder %s89, %s103
    %p105 = scmp.eq.s32.totalorder %s16, 0
    %p106 = por %p104, %p105
    %s107 = ssub.s32 %s10, %s17
    %p108 = scmp.eq.s32.totalorder %s107, 0
    %s110 = sadd.s32 %s109, 1
    %s111 = scalar_select %p108, %s109, %s110
    %p114 = pneg %p108
    %p115 = scmp.eq.s32.totalorder %s10, 1
    %p116 = por %p114, %p115
    %p117 = scmp.ne.s32.totalorder %s109, %s112
    %p118 = scmp.eq.s32.totalorder %s10, 0
    %p119 = por %p117, %p118
    %p120 = scmp.ne.s32.totalorder %s109, %s112
    %p121 = scmp.eq.s32.totalorder %s15, 1
    %p122 = por %p120, %p121
    %p123 = scmp.ne.s32.totalorder %s112, %s113
    %p124 = scmp.eq.s32.totalorder %s15, 0
    %p125 = por %p123, %p124
    %p126 = scmp.ne.s32.totalorder %s112, %s113
    %p127 = scmp.eq.s32.totalorder %s16, 1
    %p128 = por %p126, %p127
    %p130 = scmp.ne.s32.totalorder %s113, %s129
    %p131 = scmp.eq.s32.totalorder %s16, 0
    %p132 = por %p130, %p131
    %p133 = scmp.le.s32.totalorder 1, %s10
    %p134 = scmp.lt.s32.totalorder %s10, 3
    %p135 = pnand %p133, %p134
    %p136 = pneg %p135
    // Predicated region
    $region9: #{resblock_forward.1} parent=5 // pred_check
      _
    $region10: #{resblock_forward.1} parent=5 // pred_check_branch
      %138 = sbr.rel (%p135) target = $region12
    $region11: #{resblock_forward.1} parent=5 // pred_region
      %s139 = ssub.s32 %s10, 1
      // Predicated region
      $region13: #{resblock_forward.1} parent=11 // pred_check
        %p140 = pneg %p57
      $region14: #{resblock_forward.1} parent=11 // pred_check_branch
        %142 = sbr.rel (%p140) target = $region16
      $region15: #{resblock_forward.1} parent=11 // pred_region
        _
      $region16: #{resblock_forward.1} parent=11 // pred_fallthru
        _
      // Predicated region
      $region17: #{resblock_forward.1} parent=11 // pred_check
        %p143 = pneg %p78
      $region18: #{resblock_forward.1} parent=11 // pred_check_branch
        %145 = sbr.rel (%p143) target = $region20
      $region19: #{resblock_forward.1} parent=11 // pred_region
        _
      $region20: #{resblock_forward.1} parent=11 // pred_fallthru
        _
      // Predicated region
      $region21: #{resblock_forward.1} parent=11 // pred_check
        %p146 = pneg %p99
      $region22: #{resblock_forward.1} parent=11 // pred_check_branch
        %148 = sbr.rel (%p146) target = $region24
      $region23: #{resblock_forward.1} parent=11 // pred_region
        _
      $region24: #{resblock_forward.1} parent=11 // pred_fallthru
        _
    $region12: #{resblock_forward.1} parent=5 // pred_fallthru
      _
    %p149 = scmp.lt.s32.totalorder %s10, 2
    // Predicated region
    $region25: #{resblock_forward.1} parent=5 // pred_check
      %p150 = pneg %p149
    $region26: #{resblock_forward.1} parent=5 // pred_check_branch
      %152 = sbr.rel (%p150) target = $region28
    $region27: #{resblock_forward.1} parent=5 // pred_region
      // Predicated region
      $region29: #{resblock_forward.1} parent=27 // pred_check
        %p153 = pneg %p30
      $region30: #{resblock_forward.1} parent=27 // pred_check_branch
        %155 = sbr.rel (%p153) target = $region32
      $region31: #{resblock_forward.1} parent=27 // pred_region
        %p156 = scmp.lt.s32.totalorder %s10, 1
        %s157 = scalar_select %p156, %s10, 1
        %s158 = smul.addr %s157, 48
        %s159 = smul.addr %s158, 4
        %s160 = scalar_lea.vmem %s0, %s159
      $region32: #{resblock_forward.1} parent=27 // pred_fallthru
        _
    $region28: #{resblock_forward.1} parent=5 // pred_fallthru
      _
    %p161 = scmp.le.s32.totalorder 1, %s10
    %p162 = scmp.lt.s32.totalorder %s10, 3
    %p163 = pnand %p161, %p162
    %p164 = pneg %p163
    // Predicated region
    $region33: #{resblock_forward.1} parent=5 // pred_check
      _
    $region34: #{resblock_forward.1} parent=5 // pred_check_branch
      %166 = sbr.rel (%p163) target = $region36
    $region35: #{resblock_forward.1} parent=5 // pred_region
      %s167 = ssub.s32 %s10, 1
      %p168 = scmp.lt.s32.totalorder %s15, 1
      %s169 = scalar_select %p168, %s15, 1
      %s170 = smul.addr %s169, 48
      %s171 = smul.addr %s170, 4
      %s172 = scalar_lea.vmem %s0, %s171
      %p173 = pneg %p36
      %p174 = pneg %p33
      %p175 = pneg %p57
      %p176 = pneg %p54
      %p177 = pneg %p78
      %p178 = pneg %p75
      %p179 = pneg %p99
      %p180 = pneg %p96
      %p181 = pneg %p125
      %p182 = pneg %p122
      %p183 = scmp.lt.s32.totalorder %s15, 1
      %s184 = scalar_select %p183, %s15, 1
      %s185 = smul.addr %s184, 8
      %s186 = smul.addr %s185, 4
      %s187 = scalar_lea.vmem %s4, %s186
      %p188 = scmp.lt.s32.totalorder %s15, 1
      %s189 = scalar_select %p188, %s15, 1
      %s190 = smul.addr %s189, 48
      %s191 = smul.addr %s190, 4
      %s192 = scalar_lea.vmem %s0, %s191
      %p193 = scmp.lt.s32.totalorder %s15, 1
      %s194 = scalar_select %p193, %s15, 1
      %s195 = smul.addr %s194, 8
      %s196 = smul.addr %s195, 4
      %s197 = scalar_lea.vmem %s4, %s196
      %v199 = vld [vmem:[%s192] sm:$0xf]
      %v200 = vld [vmem:[%s192 + $0x4] sm:$0xf]
      %v201 = vld [vmem:[%s192 + $0x8] sm:$0xf]
      %v202 = vld [vmem:[%s192 + $0xc] sm:$0xf]
      %v203 = vld [vmem:[%s192 + $0x10] sm:$0xf]
      %v204 = vld [vmem:[%s192 + $0x14] sm:$0xf]
      %v205 = vld [vmem:[%s192 + $0x18] sm:$0xf]
      %v206 = vld [vmem:[%s192 + $0x1c] sm:$0xf]
      %v207 = vld [vmem:[%s192 + $0x20] sm:$0xf]
      %v208 = vld [vmem:[%s192 + $0x24] sm:$0xf]
      %v209 = vld [vmem:[%s192 + $0x28] sm:$0xf]
      %v210 = vld [vmem:[%s192 + $0x2c] sm:$0xf]
      %v211 = vld [vmem:[%s192 + $0x30] sm:$0xf]
      %v212 = vld [vmem:[%s192 + $0x34] sm:$0xf]
      %v213 = vld [vmem:[%s192 + $0x38] sm:$0xf]
      %v214 = vld [vmem:[%s192 + $0x3c] sm:$0xf]
      %v215 = vld [vmem:[%s192 + $0x40] sm:$0xf]
      %v216 = vld [vmem:[%s192 + $0x44] sm:$0xf]
      %v217 = vld [vmem:[%s192 + $0x48] sm:$0xf]
      %v218 = vld [vmem:[%s192 + $0x4c] sm:$0xf]
      %v219 = vld [vmem:[%s192 + $0x50] sm:$0xf]
      %v220 = vld [vmem:[%s192 + $0x54] sm:$0xf]
      %v221 = vld [vmem:[%s192 + $0x58] sm:$0xf]
      %v222 = vld [vmem:[%s192 + $0x5c] sm:$0xf]
      %v223 = vld [vmem:[%s192 + $0x60] sm:$0xf]
      %v224 = vld [vmem:[%s192 + $0x64] sm:$0xf]
      %v225 = vld [vmem:[%s192 + $0x68] sm:$0xf]
      %v226 = vld [vmem:[%s192 + $0x6c] sm:$0xf]
      %v227 = vld [vmem:[%s192 + $0x70] sm:$0xf]
      %v228 = vld [vmem:[%s192 + $0x74] sm:$0xf]
      %v229 = vld [vmem:[%s192 + $0x78] sm:$0xf]
      %v230 = vld [vmem:[%s192 + $0x7c] sm:$0xf]
      %v231 = vld [vmem:[%s192 + $0x80] sm:$0xf]
      %v232 = vld [vmem:[%s192 + $0x84] sm:$0xf]
      %v233 = vld [vmem:[%s192 + $0x88] sm:$0xf]
      %v234 = vld [vmem:[%s192 + $0x8c] sm:$0xf]
      %v235 = vld [vmem:[%s192 + $0x90] sm:$0xf]
      %v236 = vld [vmem:[%s192 + $0x94] sm:$0xf]
      %v237 = vld [vmem:[%s192 + $0x98] sm:$0xf]
      %v238 = vld [vmem:[%s192 + $0x9c] sm:$0xf]
      %v239 = vld [vmem:[%s1] sm:$0xf]
      %v240 = vld [vmem:[%s1 + $0x4] sm:$0xf]
      %v241 = vld [vmem:[%s1 + $0x8] sm:$0xf]
      %v242 = vld [vmem:[%s1 + $0xc] sm:$0xf]
      %v243 = vld [vmem:[%s1 + $0x10] sm:$0xf]
      %v244 = vld [vmem:[%s1 + $0x14] sm:$0xf]
      %v245 = vld [vmem:[%s1 + $0x18] sm:$0xf]
      %v246 = vld [vmem:[%s1 + $0x1c] sm:$0xf]
      %v247 = vld [vmem:[%s1 + $0x20] sm:$0xf]
      %v248 = vld [vmem:[%s1 + $0x24] sm:$0xf]
      %v249 = vld [vmem:[%s1 + $0x28] sm:$0xf]
      %v250 = vld [vmem:[%s1 + $0x2c] sm:$0xf]
      %v251 = vld [vmem:[%s1 + $0x30] sm:$0xf]
      %v252 = vld [vmem:[%s1 + $0x34] sm:$0xf]
      %v253 = vld [vmem:[%s1 + $0x38] sm:$0xf]
      %v254 = vld [vmem:[%s1 + $0x3c] sm:$0xf]
      %v255 = vld [vmem:[%s192 + $0xa0] sm:$0x1]
      %s256 = scalar_lea.vmem %s1, 64
      %v257 = vld [vmem:[%s256] sm:$0xf]
      %v258 = vld [vmem:[%s256 + $0x4] sm:$0xf]
      %v259 = vld [vmem:[%s256 + $0x8] sm:$0xf]
      %v260 = vld [vmem:[%s256 + $0xc] sm:$0xf]
      %v261 = vld [vmem:[%s256 + $0x10] sm:$0xf]
      %v262 = vld [vmem:[%s256 + $0x14] sm:$0xf]
      %v263 = vld [vmem:[%s256 + $0x18] sm:$0xf]
      %v264 = vld [vmem:[%s256 + $0x1c] sm:$0xf]
      %v265 = vld [vmem:[%s256 + $0x20] sm:$0xf]
      %v266 = vld [vmem:[%s256 + $0x24] sm:$0xf]
      %v267 = vld [vmem:[%s256 + $0x28] sm:$0xf]
      %v268 = vld [vmem:[%s256 + $0x2c] sm:$0xf]
      %v269 = vld [vmem:[%s256 + $0x30] sm:$0xf]
      %v270 = vld [vmem:[%s256 + $0x34] sm:$0xf]
      %v271 = vld [vmem:[%s256 + $0x38] sm:$0xf]
      %v272 = vld [vmem:[%s256 + $0x3c] sm:$0xf]
      %v314 = vunpack.c.l.b16 %v199
      %v315 = vunpack.c.l.b16 %v200
      %v316 = vunpack.c.l.b16 %v201
      %v317 = vunpack.c.l.b16 %v202
      %v318 = vunpack.c.l.b16 %v203
      %v319 = vunpack.c.l.b16 %v204
      %v320 = vunpack.c.l.b16 %v205
      %v321 = vunpack.c.l.b16 %v206
      %v322 = vunpack.c.l.b16 %v207
      %v323 = vunpack.c.l.b16 %v208
      %v324 = vunpack.c.l.b16 %v209
      %v325 = vunpack.c.l.b16 %v210
      %v326 = vunpack.c.l.b16 %v211
      %v327 = vunpack.c.l.b16 %v212
      %v328 = vunpack.c.l.b16 %v213
      %v329 = vunpack.c.l.b16 %v214
      %v330 = vunpack.c.l.b16 %v215
      %v331 = vunpack.c.l.b16 %v216
      %v332 = vunpack.c.l.b16 %v217
      %v333 = vunpack.c.l.b16 %v218
      %v334 = vunpack.c.l.b16 %v219
      %v335 = vunpack.c.l.b16 %v220
      %v336 = vunpack.c.l.b16 %v221
      %v337 = vunpack.c.l.b16 %v222
      %v338 = vunpack.c.l.b16 %v223
      %v339 = vunpack.c.l.b16 %v224
      %v340 = vunpack.c.l.b16 %v225
      %v341 = vunpack.c.l.b16 %v226
      %v342 = vunpack.c.l.b16 %v227
      %v343 = vunpack.c.l.b16 %v228
      %v344 = vunpack.c.l.b16 %v229
      %v345 = vunpack.c.l.b16 %v230
      %v346 = vunpack.c.l.b16 %v231
      %v347 = vunpack.c.l.b16 %v232
      %v348 = vunpack.c.l.b16 %v233
      %v349 = vunpack.c.l.b16 %v234
      %v350 = vunpack.c.l.b16 %v235
      %v351 = vunpack.c.l.b16 %v236
      %v352 = vunpack.c.l.b16 %v237
      %v353 = vunpack.c.l.b16 %v238
      %v354 = vunpack.c.l.b16 %v255
      %v355 = vpack.c.b16 %v315, %v314
      %v356 = vpack.c.b16 %v317, %v316
      %v357 = vpack.c.b16 %v319, %v318
      %v358 = vpack.c.b16 %v321, %v320
      %v359 = vpack.c.b16 %v323, %v322
      %v360 = vpack.c.b16 %v325, %v324
      %v361 = vpack.c.b16 %v327, %v326
      %v362 = vpack.c.b16 %v329, %v328
      %v363 = vpack.c.b16 %v331, %v330
      %v364 = vpack.c.b16 %v333, %v332
      %v365 = vpack.c.b16 %v335, %v334
      %v366 = vpack.c.b16 %v337, %v336
      %v367 = vpack.c.b16 %v339, %v338
      %v368 = vpack.c.b16 %v341, %v340
      %v369 = vpack.c.b16 %v343, %v342
      %v370 = vpack.c.b16 %v345, %v344
      %v371 = vpack.c.b16 %v347, %v346
      %v372 = vpack.c.b16 %v349, %v348
      %v373 = vpack.c.b16 %v351, %v350
      %v374 = vpack.c.b16 %v353, %v352
      %v375 = vpack.c.b16 %v354, %v354
      %vm376 = vsmask.f32 7424
      %v378 = vshrl.u32 %v355, 16
      %v380 = vshll.u32 %v355, 16
      %v382 = vrot.slane %v380, 1
      %v383 = vor.u32 %v378, %v382
      %v385 = vshll.u32 %v356, 16
      %v387 = vrot.slane %v385, 1
      %v388 = vsel %vm376, %v383, %v387
      %v389 = vshrl.u32 %v356, 16
      %v391 = vor.u32 %v389, %v387
      %v393 = vshll.u32 %v357, 16
      %v395 = vrot.slane %v393, 1
      %v396 = vsel %vm376, %v391, %v395
      %v397 = vshrl.u32 %v357, 16
      %v399 = vor.u32 %v397, %v395
      %v401 = vshll.u32 %v358, 16
      %v403 = vrot.slane %v401, 1
      %v404 = vsel %vm376, %v399, %v403
      %v405 = vshrl.u32 %v358, 16
      %v407 = vor.u32 %v405, %v403
      %v409 = vshll.u32 %v359, 16
      %v411 = vrot.slane %v409, 1
      %v412 = vsel %vm376, %v407, %v411
      %v413 = vshrl.u32 %v359, 16
      %v415 = vor.u32 %v413, %v411
      %v417 = vshll.u32 %v360, 16
      %v419 = vrot.slane %v417, 1
      %v420 = vsel %vm376, %v415, %v419
      %v421 = vshrl.u32 %v360, 16
      %v423 = vor.u32 %v421, %v419
      %v425 = vshll.u32 %v361, 16
      %v427 = vrot.slane %v425, 1
      %v428 = vsel %vm376, %v423, %v427
      %v429 = vshrl.u32 %v361, 16
      %v431 = vor.u32 %v429, %v427
      %v433 = vshll.u32 %v362, 16
      %v435 = vrot.slane %v433, 1
      %v436 = vsel %vm376, %v431, %v435
      %v437 = vshrl.u32 %v362, 16
      %v439 = vor.u32 %v437, %v435
      %v441 = vshll.u32 %v363, 16
      %v443 = vrot.slane %v441, 1
      %v444 = vsel %vm376, %v439, %v443
      %v445 = vshrl.u32 %v363, 16
      %v447 = vor.u32 %v445, %v443
      %v449 = vshll.u32 %v364, 16
      %v451 = vrot.slane %v449, 1
      %v452 = vsel %vm376, %v447, %v451
      %v453 = vshrl.u32 %v364, 16
      %v455 = vor.u32 %v453, %v451
      %v457 = vshll.u32 %v365, 16
      %v459 = vrot.slane %v457, 1
      %v460 = vsel %vm376, %v455, %v459
      %v461 = vshrl.u32 %v365, 16
      %v463 = vor.u32 %v461, %v459
      %v465 = vshll.u32 %v366, 16
      %v467 = vrot.slane %v465, 1
      %v468 = vsel %vm376, %v463, %v467
      %v469 = vshrl.u32 %v366, 16
      %v471 = vor.u32 %v469, %v467
      %v473 = vshll.u32 %v367, 16
      %v475 = vrot.slane %v473, 1
      %v476 = vsel %vm376, %v471, %v475
      %v477 = vshrl.u32 %v367, 16
      %v479 = vor.u32 %v477, %v475
      %v481 = vshll.u32 %v368, 16
      %v483 = vrot.slane %v481, 1
      %v484 = vsel %vm376, %v479, %v483
      %v485 = vshrl.u32 %v368, 16
      %v487 = vor.u32 %v485, %v483
      %v489 = vshll.u32 %v369, 16
      %v491 = vrot.slane %v489, 1
      %v492 = vsel %vm376, %v487, %v491
      %v493 = vshrl.u32 %v369, 16
      %v495 = vor.u32 %v493, %v491
      %v497 = vshll.u32 %v370, 16
      %v499 = vrot.slane %v497, 1
      %v500 = vsel %vm376, %v495, %v499
      %v501 = vshrl.u32 %v370, 16
      %v503 = vor.u32 %v501, %v499
      %v505 = vshll.u32 %v371, 16
      %v507 = vrot.slane %v505, 1
      %v508 = vsel %vm376, %v503, %v507
      %v509 = vshrl.u32 %v371, 16
      %v511 = vor.u32 %v509, %v507
      %v513 = vshll.u32 %v372, 16
      %v515 = vrot.slane %v513, 1
      %v516 = vsel %vm376, %v511, %v515
      %v517 = vshrl.u32 %v372, 16
      %v519 = vor.u32 %v517, %v515
      %v521 = vshll.u32 %v373, 16
      %v523 = vrot.slane %v521, 1
      %v524 = vsel %vm376, %v519, %v523
      %v525 = vshrl.u32 %v373, 16
      %v527 = vor.u32 %v525, %v523
      %v529 = vshll.u32 %v374, 16
      %v531 = vrot.slane %v529, 1
      %v532 = vsel %vm376, %v527, %v531
      %v533 = vshrl.u32 %v374, 16
      %v535 = vor.u32 %v533, %v531
      %v537 = vshll.u32 %v375, 16
      %v539 = vrot.slane %v537, 1
      %v540 = vsel %vm376, %v535, %v539
      %v577 = vunpack.c.l.b16 %v257
      %v578 = vunpack.c.l.b16 %v258
      %v579 = vunpack.c.l.b16 %v259
      %v580 = vunpack.c.l.b16 %v260
      %v581 = vunpack.c.l.b16 %v261
      %v582 = vunpack.c.l.b16 %v262
      %v583 = vunpack.c.l.b16 %v263
      %v584 = vunpack.c.l.b16 %v264
      %v585 = vunpack.c.l.b16 %v265
      %v586 = vunpack.c.l.b16 %v266
      %v587 = vunpack.c.l.b16 %v267
      %v588 = vunpack.c.l.b16 %v268
      %v589 = vunpack.c.l.b16 %v269
      %v590 = vunpack.c.l.b16 %v270
      %v591 = vunpack.c.l.b16 %v271
      %v592 = vunpack.c.l.b16 %v272
      %v593 = vpack.c.b16 %v578, %v577
      %v594 = vpack.c.b16 %v580, %v579
      %v595 = vpack.c.b16 %v582, %v581
      %v596 = vpack.c.b16 %v584, %v583
      %v597 = vpack.c.b16 %v586, %v585
      %v598 = vpack.c.b16 %v588, %v587
      %v599 = vpack.c.b16 %v590, %v589
      %v600 = vpack.c.b16 %v592, %v591
      %609 = vmatprep.subr.bf16.mxu0 0
      %610 = vmatpush1.bf16.msra.mxu0 %v600
      %611 = vmatprep.subr.bf16.mxu0 0
      %612 = vmatpush1.bf16.msra.mxu0 %v599
      %613 = vmatprep.subr.bf16.mxu0 0
      %614 = vmatpush1.bf16.msra.mxu0 %v598
      %615 = vmatprep.subr.bf16.mxu0 0
      %616 = vmatpush1.bf16.msra.mxu0 %v597
      %617 = vmatprep.subr.bf16.mxu0 0
      %618 = vmatpush1.bf16.msra.mxu0 %v596
      %619 = vmatprep.subr.bf16.mxu0 0
      %620 = vmatpush1.bf16.msra.mxu0 %v595
      %621 = vmatprep.subr.bf16.mxu0 0
      %622 = vmatpush1.bf16.msra.mxu0 %v594
      %623 = vmatprep.subr.bf16.mxu0 0
      %624 = vmatpush1.bf16.msra.mxu0 %v593
      %625 = vmatprep.subr.bf16.mxu0 0
      %626 = vmatpush2.bf16.msra.mxu0 0
      %627 = vmatprep.subr.bf16.mxu0 0
      %628 = vmatpush2.bf16.msra.mxu0 0
      %629 = vmatprep.subr.bf16.mxu0 0
      %630 = vmatpush2.bf16.msra.mxu0 0
      %631 = vmatprep.subr.bf16.mxu0 0
      %632 = vmatpush2.bf16.msra.mxu0 0
      %633 = vmatprep.subr.bf16.mxu0 0
      %634 = vmatpush2.bf16.msra.mxu0 0
      %635 = vmatprep.subr.bf16.mxu0 0
      %636 = vmatpush2.bf16.msra.mxu0 0
      %637 = vmatprep.subr.bf16.mxu0 0
      %638 = vmatpush2.bf16.msra.mxu0 0
      %639 = vmatprep.subr.bf16.mxu0 0
      %640 = vmatpush2.bf16.msra.mxu0 0
      %641 = vmatprep.mubr.bf16.mxu0 0
      %642 = vmatmul.mubr.bf16.gmra.mxu0 %v388
      %v643 = vpop.f32.mrf.mxu0
      %v644 = vadd.f32 0.0, %v643
      %v645 = vpop.f32.mrf.mxu0
      %v646 = vpop.f32.mrf.mxu0
      %v647 = vadd.f32 0.0, %v646
      %v648 = vpop.f32.mrf.mxu0
      %649 = vmatprep.mubr.bf16.mxu0 0
      %650 = vmatmul.mubr.bf16.gmra.mxu0 %v396
      %v651 = vpop.f32.mrf.mxu0
      %v652 = vadd.f32 0.0, %v651
      %v653 = vpop.f32.mrf.mxu0
      %v654 = vpop.f32.mrf.mxu0
      %v655 = vadd.f32 0.0, %v654
      %v656 = vpop.f32.mrf.mxu0
      %657 = vmatprep.mubr.bf16.mxu0 0
      %658 = vmatmul.mubr.bf16.gmra.mxu0 %v404
      %v659 = vpop.f32.mrf.mxu0
      %v660 = vadd.f32 0.0, %v659
      %v661 = vpop.f32.mrf.mxu0
      %v662 = vpop.f32.mrf.mxu0
      %v663 = vadd.f32 0.0, %v662
      %v664 = vpop.f32.mrf.mxu0
      %665 = vmatprep.mubr.bf16.mxu0 0
      %666 = vmatmul.mubr.bf16.gmra.mxu0 %v412
      %v667 = vpop.f32.mrf.mxu0
      %v668 = vadd.f32 0.0, %v667
      %v669 = vpop.f32.mrf.mxu0
      %v670 = vpop.f32.mrf.mxu0
      %v671 = vadd.f32 0.0, %v670
      %v672 = vpop.f32.mrf.mxu0
      %673 = vmatprep.mubr.bf16.mxu0 0
      %674 = vmatmul.mubr.bf16.gmra.mxu0 %v420
      %v675 = vpop.f32.mrf.mxu0
      %v676 = vadd.f32 0.0, %v675
      %v677 = vpop.f32.mrf.mxu0
      %v678 = vpop.f32.mrf.mxu0
      %v679 = vadd.f32 0.0, %v678
      %v680 = vpop.f32.mrf.mxu0
      %681 = vmatprep.mubr.bf16.mxu0 0
      %682 = vmatmul.mubr.bf16.gmra.mxu0 %v428
      %v683 = vpop.f32.mrf.mxu0
      %v684 = vadd.f32 0.0, %v683
      %v685 = vpop.f32.mrf.mxu0
      %v686 = vpop.f32.mrf.mxu0
      %v687 = vadd.f32 0.0, %v686
      %v688 = vpop.f32.mrf.mxu0
      %689 = vmatprep.mubr.bf16.mxu0 0
      %690 = vmatmul.mubr.bf16.gmra.mxu0 %v436
      %v691 = vpop.f32.mrf.mxu0
      %v692 = vadd.f32 0.0, %v691
      %v693 = vpop.f32.mrf.mxu0
      %v694 = vpop.f32.mrf.mxu0
      %v695 = vadd.f32 0.0, %v694
      %v696 = vpop.f32.mrf.mxu0
      %697 = vmatprep.mubr.bf16.mxu0 0
      %698 = vmatmul.mubr.bf16.gmra.mxu0 %v444
      %v699 = vpop.f32.mrf.mxu0
      %v700 = vadd.f32 0.0, %v699
      %v701 = vpop.f32.mrf.mxu0
      %v702 = vpop.f32.mrf.mxu0
      %v703 = vadd.f32 0.0, %v702
      %v704 = vpop.f32.mrf.mxu0
      %705 = vmatprep.mubr.bf16.mxu0 0
      %706 = vmatmul.mubr.bf16.gmra.mxu0 %v452
      %v707 = vpop.f32.mrf.mxu0
      %v708 = vadd.f32 0.0, %v707
      %v709 = vpop.f32.mrf.mxu0
      %v710 = vpop.f32.mrf.mxu0
      %v711 = vadd.f32 0.0, %v710
      %v712 = vpop.f32.mrf.mxu0
      %713 = vmatprep.mubr.bf16.mxu0 0
      %714 = vmatmul.mubr.bf16.gmra.mxu0 %v460
      %v715 = vpop.f32.mrf.mxu0
      %v716 = vadd.f32 0.0, %v715
      %v717 = vpop.f32.mrf.mxu0
      %v718 = vpop.f32.mrf.mxu0
      %v719 = vadd.f32 0.0, %v718
      %v720 = vpop.f32.mrf.mxu0
      %721 = vmatprep.mubr.bf16.mxu0 0
      %722 = vmatmul.mubr.bf16.gmra.mxu0 %v468
      %v723 = vpop.f32.mrf.mxu0
      %v724 = vadd.f32 0.0, %v723
      %v725 = vpop.f32.mrf.mxu0
      %v726 = vpop.f32.mrf.mxu0
      %v727 = vadd.f32 0.0, %v726
      %v728 = vpop.f32.mrf.mxu0
      %729 = vmatprep.mubr.bf16.mxu0 0
      %730 = vmatmul.mubr.bf16.gmra.mxu0 %v476
      %v731 = vpop.f32.mrf.mxu0
      %v732 = vadd.f32 0.0, %v731
      %v733 = vpop.f32.mrf.mxu0
      %v734 = vpop.f32.mrf.mxu0
      %v735 = vadd.f32 0.0, %v734
      %v736 = vpop.f32.mrf.mxu0
      %737 = vmatprep.mubr.bf16.mxu0 0
      %738 = vmatmul.mubr.bf16.gmra.mxu0 %v484
      %v739 = vpop.f32.mrf.mxu0
      %v740 = vadd.f32 0.0, %v739
      %v741 = vpop.f32.mrf.mxu0
      %v742 = vpop.f32.mrf.mxu0
      %v743 = vadd.f32 0.0, %v742
      %v744 = vpop.f32.mrf.mxu0
      %745 = vmatprep.mubr.bf16.mxu0 0
      %746 = vmatmul.mubr.bf16.gmra.mxu0 %v492
      %v747 = vpop.f32.mrf.mxu0
      %v748 = vadd.f32 0.0, %v747
      %v749 = vpop.f32.mrf.mxu0
      %v750 = vpop.f32.mrf.mxu0
      %v751 = vadd.f32 0.0, %v750
      %v752 = vpop.f32.mrf.mxu0
      %753 = vmatprep.mubr.bf16.mxu0 0
      %754 = vmatmul.mubr.bf16.gmra.mxu0 %v500
      %v755 = vpop.f32.mrf.mxu0
      %v756 = vadd.f32 0.0, %v755
      %v757 = vpop.f32.mrf.mxu0
      %v758 = vpop.f32.mrf.mxu0
      %v759 = vadd.f32 0.0, %v758
      %v760 = vpop.f32.mrf.mxu0
      %761 = vmatprep.mubr.bf16.mxu0 0
      %762 = vmatmul.mubr.bf16.gmra.mxu0 %v508
      %v763 = vpop.f32.mrf.mxu0
      %v764 = vadd.f32 0.0, %v763
      %v765 = vpop.f32.mrf.mxu0
      %v766 = vpop.f32.mrf.mxu0
      %v767 = vadd.f32 0.0, %v766
      %v768 = vpop.f32.mrf.mxu0
      %769 = vmatprep.mubr.bf16.mxu0 0
      %770 = vmatmul.mubr.bf16.gmra.mxu0 %v516
      %v771 = vpop.f32.mrf.mxu0
      %v772 = vadd.f32 0.0, %v771
      %v773 = vpop.f32.mrf.mxu0
      %v774 = vpop.f32.mrf.mxu0
      %v775 = vadd.f32 0.0, %v774
      %v776 = vpop.f32.mrf.mxu0
      %777 = vmatprep.mubr.bf16.mxu0 0
      %778 = vmatmul.mubr.bf16.gmra.mxu0 %v524
      %v779 = vpop.f32.mrf.mxu0
      %v780 = vadd.f32 0.0, %v779
      %v781 = vpop.f32.mrf.mxu0
      %v782 = vpop.f32.mrf.mxu0
      %v783 = vadd.f32 0.0, %v782
      %v784 = vpop.f32.mrf.mxu0
      %785 = vmatprep.mubr.bf16.mxu0 0
      %786 = vmatmul.mubr.bf16.gmra.mxu0 %v532
      %v787 = vpop.f32.mrf.mxu0
      %v788 = vadd.f32 0.0, %v787
      %v789 = vpop.f32.mrf.mxu0
      %v790 = vpop.f32.mrf.mxu0
      %v791 = vadd.f32 0.0, %v790
      %v792 = vpop.f32.mrf.mxu0
      %793 = vmatprep.mubr.bf16.mxu0 0
      %794 = vmatmul.mubr.bf16.gmra.mxu0 %v540
      %v795 = vpop.f32.mrf.mxu0
      %v796 = vadd.f32 0.0, %v795
      %v797 = vpop.f32.mrf.mxu0
      %v798 = vpop.f32.mrf.mxu0
      %v799 = vadd.f32 0.0, %v798
      %v800 = vpop.f32.mrf.mxu0
      %801 = vdwg.mxu0
      %v838 = vunpack.c.l.b16 %v239
      %v839 = vunpack.c.l.b16 %v240
      %v840 = vunpack.c.l.b16 %v241
      %v841 = vunpack.c.l.b16 %v242
      %v842 = vunpack.c.l.b16 %v243
      %v843 = vunpack.c.l.b16 %v244
      %v844 = vunpack.c.l.b16 %v245
      %v845 = vunpack.c.l.b16 %v246
      %v846 = vunpack.c.l.b16 %v247
      %v847 = vunpack.c.l.b16 %v248
      %v848 = vunpack.c.l.b16 %v249
      %v849 = vunpack.c.l.b16 %v250
      %v850 = vunpack.c.l.b16 %v251
      %v851 = vunpack.c.l.b16 %v252
      %v852 = vunpack.c.l.b16 %v253
      %v853 = vunpack.c.l.b16 %v254
      %v854 = vpack.c.b16 %v839, %v838
      %v855 = vpack.c.b16 %v841, %v840
      %v856 = vpack.c.b16 %v843, %v842
      %v857 = vpack.c.b16 %v845, %v844
      %v858 = vpack.c.b16 %v847, %v846
      %v859 = vpack.c.b16 %v849, %v848
      %v860 = vpack.c.b16 %v851, %v850
      %v861 = vpack.c.b16 %v853, %v852
      %870 = vmatprep.subr.bf16.mxu0 0
      %871 = vmatpush1.bf16.msra.mxu0 %v861
      %872 = vmatprep.subr.bf16.mxu0 0
      %873 = vmatpush1.bf16.msra.mxu0 %v860
      %874 = vmatprep.subr.bf16.mxu0 0
      %875 = vmatpush1.bf16.msra.mxu0 %v859
      %876 = vmatprep.subr.bf16.mxu0 0
      %877 = vmatpush1.bf16.msra.mxu0 %v858
      %878 = vmatprep.subr.bf16.mxu0 0
      %879 = vmatpush1.bf16.msra.mxu0 %v857
      %880 = vmatprep.subr.bf16.mxu0 0
      %881 = vmatpush1.bf16.msra.mxu0 %v856
      %882 = vmatprep.subr.bf16.mxu0 0
      %883 = vmatpush1.bf16.msra.mxu0 %v855
      %884 = vmatprep.subr.bf16.mxu0 0
      %885 = vmatpush1.bf16.msra.mxu0 %v854
      %886 = vmatprep.subr.bf16.mxu0 0
      %887 = vmatpush2.bf16.msra.mxu0 0
      %888 = vmatprep.subr.bf16.mxu0 0
      %889 = vmatpush2.bf16.msra.mxu0 0
      %890 = vmatprep.subr.bf16.mxu0 0
      %891 = vmatpush2.bf16.msra.mxu0 0
      %892 = vmatprep.subr.bf16.mxu0 0
      %893 = vmatpush2.bf16.msra.mxu0 0
      %894 = vmatprep.subr.bf16.mxu0 0
      %895 = vmatpush2.bf16.msra.mxu0 0
      %896 = vmatprep.subr.bf16.mxu0 0
      %897 = vmatpush2.bf16.msra.mxu0 0
      %898 = vmatprep.subr.bf16.mxu0 0
      %899 = vmatpush2.bf16.msra.mxu0 0
      %900 = vmatprep.subr.bf16.mxu0 0
      %901 = vmatpush2.bf16.msra.mxu0 0
      %902 = vmatprep.mubr.bf16.mxu0 0
      %903 = vmatmul.mubr.bf16.gmra.mxu0 %v355
      %v904 = vpop.f32.mrf.mxu0
      %v905 = vadd.f32 %v644, %v904
      %v906 = vpop.f32.mrf.mxu0
      %v907 = vpop.f32.mrf.mxu0
      %v908 = vadd.f32 %v647, %v907
      %v909 = vpop.f32.mrf.mxu0
      %910 = vmatprep.mubr.bf16.mxu0 0
      %911 = vmatmul.mubr.bf16.gmra.mxu0 %v356
      %v912 = vpop.f32.mrf.mxu0
      %v913 = vadd.f32 %v652, %v912
      %v914 = vpop.f32.mrf.mxu0
      %v915 = vpop.f32.mrf.mxu0
      %v916 = vadd.f32 %v655, %v915
      %v917 = vpop.f32.mrf.mxu0
      %918 = vmatprep.mubr.bf16.mxu0 0
      %919 = vmatmul.mubr.bf16.gmra.mxu0 %v357
      %v920 = vpop.f32.mrf.mxu0
      %v921 = vadd.f32 %v660, %v920
      %v922 = vpop.f32.mrf.mxu0
      %v923 = vpop.f32.mrf.mxu0
      %v924 = vadd.f32 %v663, %v923
      %v925 = vpop.f32.mrf.mxu0
      %926 = vmatprep.mubr.bf16.mxu0 0
      %927 = vmatmul.mubr.bf16.gmra.mxu0 %v358
      %v928 = vpop.f32.mrf.mxu0
      %v929 = vadd.f32 %v668, %v928
      %v930 = vpop.f32.mrf.mxu0
      %v931 = vpop.f32.mrf.mxu0
      %v932 = vadd.f32 %v671, %v931
      %v933 = vpop.f32.mrf.mxu0
      %934 = vmatprep.mubr.bf16.mxu0 0
      %935 = vmatmul.mubr.bf16.gmra.mxu0 %v359
      %v936 = vpop.f32.mrf.mxu0
      %v937 = vadd.f32 %v676, %v936
      %v938 = vpop.f32.mrf.mxu0
      %v939 = vpop.f32.mrf.mxu0
      %v940 = vadd.f32 %v679, %v939
      %v941 = vpop.f32.mrf.mxu0
      %942 = vmatprep.mubr.bf16.mxu0 0
      %943 = vmatmul.mubr.bf16.gmra.mxu0 %v360
      %v944 = vpop.f32.mrf.mxu0
      %v945 = vadd.f32 %v684, %v944
      %v946 = vpop.f32.mrf.mxu0
      %v947 = vpop.f32.mrf.mxu0
      %v948 = vadd.f32 %v687, %v947
      %v949 = vpop.f32.mrf.mxu0
      %950 = vmatprep.mubr.bf16.mxu0 0
      %951 = vmatmul.mubr.bf16.gmra.mxu0 %v361
      %v952 = vpop.f32.mrf.mxu0
      %v953 = vadd.f32 %v692, %v952
      %v954 = vpop.f32.mrf.mxu0
      %v955 = vpop.f32.mrf.mxu0
      %v956 = vadd.f32 %v695, %v955
      %v957 = vpop.f32.mrf.mxu0
      %958 = vmatprep.mubr.bf16.mxu0 0
      %959 = vmatmul.mubr.bf16.gmra.mxu0 %v362
      %v960 = vpop.f32.mrf.mxu0
      %v961 = vadd.f32 %v700, %v960
      %v962 = vpop.f32.mrf.mxu0
      %v963 = vpop.f32.mrf.mxu0
      %v964 = vadd.f32 %v703, %v963
      %v965 = vpop.f32.mrf.mxu0
      %966 = vmatprep.mubr.bf16.mxu0 0
      %967 = vmatmul.mubr.bf16.gmra.mxu0 %v363
      %v968 = vpop.f32.mrf.mxu0
      %v969 = vadd.f32 %v708, %v968
      %v970 = vpop.f32.mrf.mxu0
      %v971 = vpop.f32.mrf.mxu0
      %v972 = vadd.f32 %v711, %v971
      %v973 = vpop.f32.mrf.mxu0
      %974 = vmatprep.mubr.bf16.mxu0 0
      %975 = vmatmul.mubr.bf16.gmra.mxu0 %v364
      %v976 = vpop.f32.mrf.mxu0
      %v977 = vadd.f32 %v716, %v976
      %v978 = vpop.f32.mrf.mxu0
      %v979 = vpop.f32.mrf.mxu0
      %v980 = vadd.f32 %v719, %v979
      %v981 = vpop.f32.mrf.mxu0
      %982 = vmatprep.mubr.bf16.mxu0 0
      %983 = vmatmul.mubr.bf16.gmra.mxu0 %v365
      %v984 = vpop.f32.mrf.mxu0
      %v985 = vadd.f32 %v724, %v984
      %v986 = vpop.f32.mrf.mxu0
      %v987 = vpop.f32.mrf.mxu0
      %v988 = vadd.f32 %v727, %v987
      %v989 = vpop.f32.mrf.mxu0
      %990 = vmatprep.mubr.bf16.mxu0 0
      %991 = vmatmul.mubr.bf16.gmra.mxu0 %v366
      %v992 = vpop.f32.mrf.mxu0
      %v993 = vadd.f32 %v732, %v992
      %v994 = vpop.f32.mrf.mxu0
      %v995 = vpop.f32.mrf.mxu0
      %v996 = vadd.f32 %v735, %v995
      %v997 = vpop.f32.mrf.mxu0
      %998 = vmatprep.mubr.bf16.mxu0 0
      %999 = vmatmul.mubr.bf16.gmra.mxu0 %v367
      %v1000 = vpop.f32.mrf.mxu0
      %v1001 = vadd.f32 %v740, %v1000
      %v1002 = vpop.f32.mrf.mxu0
      %v1003 = vpop.f32.mrf.mxu0
      %v1004 = vadd.f32 %v743, %v1003
      %v1005 = vpop.f32.mrf.mxu0
      %1006 = vmatprep.mubr.bf16.mxu0 0
      %1007 = vmatmul.mubr.bf16.gmra.mxu0 %v368
      %v1008 = vpop.f32.mrf.mxu0
      %v1009 = vadd.f32 %v748, %v1008
      %v1010 = vpop.f32.mrf.mxu0
      %v1011 = vpop.f32.mrf.mxu0
      %v1012 = vadd.f32 %v751, %v1011
      %v1013 = vpop.f32.mrf.mxu0
      %1014 = vmatprep.mubr.bf16.mxu0 0
      %1015 = vmatmul.mubr.bf16.gmra.mxu0 %v369
      %v1016 = vpop.f32.mrf.mxu0
      %v1017 = vadd.f32 %v756, %v1016
      %v1018 = vpop.f32.mrf.mxu0
      %v1019 = vpop.f32.mrf.mxu0
      %v1020 = vadd.f32 %v759, %v1019
      %v1021 = vpop.f32.mrf.mxu0
      %1022 = vmatprep.mubr.bf16.mxu0 0
      %1023 = vmatmul.mubr.bf16.gmra.mxu0 %v370
      %v1024 = vpop.f32.mrf.mxu0
      %v1025 = vadd.f32 %v764, %v1024
      %v1026 = vpop.f32.mrf.mxu0
      %v1027 = vpop.f32.mrf.mxu0
      %v1028 = vadd.f32 %v767, %v1027
      %v1029 = vpop.f32.mrf.mxu0
      %1030 = vmatprep.mubr.bf16.mxu0 0
      %1031 = vmatmul.mubr.bf16.gmra.mxu0 %v371
      %v1032 = vpop.f32.mrf.mxu0
      %v1033 = vadd.f32 %v772, %v1032
      %v1034 = vpop.f32.mrf.mxu0
      %v1035 = vpop.f32.mrf.mxu0
      %v1036 = vadd.f32 %v775, %v1035
      %v1037 = vpop.f32.mrf.mxu0
      %1038 = vmatprep.mubr.bf16.mxu0 0
      %1039 = vmatmul.mubr.bf16.gmra.mxu0 %v372
      %v1040 = vpop.f32.mrf.mxu0
      %v1041 = vadd.f32 %v780, %v1040
      %v1042 = vpop.f32.mrf.mxu0
      %v1043 = vpop.f32.mrf.mxu0
      %v1044 = vadd.f32 %v783, %v1043
      %v1045 = vpop.f32.mrf.mxu0
      %1046 = vmatprep.mubr.bf16.mxu0 0
      %1047 = vmatmul.mubr.bf16.gmra.mxu0 %v373
      %v1048 = vpop.f32.mrf.mxu0
      %v1049 = vadd.f32 %v788, %v1048
      %v1050 = vpop.f32.mrf.mxu0
      %v1051 = vpop.f32.mrf.mxu0
      %v1052 = vadd.f32 %v791, %v1051
      %v1053 = vpop.f32.mrf.mxu0
      %1054 = vmatprep.mubr.bf16.mxu0 0
      %1055 = vmatmul.mubr.bf16.gmra.mxu0 %v374
      %v1056 = vpop.f32.mrf.mxu0
      %v1057 = vadd.f32 %v796, %v1056
      %v1058 = vpop.f32.mrf.mxu0
      %v1059 = vpop.f32.mrf.mxu0
      %v1060 = vadd.f32 %v799, %v1059
      %v1061 = vpop.f32.mrf.mxu0
      %1062 = vdwg.mxu0
      %v1063 = vld [vmem:[%s192] sm:$0xe]
      %s1064 = scalar_lea.vmem %s1, 128
      %v1065 = vld [vmem:[%s1064] sm:$0xf]
      %v1066 = vld [vmem:[%s1064 + $0x4] sm:$0xf]
      %v1067 = vld [vmem:[%s1064 + $0x8] sm:$0xf]
      %v1068 = vld [vmem:[%s1064 + $0xc] sm:$0xf]
      %v1069 = vld [vmem:[%s1064 + $0x10] sm:$0xf]
      %v1070 = vld [vmem:[%s1064 + $0x14] sm:$0xf]
      %v1071 = vld [vmem:[%s1064 + $0x18] sm:$0xf]
      %v1072 = vld [vmem:[%s1064 + $0x1c] sm:$0xf]
      %v1073 = vld [vmem:[%s1064 + $0x20] sm:$0xf]
      %v1074 = vld [vmem:[%s1064 + $0x24] sm:$0xf]
      %v1075 = vld [vmem:[%s1064 + $0x28] sm:$0xf]
      %v1076 = vld [vmem:[%s1064 + $0x2c] sm:$0xf]
      %v1077 = vld [vmem:[%s1064 + $0x30] sm:$0xf]
      %v1078 = vld [vmem:[%s1064 + $0x34] sm:$0xf]
      %v1079 = vld [vmem:[%s1064 + $0x38] sm:$0xf]
      %v1080 = vld [vmem:[%s1064 + $0x3c] sm:$0xf]
      %v1082 = vunpack.c.l.b16 %v1063
      %v1083 = vpack.c.b16 %v315, %v1082
      %vm1084 = vcmask 1046528
      %v1085 = vrot.slane %v1083, 1
      %v1086 = vrot.slane %v356, 1
      %v1087 = vsel %vm1084, %v1085, %v1086
      %v1088 = vrot.slane %v357, 1
      %v1089 = vsel %vm1084, %v1086, %v1088
      %v1090 = vrot.slane %v358, 1
      %v1091 = vsel %vm1084, %v1088, %v1090
      %v1092 = vrot.slane %v359, 1
      %v1093 = vsel %vm1084, %v1090, %v1092
      %v1094 = vrot.slane %v360, 1
      %v1095 = vsel %vm1084, %v1092, %v1094
      %v1096 = vrot.slane %v361, 1
      %v1097 = vsel %vm1084, %v1094, %v1096
      %v1098 = vrot.slane %v362, 1
      %v1099 = vsel %vm1084, %v1096, %v1098
      %v1100 = vrot.slane %v363, 1
      %v1101 = vsel %vm1084, %v1098, %v1100
      %v1102 = vrot.slane %v364, 1
      %v1103 = vsel %vm1084, %v1100, %v1102
      %v1104 = vrot.slane %v365, 1
      %v1105 = vsel %vm1084, %v1102, %v1104
      %v1106 = vrot.slane %v366, 1
      %v1107 = vsel %vm1084, %v1104, %v1106
      %v1108 = vrot.slane %v367, 1
      %v1109 = vsel %vm1084, %v1106, %v1108
      %v1110 = vrot.slane %v368, 1
      %v1111 = vsel %vm1084, %v1108, %v1110
      %v1112 = vrot.slane %v369, 1
      %v1113 = vsel %vm1084, %v1110, %v1112
      %v1114 = vrot.slane %v370, 1
      %v1115 = vsel %vm1084, %v1112, %v1114
      %v1116 = vrot.slane %v371, 1
      %v1117 = vsel %vm1084, %v1114, %v1116
      %v1118 = vrot.slane %v372, 1
      %v1119 = vsel %vm1084, %v1116, %v1118
      %v1120 = vrot.slane %v373, 1
      %v1121 = vsel %vm1084, %v1118, %v1120
      %v1122 = vrot.slane %v374, 1
      %v1123 = vsel %vm1084, %v1120, %v1122
      %v1124 = vrot.slane %v375, 1
      %v1125 = vsel %vm1084, %v1122, %v1124
      %v1162 = vunpack.c.l.b16 %v1065
      %v1163 = vunpack.c.l.b16 %v1066
      %v1164 = vunpack.c.l.b16 %v1067
      %v1165 = vunpack.c.l.b16 %v1068
      %v1166 = vunpack.c.l.b16 %v1069
      %v1167 = vunpack.c.l.b16 %v1070
      %v1168 = vunpack.c.l.b16 %v1071
      %v1169 = vunpack.c.l.b16 %v1072
      %v1170 = vunpack.c.l.b16 %v1073
      %v1171 = vunpack.c.l.b16 %v1074
      %v1172 = vunpack.c.l.b16 %v1075
      %v1173 = vunpack.c.l.b16 %v1076
      %v1174 = vunpack.c.l.b16 %v1077
      %v1175 = vunpack.c.l.b16 %v1078
      %v1176 = vunpack.c.l.b16 %v1079
      %v1177 = vunpack.c.l.b16 %v1080
      %v1178 = vpack.c.b16 %v1163, %v1162
      %v1179 = vpack.c.b16 %v1165, %v1164
      %v1180 = vpack.c.b16 %v1167, %v1166
      %v1181 = vpack.c.b16 %v1169, %v1168
      %v1182 = vpack.c.b16 %v1171, %v1170
      %v1183 = vpack.c.b16 %v1173, %v1172
      %v1184 = vpack.c.b16 %v1175, %v1174
      %v1185 = vpack.c.b16 %v1177, %v1176
      %1194 = vmatprep.subr.bf16.mxu0 0
      %1195 = vmatpush1.bf16.msra.mxu0 %v1185
      %1196 = vmatprep.subr.bf16.mxu0 0
      %1197 = vmatpush1.bf16.msra.mxu0 %v1184
      %1198 = vmatprep.subr.bf16.mxu0 0
      %1199 = vmatpush1.bf16.msra.mxu0 %v1183
      %1200 = vmatprep.subr.bf16.mxu0 0
      %1201 = vmatpush1.bf16.msra.mxu0 %v1182
      %1202 = vmatprep.subr.bf16.mxu0 0
      %1203 = vmatpush1.bf16.msra.mxu0 %v1181
      %1204 = vmatprep.subr.bf16.mxu0 0
      %1205 = vmatpush1.bf16.msra.mxu0 %v1180
      %1206 = vmatprep.subr.bf16.mxu0 0
      %1207 = vmatpush1.bf16.msra.mxu0 %v1179
      %1208 = vmatprep.subr.bf16.mxu0 0
      %1209 = vmatpush1.bf16.msra.mxu0 %v1178
      %1210 = vmatprep.subr.bf16.mxu0 0
      %1211 = vmatpush2.bf16.msra.mxu0 0
      %1212 = vmatprep.subr.bf16.mxu0 0
      %1213 = vmatpush2.bf16.msra.mxu0 0
      %1214 = vmatprep.subr.bf16.mxu0 0
      %1215 = vmatpush2.bf16.msra.mxu0 0
      %1216 = vmatprep.subr.bf16.mxu0 0
      %1217 = vmatpush2.bf16.msra.mxu0 0
      %1218 = vmatprep.subr.bf16.mxu0 0
      %1219 = vmatpush2.bf16.msra.mxu0 0
      %1220 = vmatprep.subr.bf16.mxu0 0
      %1221 = vmatpush2.bf16.msra.mxu0 0
      %1222 = vmatprep.subr.bf16.mxu0 0
      %1223 = vmatpush2.bf16.msra.mxu0 0
      %1224 = vmatprep.subr.bf16.mxu0 0
      %1225 = vmatpush2.bf16.msra.mxu0 0
      %1226 = vmatprep.mubr.bf16.mxu0 0
      %1227 = vmatmul.mubr.bf16.gmra.mxu0 %v1087
      %v1228 = vpop.f32.mrf.mxu0
      %v1229 = vadd.f32 0.0, %v1228
      %v1230 = vpop.f32.mrf.mxu0
      %v1231 = vpop.f32.mrf.mxu0
      %v1232 = vadd.f32 0.0, %v1231
      %v1233 = vpop.f32.mrf.mxu0
      %1234 = vmatprep.mubr.bf16.mxu0 0
      %1235 = vmatmul.mubr.bf16.gmra.mxu0 %v1089
      %v1236 = vpop.f32.mrf.mxu0
      %v1237 = vadd.f32 0.0, %v1236
      %v1238 = vpop.f32.mrf.mxu0
      %v1239 = vpop.f32.mrf.mxu0
      %v1240 = vadd.f32 0.0, %v1239
      %v1241 = vpop.f32.mrf.mxu0
      %1242 = vmatprep.mubr.bf16.mxu0 0
      %1243 = vmatmul.mubr.bf16.gmra.mxu0 %v1091
      %v1244 = vpop.f32.mrf.mxu0
      %v1245 = vadd.f32 0.0, %v1244
      %v1246 = vpop.f32.mrf.mxu0
      %v1247 = vpop.f32.mrf.mxu0
      %v1248 = vadd.f32 0.0, %v1247
      %v1249 = vpop.f32.mrf.mxu0
      %1250 = vmatprep.mubr.bf16.mxu0 0
      %1251 = vmatmul.mubr.bf16.gmra.mxu0 %v1093
      %v1252 = vpop.f32.mrf.mxu0
      %v1253 = vadd.f32 0.0, %v1252
      %v1254 = vpop.f32.mrf.mxu0
      %v1255 = vpop.f32.mrf.mxu0
      %v1256 = vadd.f32 0.0, %v1255
      %v1257 = vpop.f32.mrf.mxu0
      %1258 = vmatprep.mubr.bf16.mxu0 0
      %1259 = vmatmul.mubr.bf16.gmra.mxu0 %v1095
      %v1260 = vpop.f32.mrf.mxu0
      %v1261 = vadd.f32 0.0, %v1260
      %v1262 = vpop.f32.mrf.mxu0
      %v1263 = vpop.f32.mrf.mxu0
      %v1264 = vadd.f32 0.0, %v1263
      %v1265 = vpop.f32.mrf.mxu0
      %1266 = vmatprep.mubr.bf16.mxu0 0
      %1267 = vmatmul.mubr.bf16.gmra.mxu0 %v1097
      %v1268 = vpop.f32.mrf.mxu0
      %v1269 = vadd.f32 0.0, %v1268
      %v1270 = vpop.f32.mrf.mxu0
      %v1271 = vpop.f32.mrf.mxu0
      %v1272 = vadd.f32 0.0, %v1271
      %v1273 = vpop.f32.mrf.mxu0
      %1274 = vmatprep.mubr.bf16.mxu0 0
      %1275 = vmatmul.mubr.bf16.gmra.mxu0 %v1099
      %v1276 = vpop.f32.mrf.mxu0
      %v1277 = vadd.f32 0.0, %v1276
      %v1278 = vpop.f32.mrf.mxu0
      %v1279 = vpop.f32.mrf.mxu0
      %v1280 = vadd.f32 0.0, %v1279
      %v1281 = vpop.f32.mrf.mxu0
      %1282 = vmatprep.mubr.bf16.mxu0 0
      %1283 = vmatmul.mubr.bf16.gmra.mxu0 %v1101
      %v1284 = vpop.f32.mrf.mxu0
      %v1285 = vadd.f32 0.0, %v1284
      %v1286 = vpop.f32.mrf.mxu0
      %v1287 = vpop.f32.mrf.mxu0
      %v1288 = vadd.f32 0.0, %v1287
      %v1289 = vpop.f32.mrf.mxu0
      %1290 = vmatprep.mubr.bf16.mxu0 0
      %1291 = vmatmul.mubr.bf16.gmra.mxu0 %v1103
      %v1292 = vpop.f32.mrf.mxu0
      %v1293 = vadd.f32 0.0, %v1292
      %v1294 = vpop.f32.mrf.mxu0
      %v1295 = vpop.f32.mrf.mxu0
      %v1296 = vadd.f32 0.0, %v1295
      %v1297 = vpop.f32.mrf.mxu0
      %1298 = vmatprep.mubr.bf16.mxu0 0
      %1299 = vmatmul.mubr.bf16.gmra.mxu0 %v1105
      %v1300 = vpop.f32.mrf.mxu0
      %v1301 = vadd.f32 0.0, %v1300
      %v1302 = vpop.f32.mrf.mxu0
      %v1303 = vpop.f32.mrf.mxu0
      %v1304 = vadd.f32 0.0, %v1303
      %v1305 = vpop.f32.mrf.mxu0
      %1306 = vmatprep.mubr.bf16.mxu0 0
      %1307 = vmatmul.mubr.bf16.gmra.mxu0 %v1107
      %v1308 = vpop.f32.mrf.mxu0
      %v1309 = vadd.f32 0.0, %v1308
      %v1310 = vpop.f32.mrf.mxu0
      %v1311 = vpop.f32.mrf.mxu0
      %v1312 = vadd.f32 0.0, %v1311
      %v1313 = vpop.f32.mrf.mxu0
      %1314 = vmatprep.mubr.bf16.mxu0 0
      %1315 = vmatmul.mubr.bf16.gmra.mxu0 %v1109
      %v1316 = vpop.f32.mrf.mxu0
      %v1317 = vadd.f32 0.0, %v1316
      %v1318 = vpop.f32.mrf.mxu0
      %v1319 = vpop.f32.mrf.mxu0
      %v1320 = vadd.f32 0.0, %v1319
      %v1321 = vpop.f32.mrf.mxu0
      %1322 = vmatprep.mubr.bf16.mxu0 0
      %1323 = vmatmul.mubr.bf16.gmra.mxu0 %v1111
      %v1324 = vpop.f32.mrf.mxu0
      %v1325 = vadd.f32 0.0, %v1324
      %v1326 = vpop.f32.mrf.mxu0
      %v1327 = vpop.f32.mrf.mxu0
      %v1328 = vadd.f32 0.0, %v1327
      %v1329 = vpop.f32.mrf.mxu0
      %1330 = vmatprep.mubr.bf16.mxu0 0
      %1331 = vmatmul.mubr.bf16.gmra.mxu0 %v1113
      %v1332 = vpop.f32.mrf.mxu0
      %v1333 = vadd.f32 0.0, %v1332
      %v1334 = vpop.f32.mrf.mxu0
      %v1335 = vpop.f32.mrf.mxu0
      %v1336 = vadd.f32 0.0, %v1335
      %v1337 = vpop.f32.mrf.mxu0
      %1338 = vmatprep.mubr.bf16.mxu0 0
      %1339 = vmatmul.mubr.bf16.gmra.mxu0 %v1115
      %v1340 = vpop.f32.mrf.mxu0
      %v1341 = vadd.f32 0.0, %v1340
      %v1342 = vpop.f32.mrf.mxu0
      %v1343 = vpop.f32.mrf.mxu0
      %v1344 = vadd.f32 0.0, %v1343
      %v1345 = vpop.f32.mrf.mxu0
      %1346 = vmatprep.mubr.bf16.mxu0 0
      %1347 = vmatmul.mubr.bf16.gmra.mxu0 %v1117
      %v1348 = vpop.f32.mrf.mxu0
      %v1349 = vadd.f32 0.0, %v1348
      %v1350 = vpop.f32.mrf.mxu0
      %v1351 = vpop.f32.mrf.mxu0
      %v1352 = vadd.f32 0.0, %v1351
      %v1353 = vpop.f32.mrf.mxu0
      %1354 = vmatprep.mubr.bf16.mxu0 0
      %1355 = vmatmul.mubr.bf16.gmra.mxu0 %v1119
      %v1356 = vpop.f32.mrf.mxu0
      %v1357 = vadd.f32 0.0, %v1356
      %v1358 = vpop.f32.mrf.mxu0
      %v1359 = vpop.f32.mrf.mxu0
      %v1360 = vadd.f32 0.0, %v1359
      %v1361 = vpop.f32.mrf.mxu0
      %1362 = vmatprep.mubr.bf16.mxu0 0
      %1363 = vmatmul.mubr.bf16.gmra.mxu0 %v1121
      %v1364 = vpop.f32.mrf.mxu0
      %v1365 = vadd.f32 0.0, %v1364
      %v1366 = vpop.f32.mrf.mxu0
      %v1367 = vpop.f32.mrf.mxu0
      %v1368 = vadd.f32 0.0, %v1367
      %v1369 = vpop.f32.mrf.mxu0
      %1370 = vmatprep.mubr.bf16.mxu0 0
      %1371 = vmatmul.mubr.bf16.gmra.mxu0 %v1123
      %v1372 = vpop.f32.mrf.mxu0
      %v1373 = vadd.f32 0.0, %v1372
      %v1374 = vpop.f32.mrf.mxu0
      %v1375 = vpop.f32.mrf.mxu0
      %v1376 = vadd.f32 0.0, %v1375
      %v1377 = vpop.f32.mrf.mxu0
      %1378 = vmatprep.mubr.bf16.mxu0 0
      %1379 = vmatmul.mubr.bf16.gmra.mxu0 %v1125
      %v1380 = vpop.f32.mrf.mxu0
      %v1381 = vadd.f32 0.0, %v1380
      %v1382 = vpop.f32.mrf.mxu0
      %v1383 = vpop.f32.mrf.mxu0
      %v1384 = vadd.f32 0.0, %v1383
      %v1385 = vpop.f32.mrf.mxu0
      %1386 = vdwg.mxu0
      %v1387 = vadd.f32 %v905, %v1229
      %v1388 = vadd.f32 %v908, %v1232
      %v1389 = vadd.f32 %v913, %v1237
      %v1390 = vadd.f32 %v916, %v1240
      %v1391 = vadd.f32 %v921, %v1245
      %v1392 = vadd.f32 %v924, %v1248
      %v1393 = vadd.f32 %v929, %v1253
      %v1394 = vadd.f32 %v932, %v1256
      %v1395 = vadd.f32 %v937, %v1261
      %v1396 = vadd.f32 %v940, %v1264
      %v1397 = vadd.f32 %v945, %v1269
      %v1398 = vadd.f32 %v948, %v1272
      %v1399 = vadd.f32 %v953, %v1277
      %v1400 = vadd.f32 %v956, %v1280
      %v1401 = vadd.f32 %v961, %v1285
      %v1402 = vadd.f32 %v964, %v1288
      %v1403 = vadd.f32 %v969, %v1293
      %v1404 = vadd.f32 %v972, %v1296
      %v1405 = vadd.f32 %v977, %v1301
      %v1406 = vadd.f32 %v980, %v1304
      %v1407 = vadd.f32 %v985, %v1309
      %v1408 = vadd.f32 %v988, %v1312
      %v1409 = vadd.f32 %v993, %v1317
      %v1410 = vadd.f32 %v996, %v1320
      %v1411 = vadd.f32 %v1001, %v1325
      %v1412 = vadd.f32 %v1004, %v1328
      %v1413 = vadd.f32 %v1009, %v1333
      %v1414 = vadd.f32 %v1012, %v1336
      %v1415 = vadd.f32 %v1017, %v1341
      %v1416 = vadd.f32 %v1020, %v1344
      %v1417 = vadd.f32 %v1025, %v1349
      %v1418 = vadd.f32 %v1028, %v1352
      %v1419 = vadd.f32 %v1033, %v1357
      %v1420 = vadd.f32 %v1036, %v1360
      %v1421 = vadd.f32 %v1041, %v1365
      %v1422 = vadd.f32 %v1044, %v1368
      %v1423 = vadd.f32 %v1049, %v1373
      %v1424 = vadd.f32 %v1052, %v1376
      %v1425 = vadd.f32 %v1057, %v1381
      %v1426 = vadd.f32 %v1060, %v1384
      %v1427 = vld [vmem:[%s192 + $0x8] sm:$0xc]
      %v1428 = vld [vmem:[%s192 + $0xc] sm:$0xf]
      %v1429 = vld [vmem:[%s192 + $0x10] sm:$0xf]
      %v1430 = vld [vmem:[%s192 + $0x14] sm:$0xf]
      %v1431 = vld [vmem:[%s192 + $0x18] sm:$0xf]
      %v1432 = vld [vmem:[%s192 + $0x1c] sm:$0xf]
      %v1433 = vld [vmem:[%s192 + $0x20] sm:$0xf]
      %v1434 = vld [vmem:[%s192 + $0x24] sm:$0xf]
      %v1435 = vld [vmem:[%s192 + $0x28] sm:$0xf]
      %v1436 = vld [vmem:[%s192 + $0x2c] sm:$0xf]
      %v1437 = vld [vmem:[%s192 + $0x30] sm:$0xf]
      %v1438 = vld [vmem:[%s192 + $0x34] sm:$0xf]
      %v1439 = vld [vmem:[%s192 + $0x38] sm:$0xf]
      %v1440 = vld [vmem:[%s192 + $0x3c] sm:$0xf]
      %v1441 = vld [vmem:[%s192 + $0x40] sm:$0xf]
      %v1442 = vld [vmem:[%s192 + $0x44] sm:$0xf]
      %v1443 = vld [vmem:[%s192 + $0x48] sm:$0xf]
      %v1444 = vld [vmem:[%s192 + $0x4c] sm:$0xf]
      %v1445 = vld [vmem:[%s192 + $0x50] sm:$0xf]
      %v1446 = vld [vmem:[%s192 + $0x54] sm:$0xf]
      %v1447 = vld [vmem:[%s192 + $0x58] sm:$0xf]
      %v1448 = vld [vmem:[%s192 + $0x5c] sm:$0xf]
      %v1449 = vld [vmem:[%s192 + $0x60] sm:$0xf]
      %v1450 = vld [vmem:[%s192 + $0x64] sm:$0xf]
      %v1451 = vld [vmem:[%s192 + $0x68] sm:$0xf]
      %v1452 = vld [vmem:[%s192 + $0x6c] sm:$0xf]
      %v1453 = vld [vmem:[%s192 + $0x70] sm:$0xf]
      %v1454 = vld [vmem:[%s192 + $0x74] sm:$0xf]
      %v1455 = vld [vmem:[%s192 + $0x78] sm:$0xf]
      %v1456 = vld [vmem:[%s192 + $0x7c] sm:$0xf]
      %v1457 = vld [vmem:[%s192 + $0x80] sm:$0xf]
      %v1458 = vld [vmem:[%s192 + $0x84] sm:$0xf]
      %v1459 = vld [vmem:[%s192 + $0x88] sm:$0xf]
      %v1460 = vld [vmem:[%s192 + $0x8c] sm:$0xf]
      %v1461 = vld [vmem:[%s192 + $0x90] sm:$0xf]
      %v1462 = vld [vmem:[%s192 + $0x94] sm:$0xf]
      %v1463 = vld [vmem:[%s192 + $0x98] sm:$0xf]
      %v1464 = vld [vmem:[%s192 + $0x9c] sm:$0xf]
      %v1465 = vld [vmem:[%s192 + $0xa0] sm:$0xf]
      %v1466 = vld [vmem:[%s192 + $0xa4] sm:$0xf]
      %v1467 = vld [vmem:[%s192 + $0xa8] sm:$0x3]
      %s1468 = scalar_lea.vmem %s1, 192
      %v1469 = vld [vmem:[%s1468] sm:$0xf]
      %v1470 = vld [vmem:[%s1468 + $0x4] sm:$0xf]
      %v1471 = vld [vmem:[%s1468 + $0x8] sm:$0xf]
      %v1472 = vld [vmem:[%s1468 + $0xc] sm:$0xf]
      %v1473 = vld [vmem:[%s1468 + $0x10] sm:$0xf]
      %v1474 = vld [vmem:[%s1468 + $0x14] sm:$0xf]
      %v1475 = vld [vmem:[%s1468 + $0x18] sm:$0xf]
      %v1476 = vld [vmem:[%s1468 + $0x1c] sm:$0xf]
      %v1477 = vld [vmem:[%s1468 + $0x20] sm:$0xf]
      %v1478 = vld [vmem:[%s1468 + $0x24] sm:$0xf]
      %v1479 = vld [vmem:[%s1468 + $0x28] sm:$0xf]
      %v1480 = vld [vmem:[%s1468 + $0x2c] sm:$0xf]
      %v1481 = vld [vmem:[%s1468 + $0x30] sm:$0xf]
      %v1482 = vld [vmem:[%s1468 + $0x34] sm:$0xf]
      %v1483 = vld [vmem:[%s1468 + $0x38] sm:$0xf]
      %v1484 = vld [vmem:[%s1468 + $0x3c] sm:$0xf]
      %v1526 = vunpack.c.l.b16 %v1427
      %v1527 = vunpack.c.l.b16 %v1428
      %v1528 = vunpack.c.l.b16 %v1429
      %v1529 = vunpack.c.l.b16 %v1430
      %v1530 = vunpack.c.l.b16 %v1431
      %v1531 = vunpack.c.l.b16 %v1432
      %v1532 = vunpack.c.l.b16 %v1433
      %v1533 = vunpack.c.l.b16 %v1434
      %v1534 = vunpack.c.l.b16 %v1435
      %v1535 = vunpack.c.l.b16 %v1436
      %v1536 = vunpack.c.l.b16 %v1437
      %v1537 = vunpack.c.l.b16 %v1438
      %v1538 = vunpack.c.l.b16 %v1439
      %v1539 = vunpack.c.l.b16 %v1440
      %v1540 = vunpack.c.l.b16 %v1441
      %v1541 = vunpack.c.l.b16 %v1442
      %v1542 = vunpack.c.l.b16 %v1443
      %v1543 = vunpack.c.l.b16 %v1444
      %v1544 = vunpack.c.l.b16 %v1445
      %v1545 = vunpack.c.l.b16 %v1446
      %v1546 = vunpack.c.l.b16 %v1447
      %v1547 = vunpack.c.l.b16 %v1448
      %v1548 = vunpack.c.l.b16 %v1449
      %v1549 = vunpack.c.l.b16 %v1450
      %v1550 = vunpack.c.l.b16 %v1451
      %v1551 = vunpack.c.l.b16 %v1452
      %v1552 = vunpack.c.l.b16 %v1453
      %v1553 = vunpack.c.l.b16 %v1454
      %v1554 = vunpack.c.l.b16 %v1455
      %v1555 = vunpack.c.l.b16 %v1456
      %v1556 = vunpack.c.l.b16 %v1457
      %v1557 = vunpack.c.l.b16 %v1458
      %v1558 = vunpack.c.l.b16 %v1459
      %v1559 = vunpack.c.l.b16 %v1460
      %v1560 = vunpack.c.l.b16 %v1461
      %v1561 = vunpack.c.l.b16 %v1462
      %v1562 = vunpack.c.l.b16 %v1463
      %v1563 = vunpack.c.l.b16 %v1464
      %v1564 = vunpack.c.l.b16 %v1465
      %v1565 = vunpack.c.l.b16 %v1466
      %v1566 = vunpack.c.l.b16 %v1467
      %v1567 = vpack.c.b16 %v1527, %v1526
      %v1568 = vpack.c.b16 %v1529, %v1528
      %v1569 = vpack.c.b16 %v1531, %v1530
      %v1570 = vpack.c.b16 %v1533, %v1532
      %v1571 = vpack.c.b16 %v1535, %v1534
      %v1572 = vpack.c.b16 %v1537, %v1536
      %v1573 = vpack.c.b16 %v1539, %v1538
      %v1574 = vpack.c.b16 %v1541, %v1540
      %v1575 = vpack.c.b16 %v1543, %v1542
      %v1576 = vpack.c.b16 %v1545, %v1544
      %v1577 = vpack.c.b16 %v1547, %v1546
      %v1578 = vpack.c.b16 %v1549, %v1548
      %v1579 = vpack.c.b16 %v1551, %v1550
      %v1580 = vpack.c.b16 %v1553, %v1552
      %v1581 = vpack.c.b16 %v1555, %v1554
      %v1582 = vpack.c.b16 %v1557, %v1556
      %v1583 = vpack.c.b16 %v1559, %v1558
      %v1584 = vpack.c.b16 %v1561, %v1560
      %v1585 = vpack.c.b16 %v1563, %v1562
      %v1586 = vpack.c.b16 %v1565, %v1564
      %v1587 = vpack.c.b16 %v1566, %v1566
      %vm1588 = vcmask 1045504
      %v1589 = vrot.slane %v1567, 2
      %v1590 = vrot.slane %v1568, 2
      %v1591 = vsel %vm1588, %v1589, %v1590
      %v1592 = vrot.slane %v1569, 2
      %v1593 = vsel %vm1588, %v1590, %v1592
      %v1594 = vrot.slane %v1570, 2
      %v1595 = vsel %vm1588, %v1592, %v1594
      %v1596 = vrot.slane %v1571, 2
      %v1597 = vsel %vm1588, %v1594, %v1596
      %v1598 = vrot.slane %v1572, 2
      %v1599 = vsel %vm1588, %v1596, %v1598
      %v1600 = vrot.slane %v1573, 2
      %v1601 = vsel %vm1588, %v1598, %v1600
      %v1602 = vrot.slane %v1574, 2
      %v1603 = vsel %vm1588, %v1600, %v1602
      %v1604 = vrot.slane %v1575, 2
      %v1605 = vsel %vm1588, %v1602, %v1604
      %v1606 = vrot.slane %v1576, 2
      %v1607 = vsel %vm1588, %v1604, %v1606
      %v1608 = vrot.slane %v1577, 2
      %v1609 = vsel %vm1588, %v1606, %v1608
      %v1610 = vrot.slane %v1578, 2
      %v1611 = vsel %vm1588, %v1608, %v1610
      %v1612 = vrot.slane %v1579, 2
      %v1613 = vsel %vm1588, %v1610, %v1612
      %v1614 = vrot.slane %v1580, 2
      %v1615 = vsel %vm1588, %v1612, %v1614
      %v1616 = vrot.slane %v1581, 2
      %v1617 = vsel %vm1588, %v1614, %v1616
      %v1618 = vrot.slane %v1582, 2
      %v1619 = vsel %vm1588, %v1616, %v1618
      %v1620 = vrot.slane %v1583, 2
      %v1621 = vsel %vm1588, %v1618, %v1620
      %v1622 = vrot.slane %v1584, 2
      %v1623 = vsel %vm1588, %v1620, %v1622
      %v1624 = vrot.slane %v1585, 2
      %v1625 = vsel %vm1588, %v1622, %v1624
      %v1626 = vrot.slane %v1586, 2
      %v1627 = vsel %vm1588, %v1624, %v1626
      %v1628 = vrot.slane %v1587, 2
      %v1629 = vsel %vm1588, %v1626, %v1628
      %v1666 = vunpack.c.l.b16 %v1469
      %v1667 = vunpack.c.l.b16 %v1470
      %v1668 = vunpack.c.l.b16 %v1471
      %v1669 = vunpack.c.l.b16 %v1472
      %v1670 = vunpack.c.l.b16 %v1473
      %v1671 = vunpack.c.l.b16 %v1474
      %v1672 = vunpack.c.l.b16 %v1475
      %v1673 = vunpack.c.l.b16 %v1476
      %v1674 = vunpack.c.l.b16 %v1477
      %v1675 = vunpack.c.l.b16 %v1478
      %v1676 = vunpack.c.l.b16 %v1479
      %v1677 = vunpack.c.l.b16 %v1480
      %v1678 = vunpack.c.l.b16 %v1481
      %v1679 = vunpack.c.l.b16 %v1482
      %v1680 = vunpack.c.l.b16 %v1483
      %v1681 = vunpack.c.l.b16 %v1484
      %v1682 = vpack.c.b16 %v1667, %v1666
      %v1683 = vpack.c.b16 %v1669, %v1668
      %v1684 = vpack.c.b16 %v1671, %v1670
      %v1685 = vpack.c.b16 %v1673, %v1672
      %v1686 = vpack.c.b16 %v1675, %v1674
      %v1687 = vpack.c.b16 %v1677, %v1676
      %v1688 = vpack.c.b16 %v1679, %v1678
      %v1689 = vpack.c.b16 %v1681, %v1680
      %1698 = vmatprep.subr.bf16.mxu0 0
      %1699 = vmatpush1.bf16.msra.mxu0 %v1689
      %1700 = vmatprep.subr.bf16.mxu0 0
      %1701 = vmatpush1.bf16.msra.mxu0 %v1688
      %1702 = vmatprep.subr.bf16.mxu0 0
      %1703 = vmatpush1.bf16.msra.mxu0 %v1687
      %1704 = vmatprep.subr.bf16.mxu0 0
      %1705 = vmatpush1.bf16.msra.mxu0 %v1686
      %1706 = vmatprep.subr.bf16.mxu0 0
      %1707 = vmatpush1.bf16.msra.mxu0 %v1685
      %1708 = vmatprep.subr.bf16.mxu0 0
      %1709 = vmatpush1.bf16.msra.mxu0 %v1684
      %1710 = vmatprep.subr.bf16.mxu0 0
      %1711 = vmatpush1.bf16.msra.mxu0 %v1683
      %1712 = vmatprep.subr.bf16.mxu0 0
      %1713 = vmatpush1.bf16.msra.mxu0 %v1682
      %1714 = vmatprep.subr.bf16.mxu0 0
      %1715 = vmatpush2.bf16.msra.mxu0 0
      %1716 = vmatprep.subr.bf16.mxu0 0
      %1717 = vmatpush2.bf16.msra.mxu0 0
      %1718 = vmatprep.subr.bf16.mxu0 0
      %1719 = vmatpush2.bf16.msra.mxu0 0
      %1720 = vmatprep.subr.bf16.mxu0 0
      %1721 = vmatpush2.bf16.msra.mxu0 0
      %1722 = vmatprep.subr.bf16.mxu0 0
      %1723 = vmatpush2.bf16.msra.mxu0 0
      %1724 = vmatprep.subr.bf16.mxu0 0
      %1725 = vmatpush2.bf16.msra.mxu0 0
      %1726 = vmatprep.subr.bf16.mxu0 0
      %1727 = vmatpush2.bf16.msra.mxu0 0
      %1728 = vmatprep.subr.bf16.mxu0 0
      %1729 = vmatpush2.bf16.msra.mxu0 0
      %1730 = vmatprep.mubr.bf16.mxu0 0
      %1731 = vmatmul.mubr.bf16.gmra.mxu0 %v1591
      %v1732 = vpop.f32.mrf.mxu0
      %v1733 = vadd.f32 0.0, %v1732
      %v1734 = vpop.f32.mrf.mxu0
      %v1735 = vpop.f32.mrf.mxu0
      %v1736 = vadd.f32 0.0, %v1735
      %v1737 = vpop.f32.mrf.mxu0
      %1738 = vmatprep.mubr.bf16.mxu0 0
      %1739 = vmatmul.mubr.bf16.gmra.mxu0 %v1593
      %v1740 = vpop.f32.mrf.mxu0
      %v1741 = vadd.f32 0.0, %v1740
      %v1742 = vpop.f32.mrf.mxu0
      %v1743 = vpop.f32.mrf.mxu0
      %v1744 = vadd.f32 0.0, %v1743
      %v1745 = vpop.f32.mrf.mxu0
      %1746 = vmatprep.mubr.bf16.mxu0 0
      %1747 = vmatmul.mubr.bf16.gmra.mxu0 %v1595
      %v1748 = vpop.f32.mrf.mxu0
      %v1749 = vadd.f32 0.0, %v1748
      %v1750 = vpop.f32.mrf.mxu0
      %v1751 = vpop.f32.mrf.mxu0
      %v1752 = vadd.f32 0.0, %v1751
      %v1753 = vpop.f32.mrf.mxu0
      %1754 = vmatprep.mubr.bf16.mxu0 0
      %1755 = vmatmul.mubr.bf16.gmra.mxu0 %v1597
      %v1756 = vpop.f32.mrf.mxu0
      %v1757 = vadd.f32 0.0, %v1756
      %v1758 = vpop.f32.mrf.mxu0
      %v1759 = vpop.f32.mrf.mxu0
      %v1760 = vadd.f32 0.0, %v1759
      %v1761 = vpop.f32.mrf.mxu0
      %1762 = vmatprep.mubr.bf16.mxu0 0
      %1763 = vmatmul.mubr.bf16.gmra.mxu0 %v1599
      %v1764 = vpop.f32.mrf.mxu0
      %v1765 = vadd.f32 0.0, %v1764
      %v1766 = vpop.f32.mrf.mxu0
      %v1767 = vpop.f32.mrf.mxu0
      %v1768 = vadd.f32 0.0, %v1767
      %v1769 = vpop.f32.mrf.mxu0
      %1770 = vmatprep.mubr.bf16.mxu0 0
      %1771 = vmatmul.mubr.bf16.gmra.mxu0 %v1601
      %v1772 = vpop.f32.mrf.mxu0
      %v1773 = vadd.f32 0.0, %v1772
      %v1774 = vpop.f32.mrf.mxu0
      %v1775 = vpop.f32.mrf.mxu0
      %v1776 = vadd.f32 0.0, %v1775
      %v1777 = vpop.f32.mrf.mxu0
      %1778 = vmatprep.mubr.bf16.mxu0 0
      %1779 = vmatmul.mubr.bf16.gmra.mxu0 %v1603
      %v1780 = vpop.f32.mrf.mxu0
      %v1781 = vadd.f32 0.0, %v1780
      %v1782 = vpop.f32.mrf.mxu0
      %v1783 = vpop.f32.mrf.mxu0
      %v1784 = vadd.f32 0.0, %v1783
      %v1785 = vpop.f32.mrf.mxu0
      %1786 = vmatprep.mubr.bf16.mxu0 0
      %1787 = vmatmul.mubr.bf16.gmra.mxu0 %v1605
      %v1788 = vpop.f32.mrf.mxu0
      %v1789 = vadd.f32 0.0, %v1788
      %v1790 = vpop.f32.mrf.mxu0
      %v1791 = vpop.f32.mrf.mxu0
      %v1792 = vadd.f32 0.0, %v1791
      %v1793 = vpop.f32.mrf.mxu0
      %1794 = vmatprep.mubr.bf16.mxu0 0
      %1795 = vmatmul.mubr.bf16.gmra.mxu0 %v1607
      %v1796 = vpop.f32.mrf.mxu0
      %v1797 = vadd.f32 0.0, %v1796
      %v1798 = vpop.f32.mrf.mxu0
      %v1799 = vpop.f32.mrf.mxu0
      %v1800 = vadd.f32 0.0, %v1799
      %v1801 = vpop.f32.mrf.mxu0
      %1802 = vmatprep.mubr.bf16.mxu0 0
      %1803 = vmatmul.mubr.bf16.gmra.mxu0 %v1609
      %v1804 = vpop.f32.mrf.mxu0
      %v1805 = vadd.f32 0.0, %v1804
      %v1806 = vpop.f32.mrf.mxu0
      %v1807 = vpop.f32.mrf.mxu0
      %v1808 = vadd.f32 0.0, %v1807
      %v1809 = vpop.f32.mrf.mxu0
      %1810 = vmatprep.mubr.bf16.mxu0 0
      %1811 = vmatmul.mubr.bf16.gmra.mxu0 %v1611
      %v1812 = vpop.f32.mrf.mxu0
      %v1813 = vadd.f32 0.0, %v1812
      %v1814 = vpop.f32.mrf.mxu0
      %v1815 = vpop.f32.mrf.mxu0
      %v1816 = vadd.f32 0.0, %v1815
      %v1817 = vpop.f32.mrf.mxu0
      %1818 = vmatprep.mubr.bf16.mxu0 0
      %1819 = vmatmul.mubr.bf16.gmra.mxu0 %v1613
      %v1820 = vpop.f32.mrf.mxu0
      %v1821 = vadd.f32 0.0, %v1820
      %v1822 = vpop.f32.mrf.mxu0
      %v1823 = vpop.f32.mrf.mxu0
      %v1824 = vadd.f32 0.0, %v1823
      %v1825 = vpop.f32.mrf.mxu0
      %1826 = vmatprep.mubr.bf16.mxu0 0
      %1827 = vmatmul.mubr.bf16.gmra.mxu0 %v1615
      %v1828 = vpop.f32.mrf.mxu0
      %v1829 = vadd.f32 0.0, %v1828
      %v1830 = vpop.f32.mrf.mxu0
      %v1831 = vpop.f32.mrf.mxu0
      %v1832 = vadd.f32 0.0, %v1831
      %v1833 = vpop.f32.mrf.mxu0
      %1834 = vmatprep.mubr.bf16.mxu0 0
      %1835 = vmatmul.mubr.bf16.gmra.mxu0 %v1617
      %v1836 = vpop.f32.mrf.mxu0
      %v1837 = vadd.f32 0.0, %v1836
      %v1838 = vpop.f32.mrf.mxu0
      %v1839 = vpop.f32.mrf.mxu0
      %v1840 = vadd.f32 0.0, %v1839
      %v1841 = vpop.f32.mrf.mxu0
      %1842 = vmatprep.mubr.bf16.mxu0 0
      %1843 = vmatmul.mubr.bf16.gmra.mxu0 %v1619
      %v1844 = vpop.f32.mrf.mxu0
      %v1845 = vadd.f32 0.0, %v1844
      %v1846 = vpop.f32.mrf.mxu0
      %v1847 = vpop.f32.mrf.mxu0
      %v1848 = vadd.f32 0.0, %v1847
      %v1849 = vpop.f32.mrf.mxu0
      %1850 = vmatprep.mubr.bf16.mxu0 0
      %1851 = vmatmul.mubr.bf16.gmra.mxu0 %v1621
      %v1852 = vpop.f32.mrf.mxu0
      %v1853 = vadd.f32 0.0, %v1852
      %v1854 = vpop.f32.mrf.mxu0
      %v1855 = vpop.f32.mrf.mxu0
      %v1856 = vadd.f32 0.0, %v1855
      %v1857 = vpop.f32.mrf.mxu0
      %1858 = vmatprep.mubr.bf16.mxu0 0
      %1859 = vmatmul.mubr.bf16.gmra.mxu0 %v1623
      %v1860 = vpop.f32.mrf.mxu0
      %v1861 = vadd.f32 0.0, %v1860
      %v1862 = vpop.f32.mrf.mxu0
      %v1863 = vpop.f32.mrf.mxu0
      %v1864 = vadd.f32 0.0, %v1863
      %v1865 = vpop.f32.mrf.mxu0
      %1866 = vmatprep.mubr.bf16.mxu0 0
      %1867 = vmatmul.mubr.bf16.gmra.mxu0 %v1625
      %v1868 = vpop.f32.mrf.mxu0
      %v1869 = vadd.f32 0.0, %v1868
      %v1870 = vpop.f32.mrf.mxu0
      %v1871 = vpop.f32.mrf.mxu0
      %v1872 = vadd.f32 0.0, %v1871
      %v1873 = vpop.f32.mrf.mxu0
      %1874 = vmatprep.mubr.bf16.mxu0 0
      %1875 = vmatmul.mubr.bf16.gmra.mxu0 %v1627
      %v1876 = vpop.f32.mrf.mxu0
      %v1877 = vadd.f32 0.0, %v1876
      %v1878 = vpop.f32.mrf.mxu0
      %v1879 = vpop.f32.mrf.mxu0
      %v1880 = vadd.f32 0.0, %v1879
      %v1881 = vpop.f32.mrf.mxu0
      %1882 = vmatprep.mubr.bf16.mxu0 0
      %1883 = vmatmul.mubr.bf16.gmra.mxu0 %v1629
      %v1884 = vpop.f32.mrf.mxu0
      %v1885 = vadd.f32 0.0, %v1884
      %v1886 = vpop.f32.mrf.mxu0
      %v1887 = vpop.f32.mrf.mxu0
      %v1888 = vadd.f32 0.0, %v1887
      %v1889 = vpop.f32.mrf.mxu0
      %1890 = vdwg.mxu0
      %v1891 = vadd.f32 %v1387, %v1733
      %v1892 = vadd.f32 %v1388, %v1736
      %v1893 = vadd.f32 %v1389, %v1741
      %v1894 = vadd.f32 %v1390, %v1744
      %v1895 = vadd.f32 %v1391, %v1749
      %v1896 = vadd.f32 %v1392, %v1752
      %v1897 = vadd.f32 %v1393, %v1757
      %v1898 = vadd.f32 %v1394, %v1760
      %v1899 = vadd.f32 %v1395, %v1765
      %v1900 = vadd.f32 %v1396, %v1768
      %v1901 = vadd.f32 %v1397, %v1773
      %v1902 = vadd.f32 %v1398, %v1776
      %v1903 = vadd.f32 %v1399, %v1781
      %v1904 = vadd.f32 %v1400, %v1784
      %v1905 = vadd.f32 %v1401, %v1789
      %v1906 = vadd.f32 %v1402, %v1792
      %v1907 = vadd.f32 %v1403, %v1797
      %v1908 = vadd.f32 %v1404, %v1800
      %v1909 = vadd.f32 %v1405, %v1805
      %v1910 = vadd.f32 %v1406, %v1808
      %v1911 = vadd.f32 %v1407, %v1813
      %v1912 = vadd.f32 %v1408, %v1816
      %v1913 = vadd.f32 %v1409, %v1821
      %v1914 = vadd.f32 %v1410, %v1824
      %v1915 = vadd.f32 %v1411, %v1829
      %v1916 = vadd.f32 %v1412, %v1832
      %v1917 = vadd.f32 %v1413, %v1837
      %v1918 = vadd.f32 %v1414, %v1840
      %v1919 = vadd.f32 %v1415, %v1845
      %v1920 = vadd.f32 %v1416, %v1848
      %v1921 = vadd.f32 %v1417, %v1853
      %v1922 = vadd.f32 %v1418, %v1856
      %v1923 = vadd.f32 %v1419, %v1861
      %v1924 = vadd.f32 %v1420, %v1864
      %v1925 = vadd.f32 %v1421, %v1869
      %v1926 = vadd.f32 %v1422, %v1872
      %v1927 = vadd.f32 %v1423, %v1877
      %v1928 = vadd.f32 %v1424, %v1880
      %v1929 = vadd.f32 %v1425, %v1885
      %v1930 = vadd.f32 %v1426, %v1888
      %v1931 = vld [vmem:[%s192 + $0xa8] sm:$0x7]
      %s1932 = scalar_lea.vmem %s1, 256
      %v1933 = vld [vmem:[%s1932] sm:$0xf]
      %v1934 = vld [vmem:[%s1932 + $0x4] sm:$0xf]
      %v1935 = vld [vmem:[%s1932 + $0x8] sm:$0xf]
      %v1936 = vld [vmem:[%s1932 + $0xc] sm:$0xf]
      %v1937 = vld [vmem:[%s1932 + $0x10] sm:$0xf]
      %v1938 = vld [vmem:[%s1932 + $0x14] sm:$0xf]
      %v1939 = vld [vmem:[%s1932 + $0x18] sm:$0xf]
      %v1940 = vld [vmem:[%s1932 + $0x1c] sm:$0xf]
      %v1941 = vld [vmem:[%s1932 + $0x20] sm:$0xf]
      %v1942 = vld [vmem:[%s1932 + $0x24] sm:$0xf]
      %v1943 = vld [vmem:[%s1932 + $0x28] sm:$0xf]
      %v1944 = vld [vmem:[%s1932 + $0x2c] sm:$0xf]
      %v1945 = vld [vmem:[%s1932 + $0x30] sm:$0xf]
      %v1946 = vld [vmem:[%s1932 + $0x34] sm:$0xf]
      %v1947 = vld [vmem:[%s1932 + $0x38] sm:$0xf]
      %v1948 = vld [vmem:[%s1932 + $0x3c] sm:$0xf]
      %v1950 = vunpack.c.l.b16 %v1931
      %v1951 = vpack.c.b16 %v1950, %v1950
      %vm1952 = vsmask.f32 5376
      %v1954 = vshrl.u32 %v1567, 16
      %v1956 = vrot.slane %v1954, 2
      %v1957 = vshll.u32 %v1567, 16
      %v1959 = vrot.slane %v1957, 3
      %v1960 = vor.u32 %v1956, %v1959
      %v1962 = vshrl.u32 %v1568, 16
      %v1964 = vrot.slane %v1962, 2
      %v1965 = vshll.u32 %v1568, 16
      %v1967 = vrot.slane %v1965, 3
      %v1968 = vor.u32 %v1964, %v1967
      %v1969 = vsel %vm1952, %v1960, %v1968
      %v1971 = vshrl.u32 %v1569, 16
      %v1973 = vrot.slane %v1971, 2
      %v1974 = vshll.u32 %v1569, 16
      %v1976 = vrot.slane %v1974, 3
      %v1977 = vor.u32 %v1973, %v1976
      %v1978 = vsel %vm1952, %v1968, %v1977
      %v1980 = vshrl.u32 %v1570, 16
      %v1982 = vrot.slane %v1980, 2
      %v1983 = vshll.u32 %v1570, 16
      %v1985 = vrot.slane %v1983, 3
      %v1986 = vor.u32 %v1982, %v1985
      %v1987 = vsel %vm1952, %v1977, %v1986
      %v1989 = vshrl.u32 %v1571, 16
      %v1991 = vrot.slane %v1989, 2
      %v1992 = vshll.u32 %v1571, 16
      %v1994 = vrot.slane %v1992, 3
      %v1995 = vor.u32 %v1991, %v1994
      %v1996 = vsel %vm1952, %v1986, %v1995
      %v1998 = vshrl.u32 %v1572, 16
      %v2000 = vrot.slane %v1998, 2
      %v2001 = vshll.u32 %v1572, 16
      %v2003 = vrot.slane %v2001, 3
      %v2004 = vor.u32 %v2000, %v2003
      %v2005 = vsel %vm1952, %v1995, %v2004
      %v2007 = vshrl.u32 %v1573, 16
      %v2009 = vrot.slane %v2007, 2
      %v2010 = vshll.u32 %v1573, 16
      %v2012 = vrot.slane %v2010, 3
      %v2013 = vor.u32 %v2009, %v2012
      %v2014 = vsel %vm1952, %v2004, %v2013
      %v2016 = vshrl.u32 %v1574, 16
      %v2018 = vrot.slane %v2016, 2
      %v2019 = vshll.u32 %v1574, 16
      %v2021 = vrot.slane %v2019, 3
      %v2022 = vor.u32 %v2018, %v2021
      %v2023 = vsel %vm1952, %v2013, %v2022
      %v2025 = vshrl.u32 %v1575, 16
      %v2027 = vrot.slane %v2025, 2
      %v2028 = vshll.u32 %v1575, 16
      %v2030 = vrot.slane %v2028, 3
      %v2031 = vor.u32 %v2027, %v2030
      %v2032 = vsel %vm1952, %v2022, %v2031
      %v2034 = vshrl.u32 %v1576, 16
      %v2036 = vrot.slane %v2034, 2
      %v2037 = vshll.u32 %v1576, 16
      %v2039 = vrot.slane %v2037, 3
      %v2040 = vor.u32 %v2036, %v2039
      %v2041 = vsel %vm1952, %v2031, %v2040
      %v2043 = vshrl.u32 %v1577, 16
      %v2045 = vrot.slane %v2043, 2
      %v2046 = vshll.u32 %v1577, 16
      %v2048 = vrot.slane %v2046, 3
      %v2049 = vor.u32 %v2045, %v2048
      %v2050 = vsel %vm1952, %v2040, %v2049
      %v2052 = vshrl.u32 %v1578, 16
      %v2054 = vrot.slane %v2052, 2
      %v2055 = vshll.u32 %v1578, 16
      %v2057 = vrot.slane %v2055, 3
      %v2058 = vor.u32 %v2054, %v2057
      %v2059 = vsel %vm1952, %v2049, %v2058
      %v2061 = vshrl.u32 %v1579, 16
      %v2063 = vrot.slane %v2061, 2
      %v2064 = vshll.u32 %v1579, 16
      %v2066 = vrot.slane %v2064, 3
      %v2067 = vor.u32 %v2063, %v2066
      %v2068 = vsel %vm1952, %v2058, %v2067
      %v2070 = vshrl.u32 %v1580, 16
      %v2072 = vrot.slane %v2070, 2
      %v2073 = vshll.u32 %v1580, 16
      %v2075 = vrot.slane %v2073, 3
      %v2076 = vor.u32 %v2072, %v2075
      %v2077 = vsel %vm1952, %v2067, %v2076
      %v2079 = vshrl.u32 %v1581, 16
      %v2081 = vrot.slane %v2079, 2
      %v2082 = vshll.u32 %v1581, 16
      %v2084 = vrot.slane %v2082, 3
      %v2085 = vor.u32 %v2081, %v2084
      %v2086 = vsel %vm1952, %v2076, %v2085
      %v2088 = vshrl.u32 %v1582, 16
      %v2090 = vrot.slane %v2088, 2
      %v2091 = vshll.u32 %v1582, 16
      %v2093 = vrot.slane %v2091, 3
      %v2094 = vor.u32 %v2090, %v2093
      %v2095 = vsel %vm1952, %v2085, %v2094
      %v2097 = vshrl.u32 %v1583, 16
      %v2099 = vrot.slane %v2097, 2
      %v2100 = vshll.u32 %v1583, 16
      %v2102 = vrot.slane %v2100, 3
      %v2103 = vor.u32 %v2099, %v2102
      %v2104 = vsel %vm1952, %v2094, %v2103
      %v2106 = vshrl.u32 %v1584, 16
      %v2108 = vrot.slane %v2106, 2
      %v2109 = vshll.u32 %v1584, 16
      %v2111 = vrot.slane %v2109, 3
      %v2112 = vor.u32 %v2108, %v2111
      %v2113 = vsel %vm1952, %v2103, %v2112
      %v2115 = vshrl.u32 %v1585, 16
      %v2117 = vrot.slane %v2115, 2
      %v2118 = vshll.u32 %v1585, 16
      %v2120 = vrot.slane %v2118, 3
      %v2121 = vor.u32 %v2117, %v2120
      %v2122 = vsel %vm1952, %v2112, %v2121
      %v2124 = vshrl.u32 %v1586, 16
      %v2126 = vrot.slane %v2124, 2
      %v2127 = vshll.u32 %v1586, 16
      %v2129 = vrot.slane %v2127, 3
      %v2130 = vor.u32 %v2126, %v2129
      %v2131 = vsel %vm1952, %v2121, %v2130
      %v2133 = vshrl.u32 %v1951, 16
      %v2135 = vrot.slane %v2133, 2
      %v2136 = vshll.u32 %v1951, 16
      %v2138 = vrot.slane %v2136, 3
      %v2139 = vor.u32 %v2135, %v2138
      %v2140 = vsel %vm1952, %v2130, %v2139
      %v2177 = vunpack.c.l.b16 %v1933
      %v2178 = vunpack.c.l.b16 %v1934
      %v2179 = vunpack.c.l.b16 %v1935
      %v2180 = vunpack.c.l.b16 %v1936
      %v2181 = vunpack.c.l.b16 %v1937
      %v2182 = vunpack.c.l.b16 %v1938
      %v2183 = vunpack.c.l.b16 %v1939
      %v2184 = vunpack.c.l.b16 %v1940
      %v2185 = vunpack.c.l.b16 %v1941
      %v2186 = vunpack.c.l.b16 %v1942
      %v2187 = vunpack.c.l.b16 %v1943
      %v2188 = vunpack.c.l.b16 %v1944
      %v2189 = vunpack.c.l.b16 %v1945
      %v2190 = vunpack.c.l.b16 %v1946
      %v2191 = vunpack.c.l.b16 %v1947
      %v2192 = vunpack.c.l.b16 %v1948
      %v2193 = vpack.c.b16 %v2178, %v2177
      %v2194 = vpack.c.b16 %v2180, %v2179
      %v2195 = vpack.c.b16 %v2182, %v2181
      %v2196 = vpack.c.b16 %v2184, %v2183
      %v2197 = vpack.c.b16 %v2186, %v2185
      %v2198 = vpack.c.b16 %v2188, %v2187
      %v2199 = vpack.c.b16 %v2190, %v2189
      %v2200 = vpack.c.b16 %v2192, %v2191
      %2209 = vmatprep.subr.bf16.mxu0 0
      %2210 = vmatpush1.bf16.msra.mxu0 %v2200
      %2211 = vmatprep.subr.bf16.mxu0 0
      %2212 = vmatpush1.bf16.msra.mxu0 %v2199
      %2213 = vmatprep.subr.bf16.mxu0 0
      %2214 = vmatpush1.bf16.msra.mxu0 %v2198
      %2215 = vmatprep.subr.bf16.mxu0 0
      %2216 = vmatpush1.bf16.msra.mxu0 %v2197
      %2217 = vmatprep.subr.bf16.mxu0 0
      %2218 = vmatpush1.bf16.msra.mxu0 %v2196
      %2219 = vmatprep.subr.bf16.mxu0 0
      %2220 = vmatpush1.bf16.msra.mxu0 %v2195
      %2221 = vmatprep.subr.bf16.mxu0 0
      %2222 = vmatpush1.bf16.msra.mxu0 %v2194
      %2223 = vmatprep.subr.bf16.mxu0 0
      %2224 = vmatpush1.bf16.msra.mxu0 %v2193
      %2225 = vmatprep.subr.bf16.mxu0 0
      %2226 = vmatpush2.bf16.msra.mxu0 0
      %2227 = vmatprep.subr.bf16.mxu0 0
      %2228 = vmatpush2.bf16.msra.mxu0 0
      %2229 = vmatprep.subr.bf16.mxu0 0
      %2230 = vmatpush2.bf16.msra.mxu0 0
      %2231 = vmatprep.subr.bf16.mxu0 0
      %2232 = vmatpush2.bf16.msra.mxu0 0
      %2233 = vmatprep.subr.bf16.mxu0 0
      %2234 = vmatpush2.bf16.msra.mxu0 0
      %2235 = vmatprep.subr.bf16.mxu0 0
      %2236 = vmatpush2.bf16.msra.mxu0 0
      %2237 = vmatprep.subr.bf16.mxu0 0
      %2238 = vmatpush2.bf16.msra.mxu0 0
      %2239 = vmatprep.subr.bf16.mxu0 0
      %2240 = vmatpush2.bf16.msra.mxu0 0
      %2241 = vmatprep.mubr.bf16.mxu0 0
      %2242 = vmatmul.mubr.bf16.gmra.mxu0 %v1969
      %v2243 = vpop.f32.mrf.mxu0
      %v2244 = vadd.f32 0.0, %v2243
      %v2245 = vpop.f32.mrf.mxu0
      %v2246 = vpop.f32.mrf.mxu0
      %v2247 = vadd.f32 0.0, %v2246
      %v2248 = vpop.f32.mrf.mxu0
      %2249 = vmatprep.mubr.bf16.mxu0 0
      %2250 = vmatmul.mubr.bf16.gmra.mxu0 %v1978
      %v2251 = vpop.f32.mrf.mxu0
      %v2252 = vadd.f32 0.0, %v2251
      %v2253 = vpop.f32.mrf.mxu0
      %v2254 = vpop.f32.mrf.mxu0
      %v2255 = vadd.f32 0.0, %v2254
      %v2256 = vpop.f32.mrf.mxu0
      %2257 = vmatprep.mubr.bf16.mxu0 0
      %2258 = vmatmul.mubr.bf16.gmra.mxu0 %v1987
      %v2259 = vpop.f32.mrf.mxu0
      %v2260 = vadd.f32 0.0, %v2259
      %v2261 = vpop.f32.mrf.mxu0
      %v2262 = vpop.f32.mrf.mxu0
      %v2263 = vadd.f32 0.0, %v2262
      %v2264 = vpop.f32.mrf.mxu0
      %2265 = vmatprep.mubr.bf16.mxu0 0
      %2266 = vmatmul.mubr.bf16.gmra.mxu0 %v1996
      %v2267 = vpop.f32.mrf.mxu0
      %v2268 = vadd.f32 0.0, %v2267
      %v2269 = vpop.f32.mrf.mxu0
      %v2270 = vpop.f32.mrf.mxu0
      %v2271 = vadd.f32 0.0, %v2270
      %v2272 = vpop.f32.mrf.mxu0
      %2273 = vmatprep.mubr.bf16.mxu0 0
      %2274 = vmatmul.mubr.bf16.gmra.mxu0 %v2005
      %v2275 = vpop.f32.mrf.mxu0
      %v2276 = vadd.f32 0.0, %v2275
      %v2277 = vpop.f32.mrf.mxu0
      %v2278 = vpop.f32.mrf.mxu0
      %v2279 = vadd.f32 0.0, %v2278
      %v2280 = vpop.f32.mrf.mxu0
      %2281 = vmatprep.mubr.bf16.mxu0 0
      %2282 = vmatmul.mubr.bf16.gmra.mxu0 %v2014
      %v2283 = vpop.f32.mrf.mxu0
      %v2284 = vadd.f32 0.0, %v2283
      %v2285 = vpop.f32.mrf.mxu0
      %v2286 = vpop.f32.mrf.mxu0
      %v2287 = vadd.f32 0.0, %v2286
      %v2288 = vpop.f32.mrf.mxu0
      %2289 = vmatprep.mubr.bf16.mxu0 0
      %2290 = vmatmul.mubr.bf16.gmra.mxu0 %v2023
      %v2291 = vpop.f32.mrf.mxu0
      %v2292 = vadd.f32 0.0, %v2291
      %v2293 = vpop.f32.mrf.mxu0
      %v2294 = vpop.f32.mrf.mxu0
      %v2295 = vadd.f32 0.0, %v2294
      %v2296 = vpop.f32.mrf.mxu0
      %2297 = vmatprep.mubr.bf16.mxu0 0
      %2298 = vmatmul.mubr.bf16.gmra.mxu0 %v2032
      %v2299 = vpop.f32.mrf.mxu0
      %v2300 = vadd.f32 0.0, %v2299
      %v2301 = vpop.f32.mrf.mxu0
      %v2302 = vpop.f32.mrf.mxu0
      %v2303 = vadd.f32 0.0, %v2302
      %v2304 = vpop.f32.mrf.mxu0
      %2305 = vmatprep.mubr.bf16.mxu0 0
      %2306 = vmatmul.mubr.bf16.gmra.mxu0 %v2041
      %v2307 = vpop.f32.mrf.mxu0
      %v2308 = vadd.f32 0.0, %v2307
      %v2309 = vpop.f32.mrf.mxu0
      %v2310 = vpop.f32.mrf.mxu0
      %v2311 = vadd.f32 0.0, %v2310
      %v2312 = vpop.f32.mrf.mxu0
      %2313 = vmatprep.mubr.bf16.mxu0 0
      %2314 = vmatmul.mubr.bf16.gmra.mxu0 %v2050
      %v2315 = vpop.f32.mrf.mxu0
      %v2316 = vadd.f32 0.0, %v2315
      %v2317 = vpop.f32.mrf.mxu0
      %v2318 = vpop.f32.mrf.mxu0
      %v2319 = vadd.f32 0.0, %v2318
      %v2320 = vpop.f32.mrf.mxu0
      %2321 = vmatprep.mubr.bf16.mxu0 0
      %2322 = vmatmul.mubr.bf16.gmra.mxu0 %v2059
      %v2323 = vpop.f32.mrf.mxu0
      %v2324 = vadd.f32 0.0, %v2323
      %v2325 = vpop.f32.mrf.mxu0
      %v2326 = vpop.f32.mrf.mxu0
      %v2327 = vadd.f32 0.0, %v2326
      %v2328 = vpop.f32.mrf.mxu0
      %2329 = vmatprep.mubr.bf16.mxu0 0
      %2330 = vmatmul.mubr.bf16.gmra.mxu0 %v2068
      %v2331 = vpop.f32.mrf.mxu0
      %v2332 = vadd.f32 0.0, %v2331
      %v2333 = vpop.f32.mrf.mxu0
      %v2334 = vpop.f32.mrf.mxu0
      %v2335 = vadd.f32 0.0, %v2334
      %v2336 = vpop.f32.mrf.mxu0
      %2337 = vmatprep.mubr.bf16.mxu0 0
      %2338 = vmatmul.mubr.bf16.gmra.mxu0 %v2077
      %v2339 = vpop.f32.mrf.mxu0
      %v2340 = vadd.f32 0.0, %v2339
      %v2341 = vpop.f32.mrf.mxu0
      %v2342 = vpop.f32.mrf.mxu0
      %v2343 = vadd.f32 0.0, %v2342
      %v2344 = vpop.f32.mrf.mxu0
      %2345 = vmatprep.mubr.bf16.mxu0 0
      %2346 = vmatmul.mubr.bf16.gmra.mxu0 %v2086
      %v2347 = vpop.f32.mrf.mxu0
      %v2348 = vadd.f32 0.0, %v2347
      %v2349 = vpop.f32.mrf.mxu0
      %v2350 = vpop.f32.mrf.mxu0
      %v2351 = vadd.f32 0.0, %v2350
      %v2352 = vpop.f32.mrf.mxu0
      %2353 = vmatprep.mubr.bf16.mxu0 0
      %2354 = vmatmul.mubr.bf16.gmra.mxu0 %v2095
      %v2355 = vpop.f32.mrf.mxu0
      %v2356 = vadd.f32 0.0, %v2355
      %v2357 = vpop.f32.mrf.mxu0
      %v2358 = vpop.f32.mrf.mxu0
      %v2359 = vadd.f32 0.0, %v2358
      %v2360 = vpop.f32.mrf.mxu0
      %2361 = vmatprep.mubr.bf16.mxu0 0
      %2362 = vmatmul.mubr.bf16.gmra.mxu0 %v2104
      %v2363 = vpop.f32.mrf.mxu0
      %v2364 = vadd.f32 0.0, %v2363
      %v2365 = vpop.f32.mrf.mxu0
      %v2366 = vpop.f32.mrf.mxu0
      %v2367 = vadd.f32 0.0, %v2366
      %v2368 = vpop.f32.mrf.mxu0
      %2369 = vmatprep.mubr.bf16.mxu0 0
      %2370 = vmatmul.mubr.bf16.gmra.mxu0 %v2113
      %v2371 = vpop.f32.mrf.mxu0
      %v2372 = vadd.f32 0.0, %v2371
      %v2373 = vpop.f32.mrf.mxu0
      %v2374 = vpop.f32.mrf.mxu0
      %v2375 = vadd.f32 0.0, %v2374
      %v2376 = vpop.f32.mrf.mxu0
      %2377 = vmatprep.mubr.bf16.mxu0 0
      %2378 = vmatmul.mubr.bf16.gmra.mxu0 %v2122
      %v2379 = vpop.f32.mrf.mxu0
      %v2380 = vadd.f32 0.0, %v2379
      %v2381 = vpop.f32.mrf.mxu0
      %v2382 = vpop.f32.mrf.mxu0
      %v2383 = vadd.f32 0.0, %v2382
      %v2384 = vpop.f32.mrf.mxu0
      %2385 = vmatprep.mubr.bf16.mxu0 0
      %2386 = vmatmul.mubr.bf16.gmra.mxu0 %v2131
      %v2387 = vpop.f32.mrf.mxu0
      %v2388 = vadd.f32 0.0, %v2387
      %v2389 = vpop.f32.mrf.mxu0
      %v2390 = vpop.f32.mrf.mxu0
      %v2391 = vadd.f32 0.0, %v2390
      %v2392 = vpop.f32.mrf.mxu0
      %2393 = vmatprep.mubr.bf16.mxu0 0
      %2394 = vmatmul.mubr.bf16.gmra.mxu0 %v2140
      %v2395 = vpop.f32.mrf.mxu0
      %v2396 = vadd.f32 0.0, %v2395
      %v2397 = vpop.f32.mrf.mxu0
      %v2398 = vpop.f32.mrf.mxu0
      %v2399 = vadd.f32 0.0, %v2398
      %v2400 = vpop.f32.mrf.mxu0
      %2401 = vdwg.mxu0
      %v2402 = vadd.f32 %v1891, %v2244
      %v2403 = vadd.f32 %v1892, %v2247
      %v2404 = vadd.f32 %v1893, %v2252
      %v2405 = vadd.f32 %v1894, %v2255
      %v2406 = vadd.f32 %v1895, %v2260
      %v2407 = vadd.f32 %v1896, %v2263
      %v2408 = vadd.f32 %v1897, %v2268
      %v2409 = vadd.f32 %v1898, %v2271
      %v2410 = vadd.f32 %v1899, %v2276
      %v2411 = vadd.f32 %v1900, %v2279
      %v2412 = vadd.f32 %v1901, %v2284
      %v2413 = vadd.f32 %v1902, %v2287
      %v2414 = vadd.f32 %v1903, %v2292
      %v2415 = vadd.f32 %v1904, %v2295
      %v2416 = vadd.f32 %v1905, %v2300
      %v2417 = vadd.f32 %v1906, %v2303
      %v2418 = vadd.f32 %v1907, %v2308
      %v2419 = vadd.f32 %v1908, %v2311
      %v2420 = vadd.f32 %v1909, %v2316
      %v2421 = vadd.f32 %v1910, %v2319
      %v2422 = vadd.f32 %v1911, %v2324
      %v2423 = vadd.f32 %v1912, %v2327
      %v2424 = vadd.f32 %v1913, %v2332
      %v2425 = vadd.f32 %v1914, %v2335
      %v2426 = vadd.f32 %v1915, %v2340
      %v2427 = vadd.f32 %v1916, %v2343
      %v2428 = vadd.f32 %v1917, %v2348
      %v2429 = vadd.f32 %v1918, %v2351
      %v2430 = vadd.f32 %v1919, %v2356
      %v2431 = vadd.f32 %v1920, %v2359
      %v2432 = vadd.f32 %v1921, %v2364
      %v2433 = vadd.f32 %v1922, %v2367
      %v2434 = vadd.f32 %v1923, %v2372
      %v2435 = vadd.f32 %v1924, %v2375
      %v2436 = vadd.f32 %v1925, %v2380
      %v2437 = vadd.f32 %v1926, %v2383
      %v2438 = vadd.f32 %v1927, %v2388
      %v2439 = vadd.f32 %v1928, %v2391
      %v2440 = vadd.f32 %v1929, %v2396
      %v2441 = vadd.f32 %v1930, %v2399
      %v2442 = vld [vmem:[%s192 + $0x8] sm:$0x8]
      %s2443 = scalar_lea.vmem %s1, 320
      %v2444 = vld [vmem:[%s2443] sm:$0xf]
      %v2445 = vld [vmem:[%s2443 + $0x4] sm:$0xf]
      %v2446 = vld [vmem:[%s2443 + $0x8] sm:$0xf]
      %v2447 = vld [vmem:[%s2443 + $0xc] sm:$0xf]
      %v2448 = vld [vmem:[%s2443 + $0x10] sm:$0xf]
      %v2449 = vld [vmem:[%s2443 + $0x14] sm:$0xf]
      %v2450 = vld [vmem:[%s2443 + $0x18] sm:$0xf]
      %v2451 = vld [vmem:[%s2443 + $0x1c] sm:$0xf]
      %v2452 = vld [vmem:[%s2443 + $0x20] sm:$0xf]
      %v2453 = vld [vmem:[%s2443 + $0x24] sm:$0xf]
      %v2454 = vld [vmem:[%s2443 + $0x28] sm:$0xf]
      %v2455 = vld [vmem:[%s2443 + $0x2c] sm:$0xf]
      %v2456 = vld [vmem:[%s2443 + $0x30] sm:$0xf]
      %v2457 = vld [vmem:[%s2443 + $0x34] sm:$0xf]
      %v2458 = vld [vmem:[%s2443 + $0x38] sm:$0xf]
      %v2459 = vld [vmem:[%s2443 + $0x3c] sm:$0xf]
      %v2461 = vunpack.c.l.b16 %v2442
      %v2462 = vpack.c.b16 %v1527, %v2461
      %vm2463 = vcmask 1044480
      %v2464 = vrot.slane %v2462, 3
      %v2465 = vrot.slane %v1568, 3
      %v2466 = vsel %vm2463, %v2464, %v2465
      %v2467 = vrot.slane %v1569, 3
      %v2468 = vsel %vm2463, %v2465, %v2467
      %v2469 = vrot.slane %v1570, 3
      %v2470 = vsel %vm2463, %v2467, %v2469
      %v2471 = vrot.slane %v1571, 3
      %v2472 = vsel %vm2463, %v2469, %v2471
      %v2473 = vrot.slane %v1572, 3
      %v2474 = vsel %vm2463, %v2471, %v2473
      %v2475 = vrot.slane %v1573, 3
      %v2476 = vsel %vm2463, %v2473, %v2475
      %v2477 = vrot.slane %v1574, 3
      %v2478 = vsel %vm2463, %v2475, %v2477
      %v2479 = vrot.slane %v1575, 3
      %v2480 = vsel %vm2463, %v2477, %v2479
      %v2481 = vrot.slane %v1576, 3
      %v2482 = vsel %vm2463, %v2479, %v2481
      %v2483 = vrot.slane %v1577, 3
      %v2484 = vsel %vm2463, %v2481, %v2483
      %v2485 = vrot.slane %v1578, 3
      %v2486 = vsel %vm2463, %v2483, %v2485
      %v2487 = vrot.slane %v1579, 3
      %v2488 = vsel %vm2463, %v2485, %v2487
      %v2489 = vrot.slane %v1580, 3
      %v2490 = vsel %vm2463, %v2487, %v2489
      %v2491 = vrot.slane %v1581, 3
      %v2492 = vsel %vm2463, %v2489, %v2491
      %v2493 = vrot.slane %v1582, 3
      %v2494 = vsel %vm2463, %v2491, %v2493
      %v2495 = vrot.slane %v1583, 3
      %v2496 = vsel %vm2463, %v2493, %v2495
      %v2497 = vrot.slane %v1584, 3
      %v2498 = vsel %vm2463, %v2495, %v2497
      %v2499 = vrot.slane %v1585, 3
      %v2500 = vsel %vm2463, %v2497, %v2499
      %v2501 = vrot.slane %v1586, 3
      %v2502 = vsel %vm2463, %v2499, %v2501
      %v2503 = vrot.slane %v1951, 3
      %v2504 = vsel %vm2463, %v2501, %v2503
      %v2541 = vunpack.c.l.b16 %v2444
      %v2542 = vunpack.c.l.b16 %v2445
      %v2543 = vunpack.c.l.b16 %v2446
      %v2544 = vunpack.c.l.b16 %v2447
      %v2545 = vunpack.c.l.b16 %v2448
      %v2546 = vunpack.c.l.b16 %v2449
      %v2547 = vunpack.c.l.b16 %v2450
      %v2548 = vunpack.c.l.b16 %v2451
      %v2549 = vunpack.c.l.b16 %v2452
      %v2550 = vunpack.c.l.b16 %v2453
      %v2551 = vunpack.c.l.b16 %v2454
      %v2552 = vunpack.c.l.b16 %v2455
      %v2553 = vunpack.c.l.b16 %v2456
      %v2554 = vunpack.c.l.b16 %v2457
      %v2555 = vunpack.c.l.b16 %v2458
      %v2556 = vunpack.c.l.b16 %v2459
      %v2557 = vpack.c.b16 %v2542, %v2541
      %v2558 = vpack.c.b16 %v2544, %v2543
      %v2559 = vpack.c.b16 %v2546, %v2545
      %v2560 = vpack.c.b16 %v2548, %v2547
      %v2561 = vpack.c.b16 %v2550, %v2549
      %v2562 = vpack.c.b16 %v2552, %v2551
      %v2563 = vpack.c.b16 %v2554, %v2553
      %v2564 = vpack.c.b16 %v2556, %v2555
      %2573 = vmatprep.subr.bf16.mxu0 0
      %2574 = vmatpush1.bf16.msra.mxu0 %v2564
      %2575 = vmatprep.subr.bf16.mxu0 0
      %2576 = vmatpush1.bf16.msra.mxu0 %v2563
      %2577 = vmatprep.subr.bf16.mxu0 0
      %2578 = vmatpush1.bf16.msra.mxu0 %v2562
      %2579 = vmatprep.subr.bf16.mxu0 0
      %2580 = vmatpush1.bf16.msra.mxu0 %v2561
      %2581 = vmatprep.subr.bf16.mxu0 0
      %2582 = vmatpush1.bf16.msra.mxu0 %v2560
      %2583 = vmatprep.subr.bf16.mxu0 0
      %2584 = vmatpush1.bf16.msra.mxu0 %v2559
      %2585 = vmatprep.subr.bf16.mxu0 0
      %2586 = vmatpush1.bf16.msra.mxu0 %v2558
      %2587 = vmatprep.subr.bf16.mxu0 0
      %2588 = vmatpush1.bf16.msra.mxu0 %v2557
      %2589 = vmatprep.subr.bf16.mxu0 0
      %2590 = vmatpush2.bf16.msra.mxu0 0
      %2591 = vmatprep.subr.bf16.mxu0 0
      %2592 = vmatpush2.bf16.msra.mxu0 0
      %2593 = vmatprep.subr.bf16.mxu0 0
      %2594 = vmatpush2.bf16.msra.mxu0 0
      %2595 = vmatprep.subr.bf16.mxu0 0
      %2596 = vmatpush2.bf16.msra.mxu0 0
      %2597 = vmatprep.subr.bf16.mxu0 0
      %2598 = vmatpush2.bf16.msra.mxu0 0
      %2599 = vmatprep.subr.bf16.mxu0 0
      %2600 = vmatpush2.bf16.msra.mxu0 0
      %2601 = vmatprep.subr.bf16.mxu0 0
      %2602 = vmatpush2.bf16.msra.mxu0 0
      %2603 = vmatprep.subr.bf16.mxu0 0
      %2604 = vmatpush2.bf16.msra.mxu0 0
      %2605 = vmatprep.mubr.bf16.mxu0 0
      %2606 = vmatmul.mubr.bf16.gmra.mxu0 %v2466
      %v2607 = vpop.f32.mrf.mxu0
      %v2608 = vadd.f32 0.0, %v2607
      %v2609 = vpop.f32.mrf.mxu0
      %v2610 = vpop.f32.mrf.mxu0
      %v2611 = vadd.f32 0.0, %v2610
      %v2612 = vpop.f32.mrf.mxu0
      %2613 = vmatprep.mubr.bf16.mxu0 0
      %2614 = vmatmul.mubr.bf16.gmra.mxu0 %v2468
      %v2615 = vpop.f32.mrf.mxu0
      %v2616 = vadd.f32 0.0, %v2615
      %v2617 = vpop.f32.mrf.mxu0
      %v2618 = vpop.f32.mrf.mxu0
      %v2619 = vadd.f32 0.0, %v2618
      %v2620 = vpop.f32.mrf.mxu0
      %2621 = vmatprep.mubr.bf16.mxu0 0
      %2622 = vmatmul.mubr.bf16.gmra.mxu0 %v2470
      %v2623 = vpop.f32.mrf.mxu0
      %v2624 = vadd.f32 0.0, %v2623
      %v2625 = vpop.f32.mrf.mxu0
      %v2626 = vpop.f32.mrf.mxu0
      %v2627 = vadd.f32 0.0, %v2626
      %v2628 = vpop.f32.mrf.mxu0
      %2629 = vmatprep.mubr.bf16.mxu0 0
      %2630 = vmatmul.mubr.bf16.gmra.mxu0 %v2472
      %v2631 = vpop.f32.mrf.mxu0
      %v2632 = vadd.f32 0.0, %v2631
      %v2633 = vpop.f32.mrf.mxu0
      %v2634 = vpop.f32.mrf.mxu0
      %v2635 = vadd.f32 0.0, %v2634
      %v2636 = vpop.f32.mrf.mxu0
      %2637 = vmatprep.mubr.bf16.mxu0 0
      %2638 = vmatmul.mubr.bf16.gmra.mxu0 %v2474
      %v2639 = vpop.f32.mrf.mxu0
      %v2640 = vadd.f32 0.0, %v2639
      %v2641 = vpop.f32.mrf.mxu0
      %v2642 = vpop.f32.mrf.mxu0
      %v2643 = vadd.f32 0.0, %v2642
      %v2644 = vpop.f32.mrf.mxu0
      %2645 = vmatprep.mubr.bf16.mxu0 0
      %2646 = vmatmul.mubr.bf16.gmra.mxu0 %v2476
      %v2647 = vpop.f32.mrf.mxu0
      %v2648 = vadd.f32 0.0, %v2647
      %v2649 = vpop.f32.mrf.mxu0
      %v2650 = vpop.f32.mrf.mxu0
      %v2651 = vadd.f32 0.0, %v2650
      %v2652 = vpop.f32.mrf.mxu0
      %2653 = vmatprep.mubr.bf16.mxu0 0
      %2654 = vmatmul.mubr.bf16.gmra.mxu0 %v2478
      %v2655 = vpop.f32.mrf.mxu0
      %v2656 = vadd.f32 0.0, %v2655
      %v2657 = vpop.f32.mrf.mxu0
      %v2658 = vpop.f32.mrf.mxu0
      %v2659 = vadd.f32 0.0, %v2658
      %v2660 = vpop.f32.mrf.mxu0
      %2661 = vmatprep.mubr.bf16.mxu0 0
      %2662 = vmatmul.mubr.bf16.gmra.mxu0 %v2480
      %v2663 = vpop.f32.mrf.mxu0
      %v2664 = vadd.f32 0.0, %v2663
      %v2665 = vpop.f32.mrf.mxu0
      %v2666 = vpop.f32.mrf.mxu0
      %v2667 = vadd.f32 0.0, %v2666
      %v2668 = vpop.f32.mrf.mxu0
      %2669 = vmatprep.mubr.bf16.mxu0 0
      %2670 = vmatmul.mubr.bf16.gmra.mxu0 %v2482
      %v2671 = vpop.f32.mrf.mxu0
      %v2672 = vadd.f32 0.0, %v2671
      %v2673 = vpop.f32.mrf.mxu0
      %v2674 = vpop.f32.mrf.mxu0
      %v2675 = vadd.f32 0.0, %v2674
      %v2676 = vpop.f32.mrf.mxu0
      %2677 = vmatprep.mubr.bf16.mxu0 0
      %2678 = vmatmul.mubr.bf16.gmra.mxu0 %v2484
      %v2679 = vpop.f32.mrf.mxu0
      %v2680 = vadd.f32 0.0, %v2679
      %v2681 = vpop.f32.mrf.mxu0
      %v2682 = vpop.f32.mrf.mxu0
      %v2683 = vadd.f32 0.0, %v2682
      %v2684 = vpop.f32.mrf.mxu0
      %2685 = vmatprep.mubr.bf16.mxu0 0
      %2686 = vmatmul.mubr.bf16.gmra.mxu0 %v2486
      %v2687 = vpop.f32.mrf.mxu0
      %v2688 = vadd.f32 0.0, %v2687
      %v2689 = vpop.f32.mrf.mxu0
      %v2690 = vpop.f32.mrf.mxu0
      %v2691 = vadd.f32 0.0, %v2690
      %v2692 = vpop.f32.mrf.mxu0
      %2693 = vmatprep.mubr.bf16.mxu0 0
      %2694 = vmatmul.mubr.bf16.gmra.mxu0 %v2488
      %v2695 = vpop.f32.mrf.mxu0
      %v2696 = vadd.f32 0.0, %v2695
      %v2697 = vpop.f32.mrf.mxu0
      %v2698 = vpop.f32.mrf.mxu0
      %v2699 = vadd.f32 0.0, %v2698
      %v2700 = vpop.f32.mrf.mxu0
      %2701 = vmatprep.mubr.bf16.mxu0 0
      %2702 = vmatmul.mubr.bf16.gmra.mxu0 %v2490
      %v2703 = vpop.f32.mrf.mxu0
      %v2704 = vadd.f32 0.0, %v2703
      %v2705 = vpop.f32.mrf.mxu0
      %v2706 = vpop.f32.mrf.mxu0
      %v2707 = vadd.f32 0.0, %v2706
      %v2708 = vpop.f32.mrf.mxu0
      %2709 = vmatprep.mubr.bf16.mxu0 0
      %2710 = vmatmul.mubr.bf16.gmra.mxu0 %v2492
      %v2711 = vpop.f32.mrf.mxu0
      %v2712 = vadd.f32 0.0, %v2711
      %v2713 = vpop.f32.mrf.mxu0
      %v2714 = vpop.f32.mrf.mxu0
      %v2715 = vadd.f32 0.0, %v2714
      %v2716 = vpop.f32.mrf.mxu0
      %2717 = vmatprep.mubr.bf16.mxu0 0
      %2718 = vmatmul.mubr.bf16.gmra.mxu0 %v2494
      %v2719 = vpop.f32.mrf.mxu0
      %v2720 = vadd.f32 0.0, %v2719
      %v2721 = vpop.f32.mrf.mxu0
      %v2722 = vpop.f32.mrf.mxu0
      %v2723 = vadd.f32 0.0, %v2722
      %v2724 = vpop.f32.mrf.mxu0
      %2725 = vmatprep.mubr.bf16.mxu0 0
      %2726 = vmatmul.mubr.bf16.gmra.mxu0 %v2496
      %v2727 = vpop.f32.mrf.mxu0
      %v2728 = vadd.f32 0.0, %v2727
      %v2729 = vpop.f32.mrf.mxu0
      %v2730 = vpop.f32.mrf.mxu0
      %v2731 = vadd.f32 0.0, %v2730
      %v2732 = vpop.f32.mrf.mxu0
      %2733 = vmatprep.mubr.bf16.mxu0 0
      %2734 = vmatmul.mubr.bf16.gmra.mxu0 %v2498
      %v2735 = vpop.f32.mrf.mxu0
      %v2736 = vadd.f32 0.0, %v2735
      %v2737 = vpop.f32.mrf.mxu0
      %v2738 = vpop.f32.mrf.mxu0
      %v2739 = vadd.f32 0.0, %v2738
      %v2740 = vpop.f32.mrf.mxu0
      %2741 = vmatprep.mubr.bf16.mxu0 0
      %2742 = vmatmul.mubr.bf16.gmra.mxu0 %v2500
      %v2743 = vpop.f32.mrf.mxu0
      %v2744 = vadd.f32 0.0, %v2743
      %v2745 = vpop.f32.mrf.mxu0
      %v2746 = vpop.f32.mrf.mxu0
      %v2747 = vadd.f32 0.0, %v2746
      %v2748 = vpop.f32.mrf.mxu0
      %2749 = vmatprep.mubr.bf16.mxu0 0
      %2750 = vmatmul.mubr.bf16.gmra.mxu0 %v2502
      %v2751 = vpop.f32.mrf.mxu0
      %v2752 = vadd.f32 0.0, %v2751
      %v2753 = vpop.f32.mrf.mxu0
      %v2754 = vpop.f32.mrf.mxu0
      %v2755 = vadd.f32 0.0, %v2754
      %v2756 = vpop.f32.mrf.mxu0
      %2757 = vmatprep.mubr.bf16.mxu0 0
      %2758 = vmatmul.mubr.bf16.gmra.mxu0 %v2504
      %v2759 = vpop.f32.mrf.mxu0
      %v2760 = vadd.f32 0.0, %v2759
      %v2761 = vpop.f32.mrf.mxu0
      %v2762 = vpop.f32.mrf.mxu0
      %v2763 = vadd.f32 0.0, %v2762
      %v2764 = vpop.f32.mrf.mxu0
      %2765 = vdwg.mxu0
      %v2766 = vadd.f32 %v2402, %v2608
      %v2767 = vadd.f32 %v2403, %v2611
      %v2768 = vadd.f32 %v2404, %v2616
      %v2769 = vadd.f32 %v2405, %v2619
      %v2770 = vadd.f32 %v2406, %v2624
      %v2771 = vadd.f32 %v2407, %v2627
      %v2772 = vadd.f32 %v2408, %v2632
      %v2773 = vadd.f32 %v2409, %v2635
      %v2774 = vadd.f32 %v2410, %v2640
      %v2775 = vadd.f32 %v2411, %v2643
      %v2776 = vadd.f32 %v2412, %v2648
      %v2777 = vadd.f32 %v2413, %v2651
      %v2778 = vadd.f32 %v2414, %v2656
      %v2779 = vadd.f32 %v2415, %v2659
      %v2780 = vadd.f32 %v2416, %v2664
      %v2781 = vadd.f32 %v2417, %v2667
      %v2782 = vadd.f32 %v2418, %v2672
      %v2783 = vadd.f32 %v2419, %v2675
      %v2784 = vadd.f32 %v2420, %v2680
      %v2785 = vadd.f32 %v2421, %v2683
      %v2786 = vadd.f32 %v2422, %v2688
      %v2787 = vadd.f32 %v2423, %v2691
      %v2788 = vadd.f32 %v2424, %v2696
      %v2789 = vadd.f32 %v2425, %v2699
      %v2790 = vadd.f32 %v2426, %v2704
      %v2791 = vadd.f32 %v2427, %v2707
      %v2792 = vadd.f32 %v2428, %v2712
      %v2793 = vadd.f32 %v2429, %v2715
      %v2794 = vadd.f32 %v2430, %v2720
      %v2795 = vadd.f32 %v2431, %v2723
      %v2796 = vadd.f32 %v2432, %v2728
      %v2797 = vadd.f32 %v2433, %v2731
      %v2798 = vadd.f32 %v2434, %v2736
      %v2799 = vadd.f32 %v2435, %v2739
      %v2800 = vadd.f32 %v2436, %v2744
      %v2801 = vadd.f32 %v2437, %v2747
      %v2802 = vadd.f32 %v2438, %v2752
      %v2803 = vadd.f32 %v2439, %v2755
      %v2804 = vadd.f32 %v2440, %v2760
      %v2805 = vadd.f32 %v2441, %v2763
      %v2806 = vld [vmem:[%s192 + $0x14] sm:$0xf]
      %v2807 = vld [vmem:[%s192 + $0x18] sm:$0xf]
      %v2808 = vld [vmem:[%s192 + $0x1c] sm:$0xf]
      %v2809 = vld [vmem:[%s192 + $0x20] sm:$0xf]
      %v2810 = vld [vmem:[%s192 + $0x24] sm:$0xf]
      %v2811 = vld [vmem:[%s192 + $0x28] sm:$0xf]
      %v2812 = vld [vmem:[%s192 + $0x2c] sm:$0xf]
      %v2813 = vld [vmem:[%s192 + $0x30] sm:$0xf]
      %v2814 = vld [vmem:[%s192 + $0x34] sm:$0xf]
      %v2815 = vld [vmem:[%s192 + $0x38] sm:$0xf]
      %v2816 = vld [vmem:[%s192 + $0x3c] sm:$0xf]
      %v2817 = vld [vmem:[%s192 + $0x40] sm:$0xf]
      %v2818 = vld [vmem:[%s192 + $0x44] sm:$0xf]
      %v2819 = vld [vmem:[%s192 + $0x48] sm:$0xf]
      %v2820 = vld [vmem:[%s192 + $0x4c] sm:$0xf]
      %v2821 = vld [vmem:[%s192 + $0x50] sm:$0xf]
      %v2822 = vld [vmem:[%s192 + $0x54] sm:$0xf]
      %v2823 = vld [vmem:[%s192 + $0x58] sm:$0xf]
      %v2824 = vld [vmem:[%s192 + $0x5c] sm:$0xf]
      %v2825 = vld [vmem:[%s192 + $0x60] sm:$0xf]
      %v2826 = vld [vmem:[%s192 + $0x64] sm:$0xf]
      %v2827 = vld [vmem:[%s192 + $0x68] sm:$0xf]
      %v2828 = vld [vmem:[%s192 + $0x6c] sm:$0xf]
      %v2829 = vld [vmem:[%s192 + $0x70] sm:$0xf]
      %v2830 = vld [vmem:[%s192 + $0x74] sm:$0xf]
      %v2831 = vld [vmem:[%s192 + $0x78] sm:$0xf]
      %v2832 = vld [vmem:[%s192 + $0x7c] sm:$0xf]
      %v2833 = vld [vmem:[%s192 + $0x80] sm:$0xf]
      %v2834 = vld [vmem:[%s192 + $0x84] sm:$0xf]
      %v2835 = vld [vmem:[%s192 + $0x88] sm:$0xf]
      %v2836 = vld [vmem:[%s192 + $0x8c] sm:$0xf]
      %v2837 = vld [vmem:[%s192 + $0x90] sm:$0xf]
      %v2838 = vld [vmem:[%s192 + $0x94] sm:$0xf]
      %v2839 = vld [vmem:[%s192 + $0x98] sm:$0xf]
      %v2840 = vld [vmem:[%s192 + $0x9c] sm:$0xf]
      %v2841 = vld [vmem:[%s192 + $0xa0] sm:$0xf]
      %v2842 = vld [vmem:[%s192 + $0xa4] sm:$0xf]
      %v2843 = vld [vmem:[%s192 + $0xa8] sm:$0xf]
      %v2844 = vld [vmem:[%s192 + $0xac] sm:$0xf]
      %v2845 = vld [vmem:[%s192 + $0xb0] sm:$0xf]
      %s2846 = scalar_lea.vmem %s1, 384
      %v2847 = vld [vmem:[%s2846] sm:$0xf]
      %v2848 = vld [vmem:[%s2846 + $0x4] sm:$0xf]
      %v2849 = vld [vmem:[%s2846 + $0x8] sm:$0xf]
      %v2850 = vld [vmem:[%s2846 + $0xc] sm:$0xf]
      %v2851 = vld [vmem:[%s2846 + $0x10] sm:$0xf]
      %v2852 = vld [vmem:[%s2846 + $0x14] sm:$0xf]
      %v2853 = vld [vmem:[%s2846 + $0x18] sm:$0xf]
      %v2854 = vld [vmem:[%s2846 + $0x1c] sm:$0xf]
      %v2855 = vld [vmem:[%s2846 + $0x20] sm:$0xf]
      %v2856 = vld [vmem:[%s2846 + $0x24] sm:$0xf]
      %v2857 = vld [vmem:[%s2846 + $0x28] sm:$0xf]
      %v2858 = vld [vmem:[%s2846 + $0x2c] sm:$0xf]
      %v2859 = vld [vmem:[%s2846 + $0x30] sm:$0xf]
      %v2860 = vld [vmem:[%s2846 + $0x34] sm:$0xf]
      %v2861 = vld [vmem:[%s2846 + $0x38] sm:$0xf]
      %v2862 = vld [vmem:[%s2846 + $0x3c] sm:$0xf]
      %v2903 = vunpack.c.l.b16 %v2806
      %v2904 = vunpack.c.l.b16 %v2807
      %v2905 = vunpack.c.l.b16 %v2808
      %v2906 = vunpack.c.l.b16 %v2809
      %v2907 = vunpack.c.l.b16 %v2810
      %v2908 = vunpack.c.l.b16 %v2811
      %v2909 = vunpack.c.l.b16 %v2812
      %v2910 = vunpack.c.l.b16 %v2813
      %v2911 = vunpack.c.l.b16 %v2814
      %v2912 = vunpack.c.l.b16 %v2815
      %v2913 = vunpack.c.l.b16 %v2816
      %v2914 = vunpack.c.l.b16 %v2817
      %v2915 = vunpack.c.l.b16 %v2818
      %v2916 = vunpack.c.l.b16 %v2819
      %v2917 = vunpack.c.l.b16 %v2820
      %v2918 = vunpack.c.l.b16 %v2821
      %v2919 = vunpack.c.l.b16 %v2822
      %v2920 = vunpack.c.l.b16 %v2823
      %v2921 = vunpack.c.l.b16 %v2824
      %v2922 = vunpack.c.l.b16 %v2825
      %v2923 = vunpack.c.l.b16 %v2826
      %v2924 = vunpack.c.l.b16 %v2827
      %v2925 = vunpack.c.l.b16 %v2828
      %v2926 = vunpack.c.l.b16 %v2829
      %v2927 = vunpack.c.l.b16 %v2830
      %v2928 = vunpack.c.l.b16 %v2831
      %v2929 = vunpack.c.l.b16 %v2832
      %v2930 = vunpack.c.l.b16 %v2833
      %v2931 = vunpack.c.l.b16 %v2834
      %v2932 = vunpack.c.l.b16 %v2835
      %v2933 = vunpack.c.l.b16 %v2836
      %v2934 = vunpack.c.l.b16 %v2837
      %v2935 = vunpack.c.l.b16 %v2838
      %v2936 = vunpack.c.l.b16 %v2839
      %v2937 = vunpack.c.l.b16 %v2840
      %v2938 = vunpack.c.l.b16 %v2841
      %v2939 = vunpack.c.l.b16 %v2842
      %v2940 = vunpack.c.l.b16 %v2843
      %v2941 = vunpack.c.l.b16 %v2844
      %v2942 = vunpack.c.l.b16 %v2845
      %v2943 = vpack.c.b16 %v2904, %v2903
      %v2944 = vpack.c.b16 %v2906, %v2905
      %v2945 = vpack.c.b16 %v2908, %v2907
      %v2946 = vpack.c.b16 %v2910, %v2909
      %v2947 = vpack.c.b16 %v2912, %v2911
      %v2948 = vpack.c.b16 %v2914, %v2913
      %v2949 = vpack.c.b16 %v2916, %v2915
      %v2950 = vpack.c.b16 %v2918, %v2917
      %v2951 = vpack.c.b16 %v2920, %v2919
      %v2952 = vpack.c.b16 %v2922, %v2921
      %v2953 = vpack.c.b16 %v2924, %v2923
      %v2954 = vpack.c.b16 %v2926, %v2925
      %v2955 = vpack.c.b16 %v2928, %v2927
      %v2956 = vpack.c.b16 %v2930, %v2929
      %v2957 = vpack.c.b16 %v2932, %v2931
      %v2958 = vpack.c.b16 %v2934, %v2933
      %v2959 = vpack.c.b16 %v2936, %v2935
      %v2960 = vpack.c.b16 %v2938, %v2937
      %v2961 = vpack.c.b16 %v2940, %v2939
      %v2962 = vpack.c.b16 %v2942, %v2941
      %v2999 = vunpack.c.l.b16 %v2847
      %v3000 = vunpack.c.l.b16 %v2848
      %v3001 = vunpack.c.l.b16 %v2849
      %v3002 = vunpack.c.l.b16 %v2850
      %v3003 = vunpack.c.l.b16 %v2851
      %v3004 = vunpack.c.l.b16 %v2852
      %v3005 = vunpack.c.l.b16 %v2853
      %v3006 = vunpack.c.l.b16 %v2854
      %v3007 = vunpack.c.l.b16 %v2855
      %v3008 = vunpack.c.l.b16 %v2856
      %v3009 = vunpack.c.l.b16 %v2857
      %v3010 = vunpack.c.l.b16 %v2858
      %v3011 = vunpack.c.l.b16 %v2859
      %v3012 = vunpack.c.l.b16 %v2860
      %v3013 = vunpack.c.l.b16 %v2861
      %v3014 = vunpack.c.l.b16 %v2862
      %v3015 = vpack.c.b16 %v3000, %v2999
      %v3016 = vpack.c.b16 %v3002, %v3001
      %v3017 = vpack.c.b16 %v3004, %v3003
      %v3018 = vpack.c.b16 %v3006, %v3005
      %v3019 = vpack.c.b16 %v3008, %v3007
      %v3020 = vpack.c.b16 %v3010, %v3009
      %v3021 = vpack.c.b16 %v3012, %v3011
      %v3022 = vpack.c.b16 %v3014, %v3013
      %3031 = vmatprep.subr.bf16.mxu0 0
      %3032 = vmatpush1.bf16.msra.mxu0 %v3022
      %3033 = vmatprep.subr.bf16.mxu0 0
      %3034 = vmatpush1.bf16.msra.mxu0 %v3021
      %3035 = vmatprep.subr.bf16.mxu0 0
      %3036 = vmatpush1.bf16.msra.mxu0 %v3020
      %3037 = vmatprep.subr.bf16.mxu0 0
      %3038 = vmatpush1.bf16.msra.mxu0 %v3019
      %3039 = vmatprep.subr.bf16.mxu0 0
      %3040 = vmatpush1.bf16.msra.mxu0 %v3018
      %3041 = vmatprep.subr.bf16.mxu0 0
      %3042 = vmatpush1.bf16.msra.mxu0 %v3017
      %3043 = vmatprep.subr.bf16.mxu0 0
      %3044 = vmatpush1.bf16.msra.mxu0 %v3016
      %3045 = vmatprep.subr.bf16.mxu0 0
      %3046 = vmatpush1.bf16.msra.mxu0 %v3015
      %3047 = vmatprep.subr.bf16.mxu0 0
      %3048 = vmatpush2.bf16.msra.mxu0 0
      %3049 = vmatprep.subr.bf16.mxu0 0
      %3050 = vmatpush2.bf16.msra.mxu0 0
      %3051 = vmatprep.subr.bf16.mxu0 0
      %3052 = vmatpush2.bf16.msra.mxu0 0
      %3053 = vmatprep.subr.bf16.mxu0 0
      %3054 = vmatpush2.bf16.msra.mxu0 0
      %3055 = vmatprep.subr.bf16.mxu0 0
      %3056 = vmatpush2.bf16.msra.mxu0 0
      %3057 = vmatprep.subr.bf16.mxu0 0
      %3058 = vmatpush2.bf16.msra.mxu0 0
      %3059 = vmatprep.subr.bf16.mxu0 0
      %3060 = vmatpush2.bf16.msra.mxu0 0
      %3061 = vmatprep.subr.bf16.mxu0 0
      %3062 = vmatpush2.bf16.msra.mxu0 0
      %3063 = vmatprep.mubr.bf16.mxu0 0
      %3064 = vmatmul.mubr.bf16.gmra.mxu0 %v2943
      %v3065 = vpop.f32.mrf.mxu0
      %v3066 = vadd.f32 0.0, %v3065
      %v3067 = vpop.f32.mrf.mxu0
      %v3068 = vpop.f32.mrf.mxu0
      %v3069 = vadd.f32 0.0, %v3068
      %v3070 = vpop.f32.mrf.mxu0
      %3071 = vmatprep.mubr.bf16.mxu0 0
      %3072 = vmatmul.mubr.bf16.gmra.mxu0 %v2944
      %v3073 = vpop.f32.mrf.mxu0
      %v3074 = vadd.f32 0.0, %v3073
      %v3075 = vpop.f32.mrf.mxu0
      %v3076 = vpop.f32.mrf.mxu0
      %v3077 = vadd.f32 0.0, %v3076
      %v3078 = vpop.f32.mrf.mxu0
      %3079 = vmatprep.mubr.bf16.mxu0 0
      %3080 = vmatmul.mubr.bf16.gmra.mxu0 %v2945
      %v3081 = vpop.f32.mrf.mxu0
      %v3082 = vadd.f32 0.0, %v3081
      %v3083 = vpop.f32.mrf.mxu0
      %v3084 = vpop.f32.mrf.mxu0
      %v3085 = vadd.f32 0.0, %v3084
      %v3086 = vpop.f32.mrf.mxu0
      %3087 = vmatprep.mubr.bf16.mxu0 0
      %3088 = vmatmul.mubr.bf16.gmra.mxu0 %v2946
      %v3089 = vpop.f32.mrf.mxu0
      %v3090 = vadd.f32 0.0, %v3089
      %v3091 = vpop.f32.mrf.mxu0
      %v3092 = vpop.f32.mrf.mxu0
      %v3093 = vadd.f32 0.0, %v3092
      %v3094 = vpop.f32.mrf.mxu0
      %3095 = vmatprep.mubr.bf16.mxu0 0
      %3096 = vmatmul.mubr.bf16.gmra.mxu0 %v2947
      %v3097 = vpop.f32.mrf.mxu0
      %v3098 = vadd.f32 0.0, %v3097
      %v3099 = vpop.f32.mrf.mxu0
      %v3100 = vpop.f32.mrf.mxu0
      %v3101 = vadd.f32 0.0, %v3100
      %v3102 = vpop.f32.mrf.mxu0
      %3103 = vmatprep.mubr.bf16.mxu0 0
      %3104 = vmatmul.mubr.bf16.gmra.mxu0 %v2948
      %v3105 = vpop.f32.mrf.mxu0
      %v3106 = vadd.f32 0.0, %v3105
      %v3107 = vpop.f32.mrf.mxu0
      %v3108 = vpop.f32.mrf.mxu0
      %v3109 = vadd.f32 0.0, %v3108
      %v3110 = vpop.f32.mrf.mxu0
      %3111 = vmatprep.mubr.bf16.mxu0 0
      %3112 = vmatmul.mubr.bf16.gmra.mxu0 %v2949
      %v3113 = vpop.f32.mrf.mxu0
      %v3114 = vadd.f32 0.0, %v3113
      %v3115 = vpop.f32.mrf.mxu0
      %v3116 = vpop.f32.mrf.mxu0
      %v3117 = vadd.f32 0.0, %v3116
      %v3118 = vpop.f32.mrf.mxu0
      %3119 = vmatprep.mubr.bf16.mxu0 0
      %3120 = vmatmul.mubr.bf16.gmra.mxu0 %v2950
      %v3121 = vpop.f32.mrf.mxu0
      %v3122 = vadd.f32 0.0, %v3121
      %v3123 = vpop.f32.mrf.mxu0
      %v3124 = vpop.f32.mrf.mxu0
      %v3125 = vadd.f32 0.0, %v3124
      %v3126 = vpop.f32.mrf.mxu0
      %3127 = vmatprep.mubr.bf16.mxu0 0
      %3128 = vmatmul.mubr.bf16.gmra.mxu0 %v2951
      %v3129 = vpop.f32.mrf.mxu0
      %v3130 = vadd.f32 0.0, %v3129
      %v3131 = vpop.f32.mrf.mxu0
      %v3132 = vpop.f32.mrf.mxu0
      %v3133 = vadd.f32 0.0, %v3132
      %v3134 = vpop.f32.mrf.mxu0
      %3135 = vmatprep.mubr.bf16.mxu0 0
      %3136 = vmatmul.mubr.bf16.gmra.mxu0 %v2952
      %v3137 = vpop.f32.mrf.mxu0
      %v3138 = vadd.f32 0.0, %v3137
      %v3139 = vpop.f32.mrf.mxu0
      %v3140 = vpop.f32.mrf.mxu0
      %v3141 = vadd.f32 0.0, %v3140
      %v3142 = vpop.f32.mrf.mxu0
      %3143 = vmatprep.mubr.bf16.mxu0 0
      %3144 = vmatmul.mubr.bf16.gmra.mxu0 %v2953
      %v3145 = vpop.f32.mrf.mxu0
      %v3146 = vadd.f32 0.0, %v3145
      %v3147 = vpop.f32.mrf.mxu0
      %v3148 = vpop.f32.mrf.mxu0
      %v3149 = vadd.f32 0.0, %v3148
      %v3150 = vpop.f32.mrf.mxu0
      %3151 = vmatprep.mubr.bf16.mxu0 0
      %3152 = vmatmul.mubr.bf16.gmra.mxu0 %v2954
      %v3153 = vpop.f32.mrf.mxu0
      %v3154 = vadd.f32 0.0, %v3153
      %v3155 = vpop.f32.mrf.mxu0
      %v3156 = vpop.f32.mrf.mxu0
      %v3157 = vadd.f32 0.0, %v3156
      %v3158 = vpop.f32.mrf.mxu0
      %3159 = vmatprep.mubr.bf16.mxu0 0
      %3160 = vmatmul.mubr.bf16.gmra.mxu0 %v2955
      %v3161 = vpop.f32.mrf.mxu0
      %v3162 = vadd.f32 0.0, %v3161
      %v3163 = vpop.f32.mrf.mxu0
      %v3164 = vpop.f32.mrf.mxu0
      %v3165 = vadd.f32 0.0, %v3164
      %v3166 = vpop.f32.mrf.mxu0
      %3167 = vmatprep.mubr.bf16.mxu0 0
      %3168 = vmatmul.mubr.bf16.gmra.mxu0 %v2956
      %v3169 = vpop.f32.mrf.mxu0
      %v3170 = vadd.f32 0.0, %v3169
      %v3171 = vpop.f32.mrf.mxu0
      %v3172 = vpop.f32.mrf.mxu0
      %v3173 = vadd.f32 0.0, %v3172
      %v3174 = vpop.f32.mrf.mxu0
      %3175 = vmatprep.mubr.bf16.mxu0 0
      %3176 = vmatmul.mubr.bf16.gmra.mxu0 %v2957
      %v3177 = vpop.f32.mrf.mxu0
      %v3178 = vadd.f32 0.0, %v3177
      %v3179 = vpop.f32.mrf.mxu0
      %v3180 = vpop.f32.mrf.mxu0
      %v3181 = vadd.f32 0.0, %v3180
      %v3182 = vpop.f32.mrf.mxu0
      %3183 = vmatprep.mubr.bf16.mxu0 0
      %3184 = vmatmul.mubr.bf16.gmra.mxu0 %v2958
      %v3185 = vpop.f32.mrf.mxu0
      %v3186 = vadd.f32 0.0, %v3185
      %v3187 = vpop.f32.mrf.mxu0
      %v3188 = vpop.f32.mrf.mxu0
      %v3189 = vadd.f32 0.0, %v3188
      %v3190 = vpop.f32.mrf.mxu0
      %3191 = vmatprep.mubr.bf16.mxu0 0
      %3192 = vmatmul.mubr.bf16.gmra.mxu0 %v2959
      %v3193 = vpop.f32.mrf.mxu0
      %v3194 = vadd.f32 0.0, %v3193
      %v3195 = vpop.f32.mrf.mxu0
      %v3196 = vpop.f32.mrf.mxu0
      %v3197 = vadd.f32 0.0, %v3196
      %v3198 = vpop.f32.mrf.mxu0
      %3199 = vmatprep.mubr.bf16.mxu0 0
      %3200 = vmatmul.mubr.bf16.gmra.mxu0 %v2960
      %v3201 = vpop.f32.mrf.mxu0
      %v3202 = vadd.f32 0.0, %v3201
      %v3203 = vpop.f32.mrf.mxu0
      %v3204 = vpop.f32.mrf.mxu0
      %v3205 = vadd.f32 0.0, %v3204
      %v3206 = vpop.f32.mrf.mxu0
      %3207 = vmatprep.mubr.bf16.mxu0 0
      %3208 = vmatmul.mubr.bf16.gmra.mxu0 %v2961
      %v3209 = vpop.f32.mrf.mxu0
      %v3210 = vadd.f32 0.0, %v3209
      %v3211 = vpop.f32.mrf.mxu0
      %v3212 = vpop.f32.mrf.mxu0
      %v3213 = vadd.f32 0.0, %v3212
      %v3214 = vpop.f32.mrf.mxu0
      %3215 = vmatprep.mubr.bf16.mxu0 0
      %3216 = vmatmul.mubr.bf16.gmra.mxu0 %v2962
      %v3217 = vpop.f32.mrf.mxu0
      %v3218 = vadd.f32 0.0, %v3217
      %v3219 = vpop.f32.mrf.mxu0
      %v3220 = vpop.f32.mrf.mxu0
      %v3221 = vadd.f32 0.0, %v3220
      %v3222 = vpop.f32.mrf.mxu0
      %3223 = vdwg.mxu0
      %v3224 = vadd.f32 %v2766, %v3066
      %v3225 = vadd.f32 %v2767, %v3069
      %v3226 = vadd.f32 %v2768, %v3074
      %v3227 = vadd.f32 %v2769, %v3077
      %v3228 = vadd.f32 %v2770, %v3082
      %v3229 = vadd.f32 %v2771, %v3085
      %v3230 = vadd.f32 %v2772, %v3090
      %v3231 = vadd.f32 %v2773, %v3093
      %v3232 = vadd.f32 %v2774, %v3098
      %v3233 = vadd.f32 %v2775, %v3101
      %v3234 = vadd.f32 %v2776, %v3106
      %v3235 = vadd.f32 %v2777, %v3109
      %v3236 = vadd.f32 %v2778, %v3114
      %v3237 = vadd.f32 %v2779, %v3117
      %v3238 = vadd.f32 %v2780, %v3122
      %v3239 = vadd.f32 %v2781, %v3125
      %v3240 = vadd.f32 %v2782, %v3130
      %v3241 = vadd.f32 %v2783, %v3133
      %v3242 = vadd.f32 %v2784, %v3138
      %v3243 = vadd.f32 %v2785, %v3141
      %v3244 = vadd.f32 %v2786, %v3146
      %v3245 = vadd.f32 %v2787, %v3149
      %v3246 = vadd.f32 %v2788, %v3154
      %v3247 = vadd.f32 %v2789, %v3157
      %v3248 = vadd.f32 %v2790, %v3162
      %v3249 = vadd.f32 %v2791, %v3165
      %v3250 = vadd.f32 %v2792, %v3170
      %v3251 = vadd.f32 %v2793, %v3173
      %v3252 = vadd.f32 %v2794, %v3178
      %v3253 = vadd.f32 %v2795, %v3181
      %v3254 = vadd.f32 %v2796, %v3186
      %v3255 = vadd.f32 %v2797, %v3189
      %v3256 = vadd.f32 %v2798, %v3194
      %v3257 = vadd.f32 %v2799, %v3197
      %v3258 = vadd.f32 %v2800, %v3202
      %v3259 = vadd.f32 %v2801, %v3205
      %v3260 = vadd.f32 %v2802, %v3210
      %v3261 = vadd.f32 %v2803, %v3213
      %v3262 = vadd.f32 %v2804, %v3218
      %v3263 = vadd.f32 %v2805, %v3221
      %v3264 = vld [vmem:[%s192 + $0x14] sm:$0xf]
      %v3265 = vld [vmem:[%s192 + $0x18] sm:$0xf]
      %v3266 = vld [vmem:[%s192 + $0x1c] sm:$0xf]
      %v3267 = vld [vmem:[%s192 + $0x20] sm:$0xf]
      %v3268 = vld [vmem:[%s192 + $0x24] sm:$0xf]
      %v3269 = vld [vmem:[%s192 + $0x28] sm:$0xf]
      %v3270 = vld [vmem:[%s192 + $0x2c] sm:$0xf]
      %v3271 = vld [vmem:[%s192 + $0x30] sm:$0xf]
      %v3272 = vld [vmem:[%s192 + $0x34] sm:$0xf]
      %v3273 = vld [vmem:[%s192 + $0x38] sm:$0xf]
      %v3274 = vld [vmem:[%s192 + $0x3c] sm:$0xf]
      %v3275 = vld [vmem:[%s192 + $0x40] sm:$0xf]
      %v3276 = vld [vmem:[%s192 + $0x44] sm:$0xf]
      %v3277 = vld [vmem:[%s192 + $0x48] sm:$0xf]
      %v3278 = vld [vmem:[%s192 + $0x4c] sm:$0xf]
      %v3279 = vld [vmem:[%s192 + $0x50] sm:$0xf]
      %v3280 = vld [vmem:[%s192 + $0x54] sm:$0xf]
      %v3281 = vld [vmem:[%s192 + $0x58] sm:$0xf]
      %v3282 = vld [vmem:[%s192 + $0x5c] sm:$0xf]
      %v3283 = vld [vmem:[%s192 + $0x60] sm:$0xf]
      %v3284 = vld [vmem:[%s192 + $0x64] sm:$0xf]
      %v3285 = vld [vmem:[%s192 + $0x68] sm:$0xf]
      %v3286 = vld [vmem:[%s192 + $0x6c] sm:$0xf]
      %v3287 = vld [vmem:[%s192 + $0x70] sm:$0xf]
      %v3288 = vld [vmem:[%s192 + $0x74] sm:$0xf]
      %v3289 = vld [vmem:[%s192 + $0x78] sm:$0xf]
      %v3290 = vld [vmem:[%s192 + $0x7c] sm:$0xf]
      %v3291 = vld [vmem:[%s192 + $0x80] sm:$0xf]
      %v3292 = vld [vmem:[%s192 + $0x84] sm:$0xf]
      %v3293 = vld [vmem:[%s192 + $0x88] sm:$0xf]
      %v3294 = vld [vmem:[%s192 + $0x8c] sm:$0xf]
      %v3295 = vld [vmem:[%s192 + $0x90] sm:$0xf]
      %v3296 = vld [vmem:[%s192 + $0x94] sm:$0xf]
      %v3297 = vld [vmem:[%s192 + $0x98] sm:$0xf]
      %v3298 = vld [vmem:[%s192 + $0x9c] sm:$0xf]
      %v3299 = vld [vmem:[%s192 + $0xa0] sm:$0xf]
      %v3300 = vld [vmem:[%s192 + $0xa4] sm:$0xf]
      %v3301 = vld [vmem:[%s192 + $0xa8] sm:$0xf]
      %v3302 = vld [vmem:[%s192 + $0xac] sm:$0xf]
      %v3303 = vld [vmem:[%s192 + $0xb0] sm:$0xf]
      %v3304 = vld [vmem:[%s192 + $0xb4] sm:$0x1]
      %s3305 = scalar_lea.vmem %s1, 448
      %v3306 = vld [vmem:[%s3305] sm:$0xf]
      %v3307 = vld [vmem:[%s3305 + $0x4] sm:$0xf]
      %v3308 = vld [vmem:[%s3305 + $0x8] sm:$0xf]
      %v3309 = vld [vmem:[%s3305 + $0xc] sm:$0xf]
      %v3310 = vld [vmem:[%s3305 + $0x10] sm:$0xf]
      %v3311 = vld [vmem:[%s3305 + $0x14] sm:$0xf]
      %v3312 = vld [vmem:[%s3305 + $0x18] sm:$0xf]
      %v3313 = vld [vmem:[%s3305 + $0x1c] sm:$0xf]
      %v3314 = vld [vmem:[%s3305 + $0x20] sm:$0xf]
      %v3315 = vld [vmem:[%s3305 + $0x24] sm:$0xf]
      %v3316 = vld [vmem:[%s3305 + $0x28] sm:$0xf]
      %v3317 = vld [vmem:[%s3305 + $0x2c] sm:$0xf]
      %v3318 = vld [vmem:[%s3305 + $0x30] sm:$0xf]
      %v3319 = vld [vmem:[%s3305 + $0x34] sm:$0xf]
      %v3320 = vld [vmem:[%s3305 + $0x38] sm:$0xf]
      %v3321 = vld [vmem:[%s3305 + $0x3c] sm:$0xf]
      %v3363 = vunpack.c.l.b16 %v3264
      %v3364 = vunpack.c.l.b16 %v3265
      %v3365 = vunpack.c.l.b16 %v3266
      %v3366 = vunpack.c.l.b16 %v3267
      %v3367 = vunpack.c.l.b16 %v3268
      %v3368 = vunpack.c.l.b16 %v3269
      %v3369 = vunpack.c.l.b16 %v3270
      %v3370 = vunpack.c.l.b16 %v3271
      %v3371 = vunpack.c.l.b16 %v3272
      %v3372 = vunpack.c.l.b16 %v3273
      %v3373 = vunpack.c.l.b16 %v3274
      %v3374 = vunpack.c.l.b16 %v3275
      %v3375 = vunpack.c.l.b16 %v3276
      %v3376 = vunpack.c.l.b16 %v3277
      %v3377 = vunpack.c.l.b16 %v3278
      %v3378 = vunpack.c.l.b16 %v3279
      %v3379 = vunpack.c.l.b16 %v3280
      %v3380 = vunpack.c.l.b16 %v3281
      %v3381 = vunpack.c.l.b16 %v3282
      %v3382 = vunpack.c.l.b16 %v3283
      %v3383 = vunpack.c.l.b16 %v3284
      %v3384 = vunpack.c.l.b16 %v3285
      %v3385 = vunpack.c.l.b16 %v3286
      %v3386 = vunpack.c.l.b16 %v3287
      %v3387 = vunpack.c.l.b16 %v3288
      %v3388 = vunpack.c.l.b16 %v3289
      %v3389 = vunpack.c.l.b16 %v3290
      %v3390 = vunpack.c.l.b16 %v3291
      %v3391 = vunpack.c.l.b16 %v3292
      %v3392 = vunpack.c.l.b16 %v3293
      %v3393 = vunpack.c.l.b16 %v3294
      %v3394 = vunpack.c.l.b16 %v3295
      %v3395 = vunpack.c.l.b16 %v3296
      %v3396 = vunpack.c.l.b16 %v3297
      %v3397 = vunpack.c.l.b16 %v3298
      %v3398 = vunpack.c.l.b16 %v3299
      %v3399 = vunpack.c.l.b16 %v3300
      %v3400 = vunpack.c.l.b16 %v3301
      %v3401 = vunpack.c.l.b16 %v3302
      %v3402 = vunpack.c.l.b16 %v3303
      %v3403 = vunpack.c.l.b16 %v3304
      %v3404 = vpack.c.b16 %v3364, %v3363
      %v3405 = vpack.c.b16 %v3366, %v3365
      %v3406 = vpack.c.b16 %v3368, %v3367
      %v3407 = vpack.c.b16 %v3370, %v3369
      %v3408 = vpack.c.b16 %v3372, %v3371
      %v3409 = vpack.c.b16 %v3374, %v3373
      %v3410 = vpack.c.b16 %v3376, %v3375
      %v3411 = vpack.c.b16 %v3378, %v3377
      %v3412 = vpack.c.b16 %v3380, %v3379
      %v3413 = vpack.c.b16 %v3382, %v3381
      %v3414 = vpack.c.b16 %v3384, %v3383
      %v3415 = vpack.c.b16 %v3386, %v3385
      %v3416 = vpack.c.b16 %v3388, %v3387
      %v3417 = vpack.c.b16 %v3390, %v3389
      %v3418 = vpack.c.b16 %v3392, %v3391
      %v3419 = vpack.c.b16 %v3394, %v3393
      %v3420 = vpack.c.b16 %v3396, %v3395
      %v3421 = vpack.c.b16 %v3398, %v3397
      %v3422 = vpack.c.b16 %v3400, %v3399
      %v3423 = vpack.c.b16 %v3402, %v3401
      %v3424 = vpack.c.b16 %v3403, %v3403
      %v3426 = vshrl.u32 %v3404, 16
      %v3428 = vshll.u32 %v3404, 16
      %v3430 = vrot.slane %v3428, 1
      %v3431 = vor.u32 %v3426, %v3430
      %v3433 = vshll.u32 %v3405, 16
      %v3435 = vrot.slane %v3433, 1
      %v3436 = vsel %vm376, %v3431, %v3435
      %v3437 = vshrl.u32 %v3405, 16
      %v3439 = vor.u32 %v3437, %v3435
      %v3441 = vshll.u32 %v3406, 16
      %v3443 = vrot.slane %v3441, 1
      %v3444 = vsel %vm376, %v3439, %v3443
      %v3445 = vshrl.u32 %v3406, 16
      %v3447 = vor.u32 %v3445, %v3443
      %v3449 = vshll.u32 %v3407, 16
      %v3451 = vrot.slane %v3449, 1
      %v3452 = vsel %vm376, %v3447, %v3451
      %v3453 = vshrl.u32 %v3407, 16
      %v3455 = vor.u32 %v3453, %v3451
      %v3457 = vshll.u32 %v3408, 16
      %v3459 = vrot.slane %v3457, 1
      %v3460 = vsel %vm376, %v3455, %v3459
      %v3461 = vshrl.u32 %v3408, 16
      %v3463 = vor.u32 %v3461, %v3459
      %v3465 = vshll.u32 %v3409, 16
      %v3467 = vrot.slane %v3465, 1
      %v3468 = vsel %vm376, %v3463, %v3467
      %v3469 = vshrl.u32 %v3409, 16
      %v3471 = vor.u32 %v3469, %v3467
      %v3473 = vshll.u32 %v3410, 16
      %v3475 = vrot.slane %v3473, 1
      %v3476 = vsel %vm376, %v3471, %v3475
      %v3477 = vshrl.u32 %v3410, 16
      %v3479 = vor.u32 %v3477, %v3475
      %v3481 = vshll.u32 %v3411, 16
      %v3483 = vrot.slane %v3481, 1
      %v3484 = vsel %vm376, %v3479, %v3483
      %v3485 = vshrl.u32 %v3411, 16
      %v3487 = vor.u32 %v3485, %v3483
      %v3489 = vshll.u32 %v3412, 16
      %v3491 = vrot.slane %v3489, 1
      %v3492 = vsel %vm376, %v3487, %v3491
      %v3493 = vshrl.u32 %v3412, 16
      %v3495 = vor.u32 %v3493, %v3491
      %v3497 = vshll.u32 %v3413, 16
      %v3499 = vrot.slane %v3497, 1
      %v3500 = vsel %vm376, %v3495, %v3499
      %v3501 = vshrl.u32 %v3413, 16
      %v3503 = vor.u32 %v3501, %v3499
      %v3505 = vshll.u32 %v3414, 16
      %v3507 = vrot.slane %v3505, 1
      %v3508 = vsel %vm376, %v3503, %v3507
      %v3509 = vshrl.u32 %v3414, 16
      %v3511 = vor.u32 %v3509, %v3507
      %v3513 = vshll.u32 %v3415, 16
      %v3515 = vrot.slane %v3513, 1
      %v3516 = vsel %vm376, %v3511, %v3515
      %v3517 = vshrl.u32 %v3415, 16
      %v3519 = vor.u32 %v3517, %v3515
      %v3521 = vshll.u32 %v3416, 16
      %v3523 = vrot.slane %v3521, 1
      %v3524 = vsel %vm376, %v3519, %v3523
      %v3525 = vshrl.u32 %v3416, 16
      %v3527 = vor.u32 %v3525, %v3523
      %v3529 = vshll.u32 %v3417, 16
      %v3531 = vrot.slane %v3529, 1
      %v3532 = vsel %vm376, %v3527, %v3531
      %v3533 = vshrl.u32 %v3417, 16
      %v3535 = vor.u32 %v3533, %v3531
      %v3537 = vshll.u32 %v3418, 16
      %v3539 = vrot.slane %v3537, 1
      %v3540 = vsel %vm376, %v3535, %v3539
      %v3541 = vshrl.u32 %v3418, 16
      %v3543 = vor.u32 %v3541, %v3539
      %v3545 = vshll.u32 %v3419, 16
      %v3547 = vrot.slane %v3545, 1
      %v3548 = vsel %vm376, %v3543, %v3547
      %v3549 = vshrl.u32 %v3419, 16
      %v3551 = vor.u32 %v3549, %v3547
      %v3553 = vshll.u32 %v3420, 16
      %v3555 = vrot.slane %v3553, 1
      %v3556 = vsel %vm376, %v3551, %v3555
      %v3557 = vshrl.u32 %v3420, 16
      %v3559 = vor.u32 %v3557, %v3555
      %v3561 = vshll.u32 %v3421, 16
      %v3563 = vrot.slane %v3561, 1
      %v3564 = vsel %vm376, %v3559, %v3563
      %v3565 = vshrl.u32 %v3421, 16
      %v3567 = vor.u32 %v3565, %v3563
      %v3569 = vshll.u32 %v3422, 16
      %v3571 = vrot.slane %v3569, 1
      %v3572 = vsel %vm376, %v3567, %v3571
      %v3573 = vshrl.u32 %v3422, 16
      %v3575 = vor.u32 %v3573, %v3571
      %v3577 = vshll.u32 %v3423, 16
      %v3579 = vrot.slane %v3577, 1
      %v3580 = vsel %vm376, %v3575, %v3579
      %v3581 = vshrl.u32 %v3423, 16
      %v3583 = vor.u32 %v3581, %v3579
      %v3585 = vshll.u32 %v3424, 16
      %v3587 = vrot.slane %v3585, 1
      %v3588 = vsel %vm376, %v3583, %v3587
      %v3625 = vunpack.c.l.b16 %v3306
      %v3626 = vunpack.c.l.b16 %v3307
      %v3627 = vunpack.c.l.b16 %v3308
      %v3628 = vunpack.c.l.b16 %v3309
      %v3629 = vunpack.c.l.b16 %v3310
      %v3630 = vunpack.c.l.b16 %v3311
      %v3631 = vunpack.c.l.b16 %v3312
      %v3632 = vunpack.c.l.b16 %v3313
      %v3633 = vunpack.c.l.b16 %v3314
      %v3634 = vunpack.c.l.b16 %v3315
      %v3635 = vunpack.c.l.b16 %v3316
      %v3636 = vunpack.c.l.b16 %v3317
      %v3637 = vunpack.c.l.b16 %v3318
      %v3638 = vunpack.c.l.b16 %v3319
      %v3639 = vunpack.c.l.b16 %v3320
      %v3640 = vunpack.c.l.b16 %v3321
      %v3641 = vpack.c.b16 %v3626, %v3625
      %v3642 = vpack.c.b16 %v3628, %v3627
      %v3643 = vpack.c.b16 %v3630, %v3629
      %v3644 = vpack.c.b16 %v3632, %v3631
      %v3645 = vpack.c.b16 %v3634, %v3633
      %v3646 = vpack.c.b16 %v3636, %v3635
      %v3647 = vpack.c.b16 %v3638, %v3637
      %v3648 = vpack.c.b16 %v3640, %v3639
      %3657 = vmatprep.subr.bf16.mxu0 0
      %3658 = vmatpush1.bf16.msra.mxu0 %v3648
      %3659 = vmatprep.subr.bf16.mxu0 0
      %3660 = vmatpush1.bf16.msra.mxu0 %v3647
      %3661 = vmatprep.subr.bf16.mxu0 0
      %3662 = vmatpush1.bf16.msra.mxu0 %v3646
      %3663 = vmatprep.subr.bf16.mxu0 0
      %3664 = vmatpush1.bf16.msra.mxu0 %v3645
      %3665 = vmatprep.subr.bf16.mxu0 0
      %3666 = vmatpush1.bf16.msra.mxu0 %v3644
      %3667 = vmatprep.subr.bf16.mxu0 0
      %3668 = vmatpush1.bf16.msra.mxu0 %v3643
      %3669 = vmatprep.subr.bf16.mxu0 0
      %3670 = vmatpush1.bf16.msra.mxu0 %v3642
      %3671 = vmatprep.subr.bf16.mxu0 0
      %3672 = vmatpush1.bf16.msra.mxu0 %v3641
      %3673 = vmatprep.subr.bf16.mxu0 0
      %3674 = vmatpush2.bf16.msra.mxu0 0
      %3675 = vmatprep.subr.bf16.mxu0 0
      %3676 = vmatpush2.bf16.msra.mxu0 0
      %3677 = vmatprep.subr.bf16.mxu0 0
      %3678 = vmatpush2.bf16.msra.mxu0 0
      %3679 = vmatprep.subr.bf16.mxu0 0
      %3680 = vmatpush2.bf16.msra.mxu0 0
      %3681 = vmatprep.subr.bf16.mxu0 0
      %3682 = vmatpush2.bf16.msra.mxu0 0
      %3683 = vmatprep.subr.bf16.mxu0 0
      %3684 = vmatpush2.bf16.msra.mxu0 0
      %3685 = vmatprep.subr.bf16.mxu0 0
      %3686 = vmatpush2.bf16.msra.mxu0 0
      %3687 = vmatprep.subr.bf16.mxu0 0
      %3688 = vmatpush2.bf16.msra.mxu0 0
      %3689 = vmatprep.mubr.bf16.mxu0 0
      %3690 = vmatmul.mubr.bf16.gmra.mxu0 %v3436
      %v3691 = vpop.f32.mrf.mxu0
      %v3692 = vadd.f32 0.0, %v3691
      %v3693 = vpop.f32.mrf.mxu0
      %v3694 = vpop.f32.mrf.mxu0
      %v3695 = vadd.f32 0.0, %v3694
      %v3696 = vpop.f32.mrf.mxu0
      %3697 = vmatprep.mubr.bf16.mxu0 0
      %3698 = vmatmul.mubr.bf16.gmra.mxu0 %v3444
      %v3699 = vpop.f32.mrf.mxu0
      %v3700 = vadd.f32 0.0, %v3699
      %v3701 = vpop.f32.mrf.mxu0
      %v3702 = vpop.f32.mrf.mxu0
      %v3703 = vadd.f32 0.0, %v3702
      %v3704 = vpop.f32.mrf.mxu0
      %3705 = vmatprep.mubr.bf16.mxu0 0
      %3706 = vmatmul.mubr.bf16.gmra.mxu0 %v3452
      %v3707 = vpop.f32.mrf.mxu0
      %v3708 = vadd.f32 0.0, %v3707
      %v3709 = vpop.f32.mrf.mxu0
      %v3710 = vpop.f32.mrf.mxu0
      %v3711 = vadd.f32 0.0, %v3710
      %v3712 = vpop.f32.mrf.mxu0
      %3713 = vmatprep.mubr.bf16.mxu0 0
      %3714 = vmatmul.mubr.bf16.gmra.mxu0 %v3460
      %v3715 = vpop.f32.mrf.mxu0
      %v3716 = vadd.f32 0.0, %v3715
      %v3717 = vpop.f32.mrf.mxu0
      %v3718 = vpop.f32.mrf.mxu0
      %v3719 = vadd.f32 0.0, %v3718
      %v3720 = vpop.f32.mrf.mxu0
      %3721 = vmatprep.mubr.bf16.mxu0 0
      %3722 = vmatmul.mubr.bf16.gmra.mxu0 %v3468
      %v3723 = vpop.f32.mrf.mxu0
      %v3724 = vadd.f32 0.0, %v3723
      %v3725 = vpop.f32.mrf.mxu0
      %v3726 = vpop.f32.mrf.mxu0
      %v3727 = vadd.f32 0.0, %v3726
      %v3728 = vpop.f32.mrf.mxu0
      %3729 = vmatprep.mubr.bf16.mxu0 0
      %3730 = vmatmul.mubr.bf16.gmra.mxu0 %v3476
      %v3731 = vpop.f32.mrf.mxu0
      %v3732 = vadd.f32 0.0, %v3731
      %v3733 = vpop.f32.mrf.mxu0
      %v3734 = vpop.f32.mrf.mxu0
      %v3735 = vadd.f32 0.0, %v3734
      %v3736 = vpop.f32.mrf.mxu0
      %3737 = vmatprep.mubr.bf16.mxu0 0
      %3738 = vmatmul.mubr.bf16.gmra.mxu0 %v3484
      %v3739 = vpop.f32.mrf.mxu0
      %v3740 = vadd.f32 0.0, %v3739
      %v3741 = vpop.f32.mrf.mxu0
      %v3742 = vpop.f32.mrf.mxu0
      %v3743 = vadd.f32 0.0, %v3742
      %v3744 = vpop.f32.mrf.mxu0
      %3745 = vmatprep.mubr.bf16.mxu0 0
      %3746 = vmatmul.mubr.bf16.gmra.mxu0 %v3492
      %v3747 = vpop.f32.mrf.mxu0
      %v3748 = vadd.f32 0.0, %v3747
      %v3749 = vpop.f32.mrf.mxu0
      %v3750 = vpop.f32.mrf.mxu0
      %v3751 = vadd.f32 0.0, %v3750
      %v3752 = vpop.f32.mrf.mxu0
      %3753 = vmatprep.mubr.bf16.mxu0 0
      %3754 = vmatmul.mubr.bf16.gmra.mxu0 %v3500
      %v3755 = vpop.f32.mrf.mxu0
      %v3756 = vadd.f32 0.0, %v3755
      %v3757 = vpop.f32.mrf.mxu0
      %v3758 = vpop.f32.mrf.mxu0
      %v3759 = vadd.f32 0.0, %v3758
      %v3760 = vpop.f32.mrf.mxu0
      %3761 = vmatprep.mubr.bf16.mxu0 0
      %3762 = vmatmul.mubr.bf16.gmra.mxu0 %v3508
      %v3763 = vpop.f32.mrf.mxu0
      %v3764 = vadd.f32 0.0, %v3763
      %v3765 = vpop.f32.mrf.mxu0
      %v3766 = vpop.f32.mrf.mxu0
      %v3767 = vadd.f32 0.0, %v3766
      %v3768 = vpop.f32.mrf.mxu0
      %3769 = vmatprep.mubr.bf16.mxu0 0
      %3770 = vmatmul.mubr.bf16.gmra.mxu0 %v3516
      %v3771 = vpop.f32.mrf.mxu0
      %v3772 = vadd.f32 0.0, %v3771
      %v3773 = vpop.f32.mrf.mxu0
      %v3774 = vpop.f32.mrf.mxu0
      %v3775 = vadd.f32 0.0, %v3774
      %v3776 = vpop.f32.mrf.mxu0
      %3777 = vmatprep.mubr.bf16.mxu0 0
      %3778 = vmatmul.mubr.bf16.gmra.mxu0 %v3524
      %v3779 = vpop.f32.mrf.mxu0
      %v3780 = vadd.f32 0.0, %v3779
      %v3781 = vpop.f32.mrf.mxu0
      %v3782 = vpop.f32.mrf.mxu0
      %v3783 = vadd.f32 0.0, %v3782
      %v3784 = vpop.f32.mrf.mxu0
      %3785 = vmatprep.mubr.bf16.mxu0 0
      %3786 = vmatmul.mubr.bf16.gmra.mxu0 %v3532
      %v3787 = vpop.f32.mrf.mxu0
      %v3788 = vadd.f32 0.0, %v3787
      %v3789 = vpop.f32.mrf.mxu0
      %v3790 = vpop.f32.mrf.mxu0
      %v3791 = vadd.f32 0.0, %v3790
      %v3792 = vpop.f32.mrf.mxu0
      %3793 = vmatprep.mubr.bf16.mxu0 0
      %3794 = vmatmul.mubr.bf16.gmra.mxu0 %v3540
      %v3795 = vpop.f32.mrf.mxu0
      %v3796 = vadd.f32 0.0, %v3795
      %v3797 = vpop.f32.mrf.mxu0
      %v3798 = vpop.f32.mrf.mxu0
      %v3799 = vadd.f32 0.0, %v3798
      %v3800 = vpop.f32.mrf.mxu0
      %3801 = vmatprep.mubr.bf16.mxu0 0
      %3802 = vmatmul.mubr.bf16.gmra.mxu0 %v3548
      %v3803 = vpop.f32.mrf.mxu0
      %v3804 = vadd.f32 0.0, %v3803
      %v3805 = vpop.f32.mrf.mxu0
      %v3806 = vpop.f32.mrf.mxu0
      %v3807 = vadd.f32 0.0, %v3806
      %v3808 = vpop.f32.mrf.mxu0
      %3809 = vmatprep.mubr.bf16.mxu0 0
      %3810 = vmatmul.mubr.bf16.gmra.mxu0 %v3556
      %v3811 = vpop.f32.mrf.mxu0
      %v3812 = vadd.f32 0.0, %v3811
      %v3813 = vpop.f32.mrf.mxu0
      %v3814 = vpop.f32.mrf.mxu0
      %v3815 = vadd.f32 0.0, %v3814
      %v3816 = vpop.f32.mrf.mxu0
      %3817 = vmatprep.mubr.bf16.mxu0 0
      %3818 = vmatmul.mubr.bf16.gmra.mxu0 %v3564
      %v3819 = vpop.f32.mrf.mxu0
      %v3820 = vadd.f32 0.0, %v3819
      %v3821 = vpop.f32.mrf.mxu0
      %v3822 = vpop.f32.mrf.mxu0
      %v3823 = vadd.f32 0.0, %v3822
      %v3824 = vpop.f32.mrf.mxu0
      %3825 = vmatprep.mubr.bf16.mxu0 0
      %3826 = vmatmul.mubr.bf16.gmra.mxu0 %v3572
      %v3827 = vpop.f32.mrf.mxu0
      %v3828 = vadd.f32 0.0, %v3827
      %v3829 = vpop.f32.mrf.mxu0
      %v3830 = vpop.f32.mrf.mxu0
      %v3831 = vadd.f32 0.0, %v3830
      %v3832 = vpop.f32.mrf.mxu0
      %3833 = vmatprep.mubr.bf16.mxu0 0
      %3834 = vmatmul.mubr.bf16.gmra.mxu0 %v3580
      %v3835 = vpop.f32.mrf.mxu0
      %v3836 = vadd.f32 0.0, %v3835
      %v3837 = vpop.f32.mrf.mxu0
      %v3838 = vpop.f32.mrf.mxu0
      %v3839 = vadd.f32 0.0, %v3838
      %v3840 = vpop.f32.mrf.mxu0
      %3841 = vmatprep.mubr.bf16.mxu0 0
      %3842 = vmatmul.mubr.bf16.gmra.mxu0 %v3588
      %v3843 = vpop.f32.mrf.mxu0
      %v3844 = vadd.f32 0.0, %v3843
      %v3845 = vpop.f32.mrf.mxu0
      %v3846 = vpop.f32.mrf.mxu0
      %v3847 = vadd.f32 0.0, %v3846
      %v3848 = vpop.f32.mrf.mxu0
      %3849 = vdwg.mxu0
      %v3850 = vadd.f32 %v3224, %v3692
      %v3851 = vadd.f32 %v3225, %v3695
      %v3852 = vadd.f32 %v3226, %v3700
      %v3853 = vadd.f32 %v3227, %v3703
      %v3854 = vadd.f32 %v3228, %v3708
      %v3855 = vadd.f32 %v3229, %v3711
      %v3856 = vadd.f32 %v3230, %v3716
      %v3857 = vadd.f32 %v3231, %v3719
      %v3858 = vadd.f32 %v3232, %v3724
      %v3859 = vadd.f32 %v3233, %v3727
      %v3860 = vadd.f32 %v3234, %v3732
      %v3861 = vadd.f32 %v3235, %v3735
      %v3862 = vadd.f32 %v3236, %v3740
      %v3863 = vadd.f32 %v3237, %v3743
      %v3864 = vadd.f32 %v3238, %v3748
      %v3865 = vadd.f32 %v3239, %v3751
      %v3866 = vadd.f32 %v3240, %v3756
      %v3867 = vadd.f32 %v3241, %v3759
      %v3868 = vadd.f32 %v3242, %v3764
      %v3869 = vadd.f32 %v3243, %v3767
      %v3870 = vadd.f32 %v3244, %v3772
      %v3871 = vadd.f32 %v3245, %v3775
      %v3872 = vadd.f32 %v3246, %v3780
      %v3873 = vadd.f32 %v3247, %v3783
      %v3874 = vadd.f32 %v3248, %v3788
      %v3875 = vadd.f32 %v3249, %v3791
      %v3876 = vadd.f32 %v3250, %v3796
      %v3877 = vadd.f32 %v3251, %v3799
      %v3878 = vadd.f32 %v3252, %v3804
      %v3879 = vadd.f32 %v3253, %v3807
      %v3880 = vadd.f32 %v3254, %v3812
      %v3881 = vadd.f32 %v3255, %v3815
      %v3882 = vadd.f32 %v3256, %v3820
      %v3883 = vadd.f32 %v3257, %v3823
      %v3884 = vadd.f32 %v3258, %v3828
      %v3885 = vadd.f32 %v3259, %v3831
      %v3886 = vadd.f32 %v3260, %v3836
      %v3887 = vadd.f32 %v3261, %v3839
      %v3888 = vadd.f32 %v3262, %v3844
      %v3889 = vadd.f32 %v3263, %v3847
      %v3890 = vld [vmem:[%s192 + $0x14] sm:$0xe]
      %s3891 = scalar_lea.vmem %s1, 512
      %v3892 = vld [vmem:[%s3891] sm:$0xf]
      %v3893 = vld [vmem:[%s3891 + $0x4] sm:$0xf]
      %v3894 = vld [vmem:[%s3891 + $0x8] sm:$0xf]
      %v3895 = vld [vmem:[%s3891 + $0xc] sm:$0xf]
      %v3896 = vld [vmem:[%s3891 + $0x10] sm:$0xf]
      %v3897 = vld [vmem:[%s3891 + $0x14] sm:$0xf]
      %v3898 = vld [vmem:[%s3891 + $0x18] sm:$0xf]
      %v3899 = vld [vmem:[%s3891 + $0x1c] sm:$0xf]
      %v3900 = vld [vmem:[%s3891 + $0x20] sm:$0xf]
      %v3901 = vld [vmem:[%s3891 + $0x24] sm:$0xf]
      %v3902 = vld [vmem:[%s3891 + $0x28] sm:$0xf]
      %v3903 = vld [vmem:[%s3891 + $0x2c] sm:$0xf]
      %v3904 = vld [vmem:[%s3891 + $0x30] sm:$0xf]
      %v3905 = vld [vmem:[%s3891 + $0x34] sm:$0xf]
      %v3906 = vld [vmem:[%s3891 + $0x38] sm:$0xf]
      %v3907 = vld [vmem:[%s3891 + $0x3c] sm:$0xf]
      %v3909 = vunpack.c.l.b16 %v3890
      %v3910 = vpack.c.b16 %v3364, %v3909
      %v3911 = vrot.slane %v3910, 1
      %v3912 = vrot.slane %v3405, 1
      %v3913 = vsel %vm1084, %v3911, %v3912
      %v3914 = vrot.slane %v3406, 1
      %v3915 = vsel %vm1084, %v3912, %v3914
      %v3916 = vrot.slane %v3407, 1
      %v3917 = vsel %vm1084, %v3914, %v3916
      %v3918 = vrot.slane %v3408, 1
      %v3919 = vsel %vm1084, %v3916, %v3918
      %v3920 = vrot.slane %v3409, 1
      %v3921 = vsel %vm1084, %v3918, %v3920
      %v3922 = vrot.slane %v3410, 1
      %v3923 = vsel %vm1084, %v3920, %v3922
      %v3924 = vrot.slane %v3411, 1
      %v3925 = vsel %vm1084, %v3922, %v3924
      %v3926 = vrot.slane %v3412, 1
      %v3927 = vsel %vm1084, %v3924, %v3926
      %v3928 = vrot.slane %v3413, 1
      %v3929 = vsel %vm1084, %v3926, %v3928
      %v3930 = vrot.slane %v3414, 1
      %v3931 = vsel %vm1084, %v3928, %v3930
      %v3932 = vrot.slane %v3415, 1
      %v3933 = vsel %vm1084, %v3930, %v3932
      %v3934 = vrot.slane %v3416, 1
      %v3935 = vsel %vm1084, %v3932, %v3934
      %v3936 = vrot.slane %v3417, 1
      %v3937 = vsel %vm1084, %v3934, %v3936
      %v3938 = vrot.slane %v3418, 1
      %v3939 = vsel %vm1084, %v3936, %v3938
      %v3940 = vrot.slane %v3419, 1
      %v3941 = vsel %vm1084, %v3938, %v3940
      %v3942 = vrot.slane %v3420, 1
      %v3943 = vsel %vm1084, %v3940, %v3942
      %v3944 = vrot.slane %v3421, 1
      %v3945 = vsel %vm1084, %v3942, %v3944
      %v3946 = vrot.slane %v3422, 1
      %v3947 = vsel %vm1084, %v3944, %v3946
      %v3948 = vrot.slane %v3423, 1
      %v3949 = vsel %vm1084, %v3946, %v3948
      %v3950 = vrot.slane %v3424, 1
      %v3951 = vsel %vm1084, %v3948, %v3950
      %v3988 = vunpack.c.l.b16 %v3892
      %v3989 = vunpack.c.l.b16 %v3893
      %v3990 = vunpack.c.l.b16 %v3894
      %v3991 = vunpack.c.l.b16 %v3895
      %v3992 = vunpack.c.l.b16 %v3896
      %v3993 = vunpack.c.l.b16 %v3897
      %v3994 = vunpack.c.l.b16 %v3898
      %v3995 = vunpack.c.l.b16 %v3899
      %v3996 = vunpack.c.l.b16 %v3900
      %v3997 = vunpack.c.l.b16 %v3901
      %v3998 = vunpack.c.l.b16 %v3902
      %v3999 = vunpack.c.l.b16 %v3903
      %v4000 = vunpack.c.l.b16 %v3904
      %v4001 = vunpack.c.l.b16 %v3905
      %v4002 = vunpack.c.l.b16 %v3906
      %v4003 = vunpack.c.l.b16 %v3907
      %v4004 = vpack.c.b16 %v3989, %v3988
      %v4005 = vpack.c.b16 %v3991, %v3990
      %v4006 = vpack.c.b16 %v3993, %v3992
      %v4007 = vpack.c.b16 %v3995, %v3994
      %v4008 = vpack.c.b16 %v3997, %v3996
      %v4009 = vpack.c.b16 %v3999, %v3998
      %v4010 = vpack.c.b16 %v4001, %v4000
      %v4011 = vpack.c.b16 %v4003, %v4002
      %4020 = vmatprep.subr.bf16.mxu0 0
      %4021 = vmatpush1.bf16.msra.mxu0 %v4011
      %4022 = vmatprep.subr.bf16.mxu0 0
      %4023 = vmatpush1.bf16.msra.mxu0 %v4010
      %4024 = vmatprep.subr.bf16.mxu0 0
      %4025 = vmatpush1.bf16.msra.mxu0 %v4009
      %4026 = vmatprep.subr.bf16.mxu0 0
      %4027 = vmatpush1.bf16.msra.mxu0 %v4008
      %4028 = vmatprep.subr.bf16.mxu0 0
      %4029 = vmatpush1.bf16.msra.mxu0 %v4007
      %4030 = vmatprep.subr.bf16.mxu0 0
      %4031 = vmatpush1.bf16.msra.mxu0 %v4006
      %4032 = vmatprep.subr.bf16.mxu0 0
      %4033 = vmatpush1.bf16.msra.mxu0 %v4005
      %4034 = vmatprep.subr.bf16.mxu0 0
      %4035 = vmatpush1.bf16.msra.mxu0 %v4004
      %4036 = vmatprep.subr.bf16.mxu0 0
      %4037 = vmatpush2.bf16.msra.mxu0 0
      %4038 = vmatprep.subr.bf16.mxu0 0
      %4039 = vmatpush2.bf16.msra.mxu0 0
      %4040 = vmatprep.subr.bf16.mxu0 0
      %4041 = vmatpush2.bf16.msra.mxu0 0
      %4042 = vmatprep.subr.bf16.mxu0 0
      %4043 = vmatpush2.bf16.msra.mxu0 0
      %4044 = vmatprep.subr.bf16.mxu0 0
      %4045 = vmatpush2.bf16.msra.mxu0 0
      %4046 = vmatprep.subr.bf16.mxu0 0
      %4047 = vmatpush2.bf16.msra.mxu0 0
      %4048 = vmatprep.subr.bf16.mxu0 0
      %4049 = vmatpush2.bf16.msra.mxu0 0
      %4050 = vmatprep.subr.bf16.mxu0 0
      %4051 = vmatpush2.bf16.msra.mxu0 0
      %4052 = vmatprep.mubr.bf16.mxu0 0
      %4053 = vmatmul.mubr.bf16.gmra.mxu0 %v3913
      %v4054 = vpop.f32.mrf.mxu0
      %v4055 = vadd.f32 0.0, %v4054
      %v4056 = vpop.f32.mrf.mxu0
      %v4057 = vpop.f32.mrf.mxu0
      %v4058 = vadd.f32 0.0, %v4057
      %v4059 = vpop.f32.mrf.mxu0
      %4060 = vmatprep.mubr.bf16.mxu0 0
      %4061 = vmatmul.mubr.bf16.gmra.mxu0 %v3915
      %v4062 = vpop.f32.mrf.mxu0
      %v4063 = vadd.f32 0.0, %v4062
      %v4064 = vpop.f32.mrf.mxu0
      %v4065 = vpop.f32.mrf.mxu0
      %v4066 = vadd.f32 0.0, %v4065
      %v4067 = vpop.f32.mrf.mxu0
      %4068 = vmatprep.mubr.bf16.mxu0 0
      %4069 = vmatmul.mubr.bf16.gmra.mxu0 %v3917
      %v4070 = vpop.f32.mrf.mxu0
      %v4071 = vadd.f32 0.0, %v4070
      %v4072 = vpop.f32.mrf.mxu0
      %v4073 = vpop.f32.mrf.mxu0
      %v4074 = vadd.f32 0.0, %v4073
      %v4075 = vpop.f32.mrf.mxu0
      %4076 = vmatprep.mubr.bf16.mxu0 0
      %4077 = vmatmul.mubr.bf16.gmra.mxu0 %v3919
      %v4078 = vpop.f32.mrf.mxu0
      %v4079 = vadd.f32 0.0, %v4078
      %v4080 = vpop.f32.mrf.mxu0
      %v4081 = vpop.f32.mrf.mxu0
      %v4082 = vadd.f32 0.0, %v4081
      %v4083 = vpop.f32.mrf.mxu0
      %4084 = vmatprep.mubr.bf16.mxu0 0
      %4085 = vmatmul.mubr.bf16.gmra.mxu0 %v3921
      %v4086 = vpop.f32.mrf.mxu0
      %v4087 = vadd.f32 0.0, %v4086
      %v4088 = vpop.f32.mrf.mxu0
      %v4089 = vpop.f32.mrf.mxu0
      %v4090 = vadd.f32 0.0, %v4089
      %v4091 = vpop.f32.mrf.mxu0
      %4092 = vmatprep.mubr.bf16.mxu0 0
      %4093 = vmatmul.mubr.bf16.gmra.mxu0 %v3923
      %v4094 = vpop.f32.mrf.mxu0
      %v4095 = vadd.f32 0.0, %v4094
      %v4096 = vpop.f32.mrf.mxu0
      %v4097 = vpop.f32.mrf.mxu0
      %v4098 = vadd.f32 0.0, %v4097
      %v4099 = vpop.f32.mrf.mxu0
      %4100 = vmatprep.mubr.bf16.mxu0 0
      %4101 = vmatmul.mubr.bf16.gmra.mxu0 %v3925
      %v4102 = vpop.f32.mrf.mxu0
      %v4103 = vadd.f32 0.0, %v4102
      %v4104 = vpop.f32.mrf.mxu0
      %v4105 = vpop.f32.mrf.mxu0
      %v4106 = vadd.f32 0.0, %v4105
      %v4107 = vpop.f32.mrf.mxu0
      %4108 = vmatprep.mubr.bf16.mxu0 0
      %4109 = vmatmul.mubr.bf16.gmra.mxu0 %v3927
      %v4110 = vpop.f32.mrf.mxu0
      %v4111 = vadd.f32 0.0, %v4110
      %v4112 = vpop.f32.mrf.mxu0
      %v4113 = vpop.f32.mrf.mxu0
      %v4114 = vadd.f32 0.0, %v4113
      %v4115 = vpop.f32.mrf.mxu0
      %4116 = vmatprep.mubr.bf16.mxu0 0
      %4117 = vmatmul.mubr.bf16.gmra.mxu0 %v3929
      %v4118 = vpop.f32.mrf.mxu0
      %v4119 = vadd.f32 0.0, %v4118
      %v4120 = vpop.f32.mrf.mxu0
      %v4121 = vpop.f32.mrf.mxu0
      %v4122 = vadd.f32 0.0, %v4121
      %v4123 = vpop.f32.mrf.mxu0
      %4124 = vmatprep.mubr.bf16.mxu0 0
      %4125 = vmatmul.mubr.bf16.gmra.mxu0 %v3931
      %v4126 = vpop.f32.mrf.mxu0
      %v4127 = vadd.f32 0.0, %v4126
      %v4128 = vpop.f32.mrf.mxu0
      %v4129 = vpop.f32.mrf.mxu0
      %v4130 = vadd.f32 0.0, %v4129
      %v4131 = vpop.f32.mrf.mxu0
      %4132 = vmatprep.mubr.bf16.mxu0 0
      %4133 = vmatmul.mubr.bf16.gmra.mxu0 %v3933
      %v4134 = vpop.f32.mrf.mxu0
      %v4135 = vadd.f32 0.0, %v4134
      %v4136 = vpop.f32.mrf.mxu0
      %v4137 = vpop.f32.mrf.mxu0
      %v4138 = vadd.f32 0.0, %v4137
      %v4139 = vpop.f32.mrf.mxu0
      %4140 = vmatprep.mubr.bf16.mxu0 0
      %4141 = vmatmul.mubr.bf16.gmra.mxu0 %v3935
      %v4142 = vpop.f32.mrf.mxu0
      %v4143 = vadd.f32 0.0, %v4142
      %v4144 = vpop.f32.mrf.mxu0
      %v4145 = vpop.f32.mrf.mxu0
      %v4146 = vadd.f32 0.0, %v4145
      %v4147 = vpop.f32.mrf.mxu0
      %4148 = vmatprep.mubr.bf16.mxu0 0
      %4149 = vmatmul.mubr.bf16.gmra.mxu0 %v3937
      %v4150 = vpop.f32.mrf.mxu0
      %v4151 = vadd.f32 0.0, %v4150
      %v4152 = vpop.f32.mrf.mxu0
      %v4153 = vpop.f32.mrf.mxu0
      %v4154 = vadd.f32 0.0, %v4153
      %v4155 = vpop.f32.mrf.mxu0
      %4156 = vmatprep.mubr.bf16.mxu0 0
      %4157 = vmatmul.mubr.bf16.gmra.mxu0 %v3939
      %v4158 = vpop.f32.mrf.mxu0
      %v4159 = vadd.f32 0.0, %v4158
      %v4160 = vpop.f32.mrf.mxu0
      %v4161 = vpop.f32.mrf.mxu0
      %v4162 = vadd.f32 0.0, %v4161
      %v4163 = vpop.f32.mrf.mxu0
      %4164 = vmatprep.mubr.bf16.mxu0 0
      %4165 = vmatmul.mubr.bf16.gmra.mxu0 %v3941
      %v4166 = vpop.f32.mrf.mxu0
      %v4167 = vadd.f32 0.0, %v4166
      %v4168 = vpop.f32.mrf.mxu0
      %v4169 = vpop.f32.mrf.mxu0
      %v4170 = vadd.f32 0.0, %v4169
      %v4171 = vpop.f32.mrf.mxu0
      %4172 = vmatprep.mubr.bf16.mxu0 0
      %4173 = vmatmul.mubr.bf16.gmra.mxu0 %v3943
      %v4174 = vpop.f32.mrf.mxu0
      %v4175 = vadd.f32 0.0, %v4174
      %v4176 = vpop.f32.mrf.mxu0
      %v4177 = vpop.f32.mrf.mxu0
      %v4178 = vadd.f32 0.0, %v4177
      %v4179 = vpop.f32.mrf.mxu0
      %4180 = vmatprep.mubr.bf16.mxu0 0
      %4181 = vmatmul.mubr.bf16.gmra.mxu0 %v3945
      %v4182 = vpop.f32.mrf.mxu0
      %v4183 = vadd.f32 0.0, %v4182
      %v4184 = vpop.f32.mrf.mxu0
      %v4185 = vpop.f32.mrf.mxu0
      %v4186 = vadd.f32 0.0, %v4185
      %v4187 = vpop.f32.mrf.mxu0
      %4188 = vmatprep.mubr.bf16.mxu0 0
      %4189 = vmatmul.mubr.bf16.gmra.mxu0 %v3947
      %v4190 = vpop.f32.mrf.mxu0
      %v4191 = vadd.f32 0.0, %v4190
      %v4192 = vpop.f32.mrf.mxu0
      %v4193 = vpop.f32.mrf.mxu0
      %v4194 = vadd.f32 0.0, %v4193
      %v4195 = vpop.f32.mrf.mxu0
      %4196 = vmatprep.mubr.bf16.mxu0 0
      %4197 = vmatmul.mubr.bf16.gmra.mxu0 %v3949
      %v4198 = vpop.f32.mrf.mxu0
      %v4199 = vadd.f32 0.0, %v4198
      %v4200 = vpop.f32.mrf.mxu0
      %v4201 = vpop.f32.mrf.mxu0
      %v4202 = vadd.f32 0.0, %v4201
      %v4203 = vpop.f32.mrf.mxu0
      %4204 = vmatprep.mubr.bf16.mxu0 0
      %4205 = vmatmul.mubr.bf16.gmra.mxu0 %v3951
      %v4206 = vpop.f32.mrf.mxu0
      %v4207 = vadd.f32 0.0, %v4206
      %v4208 = vpop.f32.mrf.mxu0
      %v4209 = vpop.f32.mrf.mxu0
      %v4210 = vadd.f32 0.0, %v4209
      %v4211 = vpop.f32.mrf.mxu0
      %4212 = vdwg.mxu0
      %v4213 = vadd.f32 %v3850, %v4055
      %v4214 = vadd.f32 %v3851, %v4058
      %v4215 = vadd.f32 %v3852, %v4063
      %v4216 = vadd.f32 %v3853, %v4066
      %v4217 = vadd.f32 %v3854, %v4071
      %v4218 = vadd.f32 %v3855, %v4074
      %v4219 = vadd.f32 %v3856, %v4079
      %v4220 = vadd.f32 %v3857, %v4082
      %v4221 = vadd.f32 %v3858, %v4087
      %v4222 = vadd.f32 %v3859, %v4090
      %v4223 = vadd.f32 %v3860, %v4095
      %v4224 = vadd.f32 %v3861, %v4098
      %v4225 = vadd.f32 %v3862, %v4103
      %v4226 = vadd.f32 %v3863, %v4106
      %v4227 = vadd.f32 %v3864, %v4111
      %v4228 = vadd.f32 %v3865, %v4114
      %v4229 = vadd.f32 %v3866, %v4119
      %v4230 = vadd.f32 %v3867, %v4122
      %v4231 = vadd.f32 %v3868, %v4127
      %v4232 = vadd.f32 %v3869, %v4130
      %v4233 = vadd.f32 %v3870, %v4135
      %v4234 = vadd.f32 %v3871, %v4138
      %v4235 = vadd.f32 %v3872, %v4143
      %v4236 = vadd.f32 %v3873, %v4146
      %v4237 = vadd.f32 %v3874, %v4151
      %v4238 = vadd.f32 %v3875, %v4154
      %v4239 = vadd.f32 %v3876, %v4159
      %v4240 = vadd.f32 %v3877, %v4162
      %v4241 = vadd.f32 %v3878, %v4167
      %v4242 = vadd.f32 %v3879, %v4170
      %v4243 = vadd.f32 %v3880, %v4175
      %v4244 = vadd.f32 %v3881, %v4178
      %v4245 = vadd.f32 %v3882, %v4183
      %v4246 = vadd.f32 %v3883, %v4186
      %v4247 = vadd.f32 %v3884, %v4191
      %v4248 = vadd.f32 %v3885, %v4194
      %v4249 = vadd.f32 %v3886, %v4199
      %v4250 = vadd.f32 %v3887, %v4202
      %v4251 = vadd.f32 %v3888, %v4207
      %v4252 = vadd.f32 %v3889, %v4210
      %vm4253 = vcmp.ge.f32.partialorder %v4213, 0.0
      %vm4254 = vcmp.ge.f32.partialorder %v4214, 0.0
      %vm4255 = vcmp.ge.f32.partialorder %v4215, 0.0
      %vm4256 = vcmp.ge.f32.partialorder %v4216, 0.0
      %vm4257 = vcmp.ge.f32.partialorder %v4217, 0.0
      %vm4258 = vcmp.ge.f32.partialorder %v4218, 0.0
      %vm4259 = vcmp.ge.f32.partialorder %v4219, 0.0
      %vm4260 = vcmp.ge.f32.partialorder %v4220, 0.0
      %vm4261 = vcmp.ge.f32.partialorder %v4221, 0.0
      %vm4262 = vcmp.ge.f32.partialorder %v4222, 0.0
      %vm4263 = vcmp.ge.f32.partialorder %v4223, 0.0
      %vm4264 = vcmp.ge.f32.partialorder %v4224, 0.0
      %vm4265 = vcmp.ge.f32.partialorder %v4225, 0.0
      %vm4266 = vcmp.ge.f32.partialorder %v4226, 0.0
      %vm4267 = vcmp.ge.f32.partialorder %v4227, 0.0
      %vm4268 = vcmp.ge.f32.partialorder %v4228, 0.0
      %vm4269 = vcmp.ge.f32.partialorder %v4229, 0.0
      %vm4270 = vcmp.ge.f32.partialorder %v4230, 0.0
      %vm4271 = vcmp.ge.f32.partialorder %v4231, 0.0
      %vm4272 = vcmp.ge.f32.partialorder %v4232, 0.0
      %vm4273 = vcmp.ge.f32.partialorder %v4233, 0.0
      %vm4274 = vcmp.ge.f32.partialorder %v4234, 0.0
      %vm4275 = vcmp.ge.f32.partialorder %v4235, 0.0
      %vm4276 = vcmp.ge.f32.partialorder %v4236, 0.0
      %vm4277 = vcmp.ge.f32.partialorder %v4237, 0.0
      %vm4278 = vcmp.ge.f32.partialorder %v4238, 0.0
      %vm4279 = vcmp.ge.f32.partialorder %v4239, 0.0
      %vm4280 = vcmp.ge.f32.partialorder %v4240, 0.0
      %vm4281 = vcmp.ge.f32.partialorder %v4241, 0.0
      %vm4282 = vcmp.ge.f32.partialorder %v4242, 0.0
      %vm4283 = vcmp.ge.f32.partialorder %v4243, 0.0
      %vm4284 = vcmp.ge.f32.partialorder %v4244, 0.0
      %vm4285 = vcmp.ge.f32.partialorder %v4245, 0.0
      %vm4286 = vcmp.ge.f32.partialorder %v4246, 0.0
      %vm4287 = vcmp.ge.f32.partialorder %v4247, 0.0
      %vm4288 = vcmp.ge.f32.partialorder %v4248, 0.0
      %vm4289 = vcmp.ge.f32.partialorder %v4249, 0.0
      %vm4290 = vcmp.ge.f32.partialorder %v4250, 0.0
      %vm4291 = vcmp.ge.f32.partialorder %v4251, 0.0
      %vm4292 = vcmp.ge.f32.partialorder %v4252, 0.0
      %v4293 = vmul.f32 %v4213, 0.2
      %v4294 = vmul.f32 %v4214, 0.2
      %v4295 = vmul.f32 %v4215, 0.2
      %v4296 = vmul.f32 %v4216, 0.2
      %v4297 = vmul.f32 %v4217, 0.2
      %v4298 = vmul.f32 %v4218, 0.2
      %v4299 = vmul.f32 %v4219, 0.2
      %v4300 = vmul.f32 %v4220, 0.2
      %v4301 = vmul.f32 %v4221, 0.2
      %v4302 = vmul.f32 %v4222, 0.2
      %v4303 = vmul.f32 %v4223, 0.2
      %v4304 = vmul.f32 %v4224, 0.2
      %v4305 = vmul.f32 %v4225, 0.2
      %v4306 = vmul.f32 %v4226, 0.2
      %v4307 = vmul.f32 %v4227, 0.2
      %v4308 = vmul.f32 %v4228, 0.2
      %v4309 = vmul.f32 %v4229, 0.2
      %v4310 = vmul.f32 %v4230, 0.2
      %v4311 = vmul.f32 %v4231, 0.2
      %v4312 = vmul.f32 %v4232, 0.2
      %v4313 = vmul.f32 %v4233, 0.2
      %v4314 = vmul.f32 %v4234, 0.2
      %v4315 = vmul.f32 %v4235, 0.2
      %v4316 = vmul.f32 %v4236, 0.2
      %v4317 = vmul.f32 %v4237, 0.2
      %v4318 = vmul.f32 %v4238, 0.2
      %v4319 = vmul.f32 %v4239, 0.2
      %v4320 = vmul.f32 %v4240, 0.2
      %v4321 = vmul.f32 %v4241, 0.2
      %v4322 = vmul.f32 %v4242, 0.2
      %v4323 = vmul.f32 %v4243, 0.2
      %v4324 = vmul.f32 %v4244, 0.2
      %v4325 = vmul.f32 %v4245, 0.2
      %v4326 = vmul.f32 %v4246, 0.2
      %v4327 = vmul.f32 %v4247, 0.2
      %v4328 = vmul.f32 %v4248, 0.2
      %v4329 = vmul.f32 %v4249, 0.2
      %v4330 = vmul.f32 %v4250, 0.2
      %v4331 = vmul.f32 %v4251, 0.2
      %v4332 = vmul.f32 %v4252, 0.2
      %v4333 = vsel %vm4253, %v4213, %v4293
      %v4334 = vsel %vm4254, %v4214, %v4294
      %v4335 = vsel %vm4255, %v4215, %v4295
      %v4336 = vsel %vm4256, %v4216, %v4296
      %v4337 = vsel %vm4257, %v4217, %v4297
      %v4338 = vsel %vm4258, %v4218, %v4298
      %v4339 = vsel %vm4259, %v4219, %v4299
      %v4340 = vsel %vm4260, %v4220, %v4300
      %v4341 = vsel %vm4261, %v4221, %v4301
      %v4342 = vsel %vm4262, %v4222, %v4302
      %v4343 = vsel %vm4263, %v4223, %v4303
      %v4344 = vsel %vm4264, %v4224, %v4304
      %v4345 = vsel %vm4265, %v4225, %v4305
      %v4346 = vsel %vm4266, %v4226, %v4306
      %v4347 = vsel %vm4267, %v4227, %v4307
      %v4348 = vsel %vm4268, %v4228, %v4308
      %v4349 = vsel %vm4269, %v4229, %v4309
      %v4350 = vsel %vm4270, %v4230, %v4310
      %v4351 = vsel %vm4271, %v4231, %v4311
      %v4352 = vsel %vm4272, %v4232, %v4312
      %v4353 = vsel %vm4273, %v4233, %v4313
      %v4354 = vsel %vm4274, %v4234, %v4314
      %v4355 = vsel %vm4275, %v4235, %v4315
      %v4356 = vsel %vm4276, %v4236, %v4316
      %v4357 = vsel %vm4277, %v4237, %v4317
      %v4358 = vsel %vm4278, %v4238, %v4318
      %v4359 = vsel %vm4279, %v4239, %v4319
      %v4360 = vsel %vm4280, %v4240, %v4320
      %v4361 = vsel %vm4281, %v4241, %v4321
      %v4362 = vsel %vm4282, %v4242, %v4322
      %v4363 = vsel %vm4283, %v4243, %v4323
      %v4364 = vsel %vm4284, %v4244, %v4324
      %v4365 = vsel %vm4285, %v4245, %v4325
      %v4366 = vsel %vm4286, %v4246, %v4326
      %v4367 = vsel %vm4287, %v4247, %v4327
      %v4368 = vsel %vm4288, %v4248, %v4328
      %v4369 = vsel %vm4289, %v4249, %v4329
      %v4370 = vsel %vm4290, %v4250, %v4330
      %v4371 = vsel %vm4291, %v4251, %v4331
      %v4372 = vsel %vm4292, %v4252, %v4332
      %v4373 = vmul.f32 %v4333, 1.4
      %v4374 = vmul.f32 %v4334, 1.4
      %v4375 = vmul.f32 %v4335, 1.4
      %v4376 = vmul.f32 %v4336, 1.4
      %v4377 = vmul.f32 %v4337, 1.4
      %v4378 = vmul.f32 %v4338, 1.4
      %v4379 = vmul.f32 %v4339, 1.4
      %v4380 = vmul.f32 %v4340, 1.4
      %v4381 = vmul.f32 %v4341, 1.4
      %v4382 = vmul.f32 %v4342, 1.4
      %v4383 = vmul.f32 %v4343, 1.4
      %v4384 = vmul.f32 %v4344, 1.4
      %v4385 = vmul.f32 %v4345, 1.4
      %v4386 = vmul.f32 %v4346, 1.4
      %v4387 = vmul.f32 %v4347, 1.4
      %v4388 = vmul.f32 %v4348, 1.4
      %v4389 = vmul.f32 %v4349, 1.4
      %v4390 = vmul.f32 %v4350, 1.4
      %v4391 = vmul.f32 %v4351, 1.4
      %v4392 = vmul.f32 %v4352, 1.4
      %v4393 = vmul.f32 %v4353, 1.4
      %v4394 = vmul.f32 %v4354, 1.4
      %v4395 = vmul.f32 %v4355, 1.4
      %v4396 = vmul.f32 %v4356, 1.4
      %v4397 = vmul.f32 %v4357, 1.4
      %v4398 = vmul.f32 %v4358, 1.4
      %v4399 = vmul.f32 %v4359, 1.4
      %v4400 = vmul.f32 %v4360, 1.4
      %v4401 = vmul.f32 %v4361, 1.4
      %v4402 = vmul.f32 %v4362, 1.4
      %v4403 = vmul.f32 %v4363, 1.4
      %v4404 = vmul.f32 %v4364, 1.4
      %v4405 = vmul.f32 %v4365, 1.4
      %v4406 = vmul.f32 %v4366, 1.4
      %v4407 = vmul.f32 %v4367, 1.4
      %v4408 = vmul.f32 %v4368, 1.4
      %v4409 = vmul.f32 %v4369, 1.4
      %v4410 = vmul.f32 %v4370, 1.4
      %v4411 = vmul.f32 %v4371, 1.4
      %v4412 = vmul.f32 %v4372, 1.4
      %v4453 = vcombine.high %v4373, %v4373
      %v4454 = vcombine.high %v4374, %v4374
      %v4455 = vcombine.high %v4375, %v4375
      %v4456 = vcombine.high %v4376, %v4376
      %v4457 = vcombine.high %v4377, %v4377
      %v4458 = vcombine.high %v4378, %v4378
      %v4459 = vcombine.high %v4379, %v4379
      %v4460 = vcombine.high %v4380, %v4380
      %v4461 = vcombine.high %v4381, %v4381
      %v4462 = vcombine.high %v4382, %v4382
      %v4463 = vcombine.high %v4383, %v4383
      %v4464 = vcombine.high %v4384, %v4384
      %v4465 = vcombine.high %v4385, %v4385
      %v4466 = vcombine.high %v4386, %v4386
      %v4467 = vcombine.high %v4387, %v4387
      %v4468 = vcombine.high %v4388, %v4388
      %v4469 = vcombine.high %v4389, %v4389
      %v4470 = vcombine.high %v4390, %v4390
      %v4471 = vcombine.high %v4391, %v4391
      %v4472 = vcombine.high %v4392, %v4392
      %v4473 = vcombine.high %v4393, %v4393
      %v4474 = vcombine.high %v4394, %v4394
      %v4475 = vcombine.high %v4395, %v4395
      %v4476 = vcombine.high %v4396, %v4396
      %v4477 = vcombine.high %v4397, %v4397
      %v4478 = vcombine.high %v4398, %v4398
      %v4479 = vcombine.high %v4399, %v4399
      %v4480 = vcombine.high %v4400, %v4400
      %v4481 = vcombine.high %v4401, %v4401
      %v4482 = vcombine.high %v4402, %v4402
      %v4483 = vcombine.high %v4403, %v4403
      %v4484 = vcombine.high %v4404, %v4404
      %v4485 = vcombine.high %v4405, %v4405
      %v4486 = vcombine.high %v4406, %v4406
      %v4487 = vcombine.high %v4407, %v4407
      %v4488 = vcombine.high %v4408, %v4408
      %v4489 = vcombine.high %v4409, %v4409
      %v4490 = vcombine.high %v4410, %v4410
      %v4491 = vcombine.high %v4411, %v4411
      %v4492 = vcombine.high %v4412, %v4412
      %v4533 = vadd.f32 %v4373, %v4455
      %v4534 = vadd.f32 %v4453, %v4376
      %v4535 = vadd.f32 %v4374, %v4456
      %v4536 = vadd.f32 %v4454, %v4377
      %v4537 = vadd.f32 %v4375, %v4457
      %v4538 = vadd.f32 %v4378, %v4460
      %v4539 = vadd.f32 %v4458, %v4381
      %v4540 = vadd.f32 %v4379, %v4461
      %v4541 = vadd.f32 %v4459, %v4382
      %v4542 = vadd.f32 %v4380, %v4462
      %v4543 = vadd.f32 %v4383, %v4465
      %v4544 = vadd.f32 %v4463, %v4386
      %v4545 = vadd.f32 %v4384, %v4466
      %v4546 = vadd.f32 %v4464, %v4387
      %v4547 = vadd.f32 %v4385, %v4467
      %v4548 = vadd.f32 %v4388, %v4470
      %v4549 = vadd.f32 %v4468, %v4391
      %v4550 = vadd.f32 %v4389, %v4471
      %v4551 = vadd.f32 %v4469, %v4392
      %v4552 = vadd.f32 %v4390, %v4472
      %v4553 = vadd.f32 %v4393, %v4475
      %v4554 = vadd.f32 %v4473, %v4396
      %v4555 = vadd.f32 %v4394, %v4476
      %v4556 = vadd.f32 %v4474, %v4397
      %v4557 = vadd.f32 %v4395, %v4477
      %v4558 = vadd.f32 %v4398, %v4480
      %v4559 = vadd.f32 %v4478, %v4401
      %v4560 = vadd.f32 %v4399, %v4481
      %v4561 = vadd.f32 %v4479, %v4402
      %v4562 = vadd.f32 %v4400, %v4482
      %v4563 = vadd.f32 %v4403, %v4485
      %v4564 = vadd.f32 %v4483, %v4406
      %v4565 = vadd.f32 %v4404, %v4486
      %v4566 = vadd.f32 %v4484, %v4407
      %v4567 = vadd.f32 %v4405, %v4487
      %v4568 = vadd.f32 %v4408, %v4490
      %v4569 = vadd.f32 %v4488, %v4411
      %v4570 = vadd.f32 %v4409, %v4491
      %v4571 = vadd.f32 %v4489, %v4412
      %v4572 = vadd.f32 %v4410, %v4492
      %v4614 = vunpack.c.l.s4 1983009808
      %v4615 = vunpack.c.0.s8 %v4614
      %v4616 = vlaneseq
      %v4617 = vshrl.u32 %v4616, 7
      %v4618 = vsub.s32 %v4615, %v4617
      %v4619 = vrot.slane %v4533, %v4618
      %v4620 = vcombine.high %v4619, %v4619
      %v4622 = vunpack.c.l.s4 1983009808
      %v4623 = vunpack.c.0.s8 %v4622
      %v4624 = vlaneseq
      %v4625 = vshrl.u32 %v4624, 7
      %v4626 = vsub.s32 %v4623, %v4625
      %v4627 = vrot.slane %v4534, %v4626
      %v4628 = vcombine.high %v4627, %v4627
      %v4630 = vunpack.c.l.s4 1983009808
      %v4631 = vunpack.c.0.s8 %v4630
      %v4632 = vlaneseq
      %v4633 = vshrl.u32 %v4632, 7
      %v4634 = vsub.s32 %v4631, %v4633
      %v4635 = vrot.slane %v4535, %v4634
      %v4636 = vcombine.high %v4635, %v4635
      %v4638 = vunpack.c.l.s4 1983009808
      %v4639 = vunpack.c.0.s8 %v4638
      %v4640 = vlaneseq
      %v4641 = vshrl.u32 %v4640, 7
      %v4642 = vsub.s32 %v4639, %v4641
      %v4643 = vrot.slane %v4536, %v4642
      %v4644 = vcombine.high %v4643, %v4643
      %v4646 = vunpack.c.l.s4 1983009808
      %v4647 = vunpack.c.0.s8 %v4646
      %v4648 = vlaneseq
      %v4649 = vshrl.u32 %v4648, 7
      %v4650 = vsub.s32 %v4647, %v4649
      %v4651 = vrot.slane %v4537, %v4650
      %v4652 = vcombine.high %v4651, %v4651
      %v4654 = vunpack.c.l.s4 1983009808
      %v4655 = vunpack.c.0.s8 %v4654
      %v4656 = vlaneseq
      %v4657 = vshrl.u32 %v4656, 7
      %v4658 = vsub.s32 %v4655, %v4657
      %v4659 = vrot.slane %v4538, %v4658
      %v4660 = vcombine.high %v4659, %v4659
      %v4662 = vunpack.c.l.s4 1983009808
      %v4663 = vunpack.c.0.s8 %v4662
      %v4664 = vlaneseq
      %v4665 = vshrl.u32 %v4664, 7
      %v4666 = vsub.s32 %v4663, %v4665
      %v4667 = vrot.slane %v4539, %v4666
      %v4668 = vcombine.high %v4667, %v4667
      %v4670 = vunpack.c.l.s4 1983009808
      %v4671 = vunpack.c.0.s8 %v4670
      %v4672 = vlaneseq
      %v4673 = vshrl.u32 %v4672, 7
      %v4674 = vsub.s32 %v4671, %v4673
      %v4675 = vrot.slane %v4540, %v4674
      %v4676 = vcombine.high %v4675, %v4675
      %v4678 = vunpack.c.l.s4 1983009808
      %v4679 = vunpack.c.0.s8 %v4678
      %v4680 = vlaneseq
      %v4681 = vshrl.u32 %v4680, 7
      %v4682 = vsub.s32 %v4679, %v4681
      %v4683 = vrot.slane %v4541, %v4682
      %v4684 = vcombine.high %v4683, %v4683
      %v4686 = vunpack.c.l.s4 1983009808
      %v4687 = vunpack.c.0.s8 %v4686
      %v4688 = vlaneseq
      %v4689 = vshrl.u32 %v4688, 7
      %v4690 = vsub.s32 %v4687, %v4689
      %v4691 = vrot.slane %v4542, %v4690
      %v4692 = vcombine.high %v4691, %v4691
      %v4694 = vunpack.c.l.s4 1983009808
      %v4695 = vunpack.c.0.s8 %v4694
      %v4696 = vlaneseq
      %v4697 = vshrl.u32 %v4696, 7
      %v4698 = vsub.s32 %v4695, %v4697
      %v4699 = vrot.slane %v4543, %v4698
      %v4700 = vcombine.high %v4699, %v4699
      %v4702 = vunpack.c.l.s4 1983009808
      %v4703 = vunpack.c.0.s8 %v4702
      %v4704 = vlaneseq
      %v4705 = vshrl.u32 %v4704, 7
      %v4706 = vsub.s32 %v4703, %v4705
      %v4707 = vrot.slane %v4544, %v4706
      %v4708 = vcombine.high %v4707, %v4707
      %v4710 = vunpack.c.l.s4 1983009808
      %v4711 = vunpack.c.0.s8 %v4710
      %v4712 = vlaneseq
      %v4713 = vshrl.u32 %v4712, 7
      %v4714 = vsub.s32 %v4711, %v4713
      %v4715 = vrot.slane %v4545, %v4714
      %v4716 = vcombine.high %v4715, %v4715
      %v4718 = vunpack.c.l.s4 1983009808
      %v4719 = vunpack.c.0.s8 %v4718
      %v4720 = vlaneseq
      %v4721 = vshrl.u32 %v4720, 7
      %v4722 = vsub.s32 %v4719, %v4721
      %v4723 = vrot.slane %v4546, %v4722
      %v4724 = vcombine.high %v4723, %v4723
      %v4726 = vunpack.c.l.s4 1983009808
      %v4727 = vunpack.c.0.s8 %v4726
      %v4728 = vlaneseq
      %v4729 = vshrl.u32 %v4728, 7
      %v4730 = vsub.s32 %v4727, %v4729
      %v4731 = vrot.slane %v4547, %v4730
      %v4732 = vcombine.high %v4731, %v4731
      %v4734 = vunpack.c.l.s4 1983009808
      %v4735 = vunpack.c.0.s8 %v4734
      %v4736 = vlaneseq
      %v4737 = vshrl.u32 %v4736, 7
      %v4738 = vsub.s32 %v4735, %v4737
      %v4739 = vrot.slane %v4548, %v4738
      %v4740 = vcombine.high %v4739, %v4739
      %v4742 = vunpack.c.l.s4 1983009808
      %v4743 = vunpack.c.0.s8 %v4742
      %v4744 = vlaneseq
      %v4745 = vshrl.u32 %v4744, 7
      %v4746 = vsub.s32 %v4743, %v4745
      %v4747 = vrot.slane %v4549, %v4746
      %v4748 = vcombine.high %v4747, %v4747
      %v4750 = vunpack.c.l.s4 1983009808
      %v4751 = vunpack.c.0.s8 %v4750
      %v4752 = vlaneseq
      %v4753 = vshrl.u32 %v4752, 7
      %v4754 = vsub.s32 %v4751, %v4753
      %v4755 = vrot.slane %v4550, %v4754
      %v4756 = vcombine.high %v4755, %v4755
      %v4758 = vunpack.c.l.s4 1983009808
      %v4759 = vunpack.c.0.s8 %v4758
      %v4760 = vlaneseq
      %v4761 = vshrl.u32 %v4760, 7
      %v4762 = vsub.s32 %v4759, %v4761
      %v4763 = vrot.slane %v4551, %v4762
      %v4764 = vcombine.high %v4763, %v4763
      %v4766 = vunpack.c.l.s4 1983009808
      %v4767 = vunpack.c.0.s8 %v4766
      %v4768 = vlaneseq
      %v4769 = vshrl.u32 %v4768, 7
      %v4770 = vsub.s32 %v4767, %v4769
      %v4771 = vrot.slane %v4552, %v4770
      %v4772 = vcombine.high %v4771, %v4771
      %v4774 = vunpack.c.l.s4 1983009808
      %v4775 = vunpack.c.0.s8 %v4774
      %v4776 = vlaneseq
      %v4777 = vshrl.u32 %v4776, 7
      %v4778 = vsub.s32 %v4775, %v4777
      %v4779 = vrot.slane %v4553, %v4778
      %v4780 = vcombine.high %v4779, %v4779
      %v4782 = vunpack.c.l.s4 1983009808
      %v4783 = vunpack.c.0.s8 %v4782
      %v4784 = vlaneseq
      %v4785 = vshrl.u32 %v4784, 7
      %v4786 = vsub.s32 %v4783, %v4785
      %v4787 = vrot.slane %v4554, %v4786
      %v4788 = vcombine.high %v4787, %v4787
      %v4790 = vunpack.c.l.s4 1983009808
      %v4791 = vunpack.c.0.s8 %v4790
      %v4792 = vlaneseq
      %v4793 = vshrl.u32 %v4792, 7
      %v4794 = vsub.s32 %v4791, %v4793
      %v4795 = vrot.slane %v4555, %v4794
      %v4796 = vcombine.high %v4795, %v4795
      %v4798 = vunpack.c.l.s4 1983009808
      %v4799 = vunpack.c.0.s8 %v4798
      %v4800 = vlaneseq
      %v4801 = vshrl.u32 %v4800, 7
      %v4802 = vsub.s32 %v4799, %v4801
      %v4803 = vrot.slane %v4556, %v4802
      %v4804 = vcombine.high %v4803, %v4803
      %v4806 = vunpack.c.l.s4 1983009808
      %v4807 = vunpack.c.0.s8 %v4806
      %v4808 = vlaneseq
      %v4809 = vshrl.u32 %v4808, 7
      %v4810 = vsub.s32 %v4807, %v4809
      %v4811 = vrot.slane %v4557, %v4810
      %v4812 = vcombine.high %v4811, %v4811
      %v4814 = vunpack.c.l.s4 1983009808
      %v4815 = vunpack.c.0.s8 %v4814
      %v4816 = vlaneseq
      %v4817 = vshrl.u32 %v4816, 7
      %v4818 = vsub.s32 %v4815, %v4817
      %v4819 = vrot.slane %v4558, %v4818
      %v4820 = vcombine.high %v4819, %v4819
      %v4822 = vunpack.c.l.s4 1983009808
      %v4823 = vunpack.c.0.s8 %v4822
      %v4824 = vlaneseq
      %v4825 = vshrl.u32 %v4824, 7
      %v4826 = vsub.s32 %v4823, %v4825
      %v4827 = vrot.slane %v4559, %v4826
      %v4828 = vcombine.high %v4827, %v4827
      %v4830 = vunpack.c.l.s4 1983009808
      %v4831 = vunpack.c.0.s8 %v4830
      %v4832 = vlaneseq
      %v4833 = vshrl.u32 %v4832, 7
      %v4834 = vsub.s32 %v4831, %v4833
      %v4835 = vrot.slane %v4560, %v4834
      %v4836 = vcombine.high %v4835, %v4835
      %v4838 = vunpack.c.l.s4 1983009808
      %v4839 = vunpack.c.0.s8 %v4838
      %v4840 = vlaneseq
      %v4841 = vshrl.u32 %v4840, 7
      %v4842 = vsub.s32 %v4839, %v4841
      %v4843 = vrot.slane %v4561, %v4842
      %v4844 = vcombine.high %v4843, %v4843
      %v4846 = vunpack.c.l.s4 1983009808
      %v4847 = vunpack.c.0.s8 %v4846
      %v4848 = vlaneseq
      %v4849 = vshrl.u32 %v4848, 7
      %v4850 = vsub.s32 %v4847, %v4849
      %v4851 = vrot.slane %v4562, %v4850
      %v4852 = vcombine.high %v4851, %v4851
      %v4854 = vunpack.c.l.s4 1983009808
      %v4855 = vunpack.c.0.s8 %v4854
      %v4856 = vlaneseq
      %v4857 = vshrl.u32 %v4856, 7
      %v4858 = vsub.s32 %v4855, %v4857
      %v4859 = vrot.slane %v4563, %v4858
      %v4860 = vcombine.high %v4859, %v4859
      %v4862 = vunpack.c.l.s4 1983009808
      %v4863 = vunpack.c.0.s8 %v4862
      %v4864 = vlaneseq
      %v4865 = vshrl.u32 %v4864, 7
      %v4866 = vsub.s32 %v4863, %v4865
      %v4867 = vrot.slane %v4564, %v4866
      %v4868 = vcombine.high %v4867, %v4867
      %v4870 = vunpack.c.l.s4 1983009808
      %v4871 = vunpack.c.0.s8 %v4870
      %v4872 = vlaneseq
      %v4873 = vshrl.u32 %v4872, 7
      %v4874 = vsub.s32 %v4871, %v4873
      %v4875 = vrot.slane %v4565, %v4874
      %v4876 = vcombine.high %v4875, %v4875
      %v4878 = vunpack.c.l.s4 1983009808
      %v4879 = vunpack.c.0.s8 %v4878
      %v4880 = vlaneseq
      %v4881 = vshrl.u32 %v4880, 7
      %v4882 = vsub.s32 %v4879, %v4881
      %v4883 = vrot.slane %v4566, %v4882
      %v4884 = vcombine.high %v4883, %v4883
      %v4886 = vunpack.c.l.s4 1983009808
      %v4887 = vunpack.c.0.s8 %v4886
      %v4888 = vlaneseq
      %v4889 = vshrl.u32 %v4888, 7
      %v4890 = vsub.s32 %v4887, %v4889
      %v4891 = vrot.slane %v4567, %v4890
      %v4892 = vcombine.high %v4891, %v4891
      %v4894 = vunpack.c.l.s4 1983009808
      %v4895 = vunpack.c.0.s8 %v4894
      %v4896 = vlaneseq
      %v4897 = vshrl.u32 %v4896, 7
      %v4898 = vsub.s32 %v4895, %v4897
      %v4899 = vrot.slane %v4568, %v4898
      %v4900 = vcombine.high %v4899, %v4899
      %v4902 = vunpack.c.l.s4 1983009808
      %v4903 = vunpack.c.0.s8 %v4902
      %v4904 = vlaneseq
      %v4905 = vshrl.u32 %v4904, 7
      %v4906 = vsub.s32 %v4903, %v4905
      %v4907 = vrot.slane %v4569, %v4906
      %v4908 = vcombine.high %v4907, %v4907
      %v4910 = vunpack.c.l.s4 1983009808
      %v4911 = vunpack.c.0.s8 %v4910
      %v4912 = vlaneseq
      %v4913 = vshrl.u32 %v4912, 7
      %v4914 = vsub.s32 %v4911, %v4913
      %v4915 = vrot.slane %v4570, %v4914
      %v4916 = vcombine.high %v4915, %v4915
      %v4918 = vunpack.c.l.s4 1983009808
      %v4919 = vunpack.c.0.s8 %v4918
      %v4920 = vlaneseq
      %v4921 = vshrl.u32 %v4920, 7
      %v4922 = vsub.s32 %v4919, %v4921
      %v4923 = vrot.slane %v4571, %v4922
      %v4924 = vcombine.high %v4923, %v4923
      %v4926 = vunpack.c.l.s4 1983009808
      %v4927 = vunpack.c.0.s8 %v4926
      %v4928 = vlaneseq
      %v4929 = vshrl.u32 %v4928, 7
      %v4930 = vsub.s32 %v4927, %v4929
      %v4931 = vrot.slane %v4572, %v4930
      %v4932 = vcombine.high %v4931, %v4931
      %v5013 = vrot.slane %v4619, 7
      %v5014 = vrot.slane %v5013, 2
      %v5015 = vrot.slane %v4620, 7
      %v5016 = vrot.slane %v5015, 2
      %v5017 = vrot.slane %v4627, 7
      %v5018 = vrot.slane %v5017, 2
      %v5019 = vrot.slane %v4628, 7
      %v5020 = vrot.slane %v5019, 2
      %v5021 = vrot.slane %v4635, 7
      %v5022 = vrot.slane %v5021, 2
      %v5023 = vrot.slane %v4636, 7
      %v5024 = vrot.slane %v5023, 2
      %v5025 = vrot.slane %v4643, 7
      %v5026 = vrot.slane %v5025, 2
      %v5027 = vrot.slane %v4644, 7
      %v5028 = vrot.slane %v5027, 2
      %v5029 = vrot.slane %v4651, 7
      %v5030 = vrot.slane %v5029, 2
      %v5031 = vrot.slane %v4652, 7
      %v5032 = vrot.slane %v5031, 2
      %v5033 = vrot.slane %v4659, 7
      %v5034 = vrot.slane %v5033, 2
      %v5035 = vrot.slane %v4660, 7
      %v5036 = vrot.slane %v5035, 2
      %v5037 = vrot.slane %v4667, 7
      %v5038 = vrot.slane %v5037, 2
      %v5039 = vrot.slane %v4668, 7
      %v5040 = vrot.slane %v5039, 2
      %v5041 = vrot.slane %v4675, 7
      %v5042 = vrot.slane %v5041, 2
      %v5043 = vrot.slane %v4676, 7
      %v5044 = vrot.slane %v5043, 2
      %v5045 = vrot.slane %v4683, 7
      %v5046 = vrot.slane %v5045, 2
      %v5047 = vrot.slane %v4684, 7
      %v5048 = vrot.slane %v5047, 2
      %v5049 = vrot.slane %v4691, 7
      %v5050 = vrot.slane %v5049, 2
      %v5051 = vrot.slane %v4692, 7
      %v5052 = vrot.slane %v5051, 2
      %v5053 = vrot.slane %v4699, 7
      %v5054 = vrot.slane %v5053, 2
      %v5055 = vrot.slane %v4700, 7
      %v5056 = vrot.slane %v5055, 2
      %v5057 = vrot.slane %v4707, 7
      %v5058 = vrot.slane %v5057, 2
      %v5059 = vrot.slane %v4708, 7
      %v5060 = vrot.slane %v5059, 2
      %v5061 = vrot.slane %v4715, 7
      %v5062 = vrot.slane %v5061, 2
      %v5063 = vrot.slane %v4716, 7
      %v5064 = vrot.slane %v5063, 2
      %v5065 = vrot.slane %v4723, 7
      %v5066 = vrot.slane %v5065, 2
      %v5067 = vrot.slane %v4724, 7
      %v5068 = vrot.slane %v5067, 2
      %v5069 = vrot.slane %v4731, 7
      %v5070 = vrot.slane %v5069, 2
      %v5071 = vrot.slane %v4732, 7
      %v5072 = vrot.slane %v5071, 2
      %v5073 = vrot.slane %v4739, 7
      %v5074 = vrot.slane %v5073, 2
      %v5075 = vrot.slane %v4740, 7
      %v5076 = vrot.slane %v5075, 2
      %v5077 = vrot.slane %v4747, 7
      %v5078 = vrot.slane %v5077, 2
      %v5079 = vrot.slane %v4748, 7
      %v5080 = vrot.slane %v5079, 2
      %v5081 = vrot.slane %v4755, 7
      %v5082 = vrot.slane %v5081, 2
      %v5083 = vrot.slane %v4756, 7
      %v5084 = vrot.slane %v5083, 2
      %v5085 = vrot.slane %v4763, 7
      %v5086 = vrot.slane %v5085, 2
      %v5087 = vrot.slane %v4764, 7
      %v5088 = vrot.slane %v5087, 2
      %v5089 = vrot.slane %v4771, 7
      %v5090 = vrot.slane %v5089, 2
      %v5091 = vrot.slane %v4772, 7
      %v5092 = vrot.slane %v5091, 2
      %v5093 = vrot.slane %v4779, 7
      %v5094 = vrot.slane %v5093, 2
      %v5095 = vrot.slane %v4780, 7
      %v5096 = vrot.slane %v5095, 2
      %v5097 = vrot.slane %v4787, 7
      %v5098 = vrot.slane %v5097, 2
      %v5099 = vrot.slane %v4788, 7
      %v5100 = vrot.slane %v5099, 2
      %v5101 = vrot.slane %v4795, 7
      %v5102 = vrot.slane %v5101, 2
      %v5103 = vrot.slane %v4796, 7
      %v5104 = vrot.slane %v5103, 2
      %v5105 = vrot.slane %v4803, 7
      %v5106 = vrot.slane %v5105, 2
      %v5107 = vrot.slane %v4804, 7
      %v5108 = vrot.slane %v5107, 2
      %v5109 = vrot.slane %v4811, 7
      %v5110 = vrot.slane %v5109, 2
      %v5111 = vrot.slane %v4812, 7
      %v5112 = vrot.slane %v5111, 2
      %v5113 = vrot.slane %v4819, 7
      %v5114 = vrot.slane %v5113, 2
      %v5115 = vrot.slane %v4820, 7
      %v5116 = vrot.slane %v5115, 2
      %v5117 = vrot.slane %v4827, 7
      %v5118 = vrot.slane %v5117, 2
      %v5119 = vrot.slane %v4828, 7
      %v5120 = vrot.slane %v5119, 2
      %v5121 = vrot.slane %v4835, 7
      %v5122 = vrot.slane %v5121, 2
      %v5123 = vrot.slane %v4836, 7
      %v5124 = vrot.slane %v5123, 2
      %v5125 = vrot.slane %v4843, 7
      %v5126 = vrot.slane %v5125, 2
      %v5127 = vrot.slane %v4844, 7
      %v5128 = vrot.slane %v5127, 2
      %v5129 = vrot.slane %v4851, 7
      %v5130 = vrot.slane %v5129, 2
      %v5131 = vrot.slane %v4852, 7
      %v5132 = vrot.slane %v5131, 2
      %v5133 = vrot.slane %v4859, 7
      %v5134 = vrot.slane %v5133, 2
      %v5135 = vrot.slane %v4860, 7
      %v5136 = vrot.slane %v5135, 2
      %v5137 = vrot.slane %v4867, 7
      %v5138 = vrot.slane %v5137, 2
      %v5139 = vrot.slane %v4868, 7
      %v5140 = vrot.slane %v5139, 2
      %v5141 = vrot.slane %v4875, 7
      %v5142 = vrot.slane %v5141, 2
      %v5143 = vrot.slane %v4876, 7
      %v5144 = vrot.slane %v5143, 2
      %v5145 = vrot.slane %v4883, 7
      %v5146 = vrot.slane %v5145, 2
      %v5147 = vrot.slane %v4884, 7
      %v5148 = vrot.slane %v5147, 2
      %v5149 = vrot.slane %v4891, 7
      %v5150 = vrot.slane %v5149, 2
      %v5151 = vrot.slane %v4892, 7
      %v5152 = vrot.slane %v5151, 2
      %v5153 = vrot.slane %v4899, 7
      %v5154 = vrot.slane %v5153, 2
      %v5155 = vrot.slane %v4900, 7
      %v5156 = vrot.slane %v5155, 2
      %v5157 = vrot.slane %v4907, 7
      %v5158 = vrot.slane %v5157, 2
      %v5159 = vrot.slane %v4908, 7
      %v5160 = vrot.slane %v5159, 2
      %v5161 = vrot.slane %v4915, 7
      %v5162 = vrot.slane %v5161, 2
      %v5163 = vrot.slane %v4916, 7
      %v5164 = vrot.slane %v5163, 2
      %v5165 = vrot.slane %v4923, 7
      %v5166 = vrot.slane %v5165, 2
      %v5167 = vrot.slane %v4924, 7
      %v5168 = vrot.slane %v5167, 2
      %v5169 = vrot.slane %v4931, 7
      %v5170 = vrot.slane %v5169, 2
      %v5171 = vrot.slane %v4932, 7
      %v5172 = vrot.slane %v5171, 2
      %v5253 = vadd.f32 %v4619, %v5014
      %v5254 = vadd.f32 %v4620, %v5016
      %v5255 = vadd.f32 %v4627, %v5018
      %v5256 = vadd.f32 %v4628, %v5020
      %v5257 = vadd.f32 %v4635, %v5022
      %v5258 = vadd.f32 %v4636, %v5024
      %v5259 = vadd.f32 %v4643, %v5026
      %v5260 = vadd.f32 %v4644, %v5028
      %v5261 = vadd.f32 %v4651, %v5030
      %v5262 = vadd.f32 %v4652, %v5032
      %v5263 = vadd.f32 %v4659, %v5034
      %v5264 = vadd.f32 %v4660, %v5036
      %v5265 = vadd.f32 %v4667, %v5038
      %v5266 = vadd.f32 %v4668, %v5040
      %v5267 = vadd.f32 %v4675, %v5042
      %v5268 = vadd.f32 %v4676, %v5044
      %v5269 = vadd.f32 %v4683, %v5046
      %v5270 = vadd.f32 %v4684, %v5048
      %v5271 = vadd.f32 %v4691, %v5050
      %v5272 = vadd.f32 %v4692, %v5052
      %v5273 = vadd.f32 %v4699, %v5054
      %v5274 = vadd.f32 %v4700, %v5056
      %v5275 = vadd.f32 %v4707, %v5058
      %v5276 = vadd.f32 %v4708, %v5060
      %v5277 = vadd.f32 %v4715, %v5062
      %v5278 = vadd.f32 %v4716, %v5064
      %v5279 = vadd.f32 %v4723, %v5066
      %v5280 = vadd.f32 %v4724, %v5068
      %v5281 = vadd.f32 %v4731, %v5070
      %v5282 = vadd.f32 %v4732, %v5072
      %v5283 = vadd.f32 %v4739, %v5074
      %v5284 = vadd.f32 %v4740, %v5076
      %v5285 = vadd.f32 %v4747, %v5078
      %v5286 = vadd.f32 %v4748, %v5080
      %v5287 = vadd.f32 %v4755, %v5082
      %v5288 = vadd.f32 %v4756, %v5084
      %v5289 = vadd.f32 %v4763, %v5086
      %v5290 = vadd.f32 %v4764, %v5088
      %v5291 = vadd.f32 %v4771, %v5090
      %v5292 = vadd.f32 %v4772, %v5092
      %v5293 = vadd.f32 %v4779, %v5094
      %v5294 = vadd.f32 %v4780, %v5096
      %v5295 = vadd.f32 %v4787, %v5098
      %v5296 = vadd.f32 %v4788, %v5100
      %v5297 = vadd.f32 %v4795, %v5102
      %v5298 = vadd.f32 %v4796, %v5104
      %v5299 = vadd.f32 %v4803, %v5106
      %v5300 = vadd.f32 %v4804, %v5108
      %v5301 = vadd.f32 %v4811, %v5110
      %v5302 = vadd.f32 %v4812, %v5112
      %v5303 = vadd.f32 %v4819, %v5114
      %v5304 = vadd.f32 %v4820, %v5116
      %v5305 = vadd.f32 %v4827, %v5118
      %v5306 = vadd.f32 %v4828, %v5120
      %v5307 = vadd.f32 %v4835, %v5122
      %v5308 = vadd.f32 %v4836, %v5124
      %v5309 = vadd.f32 %v4843, %v5126
      %v5310 = vadd.f32 %v4844, %v5128
      %v5311 = vadd.f32 %v4851, %v5130
      %v5312 = vadd.f32 %v4852, %v5132
      %v5313 = vadd.f32 %v4859, %v5134
      %v5314 = vadd.f32 %v4860, %v5136
      %v5315 = vadd.f32 %v4867, %v5138
      %v5316 = vadd.f32 %v4868, %v5140
      %v5317 = vadd.f32 %v4875, %v5142
      %v5318 = vadd.f32 %v4876, %v5144
      %v5319 = vadd.f32 %v4883, %v5146
      %v5320 = vadd.f32 %v4884, %v5148
      %v5321 = vadd.f32 %v4891, %v5150
      %v5322 = vadd.f32 %v4892, %v5152
      %v5323 = vadd.f32 %v4899, %v5154
      %v5324 = vadd.f32 %v4900, %v5156
      %v5325 = vadd.f32 %v4907, %v5158
      %v5326 = vadd.f32 %v4908, %v5160
      %v5327 = vadd.f32 %v4915, %v5162
      %v5328 = vadd.f32 %v4916, %v5164
      %v5329 = vadd.f32 %v4923, %v5166
      %v5330 = vadd.f32 %v4924, %v5168
      %v5331 = vadd.f32 %v4931, %v5170
      %v5332 = vadd.f32 %v4932, %v5172
      %v5333 = vmul.f32 %v5253, 0.25
      %v5334 = vmul.f32 %v5254, 0.25
      %v5335 = vmul.f32 %v5255, 0.25
      %v5336 = vmul.f32 %v5256, 0.25
      %v5337 = vmul.f32 %v5257, 0.25
      %v5338 = vmul.f32 %v5258, 0.25
      %v5339 = vmul.f32 %v5259, 0.25
      %v5340 = vmul.f32 %v5260, 0.25
      %v5341 = vmul.f32 %v5261, 0.25
      %v5342 = vmul.f32 %v5262, 0.25
      %v5343 = vmul.f32 %v5263, 0.25
      %v5344 = vmul.f32 %v5264, 0.25
      %v5345 = vmul.f32 %v5265, 0.25
      %v5346 = vmul.f32 %v5266, 0.25
      %v5347 = vmul.f32 %v5267, 0.25
      %v5348 = vmul.f32 %v5268, 0.25
      %v5349 = vmul.f32 %v5269, 0.25
      %v5350 = vmul.f32 %v5270, 0.25
      %v5351 = vmul.f32 %v5271, 0.25
      %v5352 = vmul.f32 %v5272, 0.25
      %v5353 = vmul.f32 %v5273, 0.25
      %v5354 = vmul.f32 %v5274, 0.25
      %v5355 = vmul.f32 %v5275, 0.25
      %v5356 = vmul.f32 %v5276, 0.25
      %v5357 = vmul.f32 %v5277, 0.25
      %v5358 = vmul.f32 %v5278, 0.25
      %v5359 = vmul.f32 %v5279, 0.25
      %v5360 = vmul.f32 %v5280, 0.25
      %v5361 = vmul.f32 %v5281, 0.25
      %v5362 = vmul.f32 %v5282, 0.25
      %v5363 = vmul.f32 %v5283, 0.25
      %v5364 = vmul.f32 %v5284, 0.25
      %v5365 = vmul.f32 %v5285, 0.25
      %v5366 = vmul.f32 %v5286, 0.25
      %v5367 = vmul.f32 %v5287, 0.25
      %v5368 = vmul.f32 %v5288, 0.25
      %v5369 = vmul.f32 %v5289, 0.25
      %v5370 = vmul.f32 %v5290, 0.25
      %v5371 = vmul.f32 %v5291, 0.25
      %v5372 = vmul.f32 %v5292, 0.25
      %v5373 = vmul.f32 %v5293, 0.25
      %v5374 = vmul.f32 %v5294, 0.25
      %v5375 = vmul.f32 %v5295, 0.25
      %v5376 = vmul.f32 %v5296, 0.25
      %v5377 = vmul.f32 %v5297, 0.25
      %v5378 = vmul.f32 %v5298, 0.25
      %v5379 = vmul.f32 %v5299, 0.25
      %v5380 = vmul.f32 %v5300, 0.25
      %v5381 = vmul.f32 %v5301, 0.25
      %v5382 = vmul.f32 %v5302, 0.25
      %v5383 = vmul.f32 %v5303, 0.25
      %v5384 = vmul.f32 %v5304, 0.25
      %v5385 = vmul.f32 %v5305, 0.25
      %v5386 = vmul.f32 %v5306, 0.25
      %v5387 = vmul.f32 %v5307, 0.25
      %v5388 = vmul.f32 %v5308, 0.25
      %v5389 = vmul.f32 %v5309, 0.25
      %v5390 = vmul.f32 %v5310, 0.25
      %v5391 = vmul.f32 %v5311, 0.25
      %v5392 = vmul.f32 %v5312, 0.25
      %v5393 = vmul.f32 %v5313, 0.25
      %v5394 = vmul.f32 %v5314, 0.25
      %v5395 = vmul.f32 %v5315, 0.25
      %v5396 = vmul.f32 %v5316, 0.25
      %v5397 = vmul.f32 %v5317, 0.25
      %v5398 = vmul.f32 %v5318, 0.25
      %v5399 = vmul.f32 %v5319, 0.25
      %v5400 = vmul.f32 %v5320, 0.25
      %v5401 = vmul.f32 %v5321, 0.25
      %v5402 = vmul.f32 %v5322, 0.25
      %v5403 = vmul.f32 %v5323, 0.25
      %v5404 = vmul.f32 %v5324, 0.25
      %v5405 = vmul.f32 %v5325, 0.25
      %v5406 = vmul.f32 %v5326, 0.25
      %v5407 = vmul.f32 %v5327, 0.25
      %v5408 = vmul.f32 %v5328, 0.25
      %v5409 = vmul.f32 %v5329, 0.25
      %v5410 = vmul.f32 %v5330, 0.25
      %v5411 = vmul.f32 %v5331, 0.25
      %v5412 = vmul.f32 %v5332, 0.25
      %v5413 = vlaneseq
      %v5414 = vshrl.u32 %v5413, 7
      %v5415 = vadd.s32 %v5414, 8
      %vm5416 = vcmp.lt.s32.totalorder %v5414, 8
      %vm5417 = vcmp.lt.s32.totalorder %v5415, 8
      %v5498 = vlaneseq
      %v5499 = vshrl.u32 %v5498, 7
      %v5500 = vsub.s32 0, %v5499
      %v5501 = vrot.slane %v5333, %v5500
      %v5502 = vlaneseq
      %v5503 = vshrl.u32 %v5502, 7
      %v5504 = vsub.s32 0, %v5503
      %v5505 = vrot.slane %v5334, %v5504
      %v5506 = vlaneseq
      %v5507 = vshrl.u32 %v5506, 7
      %v5508 = vsub.s32 0, %v5507
      %v5509 = vrot.slane %v5335, %v5508
      %v5510 = vlaneseq
      %v5511 = vshrl.u32 %v5510, 7
      %v5512 = vsub.s32 0, %v5511
      %v5513 = vrot.slane %v5336, %v5512
      %v5514 = vlaneseq
      %v5515 = vshrl.u32 %v5514, 7
      %v5516 = vsub.s32 0, %v5515
      %v5517 = vrot.slane %v5337, %v5516
      %v5518 = vlaneseq
      %v5519 = vshrl.u32 %v5518, 7
      %v5520 = vsub.s32 0, %v5519
      %v5521 = vrot.slane %v5338, %v5520
      %v5522 = vlaneseq
      %v5523 = vshrl.u32 %v5522, 7
      %v5524 = vsub.s32 0, %v5523
      %v5525 = vrot.slane %v5339, %v5524
      %v5526 = vlaneseq
      %v5527 = vshrl.u32 %v5526, 7
      %v5528 = vsub.s32 0, %v5527
      %v5529 = vrot.slane %v5340, %v5528
      %v5530 = vlaneseq
      %v5531 = vshrl.u32 %v5530, 7
      %v5532 = vsub.s32 0, %v5531
      %v5533 = vrot.slane %v5341, %v5532
      %v5534 = vlaneseq
      %v5535 = vshrl.u32 %v5534, 7
      %v5536 = vsub.s32 0, %v5535
      %v5537 = vrot.slane %v5342, %v5536
      %v5538 = vlaneseq
      %v5539 = vshrl.u32 %v5538, 7
      %v5540 = vsub.s32 0, %v5539
      %v5541 = vrot.slane %v5343, %v5540
      %v5542 = vlaneseq
      %v5543 = vshrl.u32 %v5542, 7
      %v5544 = vsub.s32 0, %v5543
      %v5545 = vrot.slane %v5344, %v5544
      %v5546 = vlaneseq
      %v5547 = vshrl.u32 %v5546, 7
      %v5548 = vsub.s32 0, %v5547
      %v5549 = vrot.slane %v5345, %v5548
      %v5550 = vlaneseq
      %v5551 = vshrl.u32 %v5550, 7
      %v5552 = vsub.s32 0, %v5551
      %v5553 = vrot.slane %v5346, %v5552
      %v5554 = vlaneseq
      %v5555 = vshrl.u32 %v5554, 7
      %v5556 = vsub.s32 0, %v5555
      %v5557 = vrot.slane %v5347, %v5556
      %v5558 = vlaneseq
      %v5559 = vshrl.u32 %v5558, 7
      %v5560 = vsub.s32 0, %v5559
      %v5561 = vrot.slane %v5348, %v5560
      %v5562 = vlaneseq
      %v5563 = vshrl.u32 %v5562, 7
      %v5564 = vsub.s32 0, %v5563
      %v5565 = vrot.slane %v5349, %v5564
      %v5566 = vlaneseq
      %v5567 = vshrl.u32 %v5566, 7
      %v5568 = vsub.s32 0, %v5567
      %v5569 = vrot.slane %v5350, %v5568
      %v5570 = vlaneseq
      %v5571 = vshrl.u32 %v5570, 7
      %v5572 = vsub.s32 0, %v5571
      %v5573 = vrot.slane %v5351, %v5572
      %v5574 = vlaneseq
      %v5575 = vshrl.u32 %v5574, 7
      %v5576 = vsub.s32 0, %v5575
      %v5577 = vrot.slane %v5352, %v5576
      %v5578 = vlaneseq
      %v5579 = vshrl.u32 %v5578, 7
      %v5580 = vsub.s32 0, %v5579
      %v5581 = vrot.slane %v5353, %v5580
      %v5582 = vlaneseq
      %v5583 = vshrl.u32 %v5582, 7
      %v5584 = vsub.s32 0, %v5583
      %v5585 = vrot.slane %v5354, %v5584
      %v5586 = vlaneseq
      %v5587 = vshrl.u32 %v5586, 7
      %v5588 = vsub.s32 0, %v5587
      %v5589 = vrot.slane %v5355, %v5588
      %v5590 = vlaneseq
      %v5591 = vshrl.u32 %v5590, 7
      %v5592 = vsub.s32 0, %v5591
      %v5593 = vrot.slane %v5356, %v5592
      %v5594 = vlaneseq
      %v5595 = vshrl.u32 %v5594, 7
      %v5596 = vsub.s32 0, %v5595
      %v5597 = vrot.slane %v5357, %v5596
      %v5598 = vlaneseq
      %v5599 = vshrl.u32 %v5598, 7
      %v5600 = vsub.s32 0, %v5599
      %v5601 = vrot.slane %v5358, %v5600
      %v5602 = vlaneseq
      %v5603 = vshrl.u32 %v5602, 7
      %v5604 = vsub.s32 0, %v5603
      %v5605 = vrot.slane %v5359, %v5604
      %v5606 = vlaneseq
      %v5607 = vshrl.u32 %v5606, 7
      %v5608 = vsub.s32 0, %v5607
      %v5609 = vrot.slane %v5360, %v5608
      %v5610 = vlaneseq
      %v5611 = vshrl.u32 %v5610, 7
      %v5612 = vsub.s32 0, %v5611
      %v5613 = vrot.slane %v5361, %v5612
      %v5614 = vlaneseq
      %v5615 = vshrl.u32 %v5614, 7
      %v5616 = vsub.s32 0, %v5615
      %v5617 = vrot.slane %v5362, %v5616
      %v5618 = vlaneseq
      %v5619 = vshrl.u32 %v5618, 7
      %v5620 = vsub.s32 0, %v5619
      %v5621 = vrot.slane %v5363, %v5620
      %v5622 = vlaneseq
      %v5623 = vshrl.u32 %v5622, 7
      %v5624 = vsub.s32 0, %v5623
      %v5625 = vrot.slane %v5364, %v5624
      %v5626 = vlaneseq
      %v5627 = vshrl.u32 %v5626, 7
      %v5628 = vsub.s32 0, %v5627
      %v5629 = vrot.slane %v5365, %v5628
      %v5630 = vlaneseq
      %v5631 = vshrl.u32 %v5630, 7
      %v5632 = vsub.s32 0, %v5631
      %v5633 = vrot.slane %v5366, %v5632
      %v5634 = vlaneseq
      %v5635 = vshrl.u32 %v5634, 7
      %v5636 = vsub.s32 0, %v5635
      %v5637 = vrot.slane %v5367, %v5636
      %v5638 = vlaneseq
      %v5639 = vshrl.u32 %v5638, 7
      %v5640 = vsub.s32 0, %v5639
      %v5641 = vrot.slane %v5368, %v5640
      %v5642 = vlaneseq
      %v5643 = vshrl.u32 %v5642, 7
      %v5644 = vsub.s32 0, %v5643
      %v5645 = vrot.slane %v5369, %v5644
      %v5646 = vlaneseq
      %v5647 = vshrl.u32 %v5646, 7
      %v5648 = vsub.s32 0, %v5647
      %v5649 = vrot.slane %v5370, %v5648
      %v5650 = vlaneseq
      %v5651 = vshrl.u32 %v5650, 7
      %v5652 = vsub.s32 0, %v5651
      %v5653 = vrot.slane %v5371, %v5652
      %v5654 = vlaneseq
      %v5655 = vshrl.u32 %v5654, 7
      %v5656 = vsub.s32 0, %v5655
      %v5657 = vrot.slane %v5372, %v5656
      %v5658 = vlaneseq
      %v5659 = vshrl.u32 %v5658, 7
      %v5660 = vsub.s32 0, %v5659
      %v5661 = vrot.slane %v5373, %v5660
      %v5662 = vlaneseq
      %v5663 = vshrl.u32 %v5662, 7
      %v5664 = vsub.s32 0, %v5663
      %v5665 = vrot.slane %v5374, %v5664
      %v5666 = vlaneseq
      %v5667 = vshrl.u32 %v5666, 7
      %v5668 = vsub.s32 0, %v5667
      %v5669 = vrot.slane %v5375, %v5668
      %v5670 = vlaneseq
      %v5671 = vshrl.u32 %v5670, 7
      %v5672 = vsub.s32 0, %v5671
      %v5673 = vrot.slane %v5376, %v5672
      %v5674 = vlaneseq
      %v5675 = vshrl.u32 %v5674, 7
      %v5676 = vsub.s32 0, %v5675
      %v5677 = vrot.slane %v5377, %v5676
      %v5678 = vlaneseq
      %v5679 = vshrl.u32 %v5678, 7
      %v5680 = vsub.s32 0, %v5679
      %v5681 = vrot.slane %v5378, %v5680
      %v5682 = vlaneseq
      %v5683 = vshrl.u32 %v5682, 7
      %v5684 = vsub.s32 0, %v5683
      %v5685 = vrot.slane %v5379, %v5684
      %v5686 = vlaneseq
      %v5687 = vshrl.u32 %v5686, 7
      %v5688 = vsub.s32 0, %v5687
      %v5689 = vrot.slane %v5380, %v5688
      %v5690 = vlaneseq
      %v5691 = vshrl.u32 %v5690, 7
      %v5692 = vsub.s32 0, %v5691
      %v5693 = vrot.slane %v5381, %v5692
      %v5694 = vlaneseq
      %v5695 = vshrl.u32 %v5694, 7
      %v5696 = vsub.s32 0, %v5695
      %v5697 = vrot.slane %v5382, %v5696
      %v5698 = vlaneseq
      %v5699 = vshrl.u32 %v5698, 7
      %v5700 = vsub.s32 0, %v5699
      %v5701 = vrot.slane %v5383, %v5700
      %v5702 = vlaneseq
      %v5703 = vshrl.u32 %v5702, 7
      %v5704 = vsub.s32 0, %v5703
      %v5705 = vrot.slane %v5384, %v5704
      %v5706 = vlaneseq
      %v5707 = vshrl.u32 %v5706, 7
      %v5708 = vsub.s32 0, %v5707
      %v5709 = vrot.slane %v5385, %v5708
      %v5710 = vlaneseq
      %v5711 = vshrl.u32 %v5710, 7
      %v5712 = vsub.s32 0, %v5711
      %v5713 = vrot.slane %v5386, %v5712
      %v5714 = vlaneseq
      %v5715 = vshrl.u32 %v5714, 7
      %v5716 = vsub.s32 0, %v5715
      %v5717 = vrot.slane %v5387, %v5716
      %v5718 = vlaneseq
      %v5719 = vshrl.u32 %v5718, 7
      %v5720 = vsub.s32 0, %v5719
      %v5721 = vrot.slane %v5388, %v5720
      %v5722 = vlaneseq
      %v5723 = vshrl.u32 %v5722, 7
      %v5724 = vsub.s32 0, %v5723
      %v5725 = vrot.slane %v5389, %v5724
      %v5726 = vlaneseq
      %v5727 = vshrl.u32 %v5726, 7
      %v5728 = vsub.s32 0, %v5727
      %v5729 = vrot.slane %v5390, %v5728
      %v5730 = vlaneseq
      %v5731 = vshrl.u32 %v5730, 7
      %v5732 = vsub.s32 0, %v5731
      %v5733 = vrot.slane %v5391, %v5732
      %v5734 = vlaneseq
      %v5735 = vshrl.u32 %v5734, 7
      %v5736 = vsub.s32 0, %v5735
      %v5737 = vrot.slane %v5392, %v5736
      %v5738 = vlaneseq
      %v5739 = vshrl.u32 %v5738, 7
      %v5740 = vsub.s32 0, %v5739
      %v5741 = vrot.slane %v5393, %v5740
      %v5742 = vlaneseq
      %v5743 = vshrl.u32 %v5742, 7
      %v5744 = vsub.s32 0, %v5743
      %v5745 = vrot.slane %v5394, %v5744
      %v5746 = vlaneseq
      %v5747 = vshrl.u32 %v5746, 7
      %v5748 = vsub.s32 0, %v5747
      %v5749 = vrot.slane %v5395, %v5748
      %v5750 = vlaneseq
      %v5751 = vshrl.u32 %v5750, 7
      %v5752 = vsub.s32 0, %v5751
      %v5753 = vrot.slane %v5396, %v5752
      %v5754 = vlaneseq
      %v5755 = vshrl.u32 %v5754, 7
      %v5756 = vsub.s32 0, %v5755
      %v5757 = vrot.slane %v5397, %v5756
      %v5758 = vlaneseq
      %v5759 = vshrl.u32 %v5758, 7
      %v5760 = vsub.s32 0, %v5759
      %v5761 = vrot.slane %v5398, %v5760
      %v5762 = vlaneseq
      %v5763 = vshrl.u32 %v5762, 7
      %v5764 = vsub.s32 0, %v5763
      %v5765 = vrot.slane %v5399, %v5764
      %v5766 = vlaneseq
      %v5767 = vshrl.u32 %v5766, 7
      %v5768 = vsub.s32 0, %v5767
      %v5769 = vrot.slane %v5400, %v5768
      %v5770 = vlaneseq
      %v5771 = vshrl.u32 %v5770, 7
      %v5772 = vsub.s32 0, %v5771
      %v5773 = vrot.slane %v5401, %v5772
      %v5774 = vlaneseq
      %v5775 = vshrl.u32 %v5774, 7
      %v5776 = vsub.s32 0, %v5775
      %v5777 = vrot.slane %v5402, %v5776
      %v5778 = vlaneseq
      %v5779 = vshrl.u32 %v5778, 7
      %v5780 = vsub.s32 0, %v5779
      %v5781 = vrot.slane %v5403, %v5780
      %v5782 = vlaneseq
      %v5783 = vshrl.u32 %v5782, 7
      %v5784 = vsub.s32 0, %v5783
      %v5785 = vrot.slane %v5404, %v5784
      %v5786 = vlaneseq
      %v5787 = vshrl.u32 %v5786, 7
      %v5788 = vsub.s32 0, %v5787
      %v5789 = vrot.slane %v5405, %v5788
      %v5790 = vlaneseq
      %v5791 = vshrl.u32 %v5790, 7
      %v5792 = vsub.s32 0, %v5791
      %v5793 = vrot.slane %v5406, %v5792
      %v5794 = vlaneseq
      %v5795 = vshrl.u32 %v5794, 7
      %v5796 = vsub.s32 0, %v5795
      %v5797 = vrot.slane %v5407, %v5796
      %v5798 = vlaneseq
      %v5799 = vshrl.u32 %v5798, 7
      %v5800 = vsub.s32 0, %v5799
      %v5801 = vrot.slane %v5408, %v5800
      %v5802 = vlaneseq
      %v5803 = vshrl.u32 %v5802, 7
      %v5804 = vsub.s32 0, %v5803
      %v5805 = vrot.slane %v5409, %v5804
      %v5806 = vlaneseq
      %v5807 = vshrl.u32 %v5806, 7
      %v5808 = vsub.s32 0, %v5807
      %v5809 = vrot.slane %v5410, %v5808
      %v5810 = vlaneseq
      %v5811 = vshrl.u32 %v5810, 7
      %v5812 = vsub.s32 0, %v5811
      %v5813 = vrot.slane %v5411, %v5812
      %v5814 = vlaneseq
      %v5815 = vshrl.u32 %v5814, 7
      %v5816 = vsub.s32 0, %v5815
      %v5817 = vrot.slane %v5412, %v5816
      %vm5818 = vcmask 1041409
      %v5819 = vsel %vm5818, %v5505, %v5501
      %vm5820 = vcmask 1042434
      %v5821 = vsel %vm5820, %v5509, %v5819
      %vm5822 = vcmask 1043459
      %v5823 = vsel %vm5822, %v5513, %v5821
      %vm5824 = vcmask 1044484
      %v5825 = vsel %vm5824, %v5517, %v5823
      %vm5826 = vcmask 1045509
      %v5827 = vsel %vm5826, %v5521, %v5825
      %vm5828 = vcmask 1046534
      %v5829 = vsel %vm5828, %v5525, %v5827
      %vm5830 = vcmask 1047559
      %v5831 = vsel %vm5830, %v5529, %v5829
      %v5832 = vsel %vm5818, %v5537, %v5533
      %v5833 = vsel %vm5818, %v5545, %v5541
      %v5834 = vsel %vm5820, %v5549, %v5833
      %v5835 = vsel %vm5822, %v5553, %v5834
      %v5836 = vsel %vm5824, %v5557, %v5835
      %v5837 = vsel %vm5826, %v5561, %v5836
      %v5838 = vsel %vm5828, %v5565, %v5837
      %v5839 = vsel %vm5830, %v5569, %v5838
      %v5840 = vsel %vm5818, %v5577, %v5573
      %v5841 = vsel %vm5818, %v5585, %v5581
      %v5842 = vsel %vm5820, %v5589, %v5841
      %v5843 = vsel %vm5822, %v5593, %v5842
      %v5844 = vsel %vm5824, %v5597, %v5843
      %v5845 = vsel %vm5826, %v5601, %v5844
      %v5846 = vsel %vm5828, %v5605, %v5845
      %v5847 = vsel %vm5830, %v5609, %v5846
      %v5848 = vsel %vm5818, %v5617, %v5613
      %v5849 = vsel %vm5818, %v5625, %v5621
      %v5850 = vsel %vm5820, %v5629, %v5849
      %v5851 = vsel %vm5822, %v5633, %v5850
      %v5852 = vsel %vm5824, %v5637, %v5851
      %v5853 = vsel %vm5826, %v5641, %v5852
      %v5854 = vsel %vm5828, %v5645, %v5853
      %v5855 = vsel %vm5830, %v5649, %v5854
      %v5856 = vsel %vm5818, %v5657, %v5653
      %v5857 = vsel %vm5818, %v5665, %v5661
      %v5858 = vsel %vm5820, %v5669, %v5857
      %v5859 = vsel %vm5822, %v5673, %v5858
      %v5860 = vsel %vm5824, %v5677, %v5859
      %v5861 = vsel %vm5826, %v5681, %v5860
      %v5862 = vsel %vm5828, %v5685, %v5861
      %v5863 = vsel %vm5830, %v5689, %v5862
      %v5864 = vsel %vm5818, %v5697, %v5693
      %v5865 = vsel %vm5818, %v5705, %v5701
      %v5866 = vsel %vm5820, %v5709, %v5865
      %v5867 = vsel %vm5822, %v5713, %v5866
      %v5868 = vsel %vm5824, %v5717, %v5867
      %v5869 = vsel %vm5826, %v5721, %v5868
      %v5870 = vsel %vm5828, %v5725, %v5869
      %v5871 = vsel %vm5830, %v5729, %v5870
      %v5872 = vsel %vm5818, %v5737, %v5733
      %v5873 = vsel %vm5818, %v5745, %v5741
      %v5874 = vsel %vm5820, %v5749, %v5873
      %v5875 = vsel %vm5822, %v5753, %v5874
      %v5876 = vsel %vm5824, %v5757, %v5875
      %v5877 = vsel %vm5826, %v5761, %v5876
      %v5878 = vsel %vm5828, %v5765, %v5877
      %v5879 = vsel %vm5830, %v5769, %v5878
      %v5880 = vsel %vm5818, %v5777, %v5773
      %v5881 = vsel %vm5818, %v5785, %v5781
      %v5882 = vsel %vm5820, %v5789, %v5881
      %v5883 = vsel %vm5822, %v5793, %v5882
      %v5884 = vsel %vm5824, %v5797, %v5883
      %v5885 = vsel %vm5826, %v5801, %v5884
      %v5886 = vsel %vm5828, %v5805, %v5885
      %v5887 = vsel %vm5830, %v5809, %v5886
      %v5888 = vsel %vm5818, %v5817, %v5813
      %v5905 = vsel %vm5416, %v5831, 0.0
      %v5906 = vsel %vm5417, %v5832, 0.0
      %v5907 = vsel %vm5416, %v5839, 0.0
      %v5908 = vsel %vm5417, %v5840, 0.0
      %v5909 = vsel %vm5416, %v5847, 0.0
      %v5910 = vsel %vm5417, %v5848, 0.0
      %v5911 = vsel %vm5416, %v5855, 0.0
      %v5912 = vsel %vm5417, %v5856, 0.0
      %v5913 = vsel %vm5416, %v5863, 0.0
      %v5914 = vsel %vm5417, %v5864, 0.0
      %v5915 = vsel %vm5416, %v5871, 0.0
      %v5916 = vsel %vm5417, %v5872, 0.0
      %v5917 = vsel %vm5416, %v5879, 0.0
      %v5918 = vsel %vm5417, %v5880, 0.0
      %v5919 = vsel %vm5416, %v5887, 0.0
      %v5920 = vsel %vm5417, %v5888, 0.0
      %5921 = vst [vmem:[#allocation2] sm:$0xff] 0.0
      %5922 = vst [vmem:[#allocation2 + $0x8] sm:$0xff] 0.0
      %5923 = vst [vmem:[#allocation2 + $0x10] sm:$0xff] 0.0
      %5924 = vst [vmem:[#allocation2 + $0x18] sm:$0xff] 0.0
      %5925 = vst [vmem:[#allocation2 + $0x20] sm:$0xff] 0.0
      %5926 = vst [vmem:[#allocation2 + $0x28] sm:$0xff] 0.0
      %5927 = vst [vmem:[#allocation2 + $0x30] sm:$0xff] 0.0
      %5928 = vst [vmem:[#allocation2 + $0x38] sm:$0xff] 0.0
      %5929 = vst [vmem:[#allocation2 + $0x40] sm:$0xff] 0.0
      %5930 = vst [vmem:[#allocation2 + $0x48] sm:$0xff] 0.0
      %5931 = vst [vmem:[#allocation2 + $0x50] sm:$0xff] 0.0
      %5932 = vst [vmem:[#allocation2 + $0x58] sm:$0xff] 0.0
      %5933 = vst [vmem:[#allocation2 + $0x60] sm:$0xff] 0.0
      %5934 = vst [vmem:[#allocation2 + $0x68] sm:$0x3f] 0.0
      %v5951 = vcombine.high %v5905, %v5905
      %v5953 = vunpack.c.l.s4 1983009808
      %v5954 = vunpack.c.0.s8 %v5953
      %v5955 = vlaneseq
      %v5956 = vshrl.u32 %v5955, 7
      %v5957 = vsub.s32 %v5954, %v5956
      %v5958 = vrot.slane %v5905, %v5957
      %v5960 = vunpack.c.l.s4 1983009808
      %v5961 = vunpack.c.0.s8 %v5960
      %v5962 = vlaneseq
      %v5963 = vshrl.u32 %v5962, 7
      %v5964 = vsub.s32 %v5961, %v5963
      %v5965 = vrot.slane %v5951, %v5964
      %v5966 = vcombine.high %v5958, %v5958
      %v5967 = vcombine.high %v5965, %v5965
      %v5969 = vunpack.c.l.s4 1983009808
      %v5970 = vunpack.c.0.s8 %v5969
      %v5971 = vlaneseq
      %v5972 = vshrl.u32 %v5971, 7
      %v5973 = vsub.s32 %v5970, %v5972
      %v5974 = vrot.slane %v5906, %v5973
      %v5975 = vcombine.high %v5907, %v5907
      %v5977 = vunpack.c.l.s4 1983009808
      %v5978 = vunpack.c.0.s8 %v5977
      %v5979 = vlaneseq
      %v5980 = vshrl.u32 %v5979, 7
      %v5981 = vsub.s32 %v5978, %v5980
      %v5982 = vrot.slane %v5907, %v5981
      %v5984 = vunpack.c.l.s4 1983009808
      %v5985 = vunpack.c.0.s8 %v5984
      %v5986 = vlaneseq
      %v5987 = vshrl.u32 %v5986, 7
      %v5988 = vsub.s32 %v5985, %v5987
      %v5989 = vrot.slane %v5975, %v5988
      %v5990 = vcombine.high %v5982, %v5982
      %v5991 = vcombine.high %v5989, %v5989
      %v5993 = vunpack.c.l.s4 1983009808
      %v5994 = vunpack.c.0.s8 %v5993
      %v5995 = vlaneseq
      %v5996 = vshrl.u32 %v5995, 7
      %v5997 = vsub.s32 %v5994, %v5996
      %v5998 = vrot.slane %v5908, %v5997
      %v5999 = vcombine.high %v5909, %v5909
      %v6001 = vunpack.c.l.s4 1983009808
      %v6002 = vunpack.c.0.s8 %v6001
      %v6003 = vlaneseq
      %v6004 = vshrl.u32 %v6003, 7
      %v6005 = vsub.s32 %v6002, %v6004
      %v6006 = vrot.slane %v5909, %v6005
      %v6008 = vunpack.c.l.s4 1983009808
      %v6009 = vunpack.c.0.s8 %v6008
      %v6010 = vlaneseq
      %v6011 = vshrl.u32 %v6010, 7
      %v6012 = vsub.s32 %v6009, %v6011
      %v6013 = vrot.slane %v5999, %v6012
      %v6014 = vcombine.high %v6006, %v6006
      %v6015 = vcombine.high %v6013, %v6013
      %v6017 = vunpack.c.l.s4 1983009808
      %v6018 = vunpack.c.0.s8 %v6017
      %v6019 = vlaneseq
      %v6020 = vshrl.u32 %v6019, 7
      %v6021 = vsub.s32 %v6018, %v6020
      %v6022 = vrot.slane %v5910, %v6021
      %v6023 = vcombine.high %v5911, %v5911
      %v6025 = vunpack.c.l.s4 1983009808
      %v6026 = vunpack.c.0.s8 %v6025
      %v6027 = vlaneseq
      %v6028 = vshrl.u32 %v6027, 7
      %v6029 = vsub.s32 %v6026, %v6028
      %v6030 = vrot.slane %v5911, %v6029
      %v6032 = vunpack.c.l.s4 1983009808
      %v6033 = vunpack.c.0.s8 %v6032
      %v6034 = vlaneseq
      %v6035 = vshrl.u32 %v6034, 7
      %v6036 = vsub.s32 %v6033, %v6035
      %v6037 = vrot.slane %v6023, %v6036
      %v6038 = vcombine.high %v6030, %v6030
      %v6039 = vcombine.high %v6037, %v6037
      %v6041 = vunpack.c.l.s4 1983009808
      %v6042 = vunpack.c.0.s8 %v6041
      %v6043 = vlaneseq
      %v6044 = vshrl.u32 %v6043, 7
      %v6045 = vsub.s32 %v6042, %v6044
      %v6046 = vrot.slane %v5912, %v6045
      %v6047 = vcombine.high %v5913, %v5913
      %v6049 = vunpack.c.l.s4 1983009808
      %v6050 = vunpack.c.0.s8 %v6049
      %v6051 = vlaneseq
      %v6052 = vshrl.u32 %v6051, 7
      %v6053 = vsub.s32 %v6050, %v6052
      %v6054 = vrot.slane %v5913, %v6053
      %v6056 = vunpack.c.l.s4 1983009808
      %v6057 = vunpack.c.0.s8 %v6056
      %v6058 = vlaneseq
      %v6059 = vshrl.u32 %v6058, 7
      %v6060 = vsub.s32 %v6057, %v6059
      %v6061 = vrot.slane %v6047, %v6060
      %v6062 = vcombine.high %v6054, %v6054
      %v6063 = vcombine.high %v6061, %v6061
      %v6065 = vunpack.c.l.s4 1983009808
      %v6066 = vunpack.c.0.s8 %v6065
      %v6067 = vlaneseq
      %v6068 = vshrl.u32 %v6067, 7
      %v6069 = vsub.s32 %v6066, %v6068
      %v6070 = vrot.slane %v5914, %v6069
      %v6071 = vcombine.high %v5915, %v5915
      %v6073 = vunpack.c.l.s4 1983009808
      %v6074 = vunpack.c.0.s8 %v6073
      %v6075 = vlaneseq
      %v6076 = vshrl.u32 %v6075, 7
      %v6077 = vsub.s32 %v6074, %v6076
      %v6078 = vrot.slane %v5915, %v6077
      %v6080 = vunpack.c.l.s4 1983009808
      %v6081 = vunpack.c.0.s8 %v6080
      %v6082 = vlaneseq
      %v6083 = vshrl.u32 %v6082, 7
      %v6084 = vsub.s32 %v6081, %v6083
      %v6085 = vrot.slane %v6071, %v6084
      %v6086 = vcombine.high %v6078, %v6078
      %v6087 = vcombine.high %v6085, %v6085
      %v6089 = vunpack.c.l.s4 1983009808
      %v6090 = vunpack.c.0.s8 %v6089
      %v6091 = vlaneseq
      %v6092 = vshrl.u32 %v6091, 7
      %v6093 = vsub.s32 %v6090, %v6092
      %v6094 = vrot.slane %v5916, %v6093
      %v6095 = vcombine.high %v5917, %v5917
      %v6097 = vunpack.c.l.s4 1983009808
      %v6098 = vunpack.c.0.s8 %v6097
      %v6099 = vlaneseq
      %v6100 = vshrl.u32 %v6099, 7
      %v6101 = vsub.s32 %v6098, %v6100
      %v6102 = vrot.slane %v5917, %v6101
      %v6104 = vunpack.c.l.s4 1983009808
      %v6105 = vunpack.c.0.s8 %v6104
      %v6106 = vlaneseq
      %v6107 = vshrl.u32 %v6106, 7
      %v6108 = vsub.s32 %v6105, %v6107
      %v6109 = vrot.slane %v6095, %v6108
      %v6110 = vcombine.high %v6102, %v6102
      %v6111 = vcombine.high %v6109, %v6109
      %v6113 = vunpack.c.l.s4 1983009808
      %v6114 = vunpack.c.0.s8 %v6113
      %v6115 = vlaneseq
      %v6116 = vshrl.u32 %v6115, 7
      %v6117 = vsub.s32 %v6114, %v6116
      %v6118 = vrot.slane %v5918, %v6117
      %v6119 = vcombine.high %v5919, %v5919
      %v6121 = vunpack.c.l.s4 1983009808
      %v6122 = vunpack.c.0.s8 %v6121
      %v6123 = vlaneseq
      %v6124 = vshrl.u32 %v6123, 7
      %v6125 = vsub.s32 %v6122, %v6124
      %v6126 = vrot.slane %v5919, %v6125
      %v6128 = vunpack.c.l.s4 1983009808
      %v6129 = vunpack.c.0.s8 %v6128
      %v6130 = vlaneseq
      %v6131 = vshrl.u32 %v6130, 7
      %v6132 = vsub.s32 %v6129, %v6131
      %v6133 = vrot.slane %v6119, %v6132
      %v6134 = vcombine.high %v6126, %v6126
      %v6135 = vcombine.high %v6133, %v6133
      %v6137 = vunpack.c.l.s4 1983009808
      %v6138 = vunpack.c.0.s8 %v6137
      %v6139 = vlaneseq
      %v6140 = vshrl.u32 %v6139, 7
      %v6141 = vsub.s32 %v6138, %v6140
      %v6142 = vrot.slane %v5920, %v6141
      %v6143 = vcombine.low %v5958, %v5966
      %v6144 = vcombine.low %v5965, %v5967
      %v6146 = vunpack.c.l.s4 1983009808
      %v6147 = vunpack.c.0.s8 %v6146
      %v6148 = vlaneseq
      %v6149 = vshrl.u32 %v6148, 7
      %v6150 = vsub.s32 %v6147, %v6149
      %v6151 = vrot.slane %v6143, %v6150
      %v6153 = vunpack.c.l.s4 1983009808
      %v6154 = vunpack.c.0.s8 %v6153
      %v6155 = vlaneseq
      %v6156 = vshrl.u32 %v6155, 7
      %v6157 = vsub.s32 %v6154, %v6156
      %v6158 = vrot.slane %v6144, %v6157
      %v6159 = vcombine.low %v6151, %v6158
      %v6160 = vcombine.low %v5974, %v5982
      %v6161 = vcombine.low %v5990, %v5989
      %v6163 = vunpack.c.l.s4 1983009808
      %v6164 = vunpack.c.0.s8 %v6163
      %v6165 = vlaneseq
      %v6166 = vshrl.u32 %v6165, 7
      %v6167 = vsub.s32 %v6164, %v6166
      %v6168 = vrot.slane %v6160, %v6167
      %v6170 = vunpack.c.l.s4 1983009808
      %v6171 = vunpack.c.0.s8 %v6170
      %v6172 = vlaneseq
      %v6173 = vshrl.u32 %v6172, 7
      %v6174 = vsub.s32 %v6171, %v6173
      %v6175 = vrot.slane %v6161, %v6174
      %v6176 = vcombine.low %v6168, %v6175
      %v6177 = vcombine.low %v5991, %v5998
      %v6178 = vcombine.low %v6006, %v6014
      %v6180 = vunpack.c.l.s4 1983009808
      %v6181 = vunpack.c.0.s8 %v6180
      %v6182 = vlaneseq
      %v6183 = vshrl.u32 %v6182, 7
      %v6184 = vsub.s32 %v6181, %v6183
      %v6185 = vrot.slane %v6177, %v6184
      %v6187 = vunpack.c.l.s4 1983009808
      %v6188 = vunpack.c.0.s8 %v6187
      %v6189 = vlaneseq
      %v6190 = vshrl.u32 %v6189, 7
      %v6191 = vsub.s32 %v6188, %v6190
      %v6192 = vrot.slane %v6178, %v6191
      %v6193 = vcombine.low %v6185, %v6192
      %v6194 = vcombine.low %v6013, %v6015
      %v6195 = vcombine.low %v6022, %v6030
      %v6197 = vunpack.c.l.s4 1983009808
      %v6198 = vunpack.c.0.s8 %v6197
      %v6199 = vlaneseq
      %v6200 = vshrl.u32 %v6199, 7
      %v6201 = vsub.s32 %v6198, %v6200
      %v6202 = vrot.slane %v6194, %v6201
      %v6204 = vunpack.c.l.s4 1983009808
      %v6205 = vunpack.c.0.s8 %v6204
      %v6206 = vlaneseq
      %v6207 = vshrl.u32 %v6206, 7
      %v6208 = vsub.s32 %v6205, %v6207
      %v6209 = vrot.slane %v6195, %v6208
      %v6210 = vcombine.low %v6202, %v6209
      %v6211 = vcombine.low %v6038, %v6037
      %v6212 = vcombine.low %v6039, %v6046
      %v6214 = vunpack.c.l.s4 1983009808
      %v6215 = vunpack.c.0.s8 %v6214
      %v6216 = vlaneseq
      %v6217 = vshrl.u32 %v6216, 7
      %v6218 = vsub.s32 %v6215, %v6217
      %v6219 = vrot.slane %v6211, %v6218
      %v6221 = vunpack.c.l.s4 1983009808
      %v6222 = vunpack.c.0.s8 %v6221
      %v6223 = vlaneseq
      %v6224 = vshrl.u32 %v6223, 7
      %v6225 = vsub.s32 %v6222, %v6224
      %v6226 = vrot.slane %v6212, %v6225
      %v6227 = vcombine.low %v6219, %v6226
      %v6228 = vcombine.low %v6054, %v6062
      %v6229 = vcombine.low %v6061, %v6063
      %v6231 = vunpack.c.l.s4 1983009808
      %v6232 = vunpack.c.0.s8 %v6231
      %v6233 = vlaneseq
      %v6234 = vshrl.u32 %v6233, 7
      %v6235 = vsub.s32 %v6232, %v6234
      %v6236 = vrot.slane %v6228, %v6235
      %v6238 = vunpack.c.l.s4 1983009808
      %v6239 = vunpack.c.0.s8 %v6238
      %v6240 = vlaneseq
      %v6241 = vshrl.u32 %v6240, 7
      %v6242 = vsub.s32 %v6239, %v6241
      %v6243 = vrot.slane %v6229, %v6242
      %v6244 = vcombine.low %v6236, %v6243
      %v6245 = vcombine.low %v6070, %v6078
      %v6246 = vcombine.low %v6086, %v6085
      %v6248 = vunpack.c.l.s4 1983009808
      %v6249 = vunpack.c.0.s8 %v6248
      %v6250 = vlaneseq
      %v6251 = vshrl.u32 %v6250, 7
      %v6252 = vsub.s32 %v6249, %v6251
      %v6253 = vrot.slane %v6245, %v6252
      %v6255 = vunpack.c.l.s4 1983009808
      %v6256 = vunpack.c.0.s8 %v6255
      %v6257 = vlaneseq
      %v6258 = vshrl.u32 %v6257, 7
      %v6259 = vsub.s32 %v6256, %v6258
      %v6260 = vrot.slane %v6246, %v6259
      %v6261 = vcombine.low %v6253, %v6260
      %v6262 = vcombine.low %v6087, %v6094
      %v6263 = vcombine.low %v6102, %v6110
      %v6265 = vunpack.c.l.s4 1983009808
      %v6266 = vunpack.c.0.s8 %v6265
      %v6267 = vlaneseq
      %v6268 = vshrl.u32 %v6267, 7
      %v6269 = vsub.s32 %v6266, %v6268
      %v6270 = vrot.slane %v6262, %v6269
      %v6272 = vunpack.c.l.s4 1983009808
      %v6273 = vunpack.c.0.s8 %v6272
      %v6274 = vlaneseq
      %v6275 = vshrl.u32 %v6274, 7
      %v6276 = vsub.s32 %v6273, %v6275
      %v6277 = vrot.slane %v6263, %v6276
      %v6278 = vcombine.low %v6270, %v6277
      %v6279 = vcombine.low %v6109, %v6111
      %v6280 = vcombine.low %v6118, %v6126
      %v6282 = vunpack.c.l.s4 1983009808
      %v6283 = vunpack.c.0.s8 %v6282
      %v6284 = vlaneseq
      %v6285 = vshrl.u32 %v6284, 7
      %v6286 = vsub.s32 %v6283, %v6285
      %v6287 = vrot.slane %v6279, %v6286
      %v6289 = vunpack.c.l.s4 1983009808
      %v6290 = vunpack.c.0.s8 %v6289
      %v6291 = vlaneseq
      %v6292 = vshrl.u32 %v6291, 7
      %v6293 = vsub.s32 %v6290, %v6292
      %v6294 = vrot.slane %v6280, %v6293
      %v6295 = vcombine.low %v6287, %v6294
      %v6296 = vcombine.low %v6134, %v6133
      %v6297 = vcombine.low %v6135, %v6142
      %v6299 = vunpack.c.l.s4 1983009808
      %v6300 = vunpack.c.0.s8 %v6299
      %v6301 = vlaneseq
      %v6302 = vshrl.u32 %v6301, 7
      %v6303 = vsub.s32 %v6300, %v6302
      %v6304 = vrot.slane %v6296, %v6303
      %v6306 = vunpack.c.l.s4 1983009808
      %v6307 = vunpack.c.0.s8 %v6306
      %v6308 = vlaneseq
      %v6309 = vshrl.u32 %v6308, 7
      %v6310 = vsub.s32 %v6307, %v6309
      %v6311 = vrot.slane %v6297, %v6310
      %v6312 = vcombine.low %v6304, %v6311
      %6323 = vst [vmem:[#allocation2 + $0xb] sm:$0xff] %v6159
      %6324 = vst [vmem:[#allocation2 + $0x13] sm:$0xff] %v6176
      %6325 = vst [vmem:[#allocation2 + $0x1b] sm:$0xff] %v6193
      %6326 = vst [vmem:[#allocation2 + $0x23] sm:$0xff] %v6210
      %6327 = vst [vmem:[#allocation2 + $0x2b] sm:$0xff] %v6227
      %6328 = vst [vmem:[#allocation2 + $0x33] sm:$0xff] %v6244
      %6329 = vst [vmem:[#allocation2 + $0x3b] sm:$0xff] %v6261
      %6330 = vst [vmem:[#allocation2 + $0x43] sm:$0xff] %v6278
      %6331 = vst [vmem:[#allocation2 + $0x4b] sm:$0xff] %v6295
      %6332 = vst [vmem:[#allocation2 + $0x53] sm:$0xff] %v6312
      %v6333 = vld [vmem:[%s192 + $0x8] sm:$0xc]
      %v6334 = vld [vmem:[%s192 + $0xc] sm:$0xf]
      %v6335 = vld [vmem:[%s192 + $0x10] sm:$0xf]
      %v6336 = vld [vmem:[%s192 + $0x14] sm:$0xf]
      %v6337 = vld [vmem:[%s192 + $0x18] sm:$0xf]
      %v6338 = vld [vmem:[%s192 + $0x1c] sm:$0xf]
      %v6339 = vld [vmem:[%s192 + $0x20] sm:$0xf]
      %v6340 = vld [vmem:[%s192 + $0x24] sm:$0xf]
      %v6341 = vld [vmem:[%s192 + $0x28] sm:$0xf]
      %v6342 = vld [vmem:[%s192 + $0x2c] sm:$0xf]
      %v6343 = vld [vmem:[%s192 + $0x30] sm:$0xf]
      %v6344 = vld [vmem:[%s192 + $0x34] sm:$0xf]
      %v6345 = vld [vmem:[%s192 + $0x38] sm:$0xf]
      %v6346 = vld [vmem:[%s192 + $0x3c] sm:$0xf]
      %v6347 = vld [vmem:[%s192 + $0x40] sm:$0xf]
      %v6348 = vld [vmem:[%s192 + $0x44] sm:$0xf]
      %v6349 = vld [vmem:[%s192 + $0x48] sm:$0xf]
      %v6350 = vld [vmem:[%s192 + $0x4c] sm:$0xf]
      %v6351 = vld [vmem:[%s192 + $0x50] sm:$0xf]
      %v6352 = vld [vmem:[%s192 + $0x54] sm:$0xf]
      %v6353 = vld [vmem:[%s192 + $0x58] sm:$0xf]
      %v6354 = vld [vmem:[%s192 + $0x5c] sm:$0xf]
      %v6355 = vld [vmem:[%s192 + $0x60] sm:$0xf]
      %v6356 = vld [vmem:[%s192 + $0x64] sm:$0xf]
      %v6357 = vld [vmem:[%s192 + $0x68] sm:$0xf]
      %v6358 = vld [vmem:[%s192 + $0x6c] sm:$0xf]
      %v6359 = vld [vmem:[%s192 + $0x70] sm:$0xf]
      %v6360 = vld [vmem:[%s192 + $0x74] sm:$0xf]
      %v6361 = vld [vmem:[%s192 + $0x78] sm:$0xf]
      %v6362 = vld [vmem:[%s192 + $0x7c] sm:$0xf]
      %v6363 = vld [vmem:[%s192 + $0x80] sm:$0xf]
      %v6364 = vld [vmem:[%s192 + $0x84] sm:$0xf]
      %v6365 = vld [vmem:[%s192 + $0x88] sm:$0xf]
      %v6366 = vld [vmem:[%s192 + $0x8c] sm:$0xf]
      %v6367 = vld [vmem:[%s192 + $0x90] sm:$0xf]
      %v6368 = vld [vmem:[%s192 + $0x94] sm:$0xf]
      %v6369 = vld [vmem:[%s192 + $0x98] sm:$0xf]
      %v6370 = vld [vmem:[%s192 + $0x9c] sm:$0xf]
      %v6371 = vld [vmem:[%s192 + $0xa0] sm:$0xf]
      %v6372 = vld [vmem:[%s192 + $0xa4] sm:$0xf]
      %v6373 = vld [vmem:[%s192 + $0xa8] sm:$0x7]
      %v6374 = vunpack.c.l.bf16 %v6333
      %v6375 = vunpack.c.l.bf16 %v6334
      %v6376 = vunpack.c.l.bf16 %v6335
      %v6377 = vunpack.c.l.bf16 %v6336
      %v6378 = vunpack.c.l.bf16 %v6337
      %v6379 = vunpack.c.l.bf16 %v6338
      %v6380 = vunpack.c.l.bf16 %v6339
      %v6381 = vunpack.c.l.bf16 %v6340
      %v6382 = vunpack.c.l.bf16 %v6341
      %v6383 = vunpack.c.l.bf16 %v6342
      %v6384 = vunpack.c.l.bf16 %v6343
      %v6385 = vunpack.c.l.bf16 %v6344
      %v6386 = vunpack.c.l.bf16 %v6345
      %v6387 = vunpack.c.l.bf16 %v6346
      %v6388 = vunpack.c.l.bf16 %v6347
      %v6389 = vunpack.c.l.bf16 %v6348
      %v6390 = vunpack.c.l.bf16 %v6349
      %v6391 = vunpack.c.l.bf16 %v6350
      %v6392 = vunpack.c.l.bf16 %v6351
      %v6393 = vunpack.c.l.bf16 %v6352
      %v6394 = vunpack.c.l.bf16 %v6353
      %v6395 = vunpack.c.l.bf16 %v6354
      %v6396 = vunpack.c.l.bf16 %v6355
      %v6397 = vunpack.c.l.bf16 %v6356
      %v6398 = vunpack.c.l.bf16 %v6357
      %v6399 = vunpack.c.l.bf16 %v6358
      %v6400 = vunpack.c.l.bf16 %v6359
      %v6401 = vunpack.c.l.bf16 %v6360
      %v6402 = vunpack.c.l.bf16 %v6361
      %v6403 = vunpack.c.l.bf16 %v6362
      %v6404 = vunpack.c.l.bf16 %v6363
      %v6405 = vunpack.c.l.bf16 %v6364
      %v6406 = vunpack.c.l.bf16 %v6365
      %v6407 = vunpack.c.l.bf16 %v6366
      %v6408 = vunpack.c.l.bf16 %v6367
      %v6409 = vunpack.c.l.bf16 %v6368
      %v6410 = vunpack.c.l.bf16 %v6369
      %v6411 = vunpack.c.l.bf16 %v6370
      %v6412 = vunpack.c.l.bf16 %v6371
      %v6413 = vunpack.c.l.bf16 %v6372
      %v6414 = vunpack.c.l.bf16 %v6373
      %v6456 = vcombine.high %v6374, %v6374
      %v6457 = vcombine.high %v6375, %v6375
      %v6458 = vcombine.high %v6376, %v6376
      %v6459 = vcombine.high %v6377, %v6377
      %v6460 = vcombine.high %v6378, %v6378
      %v6461 = vcombine.high %v6379, %v6379
      %v6462 = vcombine.high %v6380, %v6380
      %v6463 = vcombine.high %v6381, %v6381
      %v6464 = vcombine.high %v6382, %v6382
      %v6465 = vcombine.high %v6383, %v6383
      %v6466 = vcombine.high %v6384, %v6384
      %v6467 = vcombine.high %v6385, %v6385
      %v6468 = vcombine.high %v6386, %v6386
      %v6469 = vcombine.high %v6387, %v6387
      %v6470 = vcombine.high %v6388, %v6388
      %v6471 = vcombine.high %v6389, %v6389
      %v6472 = vcombine.high %v6390, %v6390
      %v6473 = vcombine.high %v6391, %v6391
      %v6474 = vcombine.high %v6392, %v6392
      %v6475 = vcombine.high %v6393, %v6393
      %v6476 = vcombine.high %v6394, %v6394
      %v6477 = vcombine.high %v6395, %v6395
      %v6478 = vcombine.high %v6396, %v6396
      %v6479 = vcombine.high %v6397, %v6397
      %v6480 = vcombine.high %v6398, %v6398
      %v6481 = vcombine.high %v6399, %v6399
      %v6482 = vcombine.high %v6400, %v6400
      %v6483 = vcombine.high %v6401, %v6401
      %v6484 = vcombine.high %v6402, %v6402
      %v6485 = vcombine.high %v6403, %v6403
      %v6486 = vcombine.high %v6404, %v6404
      %v6487 = vcombine.high %v6405, %v6405
      %v6488 = vcombine.high %v6406, %v6406
      %v6489 = vcombine.high %v6407, %v6407
      %v6490 = vcombine.high %v6408, %v6408
      %v6491 = vcombine.high %v6409, %v6409
      %v6492 = vcombine.high %v6410, %v6410
      %v6493 = vcombine.high %v6411, %v6411
      %v6494 = vcombine.high %v6412, %v6412
      %v6495 = vcombine.high %v6413, %v6413
      %vm6496 = vcmask 1042432
      %vm6497 = vcmask 1046532
      %vm6498 = vmor %vm6496, %vm6497
      %v6499 = vrot.slane %v6456, 5
      %v6500 = vrot.slane %v6499, 4
      %v6501 = vrot.slane %v6375, 5
      %v6502 = vsel %vm6498, %v6500, %v6501
      %v6503 = vrot.slane %v6501, 4
      %v6504 = vrot.slane %v6457, 5
      %v6505 = vsel %vm6498, %v6503, %v6504
      %v6506 = vrot.slane %v6504, 4
      %v6507 = vrot.slane %v6376, 5
      %v6508 = vsel %vm6498, %v6506, %v6507
      %v6509 = vrot.slane %v6507, 4
      %v6510 = vrot.slane %v6458, 5
      %v6511 = vsel %vm6498, %v6509, %v6510
      %v6512 = vrot.slane %v6377, 5
      %v6513 = vrot.slane %v6512, 4
      %v6514 = vrot.slane %v6459, 5
      %v6515 = vsel %vm6498, %v6513, %v6514
      %v6516 = vrot.slane %v6514, 4
      %v6517 = vrot.slane %v6378, 5
      %v6518 = vsel %vm6498, %v6516, %v6517
      %v6519 = vrot.slane %v6517, 4
      %v6520 = vrot.slane %v6460, 5
      %v6521 = vsel %vm6498, %v6519, %v6520
      %v6522 = vrot.slane %v6520, 4
      %v6523 = vrot.slane %v6379, 5
      %v6524 = vsel %vm6498, %v6522, %v6523
      %v6525 = vrot.slane %v6461, 5
      %v6526 = vrot.slane %v6525, 4
      %v6527 = vrot.slane %v6380, 5
      %v6528 = vsel %vm6498, %v6526, %v6527
      %v6529 = vrot.slane %v6527, 4
      %v6530 = vrot.slane %v6462, 5
      %v6531 = vsel %vm6498, %v6529, %v6530
      %v6532 = vrot.slane %v6530, 4
      %v6533 = vrot.slane %v6381, 5
      %v6534 = vsel %vm6498, %v6532, %v6533
      %v6535 = vrot.slane %v6533, 4
      %v6536 = vrot.slane %v6463, 5
      %v6537 = vsel %vm6498, %v6535, %v6536
      %v6538 = vrot.slane %v6382, 5
      %v6539 = vrot.slane %v6538, 4
      %v6540 = vrot.slane %v6464, 5
      %v6541 = vsel %vm6498, %v6539, %v6540
      %v6542 = vrot.slane %v6540, 4
      %v6543 = vrot.slane %v6383, 5
      %v6544 = vsel %vm6498, %v6542, %v6543
      %v6545 = vrot.slane %v6543, 4
      %v6546 = vrot.slane %v6465, 5
      %v6547 = vsel %vm6498, %v6545, %v6546
      %v6548 = vrot.slane %v6546, 4
      %v6549 = vrot.slane %v6384, 5
      %v6550 = vsel %vm6498, %v6548, %v6549
      %v6551 = vrot.slane %v6466, 5
      %v6552 = vrot.slane %v6551, 4
      %v6553 = vrot.slane %v6385, 5
      %v6554 = vsel %vm6498, %v6552, %v6553
      %v6555 = vrot.slane %v6553, 4
      %v6556 = vrot.slane %v6467, 5
      %v6557 = vsel %vm6498, %v6555, %v6556
      %v6558 = vrot.slane %v6556, 4
      %v6559 = vrot.slane %v6386, 5
      %v6560 = vsel %vm6498, %v6558, %v6559
      %v6561 = vrot.slane %v6559, 4
      %v6562 = vrot.slane %v6468, 5
      %v6563 = vsel %vm6498, %v6561, %v6562
      %v6564 = vrot.slane %v6387, 5
      %v6565 = vrot.slane %v6564, 4
      %v6566 = vrot.slane %v6469, 5
      %v6567 = vsel %vm6498, %v6565, %v6566
      %v6568 = vrot.slane %v6566, 4
      %v6569 = vrot.slane %v6388, 5
      %v6570 = vsel %vm6498, %v6568, %v6569
      %v6571 = vrot.slane %v6569, 4
      %v6572 = vrot.slane %v6470, 5
      %v6573 = vsel %vm6498, %v6571, %v6572
      %v6574 = vrot.slane %v6572, 4
      %v6575 = vrot.slane %v6389, 5
      %v6576 = vsel %vm6498, %v6574, %v6575
      %v6577 = vrot.slane %v6471, 5
      %v6578 = vrot.slane %v6577, 4
      %v6579 = vrot.slane %v6390, 5
      %v6580 = vsel %vm6498, %v6578, %v6579
      %v6581 = vrot.slane %v6579, 4
      %v6582 = vrot.slane %v6472, 5
      %v6583 = vsel %vm6498, %v6581, %v6582
      %v6584 = vrot.slane %v6582, 4
      %v6585 = vrot.slane %v6391, 5
      %v6586 = vsel %vm6498, %v6584, %v6585
      %v6587 = vrot.slane %v6585, 4
      %v6588 = vrot.slane %v6473, 5
      %v6589 = vsel %vm6498, %v6587, %v6588
      %v6590 = vrot.slane %v6392, 5
      %v6591 = vrot.slane %v6590, 4
      %v6592 = vrot.slane %v6474, 5
      %v6593 = vsel %vm6498, %v6591, %v6592
      %v6594 = vrot.slane %v6592, 4
      %v6595 = vrot.slane %v6393, 5
      %v6596 = vsel %vm6498, %v6594, %v6595
      %v6597 = vrot.slane %v6595, 4
      %v6598 = vrot.slane %v6475, 5
      %v6599 = vsel %vm6498, %v6597, %v6598
      %v6600 = vrot.slane %v6598, 4
      %v6601 = vrot.slane %v6394, 5
      %v6602 = vsel %vm6498, %v6600, %v6601
      %v6603 = vrot.slane %v6476, 5
      %v6604 = vrot.slane %v6603, 4
      %v6605 = vrot.slane %v6395, 5
      %v6606 = vsel %vm6498, %v6604, %v6605
      %v6607 = vrot.slane %v6605, 4
      %v6608 = vrot.slane %v6477, 5
      %v6609 = vsel %vm6498, %v6607, %v6608
      %v6610 = vrot.slane %v6608, 4
      %v6611 = vrot.slane %v6396, 5
      %v6612 = vsel %vm6498, %v6610, %v6611
      %v6613 = vrot.slane %v6611, 4
      %v6614 = vrot.slane %v6478, 5
      %v6615 = vsel %vm6498, %v6613, %v6614
      %v6616 = vrot.slane %v6397, 5
      %v6617 = vrot.slane %v6616, 4
      %v6618 = vrot.slane %v6479, 5
      %v6619 = vsel %vm6498, %v6617, %v6618
      %v6620 = vrot.slane %v6618, 4
      %v6621 = vrot.slane %v6398, 5
      %v6622 = vsel %vm6498, %v6620, %v6621
      %v6623 = vrot.slane %v6621, 4
      %v6624 = vrot.slane %v6480, 5
      %v6625 = vsel %vm6498, %v6623, %v6624
      %v6626 = vrot.slane %v6624, 4
      %v6627 = vrot.slane %v6399, 5
      %v6628 = vsel %vm6498, %v6626, %v6627
      %v6629 = vrot.slane %v6481, 5
      %v6630 = vrot.slane %v6629, 4
      %v6631 = vrot.slane %v6400, 5
      %v6632 = vsel %vm6498, %v6630, %v6631
      %v6633 = vrot.slane %v6631, 4
      %v6634 = vrot.slane %v6482, 5
      %v6635 = vsel %vm6498, %v6633, %v6634
      %v6636 = vrot.slane %v6634, 4
      %v6637 = vrot.slane %v6401, 5
      %v6638 = vsel %vm6498, %v6636, %v6637
      %v6639 = vrot.slane %v6637, 4
      %v6640 = vrot.slane %v6483, 5
      %v6641 = vsel %vm6498, %v6639, %v6640
      %v6642 = vrot.slane %v6402, 5
      %v6643 = vrot.slane %v6642, 4
      %v6644 = vrot.slane %v6484, 5
      %v6645 = vsel %vm6498, %v6643, %v6644
      %v6646 = vrot.slane %v6644, 4
      %v6647 = vrot.slane %v6403, 5
      %v6648 = vsel %vm6498, %v6646, %v6647
      %v6649 = vrot.slane %v6647, 4
      %v6650 = vrot.slane %v6485, 5
      %v6651 = vsel %vm6498, %v6649, %v6650
      %v6652 = vrot.slane %v6650, 4
      %v6653 = vrot.slane %v6404, 5
      %v6654 = vsel %vm6498, %v6652, %v6653
      %v6655 = vrot.slane %v6486, 5
      %v6656 = vrot.slane %v6655, 4
      %v6657 = vrot.slane %v6405, 5
      %v6658 = vsel %vm6498, %v6656, %v6657
      %v6659 = vrot.slane %v6657, 4
      %v6660 = vrot.slane %v6487, 5
      %v6661 = vsel %vm6498, %v6659, %v6660
      %v6662 = vrot.slane %v6660, 4
      %v6663 = vrot.slane %v6406, 5
      %v6664 = vsel %vm6498, %v6662, %v6663
      %v6665 = vrot.slane %v6663, 4
      %v6666 = vrot.slane %v6488, 5
      %v6667 = vsel %vm6498, %v6665, %v6666
      %v6668 = vrot.slane %v6407, 5
      %v6669 = vrot.slane %v6668, 4
      %v6670 = vrot.slane %v6489, 5
      %v6671 = vsel %vm6498, %v6669, %v6670
      %v6672 = vrot.slane %v6670, 4
      %v6673 = vrot.slane %v6408, 5
      %v6674 = vsel %vm6498, %v6672, %v6673
      %v6675 = vrot.slane %v6673, 4
      %v6676 = vrot.slane %v6490, 5
      %v6677 = vsel %vm6498, %v6675, %v6676
      %v6678 = vrot.slane %v6676, 4
      %v6679 = vrot.slane %v6409, 5
      %v6680 = vsel %vm6498, %v6678, %v6679
      %v6681 = vrot.slane %v6491, 5
      %v6682 = vrot.slane %v6681, 4
      %v6683 = vrot.slane %v6410, 5
      %v6684 = vsel %vm6498, %v6682, %v6683
      %v6685 = vrot.slane %v6683, 4
      %v6686 = vrot.slane %v6492, 5
      %v6687 = vsel %vm6498, %v6685, %v6686
      %v6688 = vrot.slane %v6686, 4
      %v6689 = vrot.slane %v6411, 5
      %v6690 = vsel %vm6498, %v6688, %v6689
      %v6691 = vrot.slane %v6689, 4
      %v6692 = vrot.slane %v6493, 5
      %v6693 = vsel %vm6498, %v6691, %v6692
      %v6694 = vrot.slane %v6412, 5
      %v6695 = vrot.slane %v6694, 4
      %v6696 = vrot.slane %v6494, 5
      %v6697 = vsel %vm6498, %v6695, %v6696
      %v6698 = vrot.slane %v6696, 4
      %v6699 = vrot.slane %v6413, 5
      %v6700 = vsel %vm6498, %v6698, %v6699
      %v6701 = vrot.slane %v6699, 4
      %v6702 = vrot.slane %v6495, 5
      %v6703 = vsel %vm6498, %v6701, %v6702
      %v6704 = vrot.slane %v6702, 4
      %v6705 = vrot.slane %v6414, 5
      %v6706 = vsel %vm6498, %v6704, %v6705
      %v6771 = vadd.f32 %v6502, %v6515
      %v6772 = vadd.f32 %v6505, %v6518
      %v6773 = vadd.f32 %v6508, %v6521
      %v6774 = vadd.f32 %v6511, %v6524
      %v6775 = vadd.f32 %v6528, %v6541
      %v6776 = vadd.f32 %v6531, %v6544
      %v6777 = vadd.f32 %v6534, %v6547
      %v6778 = vadd.f32 %v6537, %v6550
      %v6779 = vadd.f32 %v6554, %v6567
      %v6780 = vadd.f32 %v6557, %v6570
      %v6781 = vadd.f32 %v6560, %v6573
      %v6782 = vadd.f32 %v6563, %v6576
      %v6783 = vadd.f32 %v6580, %v6593
      %v6784 = vadd.f32 %v6583, %v6596
      %v6785 = vadd.f32 %v6586, %v6599
      %v6786 = vadd.f32 %v6589, %v6602
      %v6787 = vadd.f32 %v6606, %v6619
      %v6788 = vadd.f32 %v6609, %v6622
      %v6789 = vadd.f32 %v6612, %v6625
      %v6790 = vadd.f32 %v6615, %v6628
      %v6791 = vadd.f32 %v6632, %v6645
      %v6792 = vadd.f32 %v6635, %v6648
      %v6793 = vadd.f32 %v6638, %v6651
      %v6794 = vadd.f32 %v6641, %v6654
      %v6795 = vadd.f32 %v6658, %v6671
      %v6796 = vadd.f32 %v6661, %v6674
      %v6797 = vadd.f32 %v6664, %v6677
      %v6798 = vadd.f32 %v6667, %v6680
      %v6799 = vadd.f32 %v6684, %v6697
      %v6800 = vadd.f32 %v6687, %v6700
      %v6801 = vadd.f32 %v6690, %v6703
      %v6802 = vadd.f32 %v6693, %v6706
      %v6836 = vunpack.c.l.s4 1983009808
      %v6837 = vunpack.c.0.s8 %v6836
      %v6838 = vlaneseq
      %v6839 = vshrl.u32 %v6838, 7
      %v6840 = vsub.s32 %v6837, %v6839
      %v6841 = vrot.slane %v6771, %v6840
      %v6842 = vcombine.high %v6841, %v6841
      %v6844 = vunpack.c.l.s4 1983009808
      %v6845 = vunpack.c.0.s8 %v6844
      %v6846 = vlaneseq
      %v6847 = vshrl.u32 %v6846, 7
      %v6848 = vsub.s32 %v6845, %v6847
      %v6849 = vrot.slane %v6772, %v6848
      %v6850 = vcombine.high %v6849, %v6849
      %v6852 = vunpack.c.l.s4 1983009808
      %v6853 = vunpack.c.0.s8 %v6852
      %v6854 = vlaneseq
      %v6855 = vshrl.u32 %v6854, 7
      %v6856 = vsub.s32 %v6853, %v6855
      %v6857 = vrot.slane %v6773, %v6856
      %v6858 = vcombine.high %v6857, %v6857
      %v6860 = vunpack.c.l.s4 1983009808
      %v6861 = vunpack.c.0.s8 %v6860
      %v6862 = vlaneseq
      %v6863 = vshrl.u32 %v6862, 7
      %v6864 = vsub.s32 %v6861, %v6863
      %v6865 = vrot.slane %v6774, %v6864
      %v6866 = vcombine.high %v6865, %v6865
      %v6868 = vunpack.c.l.s4 1983009808
      %v6869 = vunpack.c.0.s8 %v6868
      %v6870 = vlaneseq
      %v6871 = vshrl.u32 %v6870, 7
      %v6872 = vsub.s32 %v6869, %v6871
      %v6873 = vrot.slane %v6775, %v6872
      %v6874 = vcombine.high %v6873, %v6873
      %v6876 = vunpack.c.l.s4 1983009808
      %v6877 = vunpack.c.0.s8 %v6876
      %v6878 = vlaneseq
      %v6879 = vshrl.u32 %v6878, 7
      %v6880 = vsub.s32 %v6877, %v6879
      %v6881 = vrot.slane %v6776, %v6880
      %v6882 = vcombine.high %v6881, %v6881
      %v6884 = vunpack.c.l.s4 1983009808
      %v6885 = vunpack.c.0.s8 %v6884
      %v6886 = vlaneseq
      %v6887 = vshrl.u32 %v6886, 7
      %v6888 = vsub.s32 %v6885, %v6887
      %v6889 = vrot.slane %v6777, %v6888
      %v6890 = vcombine.high %v6889, %v6889
      %v6892 = vunpack.c.l.s4 1983009808
      %v6893 = vunpack.c.0.s8 %v6892
      %v6894 = vlaneseq
      %v6895 = vshrl.u32 %v6894, 7
      %v6896 = vsub.s32 %v6893, %v6895
      %v6897 = vrot.slane %v6778, %v6896
      %v6898 = vcombine.high %v6897, %v6897
      %v6900 = vunpack.c.l.s4 1983009808
      %v6901 = vunpack.c.0.s8 %v6900
      %v6902 = vlaneseq
      %v6903 = vshrl.u32 %v6902, 7
      %v6904 = vsub.s32 %v6901, %v6903
      %v6905 = vrot.slane %v6779, %v6904
      %v6906 = vcombine.high %v6905, %v6905
      %v6908 = vunpack.c.l.s4 1983009808
      %v6909 = vunpack.c.0.s8 %v6908
      %v6910 = vlaneseq
      %v6911 = vshrl.u32 %v6910, 7
      %v6912 = vsub.s32 %v6909, %v6911
      %v6913 = vrot.slane %v6780, %v6912
      %v6914 = vcombine.high %v6913, %v6913
      %v6916 = vunpack.c.l.s4 1983009808
      %v6917 = vunpack.c.0.s8 %v6916
      %v6918 = vlaneseq
      %v6919 = vshrl.u32 %v6918, 7
      %v6920 = vsub.s32 %v6917, %v6919
      %v6921 = vrot.slane %v6781, %v6920
      %v6922 = vcombine.high %v6921, %v6921
      %v6924 = vunpack.c.l.s4 1983009808
      %v6925 = vunpack.c.0.s8 %v6924
      %v6926 = vlaneseq
      %v6927 = vshrl.u32 %v6926, 7
      %v6928 = vsub.s32 %v6925, %v6927
      %v6929 = vrot.slane %v6782, %v6928
      %v6930 = vcombine.high %v6929, %v6929
      %v6932 = vunpack.c.l.s4 1983009808
      %v6933 = vunpack.c.0.s8 %v6932
      %v6934 = vlaneseq
      %v6935 = vshrl.u32 %v6934, 7
      %v6936 = vsub.s32 %v6933, %v6935
      %v6937 = vrot.slane %v6783, %v6936
      %v6938 = vcombine.high %v6937, %v6937
      %v6940 = vunpack.c.l.s4 1983009808
      %v6941 = vunpack.c.0.s8 %v6940
      %v6942 = vlaneseq
      %v6943 = vshrl.u32 %v6942, 7
      %v6944 = vsub.s32 %v6941, %v6943
      %v6945 = vrot.slane %v6784, %v6944
      %v6946 = vcombine.high %v6945, %v6945
      %v6948 = vunpack.c.l.s4 1983009808
      %v6949 = vunpack.c.0.s8 %v6948
      %v6950 = vlaneseq
      %v6951 = vshrl.u32 %v6950, 7
      %v6952 = vsub.s32 %v6949, %v6951
      %v6953 = vrot.slane %v6785, %v6952
      %v6954 = vcombine.high %v6953, %v6953
      %v6956 = vunpack.c.l.s4 1983009808
      %v6957 = vunpack.c.0.s8 %v6956
      %v6958 = vlaneseq
      %v6959 = vshrl.u32 %v6958, 7
      %v6960 = vsub.s32 %v6957, %v6959
      %v6961 = vrot.slane %v6786, %v6960
      %v6962 = vcombine.high %v6961, %v6961
      %v6964 = vunpack.c.l.s4 1983009808
      %v6965 = vunpack.c.0.s8 %v6964
      %v6966 = vlaneseq
      %v6967 = vshrl.u32 %v6966, 7
      %v6968 = vsub.s32 %v6965, %v6967
      %v6969 = vrot.slane %v6787, %v6968
      %v6970 = vcombine.high %v6969, %v6969
      %v6972 = vunpack.c.l.s4 1983009808
      %v6973 = vunpack.c.0.s8 %v6972
      %v6974 = vlaneseq
      %v6975 = vshrl.u32 %v6974, 7
      %v6976 = vsub.s32 %v6973, %v6975
      %v6977 = vrot.slane %v6788, %v6976
      %v6978 = vcombine.high %v6977, %v6977
      %v6980 = vunpack.c.l.s4 1983009808
      %v6981 = vunpack.c.0.s8 %v6980
      %v6982 = vlaneseq
      %v6983 = vshrl.u32 %v6982, 7
      %v6984 = vsub.s32 %v6981, %v6983
      %v6985 = vrot.slane %v6789, %v6984
      %v6986 = vcombine.high %v6985, %v6985
      %v6988 = vunpack.c.l.s4 1983009808
      %v6989 = vunpack.c.0.s8 %v6988
      %v6990 = vlaneseq
      %v6991 = vshrl.u32 %v6990, 7
      %v6992 = vsub.s32 %v6989, %v6991
      %v6993 = vrot.slane %v6790, %v6992
      %v6994 = vcombine.high %v6993, %v6993
      %v6996 = vunpack.c.l.s4 1983009808
      %v6997 = vunpack.c.0.s8 %v6996
      %v6998 = vlaneseq
      %v6999 = vshrl.u32 %v6998, 7
      %v7000 = vsub.s32 %v6997, %v6999
      %v7001 = vrot.slane %v6791, %v7000
      %v7002 = vcombine.high %v7001, %v7001
      %v7004 = vunpack.c.l.s4 1983009808
      %v7005 = vunpack.c.0.s8 %v7004
      %v7006 = vlaneseq
      %v7007 = vshrl.u32 %v7006, 7
      %v7008 = vsub.s32 %v7005, %v7007
      %v7009 = vrot.slane %v6792, %v7008
      %v7010 = vcombine.high %v7009, %v7009
      %v7012 = vunpack.c.l.s4 1983009808
      %v7013 = vunpack.c.0.s8 %v7012
      %v7014 = vlaneseq
      %v7015 = vshrl.u32 %v7014, 7
      %v7016 = vsub.s32 %v7013, %v7015
      %v7017 = vrot.slane %v6793, %v7016
      %v7018 = vcombine.high %v7017, %v7017
      %v7020 = vunpack.c.l.s4 1983009808
      %v7021 = vunpack.c.0.s8 %v7020
      %v7022 = vlaneseq
      %v7023 = vshrl.u32 %v7022, 7
      %v7024 = vsub.s32 %v7021, %v7023
      %v7025 = vrot.slane %v6794, %v7024
      %v7026 = vcombine.high %v7025, %v7025
      %v7028 = vunpack.c.l.s4 1983009808
      %v7029 = vunpack.c.0.s8 %v7028
      %v7030 = vlaneseq
      %v7031 = vshrl.u32 %v7030, 7
      %v7032 = vsub.s32 %v7029, %v7031
      %v7033 = vrot.slane %v6795, %v7032
      %v7034 = vcombine.high %v7033, %v7033
      %v7036 = vunpack.c.l.s4 1983009808
      %v7037 = vunpack.c.0.s8 %v7036
      %v7038 = vlaneseq
      %v7039 = vshrl.u32 %v7038, 7
      %v7040 = vsub.s32 %v7037, %v7039
      %v7041 = vrot.slane %v6796, %v7040
      %v7042 = vcombine.high %v7041, %v7041
      %v7044 = vunpack.c.l.s4 1983009808
      %v7045 = vunpack.c.0.s8 %v7044
      %v7046 = vlaneseq
      %v7047 = vshrl.u32 %v7046, 7
      %v7048 = vsub.s32 %v7045, %v7047
      %v7049 = vrot.slane %v6797, %v7048
      %v7050 = vcombine.high %v7049, %v7049
      %v7052 = vunpack.c.l.s4 1983009808
      %v7053 = vunpack.c.0.s8 %v7052
      %v7054 = vlaneseq
      %v7055 = vshrl.u32 %v7054, 7
      %v7056 = vsub.s32 %v7053, %v7055
      %v7057 = vrot.slane %v6798, %v7056
      %v7058 = vcombine.high %v7057, %v7057
      %v7060 = vunpack.c.l.s4 1983009808
      %v7061 = vunpack.c.0.s8 %v7060
      %v7062 = vlaneseq
      %v7063 = vshrl.u32 %v7062, 7
      %v7064 = vsub.s32 %v7061, %v7063
      %v7065 = vrot.slane %v6799, %v7064
      %v7066 = vcombine.high %v7065, %v7065
      %v7068 = vunpack.c.l.s4 1983009808
      %v7069 = vunpack.c.0.s8 %v7068
      %v7070 = vlaneseq
      %v7071 = vshrl.u32 %v7070, 7
      %v7072 = vsub.s32 %v7069, %v7071
      %v7073 = vrot.slane %v6800, %v7072
      %v7074 = vcombine.high %v7073, %v7073
      %v7076 = vunpack.c.l.s4 1983009808
      %v7077 = vunpack.c.0.s8 %v7076
      %v7078 = vlaneseq
      %v7079 = vshrl.u32 %v7078, 7
      %v7080 = vsub.s32 %v7077, %v7079
      %v7081 = vrot.slane %v6801, %v7080
      %v7082 = vcombine.high %v7081, %v7081
      %v7084 = vunpack.c.l.s4 1983009808
      %v7085 = vunpack.c.0.s8 %v7084
      %v7086 = vlaneseq
      %v7087 = vshrl.u32 %v7086, 7
      %v7088 = vsub.s32 %v7085, %v7087
      %v7089 = vrot.slane %v6802, %v7088
      %v7090 = vcombine.high %v7089, %v7089
      %v7155 = vrot.slane %v6841, 7
      %v7156 = vrot.slane %v7155, 2
      %v7157 = vrot.slane %v6842, 7
      %v7158 = vrot.slane %v7157, 2
      %v7159 = vrot.slane %v6849, 7
      %v7160 = vrot.slane %v7159, 2
      %v7161 = vrot.slane %v6850, 7
      %v7162 = vrot.slane %v7161, 2
      %v7163 = vrot.slane %v6857, 7
      %v7164 = vrot.slane %v7163, 2
      %v7165 = vrot.slane %v6858, 7
      %v7166 = vrot.slane %v7165, 2
      %v7167 = vrot.slane %v6865, 7
      %v7168 = vrot.slane %v7167, 2
      %v7169 = vrot.slane %v6866, 7
      %v7170 = vrot.slane %v7169, 2
      %v7171 = vrot.slane %v6873, 7
      %v7172 = vrot.slane %v7171, 2
      %v7173 = vrot.slane %v6874, 7
      %v7174 = vrot.slane %v7173, 2
      %v7175 = vrot.slane %v6881, 7
      %v7176 = vrot.slane %v7175, 2
      %v7177 = vrot.slane %v6882, 7
      %v7178 = vrot.slane %v7177, 2
      %v7179 = vrot.slane %v6889, 7
      %v7180 = vrot.slane %v7179, 2
      %v7181 = vrot.slane %v6890, 7
      %v7182 = vrot.slane %v7181, 2
      %v7183 = vrot.slane %v6897, 7
      %v7184 = vrot.slane %v7183, 2
      %v7185 = vrot.slane %v6898, 7
      %v7186 = vrot.slane %v7185, 2
      %v7187 = vrot.slane %v6905, 7
      %v7188 = vrot.slane %v7187, 2
      %v7189 = vrot.slane %v6906, 7
      %v7190 = vrot.slane %v7189, 2
      %v7191 = vrot.slane %v6913, 7
      %v7192 = vrot.slane %v7191, 2
      %v7193 = vrot.slane %v6914, 7
      %v7194 = vrot.slane %v7193, 2
      %v7195 = vrot.slane %v6921, 7
      %v7196 = vrot.slane %v7195, 2
      %v7197 = vrot.slane %v6922, 7
      %v7198 = vrot.slane %v7197, 2
      %v7199 = vrot.slane %v6929, 7
      %v7200 = vrot.slane %v7199, 2
      %v7201 = vrot.slane %v6930, 7
      %v7202 = vrot.slane %v7201, 2
      %v7203 = vrot.slane %v6937, 7
      %v7204 = vrot.slane %v7203, 2
      %v7205 = vrot.slane %v6938, 7
      %v7206 = vrot.slane %v7205, 2
      %v7207 = vrot.slane %v6945, 7
      %v7208 = vrot.slane %v7207, 2
      %v7209 = vrot.slane %v6946, 7
      %v7210 = vrot.slane %v7209, 2
      %v7211 = vrot.slane %v6953, 7
      %v7212 = vrot.slane %v7211, 2
      %v7213 = vrot.slane %v6954, 7
      %v7214 = vrot.slane %v7213, 2
      %v7215 = vrot.slane %v6961, 7
      %v7216 = vrot.slane %v7215, 2
      %v7217 = vrot.slane %v6962, 7
      %v7218 = vrot.slane %v7217, 2
      %v7219 = vrot.slane %v6969, 7
      %v7220 = vrot.slane %v7219, 2
      %v7221 = vrot.slane %v6970, 7
      %v7222 = vrot.slane %v7221, 2
      %v7223 = vrot.slane %v6977, 7
      %v7224 = vrot.slane %v7223, 2
      %v7225 = vrot.slane %v6978, 7
      %v7226 = vrot.slane %v7225, 2
      %v7227 = vrot.slane %v6985, 7
      %v7228 = vrot.slane %v7227, 2
      %v7229 = vrot.slane %v6986, 7
      %v7230 = vrot.slane %v7229, 2
      %v7231 = vrot.slane %v6993, 7
      %v7232 = vrot.slane %v7231, 2
      %v7233 = vrot.slane %v6994, 7
      %v7234 = vrot.slane %v7233, 2
      %v7235 = vrot.slane %v7001, 7
      %v7236 = vrot.slane %v7235, 2
      %v7237 = vrot.slane %v7002, 7
      %v7238 = vrot.slane %v7237, 2
      %v7239 = vrot.slane %v7009, 7
      %v7240 = vrot.slane %v7239, 2
      %v7241 = vrot.slane %v7010, 7
      %v7242 = vrot.slane %v7241, 2
      %v7243 = vrot.slane %v7017, 7
      %v7244 = vrot.slane %v7243, 2
      %v7245 = vrot.slane %v7018, 7
      %v7246 = vrot.slane %v7245, 2
      %v7247 = vrot.slane %v7025, 7
      %v7248 = vrot.slane %v7247, 2
      %v7249 = vrot.slane %v7026, 7
      %v7250 = vrot.slane %v7249, 2
      %v7251 = vrot.slane %v7033, 7
      %v7252 = vrot.slane %v7251, 2
      %v7253 = vrot.slane %v7034, 7
      %v7254 = vrot.slane %v7253, 2
      %v7255 = vrot.slane %v7041, 7
      %v7256 = vrot.slane %v7255, 2
      %v7257 = vrot.slane %v7042, 7
      %v7258 = vrot.slane %v7257, 2
      %v7259 = vrot.slane %v7049, 7
      %v7260 = vrot.slane %v7259, 2
      %v7261 = vrot.slane %v7050, 7
      %v7262 = vrot.slane %v7261, 2
      %v7263 = vrot.slane %v7057, 7
      %v7264 = vrot.slane %v7263, 2
      %v7265 = vrot.slane %v7058, 7
      %v7266 = vrot.slane %v7265, 2
      %v7267 = vrot.slane %v7065, 7
      %v7268 = vrot.slane %v7267, 2
      %v7269 = vrot.slane %v7066, 7
      %v7270 = vrot.slane %v7269, 2
      %v7271 = vrot.slane %v7073, 7
      %v7272 = vrot.slane %v7271, 2
      %v7273 = vrot.slane %v7074, 7
      %v7274 = vrot.slane %v7273, 2
      %v7275 = vrot.slane %v7081, 7
      %v7276 = vrot.slane %v7275, 2
      %v7277 = vrot.slane %v7082, 7
      %v7278 = vrot.slane %v7277, 2
      %v7279 = vrot.slane %v7089, 7
      %v7280 = vrot.slane %v7279, 2
      %v7281 = vrot.slane %v7090, 7
      %v7282 = vrot.slane %v7281, 2
      %v7347 = vadd.f32 %v6841, %v7156
      %v7348 = vadd.f32 %v6842, %v7158
      %v7349 = vadd.f32 %v6849, %v7160
      %v7350 = vadd.f32 %v6850, %v7162
      %v7351 = vadd.f32 %v6857, %v7164
      %v7352 = vadd.f32 %v6858, %v7166
      %v7353 = vadd.f32 %v6865, %v7168
      %v7354 = vadd.f32 %v6866, %v7170
      %v7355 = vadd.f32 %v6873, %v7172
      %v7356 = vadd.f32 %v6874, %v7174
      %v7357 = vadd.f32 %v6881, %v7176
      %v7358 = vadd.f32 %v6882, %v7178
      %v7359 = vadd.f32 %v6889, %v7180
      %v7360 = vadd.f32 %v6890, %v7182
      %v7361 = vadd.f32 %v6897, %v7184
      %v7362 = vadd.f32 %v6898, %v7186
      %v7363 = vadd.f32 %v6905, %v7188
      %v7364 = vadd.f32 %v6906, %v7190
      %v7365 = vadd.f32 %v6913, %v7192
      %v7366 = vadd.f32 %v6914, %v7194
      %v7367 = vadd.f32 %v6921, %v7196
      %v7368 = vadd.f32 %v6922, %v7198
      %v7369 = vadd.f32 %v6929, %v7200
      %v7370 = vadd.f32 %v6930, %v7202
      %v7371 = vadd.f32 %v6937, %v7204
      %v7372 = vadd.f32 %v6938, %v7206
      %v7373 = vadd.f32 %v6945, %v7208
      %v7374 = vadd.f32 %v6946, %v7210
      %v7375 = vadd.f32 %v6953, %v7212
      %v7376 = vadd.f32 %v6954, %v7214
      %v7377 = vadd.f32 %v6961, %v7216
      %v7378 = vadd.f32 %v6962, %v7218
      %v7379 = vadd.f32 %v6969, %v7220
      %v7380 = vadd.f32 %v6970, %v7222
      %v7381 = vadd.f32 %v6977, %v7224
      %v7382 = vadd.f32 %v6978, %v7226
      %v7383 = vadd.f32 %v6985, %v7228
      %v7384 = vadd.f32 %v6986, %v7230
      %v7385 = vadd.f32 %v6993, %v7232
      %v7386 = vadd.f32 %v6994, %v7234
      %v7387 = vadd.f32 %v7001, %v7236
      %v7388 = vadd.f32 %v7002, %v7238
      %v7389 = vadd.f32 %v7009, %v7240
      %v7390 = vadd.f32 %v7010, %v7242
      %v7391 = vadd.f32 %v7017, %v7244
      %v7392 = vadd.f32 %v7018, %v7246
      %v7393 = vadd.f32 %v7025, %v7248
      %v7394 = vadd.f32 %v7026, %v7250
      %v7395 = vadd.f32 %v7033, %v7252
      %v7396 = vadd.f32 %v7034, %v7254
      %v7397 = vadd.f32 %v7041, %v7256
      %v7398 = vadd.f32 %v7042, %v7258
      %v7399 = vadd.f32 %v7049, %v7260
      %v7400 = vadd.f32 %v7050, %v7262
      %v7401 = vadd.f32 %v7057, %v7264
      %v7402 = vadd.f32 %v7058, %v7266
      %v7403 = vadd.f32 %v7065, %v7268
      %v7404 = vadd.f32 %v7066, %v7270
      %v7405 = vadd.f32 %v7073, %v7272
      %v7406 = vadd.f32 %v7074, %v7274
      %v7407 = vadd.f32 %v7081, %v7276
      %v7408 = vadd.f32 %v7082, %v7278
      %v7409 = vadd.f32 %v7089, %v7280
      %v7410 = vadd.f32 %v7090, %v7282
      %v7411 = vmul.f32 %v7347, 0.25
      %v7412 = vmul.f32 %v7348, 0.25
      %v7413 = vmul.f32 %v7349, 0.25
      %v7414 = vmul.f32 %v7350, 0.25
      %v7415 = vmul.f32 %v7351, 0.25
      %v7416 = vmul.f32 %v7352, 0.25
      %v7417 = vmul.f32 %v7353, 0.25
      %v7418 = vmul.f32 %v7354, 0.25
      %v7419 = vmul.f32 %v7355, 0.25
      %v7420 = vmul.f32 %v7356, 0.25
      %v7421 = vmul.f32 %v7357, 0.25
      %v7422 = vmul.f32 %v7358, 0.25
      %v7423 = vmul.f32 %v7359, 0.25
      %v7424 = vmul.f32 %v7360, 0.25
      %v7425 = vmul.f32 %v7361, 0.25
      %v7426 = vmul.f32 %v7362, 0.25
      %v7427 = vmul.f32 %v7363, 0.25
      %v7428 = vmul.f32 %v7364, 0.25
      %v7429 = vmul.f32 %v7365, 0.25
      %v7430 = vmul.f32 %v7366, 0.25
      %v7431 = vmul.f32 %v7367, 0.25
      %v7432 = vmul.f32 %v7368, 0.25
      %v7433 = vmul.f32 %v7369, 0.25
      %v7434 = vmul.f32 %v7370, 0.25
      %v7435 = vmul.f32 %v7371, 0.25
      %v7436 = vmul.f32 %v7372, 0.25
      %v7437 = vmul.f32 %v7373, 0.25
      %v7438 = vmul.f32 %v7374, 0.25
      %v7439 = vmul.f32 %v7375, 0.25
      %v7440 = vmul.f32 %v7376, 0.25
      %v7441 = vmul.f32 %v7377, 0.25
      %v7442 = vmul.f32 %v7378, 0.25
      %v7443 = vmul.f32 %v7379, 0.25
      %v7444 = vmul.f32 %v7380, 0.25
      %v7445 = vmul.f32 %v7381, 0.25
      %v7446 = vmul.f32 %v7382, 0.25
      %v7447 = vmul.f32 %v7383, 0.25
      %v7448 = vmul.f32 %v7384, 0.25
      %v7449 = vmul.f32 %v7385, 0.25
      %v7450 = vmul.f32 %v7386, 0.25
      %v7451 = vmul.f32 %v7387, 0.25
      %v7452 = vmul.f32 %v7388, 0.25
      %v7453 = vmul.f32 %v7389, 0.25
      %v7454 = vmul.f32 %v7390, 0.25
      %v7455 = vmul.f32 %v7391, 0.25
      %v7456 = vmul.f32 %v7392, 0.25
      %v7457 = vmul.f32 %v7393, 0.25
      %v7458 = vmul.f32 %v7394, 0.25
      %v7459 = vmul.f32 %v7395, 0.25
      %v7460 = vmul.f32 %v7396, 0.25
      %v7461 = vmul.f32 %v7397, 0.25
      %v7462 = vmul.f32 %v7398, 0.25
      %v7463 = vmul.f32 %v7399, 0.25
      %v7464 = vmul.f32 %v7400, 0.25
      %v7465 = vmul.f32 %v7401, 0.25
      %v7466 = vmul.f32 %v7402, 0.25
      %v7467 = vmul.f32 %v7403, 0.25
      %v7468 = vmul.f32 %v7404, 0.25
      %v7469 = vmul.f32 %v7405, 0.25
      %v7470 = vmul.f32 %v7406, 0.25
      %v7471 = vmul.f32 %v7407, 0.25
      %v7472 = vmul.f32 %v7408, 0.25
      %v7473 = vmul.f32 %v7409, 0.25
      %v7474 = vmul.f32 %v7410, 0.25
      %v7475 = vpack.c.bf16 %v7411, %v7411
      %v7476 = vpack.c.bf16 %v7412, %v7412
      %v7477 = vpack.c.bf16 %v7413, %v7413
      %v7478 = vpack.c.bf16 %v7414, %v7414
      %v7479 = vpack.c.bf16 %v7415, %v7415
      %v7480 = vpack.c.bf16 %v7416, %v7416
      %v7481 = vpack.c.bf16 %v7417, %v7417
      %v7482 = vpack.c.bf16 %v7418, %v7418
      %v7483 = vpack.c.bf16 %v7419, %v7419
      %v7484 = vpack.c.bf16 %v7420, %v7420
      %v7485 = vpack.c.bf16 %v7421, %v7421
      %v7486 = vpack.c.bf16 %v7422, %v7422
      %v7487 = vpack.c.bf16 %v7423, %v7423
      %v7488 = vpack.c.bf16 %v7424, %v7424
      %v7489 = vpack.c.bf16 %v7425, %v7425
      %v7490 = vpack.c.bf16 %v7426, %v7426
      %v7491 = vpack.c.bf16 %v7427, %v7427
      %v7492 = vpack.c.bf16 %v7428, %v7428
      %v7493 = vpack.c.bf16 %v7429, %v7429
      %v7494 = vpack.c.bf16 %v7430, %v7430
      %v7495 = vpack.c.bf16 %v7431, %v7431
      %v7496 = vpack.c.bf16 %v7432, %v7432
      %v7497 = vpack.c.bf16 %v7433, %v7433
      %v7498 = vpack.c.bf16 %v7434, %v7434
      %v7499 = vpack.c.bf16 %v7435, %v7435
      %v7500 = vpack.c.bf16 %v7436, %v7436
      %v7501 = vpack.c.bf16 %v7437, %v7437
      %v7502 = vpack.c.bf16 %v7438, %v7438
      %v7503 = vpack.c.bf16 %v7439, %v7439
      %v7504 = vpack.c.bf16 %v7440, %v7440
      %v7505 = vpack.c.bf16 %v7441, %v7441
      %v7506 = vpack.c.bf16 %v7442, %v7442
      %v7507 = vpack.c.bf16 %v7443, %v7443
      %v7508 = vpack.c.bf16 %v7444, %v7444
      %v7509 = vpack.c.bf16 %v7445, %v7445
      %v7510 = vpack.c.bf16 %v7446, %v7446
      %v7511 = vpack.c.bf16 %v7447, %v7447
      %v7512 = vpack.c.bf16 %v7448, %v7448
      %v7513 = vpack.c.bf16 %v7449, %v7449
      %v7514 = vpack.c.bf16 %v7450, %v7450
      %v7515 = vpack.c.bf16 %v7451, %v7451
      %v7516 = vpack.c.bf16 %v7452, %v7452
      %v7517 = vpack.c.bf16 %v7453, %v7453
      %v7518 = vpack.c.bf16 %v7454, %v7454
      %v7519 = vpack.c.bf16 %v7455, %v7455
      %v7520 = vpack.c.bf16 %v7456, %v7456
      %v7521 = vpack.c.bf16 %v7457, %v7457
      %v7522 = vpack.c.bf16 %v7458, %v7458
      %v7523 = vpack.c.bf16 %v7459, %v7459
      %v7524 = vpack.c.bf16 %v7460, %v7460
      %v7525 = vpack.c.bf16 %v7461, %v7461
      %v7526 = vpack.c.bf16 %v7462, %v7462
      %v7527 = vpack.c.bf16 %v7463, %v7463
      %v7528 = vpack.c.bf16 %v7464, %v7464
      %v7529 = vpack.c.bf16 %v7465, %v7465
      %v7530 = vpack.c.bf16 %v7466, %v7466
      %v7531 = vpack.c.bf16 %v7467, %v7467
      %v7532 = vpack.c.bf16 %v7468, %v7468
      %v7533 = vpack.c.bf16 %v7469, %v7469
      %v7534 = vpack.c.bf16 %v7470, %v7470
      %v7535 = vpack.c.bf16 %v7471, %v7471
      %v7536 = vpack.c.bf16 %v7472, %v7472
      %v7537 = vpack.c.bf16 %v7473, %v7473
      %v7538 = vpack.c.bf16 %v7474, %v7474
      %v7539 = vld [vmem:[#allocation2] sm:$0xff]
      %v7540 = vld [vmem:[#allocation2 + $0x8] sm:$0xff]
      %v7541 = vld [vmem:[#allocation2 + $0x10] sm:$0xff]
      %v7542 = vld [vmem:[#allocation2 + $0x18] sm:$0xff]
      %v7543 = vld [vmem:[#allocation2 + $0x20] sm:$0xff]
      %v7544 = vld [vmem:[#allocation2 + $0x28] sm:$0xff]
      %v7545 = vld [vmem:[#allocation2 + $0x30] sm:$0xff]
      %v7546 = vld [vmem:[#allocation2 + $0x38] sm:$0xff]
      %v7547 = vld [vmem:[#allocation2 + $0x40] sm:$0xff]
      %v7548 = vld [vmem:[#allocation2 + $0x48] sm:$0xff]
      %v7549 = vpack.c.bf16 %v7540, %v7539
      %v7550 = vpack.c.bf16 %v7542, %v7541
      %v7551 = vpack.c.bf16 %v7544, %v7543
      %v7552 = vpack.c.bf16 %v7546, %v7545
      %v7553 = vpack.c.bf16 %v7548, %v7547
      %v7554 = vld [vmem:[%s2] sm:$0xf]
      %v7555 = vld [vmem:[%s2 + $0x4] sm:$0xf]
      %v7556 = vld [vmem:[%s2 + $0x8] sm:$0xf]
      %v7557 = vld [vmem:[%s2 + $0xc] sm:$0xf]
      %v7558 = vld [vmem:[%s2 + $0x10] sm:$0xf]
      %v7559 = vld [vmem:[%s2 + $0x14] sm:$0xf]
      %v7560 = vld [vmem:[%s2 + $0x18] sm:$0xf]
      %v7561 = vld [vmem:[%s2 + $0x1c] sm:$0xf]
      %v7562 = vld [vmem:[%s2 + $0x20] sm:$0xf]
      %v7563 = vld [vmem:[%s2 + $0x24] sm:$0xf]
      %v7564 = vld [vmem:[%s2 + $0x28] sm:$0xf]
      %v7565 = vld [vmem:[%s2 + $0x2c] sm:$0xf]
      %v7566 = vld [vmem:[%s2 + $0x30] sm:$0xf]
      %v7567 = vld [vmem:[%s2 + $0x34] sm:$0xf]
      %v7568 = vld [vmem:[%s2 + $0x38] sm:$0xf]
      %v7569 = vld [vmem:[%s2 + $0x3c] sm:$0xf]
      %v7570 = vld [vmem:[#allocation2 + $0x1] sm:$0xff]
      %v7571 = vld [vmem:[#allocation2 + $0x9] sm:$0xff]
      %v7572 = vld [vmem:[#allocation2 + $0x11] sm:$0xff]
      %v7573 = vld [vmem:[#allocation2 + $0x19] sm:$0xff]
      %v7574 = vld [vmem:[#allocation2 + $0x21] sm:$0xff]
      %v7575 = vld [vmem:[#allocation2 + $0x29] sm:$0xff]
      %v7576 = vld [vmem:[#allocation2 + $0x31] sm:$0xff]
      %v7577 = vld [vmem:[#allocation2 + $0x39] sm:$0xff]
      %v7578 = vld [vmem:[#allocation2 + $0x41] sm:$0xff]
      %v7579 = vld [vmem:[#allocation2 + $0x49] sm:$0xff]
      %v7580 = vpack.c.bf16 %v7571, %v7570
      %v7581 = vpack.c.bf16 %v7573, %v7572
      %v7582 = vpack.c.bf16 %v7575, %v7574
      %v7583 = vpack.c.bf16 %v7577, %v7576
      %v7584 = vpack.c.bf16 %v7579, %v7578
      %s7585 = scalar_lea.vmem %s2, 64
      %v7586 = vld [vmem:[%s7585] sm:$0xf]
      %v7587 = vld [vmem:[%s7585 + $0x4] sm:$0xf]
      %v7588 = vld [vmem:[%s7585 + $0x8] sm:$0xf]
      %v7589 = vld [vmem:[%s7585 + $0xc] sm:$0xf]
      %v7590 = vld [vmem:[%s7585 + $0x10] sm:$0xf]
      %v7591 = vld [vmem:[%s7585 + $0x14] sm:$0xf]
      %v7592 = vld [vmem:[%s7585 + $0x18] sm:$0xf]
      %v7593 = vld [vmem:[%s7585 + $0x1c] sm:$0xf]
      %v7594 = vld [vmem:[%s7585 + $0x20] sm:$0xf]
      %v7595 = vld [vmem:[%s7585 + $0x24] sm:$0xf]
      %v7596 = vld [vmem:[%s7585 + $0x28] sm:$0xf]
      %v7597 = vld [vmem:[%s7585 + $0x2c] sm:$0xf]
      %v7598 = vld [vmem:[%s7585 + $0x30] sm:$0xf]
      %v7599 = vld [vmem:[%s7585 + $0x34] sm:$0xf]
      %v7600 = vld [vmem:[%s7585 + $0x38] sm:$0xf]
      %v7601 = vld [vmem:[%s7585 + $0x3c] sm:$0xf]
      %v7618 = vunpack.c.l.b16 %v7586
      %v7619 = vunpack.c.l.b16 %v7587
      %v7620 = vunpack.c.l.b16 %v7588
      %v7621 = vunpack.c.l.b16 %v7589
      %v7622 = vunpack.c.l.b16 %v7590
      %v7623 = vunpack.c.l.b16 %v7591
      %v7624 = vunpack.c.l.b16 %v7592
      %v7625 = vunpack.c.l.b16 %v7593
      %v7626 = vunpack.c.l.b16 %v7594
      %v7627 = vunpack.c.l.b16 %v7595
      %v7628 = vunpack.c.l.b16 %v7596
      %v7629 = vunpack.c.l.b16 %v7597
      %v7630 = vunpack.c.l.b16 %v7598
      %v7631 = vunpack.c.l.b16 %v7599
      %v7632 = vunpack.c.l.b16 %v7600
      %v7633 = vunpack.c.l.b16 %v7601
      %v7634 = vpack.c.b16 %v7619, %v7618
      %v7635 = vpack.c.b16 %v7621, %v7620
      %v7636 = vpack.c.b16 %v7623, %v7622
      %v7637 = vpack.c.b16 %v7625, %v7624
      %v7638 = vpack.c.b16 %v7627, %v7626
      %v7639 = vpack.c.b16 %v7629, %v7628
      %v7640 = vpack.c.b16 %v7631, %v7630
      %v7641 = vpack.c.b16 %v7633, %v7632
      %7650 = vmatprep.subr.bf16.mxu0 0
      %7651 = vmatpush1.bf16.msra.mxu0 %v7641
      %7652 = vmatprep.subr.bf16.mxu0 0
      %7653 = vmatpush1.bf16.msra.mxu0 %v7640
      %7654 = vmatprep.subr.bf16.mxu0 0
      %7655 = vmatpush1.bf16.msra.mxu0 %v7639
      %7656 = vmatprep.subr.bf16.mxu0 0
      %7657 = vmatpush1.bf16.msra.mxu0 %v7638
      %7658 = vmatprep.subr.bf16.mxu0 0
      %7659 = vmatpush1.bf16.msra.mxu0 %v7637
      %7660 = vmatprep.subr.bf16.mxu0 0
      %7661 = vmatpush1.bf16.msra.mxu0 %v7636
      %7662 = vmatprep.subr.bf16.mxu0 0
      %7663 = vmatpush1.bf16.msra.mxu0 %v7635
      %7664 = vmatprep.subr.bf16.mxu0 0
      %7665 = vmatpush1.bf16.msra.mxu0 %v7634
      %7666 = vmatprep.subr.bf16.mxu0 0
      %7667 = vmatpush2.bf16.msra.mxu0 0
      %7668 = vmatprep.subr.bf16.mxu0 0
      %7669 = vmatpush2.bf16.msra.mxu0 0
      %7670 = vmatprep.subr.bf16.mxu0 0
      %7671 = vmatpush2.bf16.msra.mxu0 0
      %7672 = vmatprep.subr.bf16.mxu0 0
      %7673 = vmatpush2.bf16.msra.mxu0 0
      %7674 = vmatprep.subr.bf16.mxu0 0
      %7675 = vmatpush2.bf16.msra.mxu0 0
      %7676 = vmatprep.subr.bf16.mxu0 0
      %7677 = vmatpush2.bf16.msra.mxu0 0
      %7678 = vmatprep.subr.bf16.mxu0 0
      %7679 = vmatpush2.bf16.msra.mxu0 0
      %7680 = vmatprep.subr.bf16.mxu0 0
      %7681 = vmatpush2.bf16.msra.mxu0 0
      %7682 = vmatprep.mubr.bf16.mxu0 0
      %7683 = vmatmul.mubr.bf16.gmra.mxu0 %v7580
      %v7684 = vpop.f32.mrf.mxu0
      %v7685 = vadd.f32 0.0, %v7684
      %v7686 = vpop.f32.mrf.mxu0
      %v7687 = vpop.f32.mrf.mxu0
      %v7688 = vadd.f32 0.0, %v7687
      %v7689 = vpop.f32.mrf.mxu0
      %7690 = vmatprep.mubr.bf16.mxu0 0
      %7691 = vmatmul.mubr.bf16.gmra.mxu0 %v7581
      %v7692 = vpop.f32.mrf.mxu0
      %v7693 = vadd.f32 0.0, %v7692
      %v7694 = vpop.f32.mrf.mxu0
      %v7695 = vpop.f32.mrf.mxu0
      %v7696 = vadd.f32 0.0, %v7695
      %v7697 = vpop.f32.mrf.mxu0
      %7698 = vmatprep.mubr.bf16.mxu0 0
      %7699 = vmatmul.mubr.bf16.gmra.mxu0 %v7582
      %v7700 = vpop.f32.mrf.mxu0
      %v7701 = vadd.f32 0.0, %v7700
      %v7702 = vpop.f32.mrf.mxu0
      %v7703 = vpop.f32.mrf.mxu0
      %v7704 = vadd.f32 0.0, %v7703
      %v7705 = vpop.f32.mrf.mxu0
      %7706 = vmatprep.mubr.bf16.mxu0 0
      %7707 = vmatmul.mubr.bf16.gmra.mxu0 %v7583
      %v7708 = vpop.f32.mrf.mxu0
      %v7709 = vadd.f32 0.0, %v7708
      %v7710 = vpop.f32.mrf.mxu0
      %v7711 = vpop.f32.mrf.mxu0
      %v7712 = vadd.f32 0.0, %v7711
      %v7713 = vpop.f32.mrf.mxu0
      %7714 = vmatprep.mubr.bf16.mxu0 0
      %7715 = vmatmul.mubr.bf16.gmra.mxu0 %v7584
      %v7716 = vpop.f32.mrf.mxu0
      %v7717 = vadd.f32 0.0, %v7716
      %v7718 = vpop.f32.mrf.mxu0
      %v7719 = vpop.f32.mrf.mxu0
      %v7720 = vadd.f32 0.0, %v7719
      %v7721 = vpop.f32.mrf.mxu0
      %7722 = vdwg.mxu0
      %v7739 = vunpack.c.l.b16 %v7554
      %v7740 = vunpack.c.l.b16 %v7555
      %v7741 = vunpack.c.l.b16 %v7556
      %v7742 = vunpack.c.l.b16 %v7557
      %v7743 = vunpack.c.l.b16 %v7558
      %v7744 = vunpack.c.l.b16 %v7559
      %v7745 = vunpack.c.l.b16 %v7560
      %v7746 = vunpack.c.l.b16 %v7561
      %v7747 = vunpack.c.l.b16 %v7562
      %v7748 = vunpack.c.l.b16 %v7563
      %v7749 = vunpack.c.l.b16 %v7564
      %v7750 = vunpack.c.l.b16 %v7565
      %v7751 = vunpack.c.l.b16 %v7566
      %v7752 = vunpack.c.l.b16 %v7567
      %v7753 = vunpack.c.l.b16 %v7568
      %v7754 = vunpack.c.l.b16 %v7569
      %v7755 = vpack.c.b16 %v7740, %v7739
      %v7756 = vpack.c.b16 %v7742, %v7741
      %v7757 = vpack.c.b16 %v7744, %v7743
      %v7758 = vpack.c.b16 %v7746, %v7745
      %v7759 = vpack.c.b16 %v7748, %v7747
      %v7760 = vpack.c.b16 %v7750, %v7749
      %v7761 = vpack.c.b16 %v7752, %v7751
      %v7762 = vpack.c.b16 %v7754, %v7753
      %7771 = vmatprep.subr.bf16.mxu0 0
      %7772 = vmatpush1.bf16.msra.mxu0 %v7762
      %7773 = vmatprep.subr.bf16.mxu0 0
      %7774 = vmatpush1.bf16.msra.mxu0 %v7761
      %7775 = vmatprep.subr.bf16.mxu0 0
      %7776 = vmatpush1.bf16.msra.mxu0 %v7760
      %7777 = vmatprep.subr.bf16.mxu0 0
      %7778 = vmatpush1.bf16.msra.mxu0 %v7759
      %7779 = vmatprep.subr.bf16.mxu0 0
      %7780 = vmatpush1.bf16.msra.mxu0 %v7758
      %7781 = vmatprep.subr.bf16.mxu0 0
      %7782 = vmatpush1.bf16.msra.mxu0 %v7757
      %7783 = vmatprep.subr.bf16.mxu0 0
      %7784 = vmatpush1.bf16.msra.mxu0 %v7756
      %7785 = vmatprep.subr.bf16.mxu0 0
      %7786 = vmatpush1.bf16.msra.mxu0 %v7755
      %7787 = vmatprep.subr.bf16.mxu0 0
      %7788 = vmatpush2.bf16.msra.mxu0 0
      %7789 = vmatprep.subr.bf16.mxu0 0
      %7790 = vmatpush2.bf16.msra.mxu0 0
      %7791 = vmatprep.subr.bf16.mxu0 0
      %7792 = vmatpush2.bf16.msra.mxu0 0
      %7793 = vmatprep.subr.bf16.mxu0 0
      %7794 = vmatpush2.bf16.msra.mxu0 0
      %7795 = vmatprep.subr.bf16.mxu0 0
      %7796 = vmatpush2.bf16.msra.mxu0 0
      %7797 = vmatprep.subr.bf16.mxu0 0
      %7798 = vmatpush2.bf16.msra.mxu0 0
      %7799 = vmatprep.subr.bf16.mxu0 0
      %7800 = vmatpush2.bf16.msra.mxu0 0
      %7801 = vmatprep.subr.bf16.mxu0 0
      %7802 = vmatpush2.bf16.msra.mxu0 0
      %7803 = vmatprep.mubr.bf16.mxu0 0
      %7804 = vmatmul.mubr.bf16.gmra.mxu0 %v7549
      %v7805 = vpop.f32.mrf.mxu0
      %v7806 = vadd.f32 %v7685, %v7805
      %v7807 = vpop.f32.mrf.mxu0
      %v7808 = vpop.f32.mrf.mxu0
      %v7809 = vadd.f32 %v7688, %v7808
      %v7810 = vpop.f32.mrf.mxu0
      %7811 = vmatprep.mubr.bf16.mxu0 0
      %7812 = vmatmul.mubr.bf16.gmra.mxu0 %v7550
      %v7813 = vpop.f32.mrf.mxu0
      %v7814 = vadd.f32 %v7693, %v7813
      %v7815 = vpop.f32.mrf.mxu0
      %v7816 = vpop.f32.mrf.mxu0
      %v7817 = vadd.f32 %v7696, %v7816
      %v7818 = vpop.f32.mrf.mxu0
      %7819 = vmatprep.mubr.bf16.mxu0 0
      %7820 = vmatmul.mubr.bf16.gmra.mxu0 %v7551
      %v7821 = vpop.f32.mrf.mxu0
      %v7822 = vadd.f32 %v7701, %v7821
      %v7823 = vpop.f32.mrf.mxu0
      %v7824 = vpop.f32.mrf.mxu0
      %v7825 = vadd.f32 %v7704, %v7824
      %v7826 = vpop.f32.mrf.mxu0
      %7827 = vmatprep.mubr.bf16.mxu0 0
      %7828 = vmatmul.mubr.bf16.gmra.mxu0 %v7552
      %v7829 = vpop.f32.mrf.mxu0
      %v7830 = vadd.f32 %v7709, %v7829
      %v7831 = vpop.f32.mrf.mxu0
      %v7832 = vpop.f32.mrf.mxu0
      %v7833 = vadd.f32 %v7712, %v7832
      %v7834 = vpop.f32.mrf.mxu0
      %7835 = vmatprep.mubr.bf16.mxu0 0
      %7836 = vmatmul.mubr.bf16.gmra.mxu0 %v7553
      %v7837 = vpop.f32.mrf.mxu0
      %v7838 = vadd.f32 %v7717, %v7837
      %v7839 = vpop.f32.mrf.mxu0
      %v7840 = vpop.f32.mrf.mxu0
      %v7841 = vadd.f32 %v7720, %v7840
      %v7842 = vpop.f32.mrf.mxu0
      %7843 = vdwg.mxu0
      %v7844 = vld [vmem:[#allocation2 + $0x2] sm:$0xff]
      %v7845 = vld [vmem:[#allocation2 + $0xa] sm:$0xff]
      %v7846 = vld [vmem:[#allocation2 + $0x12] sm:$0xff]
      %v7847 = vld [vmem:[#allocation2 + $0x1a] sm:$0xff]
      %v7848 = vld [vmem:[#allocation2 + $0x22] sm:$0xff]
      %v7849 = vld [vmem:[#allocation2 + $0x2a] sm:$0xff]
      %v7850 = vld [vmem:[#allocation2 + $0x32] sm:$0xff]
      %v7851 = vld [vmem:[#allocation2 + $0x3a] sm:$0xff]
      %v7852 = vld [vmem:[#allocation2 + $0x42] sm:$0xff]
      %v7853 = vld [vmem:[#allocation2 + $0x4a] sm:$0xff]
      %v7854 = vpack.c.bf16 %v7845, %v7844
      %v7855 = vpack.c.bf16 %v7847, %v7846
      %v7856 = vpack.c.bf16 %v7849, %v7848
      %v7857 = vpack.c.bf16 %v7851, %v7850
      %v7858 = vpack.c.bf16 %v7853, %v7852
      %s7859 = scalar_lea.vmem %s2, 128
      %v7860 = vld [vmem:[%s7859] sm:$0xf]
      %v7861 = vld [vmem:[%s7859 + $0x4] sm:$0xf]
      %v7862 = vld [vmem:[%s7859 + $0x8] sm:$0xf]
      %v7863 = vld [vmem:[%s7859 + $0xc] sm:$0xf]
      %v7864 = vld [vmem:[%s7859 + $0x10] sm:$0xf]
      %v7865 = vld [vmem:[%s7859 + $0x14] sm:$0xf]
      %v7866 = vld [vmem:[%s7859 + $0x18] sm:$0xf]
      %v7867 = vld [vmem:[%s7859 + $0x1c] sm:$0xf]
      %v7868 = vld [vmem:[%s7859 + $0x20] sm:$0xf]
      %v7869 = vld [vmem:[%s7859 + $0x24] sm:$0xf]
      %v7870 = vld [vmem:[%s7859 + $0x28] sm:$0xf]
      %v7871 = vld [vmem:[%s7859 + $0x2c] sm:$0xf]
      %v7872 = vld [vmem:[%s7859 + $0x30] sm:$0xf]
      %v7873 = vld [vmem:[%s7859 + $0x34] sm:$0xf]
      %v7874 = vld [vmem:[%s7859 + $0x38] sm:$0xf]
      %v7875 = vld [vmem:[%s7859 + $0x3c] sm:$0xf]
      %v7892 = vunpack.c.l.b16 %v7860
      %v7893 = vunpack.c.l.b16 %v7861
      %v7894 = vunpack.c.l.b16 %v7862
      %v7895 = vunpack.c.l.b16 %v7863
      %v7896 = vunpack.c.l.b16 %v7864
      %v7897 = vunpack.c.l.b16 %v7865
      %v7898 = vunpack.c.l.b16 %v7866
      %v7899 = vunpack.c.l.b16 %v7867
      %v7900 = vunpack.c.l.b16 %v7868
      %v7901 = vunpack.c.l.b16 %v7869
      %v7902 = vunpack.c.l.b16 %v7870
      %v7903 = vunpack.c.l.b16 %v7871
      %v7904 = vunpack.c.l.b16 %v7872
      %v7905 = vunpack.c.l.b16 %v7873
      %v7906 = vunpack.c.l.b16 %v7874
      %v7907 = vunpack.c.l.b16 %v7875
      %v7908 = vpack.c.b16 %v7893, %v7892
      %v7909 = vpack.c.b16 %v7895, %v7894
      %v7910 = vpack.c.b16 %v7897, %v7896
      %v7911 = vpack.c.b16 %v7899, %v7898
      %v7912 = vpack.c.b16 %v7901, %v7900
      %v7913 = vpack.c.b16 %v7903, %v7902
      %v7914 = vpack.c.b16 %v7905, %v7904
      %v7915 = vpack.c.b16 %v7907, %v7906
      %7924 = vmatprep.subr.bf16.mxu0 0
      %7925 = vmatpush1.bf16.msra.mxu0 %v7915
      %7926 = vmatprep.subr.bf16.mxu0 0
      %7927 = vmatpush1.bf16.msra.mxu0 %v7914
      %7928 = vmatprep.subr.bf16.mxu0 0
      %7929 = vmatpush1.bf16.msra.mxu0 %v7913
      %7930 = vmatprep.subr.bf16.mxu0 0
      %7931 = vmatpush1.bf16.msra.mxu0 %v7912
      %7932 = vmatprep.subr.bf16.mxu0 0
      %7933 = vmatpush1.bf16.msra.mxu0 %v7911
      %7934 = vmatprep.subr.bf16.mxu0 0
      %7935 = vmatpush1.bf16.msra.mxu0 %v7910
      %7936 = vmatprep.subr.bf16.mxu0 0
      %7937 = vmatpush1.bf16.msra.mxu0 %v7909
      %7938 = vmatprep.subr.bf16.mxu0 0
      %7939 = vmatpush1.bf16.msra.mxu0 %v7908
      %7940 = vmatprep.subr.bf16.mxu0 0
      %7941 = vmatpush2.bf16.msra.mxu0 0
      %7942 = vmatprep.subr.bf16.mxu0 0
      %7943 = vmatpush2.bf16.msra.mxu0 0
      %7944 = vmatprep.subr.bf16.mxu0 0
      %7945 = vmatpush2.bf16.msra.mxu0 0
      %7946 = vmatprep.subr.bf16.mxu0 0
      %7947 = vmatpush2.bf16.msra.mxu0 0
      %7948 = vmatprep.subr.bf16.mxu0 0
      %7949 = vmatpush2.bf16.msra.mxu0 0
      %7950 = vmatprep.subr.bf16.mxu0 0
      %7951 = vmatpush2.bf16.msra.mxu0 0
      %7952 = vmatprep.subr.bf16.mxu0 0
      %7953 = vmatpush2.bf16.msra.mxu0 0
      %7954 = vmatprep.subr.bf16.mxu0 0
      %7955 = vmatpush2.bf16.msra.mxu0 0
      %7956 = vmatprep.mubr.bf16.mxu0 0
      %7957 = vmatmul.mubr.bf16.gmra.mxu0 %v7854
      %v7958 = vpop.f32.mrf.mxu0
      %v7959 = vadd.f32 0.0, %v7958
      %v7960 = vpop.f32.mrf.mxu0
      %v7961 = vpop.f32.mrf.mxu0
      %v7962 = vadd.f32 0.0, %v7961
      %v7963 = vpop.f32.mrf.mxu0
      %7964 = vmatprep.mubr.bf16.mxu0 0
      %7965 = vmatmul.mubr.bf16.gmra.mxu0 %v7855
      %v7966 = vpop.f32.mrf.mxu0
      %v7967 = vadd.f32 0.0, %v7966
      %v7968 = vpop.f32.mrf.mxu0
      %v7969 = vpop.f32.mrf.mxu0
      %v7970 = vadd.f32 0.0, %v7969
      %v7971 = vpop.f32.mrf.mxu0
      %7972 = vmatprep.mubr.bf16.mxu0 0
      %7973 = vmatmul.mubr.bf16.gmra.mxu0 %v7856
      %v7974 = vpop.f32.mrf.mxu0
      %v7975 = vadd.f32 0.0, %v7974
      %v7976 = vpop.f32.mrf.mxu0
      %v7977 = vpop.f32.mrf.mxu0
      %v7978 = vadd.f32 0.0, %v7977
      %v7979 = vpop.f32.mrf.mxu0
      %7980 = vmatprep.mubr.bf16.mxu0 0
      %7981 = vmatmul.mubr.bf16.gmra.mxu0 %v7857
      %v7982 = vpop.f32.mrf.mxu0
      %v7983 = vadd.f32 0.0, %v7982
      %v7984 = vpop.f32.mrf.mxu0
      %v7985 = vpop.f32.mrf.mxu0
      %v7986 = vadd.f32 0.0, %v7985
      %v7987 = vpop.f32.mrf.mxu0
      %7988 = vmatprep.mubr.bf16.mxu0 0
      %7989 = vmatmul.mubr.bf16.gmra.mxu0 %v7858
      %v7990 = vpop.f32.mrf.mxu0
      %v7991 = vadd.f32 0.0, %v7990
      %v7992 = vpop.f32.mrf.mxu0
      %v7993 = vpop.f32.mrf.mxu0
      %v7994 = vadd.f32 0.0, %v7993
      %v7995 = vpop.f32.mrf.mxu0
      %7996 = vdwg.mxu0
      %v7997 = vadd.f32 %v7806, %v7959
      %v7998 = vadd.f32 %v7809, %v7962
      %v7999 = vadd.f32 %v7814, %v7967
      %v8000 = vadd.f32 %v7817, %v7970
      %v8001 = vadd.f32 %v7822, %v7975
      %v8002 = vadd.f32 %v7825, %v7978
      %v8003 = vadd.f32 %v7830, %v7983
      %v8004 = vadd.f32 %v7833, %v7986
      %v8005 = vadd.f32 %v7838, %v7991
      %v8006 = vadd.f32 %v7841, %v7994
      %v8007 = vld [vmem:[#allocation2 + $0xa] sm:$0xff]
      %v8008 = vld [vmem:[#allocation2 + $0x12] sm:$0xff]
      %v8009 = vld [vmem:[#allocation2 + $0x1a] sm:$0xff]
      %v8010 = vld [vmem:[#allocation2 + $0x22] sm:$0xff]
      %v8011 = vld [vmem:[#allocation2 + $0x2a] sm:$0xff]
      %v8012 = vld [vmem:[#allocation2 + $0x32] sm:$0xff]
      %v8013 = vld [vmem:[#allocation2 + $0x3a] sm:$0xff]
      %v8014 = vld [vmem:[#allocation2 + $0x42] sm:$0xff]
      %v8015 = vld [vmem:[#allocation2 + $0x4a] sm:$0xff]
      %v8016 = vld [vmem:[#allocation2 + $0x52] sm:$0xff]
      %v8017 = vpack.c.bf16 %v8008, %v8007
      %v8018 = vpack.c.bf16 %v8010, %v8009
      %v8019 = vpack.c.bf16 %v8012, %v8011
      %v8020 = vpack.c.bf16 %v8014, %v8013
      %v8021 = vpack.c.bf16 %v8016, %v8015
      %s8022 = scalar_lea.vmem %s2, 192
      %v8023 = vld [vmem:[%s8022] sm:$0xf]
      %v8024 = vld [vmem:[%s8022 + $0x4] sm:$0xf]
      %v8025 = vld [vmem:[%s8022 + $0x8] sm:$0xf]
      %v8026 = vld [vmem:[%s8022 + $0xc] sm:$0xf]
      %v8027 = vld [vmem:[%s8022 + $0x10] sm:$0xf]
      %v8028 = vld [vmem:[%s8022 + $0x14] sm:$0xf]
      %v8029 = vld [vmem:[%s8022 + $0x18] sm:$0xf]
      %v8030 = vld [vmem:[%s8022 + $0x1c] sm:$0xf]
      %v8031 = vld [vmem:[%s8022 + $0x20] sm:$0xf]
      %v8032 = vld [vmem:[%s8022 + $0x24] sm:$0xf]
      %v8033 = vld [vmem:[%s8022 + $0x28] sm:$0xf]
      %v8034 = vld [vmem:[%s8022 + $0x2c] sm:$0xf]
      %v8035 = vld [vmem:[%s8022 + $0x30] sm:$0xf]
      %v8036 = vld [vmem:[%s8022 + $0x34] sm:$0xf]
      %v8037 = vld [vmem:[%s8022 + $0x38] sm:$0xf]
      %v8038 = vld [vmem:[%s8022 + $0x3c] sm:$0xf]
      %v8055 = vunpack.c.l.b16 %v8023
      %v8056 = vunpack.c.l.b16 %v8024
      %v8057 = vunpack.c.l.b16 %v8025
      %v8058 = vunpack.c.l.b16 %v8026
      %v8059 = vunpack.c.l.b16 %v8027
      %v8060 = vunpack.c.l.b16 %v8028
      %v8061 = vunpack.c.l.b16 %v8029
      %v8062 = vunpack.c.l.b16 %v8030
      %v8063 = vunpack.c.l.b16 %v8031
      %v8064 = vunpack.c.l.b16 %v8032
      %v8065 = vunpack.c.l.b16 %v8033
      %v8066 = vunpack.c.l.b16 %v8034
      %v8067 = vunpack.c.l.b16 %v8035
      %v8068 = vunpack.c.l.b16 %v8036
      %v8069 = vunpack.c.l.b16 %v8037
      %v8070 = vunpack.c.l.b16 %v8038
      %v8071 = vpack.c.b16 %v8056, %v8055
      %v8072 = vpack.c.b16 %v8058, %v8057
      %v8073 = vpack.c.b16 %v8060, %v8059
      %v8074 = vpack.c.b16 %v8062, %v8061
      %v8075 = vpack.c.b16 %v8064, %v8063
      %v8076 = vpack.c.b16 %v8066, %v8065
      %v8077 = vpack.c.b16 %v8068, %v8067
      %v8078 = vpack.c.b16 %v8070, %v8069
      %8087 = vmatprep.subr.bf16.mxu0 0
      %8088 = vmatpush1.bf16.msra.mxu0 %v8078
      %8089 = vmatprep.subr.bf16.mxu0 0
      %8090 = vmatpush1.bf16.msra.mxu0 %v8077
      %8091 = vmatprep.subr.bf16.mxu0 0
      %8092 = vmatpush1.bf16.msra.mxu0 %v8076
      %8093 = vmatprep.subr.bf16.mxu0 0
      %8094 = vmatpush1.bf16.msra.mxu0 %v8075
      %8095 = vmatprep.subr.bf16.mxu0 0
      %8096 = vmatpush1.bf16.msra.mxu0 %v8074
      %8097 = vmatprep.subr.bf16.mxu0 0
      %8098 = vmatpush1.bf16.msra.mxu0 %v8073
      %8099 = vmatprep.subr.bf16.mxu0 0
      %8100 = vmatpush1.bf16.msra.mxu0 %v8072
      %8101 = vmatprep.subr.bf16.mxu0 0
      %8102 = vmatpush1.bf16.msra.mxu0 %v8071
      %8103 = vmatprep.subr.bf16.mxu0 0
      %8104 = vmatpush2.bf16.msra.mxu0 0
      %8105 = vmatprep.subr.bf16.mxu0 0
      %8106 = vmatpush2.bf16.msra.mxu0 0
      %8107 = vmatprep.subr.bf16.mxu0 0
      %8108 = vmatpush2.bf16.msra.mxu0 0
      %8109 = vmatprep.subr.bf16.mxu0 0
      %8110 = vmatpush2.bf16.msra.mxu0 0
      %8111 = vmatprep.subr.bf16.mxu0 0
      %8112 = vmatpush2.bf16.msra.mxu0 0
      %8113 = vmatprep.subr.bf16.mxu0 0
      %8114 = vmatpush2.bf16.msra.mxu0 0
      %8115 = vmatprep.subr.bf16.mxu0 0
      %8116 = vmatpush2.bf16.msra.mxu0 0
      %8117 = vmatprep.subr.bf16.mxu0 0
      %8118 = vmatpush2.bf16.msra.mxu0 0
      %8119 = vmatprep.mubr.bf16.mxu0 0
      %8120 = vmatmul.mubr.bf16.gmra.mxu0 %v8017
      %v8121 = vpop.f32.mrf.mxu0
      %v8122 = vadd.f32 0.0, %v8121
      %v8123 = vpop.f32.mrf.mxu0
      %v8124 = vpop.f32.mrf.mxu0
      %v8125 = vadd.f32 0.0, %v8124
      %v8126 = vpop.f32.mrf.mxu0
      %8127 = vmatprep.mubr.bf16.mxu0 0
      %8128 = vmatmul.mubr.bf16.gmra.mxu0 %v8018
      %v8129 = vpop.f32.mrf.mxu0
      %v8130 = vadd.f32 0.0, %v8129
      %v8131 = vpop.f32.mrf.mxu0
      %v8132 = vpop.f32.mrf.mxu0
      %v8133 = vadd.f32 0.0, %v8132
      %v8134 = vpop.f32.mrf.mxu0
      %8135 = vmatprep.mubr.bf16.mxu0 0
      %8136 = vmatmul.mubr.bf16.gmra.mxu0 %v8019
      %v8137 = vpop.f32.mrf.mxu0
      %v8138 = vadd.f32 0.0, %v8137
      %v8139 = vpop.f32.mrf.mxu0
      %v8140 = vpop.f32.mrf.mxu0
      %v8141 = vadd.f32 0.0, %v8140
      %v8142 = vpop.f32.mrf.mxu0
      %8143 = vmatprep.mubr.bf16.mxu0 0
      %8144 = vmatmul.mubr.bf16.gmra.mxu0 %v8020
      %v8145 = vpop.f32.mrf.mxu0
      %v8146 = vadd.f32 0.0, %v8145
      %v8147 = vpop.f32.mrf.mxu0
      %v8148 = vpop.f32.mrf.mxu0
      %v8149 = vadd.f32 0.0, %v8148
      %v8150 = vpop.f32.mrf.mxu0
      %8151 = vmatprep.mubr.bf16.mxu0 0
      %8152 = vmatmul.mubr.bf16.gmra.mxu0 %v8021
      %v8153 = vpop.f32.mrf.mxu0
      %v8154 = vadd.f32 0.0, %v8153
      %v8155 = vpop.f32.mrf.mxu0
      %v8156 = vpop.f32.mrf.mxu0
      %v8157 = vadd.f32 0.0, %v8156
      %v8158 = vpop.f32.mrf.mxu0
      %8159 = vdwg.mxu0
      %v8160 = vadd.f32 %v7997, %v8122
      %v8161 = vadd.f32 %v7998, %v8125
      %v8162 = vadd.f32 %v7999, %v8130
      %v8163 = vadd.f32 %v8000, %v8133
      %v8164 = vadd.f32 %v8001, %v8138
      %v8165 = vadd.f32 %v8002, %v8141
      %v8166 = vadd.f32 %v8003, %v8146
      %v8167 = vadd.f32 %v8004, %v8149
      %v8168 = vadd.f32 %v8005, %v8154
      %v8169 = vadd.f32 %v8006, %v8157
      %v8170 = vld [vmem:[#allocation2 + $0xb] sm:$0xff]
      %v8171 = vld [vmem:[#allocation2 + $0x13] sm:$0xff]
      %v8172 = vld [vmem:[#allocation2 + $0x1b] sm:$0xff]
      %v8173 = vld [vmem:[#allocation2 + $0x23] sm:$0xff]
      %v8174 = vld [vmem:[#allocation2 + $0x2b] sm:$0xff]
      %v8175 = vld [vmem:[#allocation2 + $0x33] sm:$0xff]
      %v8176 = vld [vmem:[#allocation2 + $0x3b] sm:$0xff]
      %v8177 = vld [vmem:[#allocation2 + $0x43] sm:$0xff]
      %v8178 = vld [vmem:[#allocation2 + $0x4b] sm:$0xff]
      %v8179 = vld [vmem:[#allocation2 + $0x53] sm:$0xff]
      %v8180 = vpack.c.bf16 %v8171, %v8170
      %v8181 = vpack.c.bf16 %v8173, %v8172
      %v8182 = vpack.c.bf16 %v8175, %v8174
      %v8183 = vpack.c.bf16 %v8177, %v8176
      %v8184 = vpack.c.bf16 %v8179, %v8178
      %s8185 = scalar_lea.vmem %s2, 256
      %v8186 = vld [vmem:[%s8185] sm:$0xf]
      %v8187 = vld [vmem:[%s8185 + $0x4] sm:$0xf]
      %v8188 = vld [vmem:[%s8185 + $0x8] sm:$0xf]
      %v8189 = vld [vmem:[%s8185 + $0xc] sm:$0xf]
      %v8190 = vld [vmem:[%s8185 + $0x10] sm:$0xf]
      %v8191 = vld [vmem:[%s8185 + $0x14] sm:$0xf]
      %v8192 = vld [vmem:[%s8185 + $0x18] sm:$0xf]
      %v8193 = vld [vmem:[%s8185 + $0x1c] sm:$0xf]
      %v8194 = vld [vmem:[%s8185 + $0x20] sm:$0xf]
      %v8195 = vld [vmem:[%s8185 + $0x24] sm:$0xf]
      %v8196 = vld [vmem:[%s8185 + $0x28] sm:$0xf]
      %v8197 = vld [vmem:[%s8185 + $0x2c] sm:$0xf]
      %v8198 = vld [vmem:[%s8185 + $0x30] sm:$0xf]
      %v8199 = vld [vmem:[%s8185 + $0x34] sm:$0xf]
      %v8200 = vld [vmem:[%s8185 + $0x38] sm:$0xf]
      %v8201 = vld [vmem:[%s8185 + $0x3c] sm:$0xf]
      %v8218 = vunpack.c.l.b16 %v8186
      %v8219 = vunpack.c.l.b16 %v8187
      %v8220 = vunpack.c.l.b16 %v8188
      %v8221 = vunpack.c.l.b16 %v8189
      %v8222 = vunpack.c.l.b16 %v8190
      %v8223 = vunpack.c.l.b16 %v8191
      %v8224 = vunpack.c.l.b16 %v8192
      %v8225 = vunpack.c.l.b16 %v8193
      %v8226 = vunpack.c.l.b16 %v8194
      %v8227 = vunpack.c.l.b16 %v8195
      %v8228 = vunpack.c.l.b16 %v8196
      %v8229 = vunpack.c.l.b16 %v8197
      %v8230 = vunpack.c.l.b16 %v8198
      %v8231 = vunpack.c.l.b16 %v8199
      %v8232 = vunpack.c.l.b16 %v8200
      %v8233 = vunpack.c.l.b16 %v8201
      %v8234 = vpack.c.b16 %v8219, %v8218
      %v8235 = vpack.c.b16 %v8221, %v8220
      %v8236 = vpack.c.b16 %v8223, %v8222
      %v8237 = vpack.c.b16 %v8225, %v8224
      %v8238 = vpack.c.b16 %v8227, %v8226
      %v8239 = vpack.c.b16 %v8229, %v8228
      %v8240 = vpack.c.b16 %v8231, %v8230
      %v8241 = vpack.c.b16 %v8233, %v8232
      %8250 = vmatprep.subr.bf16.mxu0 0
      %8251 = vmatpush1.bf16.msra.mxu0 %v8241
      %8252 = vmatprep.subr.bf16.mxu0 0
      %8253 = vmatpush1.bf16.msra.mxu0 %v8240
      %8254 = vmatprep.subr.bf16.mxu0 0
      %8255 = vmatpush1.bf16.msra.mxu0 %v8239
      %8256 = vmatprep.subr.bf16.mxu0 0
      %8257 = vmatpush1.bf16.msra.mxu0 %v8238
      %8258 = vmatprep.subr.bf16.mxu0 0
      %8259 = vmatpush1.bf16.msra.mxu0 %v8237
      %8260 = vmatprep.subr.bf16.mxu0 0
      %8261 = vmatpush1.bf16.msra.mxu0 %v8236
      %8262 = vmatprep.subr.bf16.mxu0 0
      %8263 = vmatpush1.bf16.msra.mxu0 %v8235
      %8264 = vmatprep.subr.bf16.mxu0 0
      %8265 = vmatpush1.bf16.msra.mxu0 %v8234
      %8266 = vmatprep.subr.bf16.mxu0 0
      %8267 = vmatpush2.bf16.msra.mxu0 0
      %8268 = vmatprep.subr.bf16.mxu0 0
      %8269 = vmatpush2.bf16.msra.mxu0 0
      %8270 = vmatprep.subr.bf16.mxu0 0
      %8271 = vmatpush2.bf16.msra.mxu0 0
      %8272 = vmatprep.subr.bf16.mxu0 0
      %8273 = vmatpush2.bf16.msra.mxu0 0
      %8274 = vmatprep.subr.bf16.mxu0 0
      %8275 = vmatpush2.bf16.msra.mxu0 0
      %8276 = vmatprep.subr.bf16.mxu0 0
      %8277 = vmatpush2.bf16.msra.mxu0 0
      %8278 = vmatprep.subr.bf16.mxu0 0
      %8279 = vmatpush2.bf16.msra.mxu0 0
      %8280 = vmatprep.subr.bf16.mxu0 0
      %8281 = vmatpush2.bf16.msra.mxu0 0
      %8282 = vmatprep.mubr.bf16.mxu0 0
      %8283 = vmatmul.mubr.bf16.gmra.mxu0 %v8180
      %v8284 = vpop.f32.mrf.mxu0
      %v8285 = vadd.f32 0.0, %v8284
      %v8286 = vpop.f32.mrf.mxu0
      %v8287 = vpop.f32.mrf.mxu0
      %v8288 = vadd.f32 0.0, %v8287
      %v8289 = vpop.f32.mrf.mxu0
      %8290 = vmatprep.mubr.bf16.mxu0 0
      %8291 = vmatmul.mubr.bf16.gmra.mxu0 %v8181
      %v8292 = vpop.f32.mrf.mxu0
      %v8293 = vadd.f32 0.0, %v8292
      %v8294 = vpop.f32.mrf.mxu0
      %v8295 = vpop.f32.mrf.mxu0
      %v8296 = vadd.f32 0.0, %v8295
      %v8297 = vpop.f32.mrf.mxu0
      %8298 = vmatprep.mubr.bf16.mxu0 0
      %8299 = vmatmul.mubr.bf16.gmra.mxu0 %v8182
      %v8300 = vpop.f32.mrf.mxu0
      %v8301 = vadd.f32 0.0, %v8300
      %v8302 = vpop.f32.mrf.mxu0
      %v8303 = vpop.f32.mrf.mxu0
      %v8304 = vadd.f32 0.0, %v8303
      %v8305 = vpop.f32.mrf.mxu0
      %8306 = vmatprep.mubr.bf16.mxu0 0
      %8307 = vmatmul.mubr.bf16.gmra.mxu0 %v8183
      %v8308 = vpop.f32.mrf.mxu0
      %v8309 = vadd.f32 0.0, %v8308
      %v8310 = vpop.f32.mrf.mxu0
      %v8311 = vpop.f32.mrf.mxu0
      %v8312 = vadd.f32 0.0, %v8311
      %v8313 = vpop.f32.mrf.mxu0
      %8314 = vmatprep.mubr.bf16.mxu0 0
      %8315 = vmatmul.mubr.bf16.gmra.mxu0 %v8184
      %v8316 = vpop.f32.mrf.mxu0
      %v8317 = vadd.f32 0.0, %v8316
      %v8318 = vpop.f32.mrf.mxu0
      %v8319 = vpop.f32.mrf.mxu0
      %v8320 = vadd.f32 0.0, %v8319
      %v8321 = vpop.f32.mrf.mxu0
      %8322 = vdwg.mxu0
      %v8323 = vadd.f32 %v8160, %v8285
      %v8324 = vadd.f32 %v8161, %v8288
      %v8325 = vadd.f32 %v8162, %v8293
      %v8326 = vadd.f32 %v8163, %v8296
      %v8327 = vadd.f32 %v8164, %v8301
      %v8328 = vadd.f32 %v8165, %v8304
      %v8329 = vadd.f32 %v8166, %v8309
      %v8330 = vadd.f32 %v8167, %v8312
      %v8331 = vadd.f32 %v8168, %v8317
      %v8332 = vadd.f32 %v8169, %v8320
      %v8333 = vld [vmem:[#allocation2 + $0xc] sm:$0xff]
      %v8334 = vld [vmem:[#allocation2 + $0x14] sm:$0xff]
      %v8335 = vld [vmem:[#allocation2 + $0x1c] sm:$0xff]
      %v8336 = vld [vmem:[#allocation2 + $0x24] sm:$0xff]
      %v8337 = vld [vmem:[#allocation2 + $0x2c] sm:$0xff]
      %v8338 = vld [vmem:[#allocation2 + $0x34] sm:$0xff]
      %v8339 = vld [vmem:[#allocation2 + $0x3c] sm:$0xff]
      %v8340 = vld [vmem:[#allocation2 + $0x44] sm:$0xff]
      %v8341 = vld [vmem:[#allocation2 + $0x4c] sm:$0xff]
      %v8342 = vld [vmem:[#allocation2 + $0x54] sm:$0xff]
      %v8343 = vpack.c.bf16 %v8334, %v8333
      %v8344 = vpack.c.bf16 %v8336, %v8335
      %v8345 = vpack.c.bf16 %v8338, %v8337
      %v8346 = vpack.c.bf16 %v8340, %v8339
      %v8347 = vpack.c.bf16 %v8342, %v8341
      %s8348 = scalar_lea.vmem %s2, 320
      %v8349 = vld [vmem:[%s8348] sm:$0xf]
      %v8350 = vld [vmem:[%s8348 + $0x4] sm:$0xf]
      %v8351 = vld [vmem:[%s8348 + $0x8] sm:$0xf]
      %v8352 = vld [vmem:[%s8348 + $0xc] sm:$0xf]
      %v8353 = vld [vmem:[%s8348 + $0x10] sm:$0xf]
      %v8354 = vld [vmem:[%s8348 + $0x14] sm:$0xf]
      %v8355 = vld [vmem:[%s8348 + $0x18] sm:$0xf]
      %v8356 = vld [vmem:[%s8348 + $0x1c] sm:$0xf]
      %v8357 = vld [vmem:[%s8348 + $0x20] sm:$0xf]
      %v8358 = vld [vmem:[%s8348 + $0x24] sm:$0xf]
      %v8359 = vld [vmem:[%s8348 + $0x28] sm:$0xf]
      %v8360 = vld [vmem:[%s8348 + $0x2c] sm:$0xf]
      %v8361 = vld [vmem:[%s8348 + $0x30] sm:$0xf]
      %v8362 = vld [vmem:[%s8348 + $0x34] sm:$0xf]
      %v8363 = vld [vmem:[%s8348 + $0x38] sm:$0xf]
      %v8364 = vld [vmem:[%s8348 + $0x3c] sm:$0xf]
      %v8381 = vunpack.c.l.b16 %v8349
      %v8382 = vunpack.c.l.b16 %v8350
      %v8383 = vunpack.c.l.b16 %v8351
      %v8384 = vunpack.c.l.b16 %v8352
      %v8385 = vunpack.c.l.b16 %v8353
      %v8386 = vunpack.c.l.b16 %v8354
      %v8387 = vunpack.c.l.b16 %v8355
      %v8388 = vunpack.c.l.b16 %v8356
      %v8389 = vunpack.c.l.b16 %v8357
      %v8390 = vunpack.c.l.b16 %v8358
      %v8391 = vunpack.c.l.b16 %v8359
      %v8392 = vunpack.c.l.b16 %v8360
      %v8393 = vunpack.c.l.b16 %v8361
      %v8394 = vunpack.c.l.b16 %v8362
      %v8395 = vunpack.c.l.b16 %v8363
      %v8396 = vunpack.c.l.b16 %v8364
      %v8397 = vpack.c.b16 %v8382, %v8381
      %v8398 = vpack.c.b16 %v8384, %v8383
      %v8399 = vpack.c.b16 %v8386, %v8385
      %v8400 = vpack.c.b16 %v8388, %v8387
      %v8401 = vpack.c.b16 %v8390, %v8389
      %v8402 = vpack.c.b16 %v8392, %v8391
      %v8403 = vpack.c.b16 %v8394, %v8393
      %v8404 = vpack.c.b16 %v8396, %v8395
      %8413 = vmatprep.subr.bf16.mxu0 0
      %8414 = vmatpush1.bf16.msra.mxu0 %v8404
      %8415 = vmatprep.subr.bf16.mxu0 0
      %8416 = vmatpush1.bf16.msra.mxu0 %v8403
      %8417 = vmatprep.subr.bf16.mxu0 0
      %8418 = vmatpush1.bf16.msra.mxu0 %v8402
      %8419 = vmatprep.subr.bf16.mxu0 0
      %8420 = vmatpush1.bf16.msra.mxu0 %v8401
      %8421 = vmatprep.subr.bf16.mxu0 0
      %8422 = vmatpush1.bf16.msra.mxu0 %v8400
      %8423 = vmatprep.subr.bf16.mxu0 0
      %8424 = vmatpush1.bf16.msra.mxu0 %v8399
      %8425 = vmatprep.subr.bf16.mxu0 0
      %8426 = vmatpush1.bf16.msra.mxu0 %v8398
      %8427 = vmatprep.subr.bf16.mxu0 0
      %8428 = vmatpush1.bf16.msra.mxu0 %v8397
      %8429 = vmatprep.subr.bf16.mxu0 0
      %8430 = vmatpush2.bf16.msra.mxu0 0
      %8431 = vmatprep.subr.bf16.mxu0 0
      %8432 = vmatpush2.bf16.msra.mxu0 0
      %8433 = vmatprep.subr.bf16.mxu0 0
      %8434 = vmatpush2.bf16.msra.mxu0 0
      %8435 = vmatprep.subr.bf16.mxu0 0
      %8436 = vmatpush2.bf16.msra.mxu0 0
      %8437 = vmatprep.subr.bf16.mxu0 0
      %8438 = vmatpush2.bf16.msra.mxu0 0
      %8439 = vmatprep.subr.bf16.mxu0 0
      %8440 = vmatpush2.bf16.msra.mxu0 0
      %8441 = vmatprep.subr.bf16.mxu0 0
      %8442 = vmatpush2.bf16.msra.mxu0 0
      %8443 = vmatprep.subr.bf16.mxu0 0
      %8444 = vmatpush2.bf16.msra.mxu0 0
      %8445 = vmatprep.mubr.bf16.mxu0 0
      %8446 = vmatmul.mubr.bf16.gmra.mxu0 %v8343
      %v8447 = vpop.f32.mrf.mxu0
      %v8448 = vadd.f32 0.0, %v8447
      %v8449 = vpop.f32.mrf.mxu0
      %v8450 = vpop.f32.mrf.mxu0
      %v8451 = vadd.f32 0.0, %v8450
      %v8452 = vpop.f32.mrf.mxu0
      %8453 = vmatprep.mubr.bf16.mxu0 0
      %8454 = vmatmul.mubr.bf16.gmra.mxu0 %v8344
      %v8455 = vpop.f32.mrf.mxu0
      %v8456 = vadd.f32 0.0, %v8455
      %v8457 = vpop.f32.mrf.mxu0
      %v8458 = vpop.f32.mrf.mxu0
      %v8459 = vadd.f32 0.0, %v8458
      %v8460 = vpop.f32.mrf.mxu0
      %8461 = vmatprep.mubr.bf16.mxu0 0
      %8462 = vmatmul.mubr.bf16.gmra.mxu0 %v8345
      %v8463 = vpop.f32.mrf.mxu0
      %v8464 = vadd.f32 0.0, %v8463
      %v8465 = vpop.f32.mrf.mxu0
      %v8466 = vpop.f32.mrf.mxu0
      %v8467 = vadd.f32 0.0, %v8466
      %v8468 = vpop.f32.mrf.mxu0
      %8469 = vmatprep.mubr.bf16.mxu0 0
      %8470 = vmatmul.mubr.bf16.gmra.mxu0 %v8346
      %v8471 = vpop.f32.mrf.mxu0
      %v8472 = vadd.f32 0.0, %v8471
      %v8473 = vpop.f32.mrf.mxu0
      %v8474 = vpop.f32.mrf.mxu0
      %v8475 = vadd.f32 0.0, %v8474
      %v8476 = vpop.f32.mrf.mxu0
      %8477 = vmatprep.mubr.bf16.mxu0 0
      %8478 = vmatmul.mubr.bf16.gmra.mxu0 %v8347
      %v8479 = vpop.f32.mrf.mxu0
      %v8480 = vadd.f32 0.0, %v8479
      %v8481 = vpop.f32.mrf.mxu0
      %v8482 = vpop.f32.mrf.mxu0
      %v8483 = vadd.f32 0.0, %v8482
      %v8484 = vpop.f32.mrf.mxu0
      %8485 = vdwg.mxu0
      %v8486 = vadd.f32 %v8323, %v8448
      %v8487 = vadd.f32 %v8324, %v8451
      %v8488 = vadd.f32 %v8325, %v8456
      %v8489 = vadd.f32 %v8326, %v8459
      %v8490 = vadd.f32 %v8327, %v8464
      %v8491 = vadd.f32 %v8328, %v8467
      %v8492 = vadd.f32 %v8329, %v8472
      %v8493 = vadd.f32 %v8330, %v8475
      %v8494 = vadd.f32 %v8331, %v8480
      %v8495 = vadd.f32 %v8332, %v8483
      %v8496 = vld [vmem:[#allocation2 + $0x14] sm:$0xff]
      %v8497 = vld [vmem:[#allocation2 + $0x1c] sm:$0xff]
      %v8498 = vld [vmem:[#allocation2 + $0x24] sm:$0xff]
      %v8499 = vld [vmem:[#allocation2 + $0x2c] sm:$0xff]
      %v8500 = vld [vmem:[#allocation2 + $0x34] sm:$0xff]
      %v8501 = vld [vmem:[#allocation2 + $0x3c] sm:$0xff]
      %v8502 = vld [vmem:[#allocation2 + $0x44] sm:$0xff]
      %v8503 = vld [vmem:[#allocation2 + $0x4c] sm:$0xff]
      %v8504 = vld [vmem:[#allocation2 + $0x54] sm:$0xff]
      %v8505 = vld [vmem:[#allocation2 + $0x5c] sm:$0xff]
      %v8506 = vpack.c.bf16 %v8497, %v8496
      %v8507 = vpack.c.bf16 %v8499, %v8498
      %v8508 = vpack.c.bf16 %v8501, %v8500
      %v8509 = vpack.c.bf16 %v8503, %v8502
      %v8510 = vpack.c.bf16 %v8505, %v8504
      %s8511 = scalar_lea.vmem %s2, 384
      %v8512 = vld [vmem:[%s8511] sm:$0xf]
      %v8513 = vld [vmem:[%s8511 + $0x4] sm:$0xf]
      %v8514 = vld [vmem:[%s8511 + $0x8] sm:$0xf]
      %v8515 = vld [vmem:[%s8511 + $0xc] sm:$0xf]
      %v8516 = vld [vmem:[%s8511 + $0x10] sm:$0xf]
      %v8517 = vld [vmem:[%s8511 + $0x14] sm:$0xf]
      %v8518 = vld [vmem:[%s8511 + $0x18] sm:$0xf]
      %v8519 = vld [vmem:[%s8511 + $0x1c] sm:$0xf]
      %v8520 = vld [vmem:[%s8511 + $0x20] sm:$0xf]
      %v8521 = vld [vmem:[%s8511 + $0x24] sm:$0xf]
      %v8522 = vld [vmem:[%s8511 + $0x28] sm:$0xf]
      %v8523 = vld [vmem:[%s8511 + $0x2c] sm:$0xf]
      %v8524 = vld [vmem:[%s8511 + $0x30] sm:$0xf]
      %v8525 = vld [vmem:[%s8511 + $0x34] sm:$0xf]
      %v8526 = vld [vmem:[%s8511 + $0x38] sm:$0xf]
      %v8527 = vld [vmem:[%s8511 + $0x3c] sm:$0xf]
      %v8544 = vunpack.c.l.b16 %v8512
      %v8545 = vunpack.c.l.b16 %v8513
      %v8546 = vunpack.c.l.b16 %v8514
      %v8547 = vunpack.c.l.b16 %v8515
      %v8548 = vunpack.c.l.b16 %v8516
      %v8549 = vunpack.c.l.b16 %v8517
      %v8550 = vunpack.c.l.b16 %v8518
      %v8551 = vunpack.c.l.b16 %v8519
      %v8552 = vunpack.c.l.b16 %v8520
      %v8553 = vunpack.c.l.b16 %v8521
      %v8554 = vunpack.c.l.b16 %v8522
      %v8555 = vunpack.c.l.b16 %v8523
      %v8556 = vunpack.c.l.b16 %v8524
      %v8557 = vunpack.c.l.b16 %v8525
      %v8558 = vunpack.c.l.b16 %v8526
      %v8559 = vunpack.c.l.b16 %v8527
      %v8560 = vpack.c.b16 %v8545, %v8544
      %v8561 = vpack.c.b16 %v8547, %v8546
      %v8562 = vpack.c.b16 %v8549, %v8548
      %v8563 = vpack.c.b16 %v8551, %v8550
      %v8564 = vpack.c.b16 %v8553, %v8552
      %v8565 = vpack.c.b16 %v8555, %v8554
      %v8566 = vpack.c.b16 %v8557, %v8556
      %v8567 = vpack.c.b16 %v8559, %v8558
      %8576 = vmatprep.subr.bf16.mxu0 0
      %8577 = vmatpush1.bf16.msra.mxu0 %v8567
      %8578 = vmatprep.subr.bf16.mxu0 0
      %8579 = vmatpush1.bf16.msra.mxu0 %v8566
      %8580 = vmatprep.subr.bf16.mxu0 0
      %8581 = vmatpush1.bf16.msra.mxu0 %v8565
      %8582 = vmatprep.subr.bf16.mxu0 0
      %8583 = vmatpush1.bf16.msra.mxu0 %v8564
      %8584 = vmatprep.subr.bf16.mxu0 0
      %8585 = vmatpush1.bf16.msra.mxu0 %v8563
      %8586 = vmatprep.subr.bf16.mxu0 0
      %8587 = vmatpush1.bf16.msra.mxu0 %v8562
      %8588 = vmatprep.subr.bf16.mxu0 0
      %8589 = vmatpush1.bf16.msra.mxu0 %v8561
      %8590 = vmatprep.subr.bf16.mxu0 0
      %8591 = vmatpush1.bf16.msra.mxu0 %v8560
      %8592 = vmatprep.subr.bf16.mxu0 0
      %8593 = vmatpush2.bf16.msra.mxu0 0
      %8594 = vmatprep.subr.bf16.mxu0 0
      %8595 = vmatpush2.bf16.msra.mxu0 0
      %8596 = vmatprep.subr.bf16.mxu0 0
      %8597 = vmatpush2.bf16.msra.mxu0 0
      %8598 = vmatprep.subr.bf16.mxu0 0
      %8599 = vmatpush2.bf16.msra.mxu0 0
      %8600 = vmatprep.subr.bf16.mxu0 0
      %8601 = vmatpush2.bf16.msra.mxu0 0
      %8602 = vmatprep.subr.bf16.mxu0 0
      %8603 = vmatpush2.bf16.msra.mxu0 0
      %8604 = vmatprep.subr.bf16.mxu0 0
      %8605 = vmatpush2.bf16.msra.mxu0 0
      %8606 = vmatprep.subr.bf16.mxu0 0
      %8607 = vmatpush2.bf16.msra.mxu0 0
      %8608 = vmatprep.mubr.bf16.mxu0 0
      %8609 = vmatmul.mubr.bf16.gmra.mxu0 %v8506
      %v8610 = vpop.f32.mrf.mxu0
      %v8611 = vadd.f32 0.0, %v8610
      %v8612 = vpop.f32.mrf.mxu0
      %v8613 = vpop.f32.mrf.mxu0
      %v8614 = vadd.f32 0.0, %v8613
      %v8615 = vpop.f32.mrf.mxu0
      %8616 = vmatprep.mubr.bf16.mxu0 0
      %8617 = vmatmul.mubr.bf16.gmra.mxu0 %v8507
      %v8618 = vpop.f32.mrf.mxu0
      %v8619 = vadd.f32 0.0, %v8618
      %v8620 = vpop.f32.mrf.mxu0
      %v8621 = vpop.f32.mrf.mxu0
      %v8622 = vadd.f32 0.0, %v8621
      %v8623 = vpop.f32.mrf.mxu0
      %8624 = vmatprep.mubr.bf16.mxu0 0
      %8625 = vmatmul.mubr.bf16.gmra.mxu0 %v8508
      %v8626 = vpop.f32.mrf.mxu0
      %v8627 = vadd.f32 0.0, %v8626
      %v8628 = vpop.f32.mrf.mxu0
      %v8629 = vpop.f32.mrf.mxu0
      %v8630 = vadd.f32 0.0, %v8629
      %v8631 = vpop.f32.mrf.mxu0
      %8632 = vmatprep.mubr.bf16.mxu0 0
      %8633 = vmatmul.mubr.bf16.gmra.mxu0 %v8509
      %v8634 = vpop.f32.mrf.mxu0
      %v8635 = vadd.f32 0.0, %v8634
      %v8636 = vpop.f32.mrf.mxu0
      %v8637 = vpop.f32.mrf.mxu0
      %v8638 = vadd.f32 0.0, %v8637
      %v8639 = vpop.f32.mrf.mxu0
      %8640 = vmatprep.mubr.bf16.mxu0 0
      %8641 = vmatmul.mubr.bf16.gmra.mxu0 %v8510
      %v8642 = vpop.f32.mrf.mxu0
      %v8643 = vadd.f32 0.0, %v8642
      %v8644 = vpop.f32.mrf.mxu0
      %v8645 = vpop.f32.mrf.mxu0
      %v8646 = vadd.f32 0.0, %v8645
      %v8647 = vpop.f32.mrf.mxu0
      %8648 = vdwg.mxu0
      %v8649 = vadd.f32 %v8486, %v8611
      %v8650 = vadd.f32 %v8487, %v8614
      %v8651 = vadd.f32 %v8488, %v8619
      %v8652 = vadd.f32 %v8489, %v8622
      %v8653 = vadd.f32 %v8490, %v8627
      %v8654 = vadd.f32 %v8491, %v8630
      %v8655 = vadd.f32 %v8492, %v8635
      %v8656 = vadd.f32 %v8493, %v8638
      %v8657 = vadd.f32 %v8494, %v8643
      %v8658 = vadd.f32 %v8495, %v8646
      %v8659 = vld [vmem:[#allocation2 + $0x15] sm:$0xff]
      %v8660 = vld [vmem:[#allocation2 + $0x1d] sm:$0xff]
      %v8661 = vld [vmem:[#allocation2 + $0x25] sm:$0xff]
      %v8662 = vld [vmem:[#allocation2 + $0x2d] sm:$0xff]
      %v8663 = vld [vmem:[#allocation2 + $0x35] sm:$0xff]
      %v8664 = vld [vmem:[#allocation2 + $0x3d] sm:$0xff]
      %v8665 = vld [vmem:[#allocation2 + $0x45] sm:$0xff]
      %v8666 = vld [vmem:[#allocation2 + $0x4d] sm:$0xff]
      %v8667 = vld [vmem:[#allocation2 + $0x55] sm:$0xff]
      %v8668 = vld [vmem:[#allocation2 + $0x5d] sm:$0xff]
      %v8669 = vpack.c.bf16 %v8660, %v8659
      %v8670 = vpack.c.bf16 %v8662, %v8661
      %v8671 = vpack.c.bf16 %v8664, %v8663
      %v8672 = vpack.c.bf16 %v8666, %v8665
      %v8673 = vpack.c.bf16 %v8668, %v8667
      %s8674 = scalar_lea.vmem %s2, 448
      %v8675 = vld [vmem:[%s8674] sm:$0xf]
      %v8676 = vld [vmem:[%s8674 + $0x4] sm:$0xf]
      %v8677 = vld [vmem:[%s8674 + $0x8] sm:$0xf]
      %v8678 = vld [vmem:[%s8674 + $0xc] sm:$0xf]
      %v8679 = vld [vmem:[%s8674 + $0x10] sm:$0xf]
      %v8680 = vld [vmem:[%s8674 + $0x14] sm:$0xf]
      %v8681 = vld [vmem:[%s8674 + $0x18] sm:$0xf]
      %v8682 = vld [vmem:[%s8674 + $0x1c] sm:$0xf]
      %v8683 = vld [vmem:[%s8674 + $0x20] sm:$0xf]
      %v8684 = vld [vmem:[%s8674 + $0x24] sm:$0xf]
      %v8685 = vld [vmem:[%s8674 + $0x28] sm:$0xf]
      %v8686 = vld [vmem:[%s8674 + $0x2c] sm:$0xf]
      %v8687 = vld [vmem:[%s8674 + $0x30] sm:$0xf]
      %v8688 = vld [vmem:[%s8674 + $0x34] sm:$0xf]
      %v8689 = vld [vmem:[%s8674 + $0x38] sm:$0xf]
      %v8690 = vld [vmem:[%s8674 + $0x3c] sm:$0xf]
      %v8707 = vunpack.c.l.b16 %v8675
      %v8708 = vunpack.c.l.b16 %v8676
      %v8709 = vunpack.c.l.b16 %v8677
      %v8710 = vunpack.c.l.b16 %v8678
      %v8711 = vunpack.c.l.b16 %v8679
      %v8712 = vunpack.c.l.b16 %v8680
      %v8713 = vunpack.c.l.b16 %v8681
      %v8714 = vunpack.c.l.b16 %v8682
      %v8715 = vunpack.c.l.b16 %v8683
      %v8716 = vunpack.c.l.b16 %v8684
      %v8717 = vunpack.c.l.b16 %v8685
      %v8718 = vunpack.c.l.b16 %v8686
      %v8719 = vunpack.c.l.b16 %v8687
      %v8720 = vunpack.c.l.b16 %v8688
      %v8721 = vunpack.c.l.b16 %v8689
      %v8722 = vunpack.c.l.b16 %v8690
      %v8723 = vpack.c.b16 %v8708, %v8707
      %v8724 = vpack.c.b16 %v8710, %v8709
      %v8725 = vpack.c.b16 %v8712, %v8711
      %v8726 = vpack.c.b16 %v8714, %v8713
      %v8727 = vpack.c.b16 %v8716, %v8715
      %v8728 = vpack.c.b16 %v8718, %v8717
      %v8729 = vpack.c.b16 %v8720, %v8719
      %v8730 = vpack.c.b16 %v8722, %v8721
      %8739 = vmatprep.subr.bf16.mxu0 0
      %8740 = vmatpush1.bf16.msra.mxu0 %v8730
      %8741 = vmatprep.subr.bf16.mxu0 0
      %8742 = vmatpush1.bf16.msra.mxu0 %v8729
      %8743 = vmatprep.subr.bf16.mxu0 0
      %8744 = vmatpush1.bf16.msra.mxu0 %v8728
      %8745 = vmatprep.subr.bf16.mxu0 0
      %8746 = vmatpush1.bf16.msra.mxu0 %v8727
      %8747 = vmatprep.subr.bf16.mxu0 0
      %8748 = vmatpush1.bf16.msra.mxu0 %v8726
      %8749 = vmatprep.subr.bf16.mxu0 0
      %8750 = vmatpush1.bf16.msra.mxu0 %v8725
      %8751 = vmatprep.subr.bf16.mxu0 0
      %8752 = vmatpush1.bf16.msra.mxu0 %v8724
      %8753 = vmatprep.subr.bf16.mxu0 0
      %8754 = vmatpush1.bf16.msra.mxu0 %v8723
      %8755 = vmatprep.subr.bf16.mxu0 0
      %8756 = vmatpush2.bf16.msra.mxu0 0
      %8757 = vmatprep.subr.bf16.mxu0 0
      %8758 = vmatpush2.bf16.msra.mxu0 0
      %8759 = vmatprep.subr.bf16.mxu0 0
      %8760 = vmatpush2.bf16.msra.mxu0 0
      %8761 = vmatprep.subr.bf16.mxu0 0
      %8762 = vmatpush2.bf16.msra.mxu0 0
      %8763 = vmatprep.subr.bf16.mxu0 0
      %8764 = vmatpush2.bf16.msra.mxu0 0
      %8765 = vmatprep.subr.bf16.mxu0 0
      %8766 = vmatpush2.bf16.msra.mxu0 0
      %8767 = vmatprep.subr.bf16.mxu0 0
      %8768 = vmatpush2.bf16.msra.mxu0 0
      %8769 = vmatprep.subr.bf16.mxu0 0
      %8770 = vmatpush2.bf16.msra.mxu0 0
      %8771 = vmatprep.mubr.bf16.mxu0 0
      %8772 = vmatmul.mubr.bf16.gmra.mxu0 %v8669
      %v8773 = vpop.f32.mrf.mxu0
      %v8774 = vadd.f32 0.0, %v8773
      %v8775 = vpop.f32.mrf.mxu0
      %v8776 = vpop.f32.mrf.mxu0
      %v8777 = vadd.f32 0.0, %v8776
      %v8778 = vpop.f32.mrf.mxu0
      %8779 = vmatprep.mubr.bf16.mxu0 0
      %8780 = vmatmul.mubr.bf16.gmra.mxu0 %v8670
      %v8781 = vpop.f32.mrf.mxu0
      %v8782 = vadd.f32 0.0, %v8781
      %v8783 = vpop.f32.mrf.mxu0
      %v8784 = vpop.f32.mrf.mxu0
      %v8785 = vadd.f32 0.0, %v8784
      %v8786 = vpop.f32.mrf.mxu0
      %8787 = vmatprep.mubr.bf16.mxu0 0
      %8788 = vmatmul.mubr.bf16.gmra.mxu0 %v8671
      %v8789 = vpop.f32.mrf.mxu0
      %v8790 = vadd.f32 0.0, %v8789
      %v8791 = vpop.f32.mrf.mxu0
      %v8792 = vpop.f32.mrf.mxu0
      %v8793 = vadd.f32 0.0, %v8792
      %v8794 = vpop.f32.mrf.mxu0
      %8795 = vmatprep.mubr.bf16.mxu0 0
      %8796 = vmatmul.mubr.bf16.gmra.mxu0 %v8672
      %v8797 = vpop.f32.mrf.mxu0
      %v8798 = vadd.f32 0.0, %v8797
      %v8799 = vpop.f32.mrf.mxu0
      %v8800 = vpop.f32.mrf.mxu0
      %v8801 = vadd.f32 0.0, %v8800
      %v8802 = vpop.f32.mrf.mxu0
      %8803 = vmatprep.mubr.bf16.mxu0 0
      %8804 = vmatmul.mubr.bf16.gmra.mxu0 %v8673
      %v8805 = vpop.f32.mrf.mxu0
      %v8806 = vadd.f32 0.0, %v8805
      %v8807 = vpop.f32.mrf.mxu0
      %v8808 = vpop.f32.mrf.mxu0
      %v8809 = vadd.f32 0.0, %v8808
      %v8810 = vpop.f32.mrf.mxu0
      %8811 = vdwg.mxu0
      %v8812 = vadd.f32 %v8649, %v8774
      %v8813 = vadd.f32 %v8650, %v8777
      %v8814 = vadd.f32 %v8651, %v8782
      %v8815 = vadd.f32 %v8652, %v8785
      %v8816 = vadd.f32 %v8653, %v8790
      %v8817 = vadd.f32 %v8654, %v8793
      %v8818 = vadd.f32 %v8655, %v8798
      %v8819 = vadd.f32 %v8656, %v8801
      %v8820 = vadd.f32 %v8657, %v8806
      %v8821 = vadd.f32 %v8658, %v8809
      %v8822 = vld [vmem:[#allocation2 + $0x16] sm:$0xff]
      %v8823 = vld [vmem:[#allocation2 + $0x1e] sm:$0xff]
      %v8824 = vld [vmem:[#allocation2 + $0x26] sm:$0xff]
      %v8825 = vld [vmem:[#allocation2 + $0x2e] sm:$0xff]
      %v8826 = vld [vmem:[#allocation2 + $0x36] sm:$0xff]
      %v8827 = vld [vmem:[#allocation2 + $0x3e] sm:$0xff]
      %v8828 = vld [vmem:[#allocation2 + $0x46] sm:$0xff]
      %v8829 = vld [vmem:[#allocation2 + $0x4e] sm:$0xff]
      %v8830 = vld [vmem:[#allocation2 + $0x56] sm:$0xff]
      %v8831 = vld [vmem:[#allocation2 + $0x5e] sm:$0xff]
      %v8832 = vpack.c.bf16 %v8823, %v8822
      %v8833 = vpack.c.bf16 %v8825, %v8824
      %v8834 = vpack.c.bf16 %v8827, %v8826
      %v8835 = vpack.c.bf16 %v8829, %v8828
      %v8836 = vpack.c.bf16 %v8831, %v8830
      %s8837 = scalar_lea.vmem %s2, 512
      %v8838 = vld [vmem:[%s8837] sm:$0xf]
      %v8839 = vld [vmem:[%s8837 + $0x4] sm:$0xf]
      %v8840 = vld [vmem:[%s8837 + $0x8] sm:$0xf]
      %v8841 = vld [vmem:[%s8837 + $0xc] sm:$0xf]
      %v8842 = vld [vmem:[%s8837 + $0x10] sm:$0xf]
      %v8843 = vld [vmem:[%s8837 + $0x14] sm:$0xf]
      %v8844 = vld [vmem:[%s8837 + $0x18] sm:$0xf]
      %v8845 = vld [vmem:[%s8837 + $0x1c] sm:$0xf]
      %v8846 = vld [vmem:[%s8837 + $0x20] sm:$0xf]
      %v8847 = vld [vmem:[%s8837 + $0x24] sm:$0xf]
      %v8848 = vld [vmem:[%s8837 + $0x28] sm:$0xf]
      %v8849 = vld [vmem:[%s8837 + $0x2c] sm:$0xf]
      %v8850 = vld [vmem:[%s8837 + $0x30] sm:$0xf]
      %v8851 = vld [vmem:[%s8837 + $0x34] sm:$0xf]
      %v8852 = vld [vmem:[%s8837 + $0x38] sm:$0xf]
      %v8853 = vld [vmem:[%s8837 + $0x3c] sm:$0xf]
      %v8870 = vunpack.c.l.b16 %v8838
      %v8871 = vunpack.c.l.b16 %v8839
      %v8872 = vunpack.c.l.b16 %v8840
      %v8873 = vunpack.c.l.b16 %v8841
      %v8874 = vunpack.c.l.b16 %v8842
      %v8875 = vunpack.c.l.b16 %v8843
      %v8876 = vunpack.c.l.b16 %v8844
      %v8877 = vunpack.c.l.b16 %v8845
      %v8878 = vunpack.c.l.b16 %v8846
      %v8879 = vunpack.c.l.b16 %v8847
      %v8880 = vunpack.c.l.b16 %v8848
      %v8881 = vunpack.c.l.b16 %v8849
      %v8882 = vunpack.c.l.b16 %v8850
      %v8883 = vunpack.c.l.b16 %v8851
      %v8884 = vunpack.c.l.b16 %v8852
      %v8885 = vunpack.c.l.b16 %v8853
      %v8886 = vpack.c.b16 %v8871, %v8870
      %v8887 = vpack.c.b16 %v8873, %v8872
      %v8888 = vpack.c.b16 %v8875, %v8874
      %v8889 = vpack.c.b16 %v8877, %v8876
      %v8890 = vpack.c.b16 %v8879, %v8878
      %v8891 = vpack.c.b16 %v8881, %v8880
      %v8892 = vpack.c.b16 %v8883, %v8882
      %v8893 = vpack.c.b16 %v8885, %v8884
      %8902 = vmatprep.subr.bf16.mxu0 0
      %8903 = vmatpush1.bf16.msra.mxu0 %v8893
      %8904 = vmatprep.subr.bf16.mxu0 0
      %8905 = vmatpush1.bf16.msra.mxu0 %v8892
      %8906 = vmatprep.subr.bf16.mxu0 0
      %8907 = vmatpush1.bf16.msra.mxu0 %v8891
      %8908 = vmatprep.subr.bf16.mxu0 0
      %8909 = vmatpush1.bf16.msra.mxu0 %v8890
      %8910 = vmatprep.subr.bf16.mxu0 0
      %8911 = vmatpush1.bf16.msra.mxu0 %v8889
      %8912 = vmatprep.subr.bf16.mxu0 0
      %8913 = vmatpush1.bf16.msra.mxu0 %v8888
      %8914 = vmatprep.subr.bf16.mxu0 0
      %8915 = vmatpush1.bf16.msra.mxu0 %v8887
      %8916 = vmatprep.subr.bf16.mxu0 0
      %8917 = vmatpush1.bf16.msra.mxu0 %v8886
      %8918 = vmatprep.subr.bf16.mxu0 0
      %8919 = vmatpush2.bf16.msra.mxu0 0
      %8920 = vmatprep.subr.bf16.mxu0 0
      %8921 = vmatpush2.bf16.msra.mxu0 0
      %8922 = vmatprep.subr.bf16.mxu0 0
      %8923 = vmatpush2.bf16.msra.mxu0 0
      %8924 = vmatprep.subr.bf16.mxu0 0
      %8925 = vmatpush2.bf16.msra.mxu0 0
      %8926 = vmatprep.subr.bf16.mxu0 0
      %8927 = vmatpush2.bf16.msra.mxu0 0
      %8928 = vmatprep.subr.bf16.mxu0 0
      %8929 = vmatpush2.bf16.msra.mxu0 0
      %8930 = vmatprep.subr.bf16.mxu0 0
      %8931 = vmatpush2.bf16.msra.mxu0 0
      %8932 = vmatprep.subr.bf16.mxu0 0
      %8933 = vmatpush2.bf16.msra.mxu0 0
      %8934 = vmatprep.mubr.bf16.mxu0 0
      %8935 = vmatmul.mubr.bf16.gmra.mxu0 %v8832
      %v8936 = vpop.f32.mrf.mxu0
      %v8937 = vadd.f32 0.0, %v8936
      %v8938 = vpop.f32.mrf.mxu0
      %v8939 = vpop.f32.mrf.mxu0
      %v8940 = vadd.f32 0.0, %v8939
      %v8941 = vpop.f32.mrf.mxu0
      %8942 = vmatprep.mubr.bf16.mxu0 0
      %8943 = vmatmul.mubr.bf16.gmra.mxu0 %v8833
      %v8944 = vpop.f32.mrf.mxu0
      %v8945 = vadd.f32 0.0, %v8944
      %v8946 = vpop.f32.mrf.mxu0
      %v8947 = vpop.f32.mrf.mxu0
      %v8948 = vadd.f32 0.0, %v8947
      %v8949 = vpop.f32.mrf.mxu0
      %8950 = vmatprep.mubr.bf16.mxu0 0
      %8951 = vmatmul.mubr.bf16.gmra.mxu0 %v8834
      %v8952 = vpop.f32.mrf.mxu0
      %v8953 = vadd.f32 0.0, %v8952
      %v8954 = vpop.f32.mrf.mxu0
      %v8955 = vpop.f32.mrf.mxu0
      %v8956 = vadd.f32 0.0, %v8955
      %v8957 = vpop.f32.mrf.mxu0
      %8958 = vmatprep.mubr.bf16.mxu0 0
      %8959 = vmatmul.mubr.bf16.gmra.mxu0 %v8835
      %v8960 = vpop.f32.mrf.mxu0
      %v8961 = vadd.f32 0.0, %v8960
      %v8962 = vpop.f32.mrf.mxu0
      %v8963 = vpop.f32.mrf.mxu0
      %v8964 = vadd.f32 0.0, %v8963
      %v8965 = vpop.f32.mrf.mxu0
      %8966 = vmatprep.mubr.bf16.mxu0 0
      %8967 = vmatmul.mubr.bf16.gmra.mxu0 %v8836
      %v8968 = vpop.f32.mrf.mxu0
      %v8969 = vadd.f32 0.0, %v8968
      %v8970 = vpop.f32.mrf.mxu0
      %v8971 = vpop.f32.mrf.mxu0
      %v8972 = vadd.f32 0.0, %v8971
      %v8973 = vpop.f32.mrf.mxu0
      %8974 = vdwg.mxu0
      %v8975 = vadd.f32 %v8812, %v8937
      %v8976 = vadd.f32 %v8813, %v8940
      %v8977 = vadd.f32 %v8814, %v8945
      %v8978 = vadd.f32 %v8815, %v8948
      %v8979 = vadd.f32 %v8816, %v8953
      %v8980 = vadd.f32 %v8817, %v8956
      %v8981 = vadd.f32 %v8818, %v8961
      %v8982 = vadd.f32 %v8819, %v8964
      %v8983 = vadd.f32 %v8820, %v8969
      %v8984 = vadd.f32 %v8821, %v8972
      %vm8985 = vcmp.ge.f32.partialorder %v8975, 0.0
      %vm8986 = vcmp.ge.f32.partialorder %v8976, 0.0
      %vm8987 = vcmp.ge.f32.partialorder %v8977, 0.0
      %vm8988 = vcmp.ge.f32.partialorder %v8978, 0.0
      %vm8989 = vcmp.ge.f32.partialorder %v8979, 0.0
      %vm8990 = vcmp.ge.f32.partialorder %v8980, 0.0
      %vm8991 = vcmp.ge.f32.partialorder %v8981, 0.0
      %vm8992 = vcmp.ge.f32.partialorder %v8982, 0.0
      %vm8993 = vcmp.ge.f32.partialorder %v8983, 0.0
      %vm8994 = vcmp.ge.f32.partialorder %v8984, 0.0
      %v8995 = vmul.f32 %v8975, 0.2
      %v8996 = vmul.f32 %v8976, 0.2
      %v8997 = vmul.f32 %v8977, 0.2
      %v8998 = vmul.f32 %v8978, 0.2
      %v8999 = vmul.f32 %v8979, 0.2
      %v9000 = vmul.f32 %v8980, 0.2
      %v9001 = vmul.f32 %v8981, 0.2
      %v9002 = vmul.f32 %v8982, 0.2
      %v9003 = vmul.f32 %v8983, 0.2
      %v9004 = vmul.f32 %v8984, 0.2
      %v9005 = vsel %vm8985, %v8975, %v8995
      %v9006 = vsel %vm8986, %v8976, %v8996
      %v9007 = vsel %vm8987, %v8977, %v8997
      %v9008 = vsel %vm8988, %v8978, %v8998
      %v9009 = vsel %vm8989, %v8979, %v8999
      %v9010 = vsel %vm8990, %v8980, %v9000
      %v9011 = vsel %vm8991, %v8981, %v9001
      %v9012 = vsel %vm8992, %v8982, %v9002
      %v9013 = vsel %vm8993, %v8983, %v9003
      %v9014 = vsel %vm8994, %v8984, %v9004
      %v9015 = vmul.f32 %v9005, 1.4
      %v9016 = vmul.f32 %v9006, 1.4
      %v9017 = vmul.f32 %v9007, 1.4
      %v9018 = vmul.f32 %v9008, 1.4
      %v9019 = vmul.f32 %v9009, 1.4
      %v9020 = vmul.f32 %v9010, 1.4
      %v9021 = vmul.f32 %v9011, 1.4
      %v9022 = vmul.f32 %v9012, 1.4
      %v9023 = vmul.f32 %v9013, 1.4
      %v9024 = vmul.f32 %v9014, 1.4
      %v9035 = vcombine.high %v9015, %v9015
      %v9037 = vunpack.c.l.s4 1983009808
      %v9038 = vunpack.c.0.s8 %v9037
      %v9039 = vlaneseq
      %v9040 = vshrl.u32 %v9039, 7
      %v9041 = vsub.s32 %v9038, %v9040
      %v9042 = vrot.slane %v9015, %v9041
      %v9044 = vunpack.c.l.s4 1983009808
      %v9045 = vunpack.c.0.s8 %v9044
      %v9046 = vlaneseq
      %v9047 = vshrl.u32 %v9046, 7
      %v9048 = vsub.s32 %v9045, %v9047
      %v9049 = vrot.slane %v9035, %v9048
      %v9050 = vcombine.high %v9042, %v9042
      %v9051 = vcombine.high %v9049, %v9049
      %v9052 = vcombine.high %v9016, %v9016
      %v9054 = vunpack.c.l.s4 1983009808
      %v9055 = vunpack.c.0.s8 %v9054
      %v9056 = vlaneseq
      %v9057 = vshrl.u32 %v9056, 7
      %v9058 = vsub.s32 %v9055, %v9057
      %v9059 = vrot.slane %v9016, %v9058
      %v9061 = vunpack.c.l.s4 1983009808
      %v9062 = vunpack.c.0.s8 %v9061
      %v9063 = vlaneseq
      %v9064 = vshrl.u32 %v9063, 7
      %v9065 = vsub.s32 %v9062, %v9064
      %v9066 = vrot.slane %v9052, %v9065
      %v9067 = vcombine.high %v9059, %v9059
      %v9068 = vcombine.high %v9066, %v9066
      %v9069 = vcombine.high %v9017, %v9017
      %v9071 = vunpack.c.l.s4 1983009808
      %v9072 = vunpack.c.0.s8 %v9071
      %v9073 = vlaneseq
      %v9074 = vshrl.u32 %v9073, 7
      %v9075 = vsub.s32 %v9072, %v9074
      %v9076 = vrot.slane %v9017, %v9075
      %v9078 = vunpack.c.l.s4 1983009808
      %v9079 = vunpack.c.0.s8 %v9078
      %v9080 = vlaneseq
      %v9081 = vshrl.u32 %v9080, 7
      %v9082 = vsub.s32 %v9079, %v9081
      %v9083 = vrot.slane %v9069, %v9082
      %v9084 = vcombine.high %v9083, %v9083
      %v9085 = vcombine.high %v9018, %v9018
      %v9087 = vunpack.c.l.s4 1983009808
      %v9088 = vunpack.c.0.s8 %v9087
      %v9089 = vlaneseq
      %v9090 = vshrl.u32 %v9089, 7
      %v9091 = vsub.s32 %v9088, %v9090
      %v9092 = vrot.slane %v9018, %v9091
      %v9094 = vunpack.c.l.s4 1983009808
      %v9095 = vunpack.c.0.s8 %v9094
      %v9096 = vlaneseq
      %v9097 = vshrl.u32 %v9096, 7
      %v9098 = vsub.s32 %v9095, %v9097
      %v9099 = vrot.slane %v9085, %v9098
      %v9100 = vcombine.high %v9092, %v9092
      %v9101 = vcombine.high %v9099, %v9099
      %v9102 = vcombine.high %v9019, %v9019
      %v9104 = vunpack.c.l.s4 1983009808
      %v9105 = vunpack.c.0.s8 %v9104
      %v9106 = vlaneseq
      %v9107 = vshrl.u32 %v9106, 7
      %v9108 = vsub.s32 %v9105, %v9107
      %v9109 = vrot.slane %v9019, %v9108
      %v9111 = vunpack.c.l.s4 1983009808
      %v9112 = vunpack.c.0.s8 %v9111
      %v9113 = vlaneseq
      %v9114 = vshrl.u32 %v9113, 7
      %v9115 = vsub.s32 %v9112, %v9114
      %v9116 = vrot.slane %v9102, %v9115
      %v9117 = vcombine.high %v9109, %v9109
      %v9118 = vcombine.high %v9020, %v9020
      %v9120 = vunpack.c.l.s4 1983009808
      %v9121 = vunpack.c.0.s8 %v9120
      %v9122 = vlaneseq
      %v9123 = vshrl.u32 %v9122, 7
      %v9124 = vsub.s32 %v9121, %v9123
      %v9125 = vrot.slane %v9020, %v9124
      %v9127 = vunpack.c.l.s4 1983009808
      %v9128 = vunpack.c.0.s8 %v9127
      %v9129 = vlaneseq
      %v9130 = vshrl.u32 %v9129, 7
      %v9131 = vsub.s32 %v9128, %v9130
      %v9132 = vrot.slane %v9118, %v9131
      %v9133 = vcombine.high %v9125, %v9125
      %v9134 = vcombine.high %v9132, %v9132
      %v9135 = vcombine.high %v9021, %v9021
      %v9137 = vunpack.c.l.s4 1983009808
      %v9138 = vunpack.c.0.s8 %v9137
      %v9139 = vlaneseq
      %v9140 = vshrl.u32 %v9139, 7
      %v9141 = vsub.s32 %v9138, %v9140
      %v9142 = vrot.slane %v9021, %v9141
      %v9144 = vunpack.c.l.s4 1983009808
      %v9145 = vunpack.c.0.s8 %v9144
      %v9146 = vlaneseq
      %v9147 = vshrl.u32 %v9146, 7
      %v9148 = vsub.s32 %v9145, %v9147
      %v9149 = vrot.slane %v9135, %v9148
      %v9150 = vcombine.high %v9142, %v9142
      %v9151 = vcombine.high %v9149, %v9149
      %v9152 = vcombine.high %v9022, %v9022
      %v9154 = vunpack.c.l.s4 1983009808
      %v9155 = vunpack.c.0.s8 %v9154
      %v9156 = vlaneseq
      %v9157 = vshrl.u32 %v9156, 7
      %v9158 = vsub.s32 %v9155, %v9157
      %v9159 = vrot.slane %v9022, %v9158
      %v9161 = vunpack.c.l.s4 1983009808
      %v9162 = vunpack.c.0.s8 %v9161
      %v9163 = vlaneseq
      %v9164 = vshrl.u32 %v9163, 7
      %v9165 = vsub.s32 %v9162, %v9164
      %v9166 = vrot.slane %v9152, %v9165
      %v9167 = vcombine.high %v9166, %v9166
      %v9168 = vcombine.high %v9023, %v9023
      %v9170 = vunpack.c.l.s4 1983009808
      %v9171 = vunpack.c.0.s8 %v9170
      %v9172 = vlaneseq
      %v9173 = vshrl.u32 %v9172, 7
      %v9174 = vsub.s32 %v9171, %v9173
      %v9175 = vrot.slane %v9023, %v9174
      %v9177 = vunpack.c.l.s4 1983009808
      %v9178 = vunpack.c.0.s8 %v9177
      %v9179 = vlaneseq
      %v9180 = vshrl.u32 %v9179, 7
      %v9181 = vsub.s32 %v9178, %v9180
      %v9182 = vrot.slane %v9168, %v9181
      %v9183 = vcombine.high %v9175, %v9175
      %v9184 = vcombine.high %v9182, %v9182
      %v9185 = vcombine.high %v9024, %v9024
      %v9187 = vunpack.c.l.s4 1983009808
      %v9188 = vunpack.c.0.s8 %v9187
      %v9189 = vlaneseq
      %v9190 = vshrl.u32 %v9189, 7
      %v9191 = vsub.s32 %v9188, %v9190
      %v9192 = vrot.slane %v9024, %v9191
      %v9194 = vunpack.c.l.s4 1983009808
      %v9195 = vunpack.c.0.s8 %v9194
      %v9196 = vlaneseq
      %v9197 = vshrl.u32 %v9196, 7
      %v9198 = vsub.s32 %v9195, %v9197
      %v9199 = vrot.slane %v9185, %v9198
      %v9200 = vcombine.high %v9192, %v9192
      %v9233 = vld [vmem:[%s3] sm:$0xf]
      %v9234 = vld [vmem:[%s3 + $0x4] sm:$0xf]
      %v9235 = vld [vmem:[%s3 + $0x8] sm:$0xf]
      %v9236 = vld [vmem:[%s3 + $0xc] sm:$0xf]
      %v9237 = vld [vmem:[%s3 + $0x10] sm:$0xf]
      %v9238 = vld [vmem:[%s3 + $0x14] sm:$0xf]
      %v9239 = vld [vmem:[%s3 + $0x18] sm:$0xf]
      %v9240 = vld [vmem:[%s3 + $0x1c] sm:$0xf]
      %v9241 = vld [vmem:[%s3 + $0x20] sm:$0xf]
      %v9242 = vld [vmem:[%s3 + $0x24] sm:$0xf]
      %v9243 = vld [vmem:[%s3 + $0x28] sm:$0xf]
      %v9244 = vld [vmem:[%s3 + $0x2c] sm:$0xf]
      %v9245 = vld [vmem:[%s3 + $0x30] sm:$0xf]
      %v9246 = vld [vmem:[%s3 + $0x34] sm:$0xf]
      %v9247 = vld [vmem:[%s3 + $0x38] sm:$0xf]
      %v9248 = vld [vmem:[%s3 + $0x3c] sm:$0xf]
      %v9313 = vunpack.c.l.b16 %v7475
      %v9314 = vunpack.c.l.b16 %v7476
      %v9315 = vunpack.c.l.b16 %v7477
      %v9316 = vunpack.c.l.b16 %v7478
      %v9317 = vunpack.c.l.b16 %v7479
      %v9318 = vunpack.c.l.b16 %v7480
      %v9319 = vunpack.c.l.b16 %v7481
      %v9320 = vunpack.c.l.b16 %v7482
      %v9321 = vunpack.c.l.b16 %v7483
      %v9322 = vunpack.c.l.b16 %v7484
      %v9323 = vunpack.c.l.b16 %v7485
      %v9324 = vunpack.c.l.b16 %v7486
      %v9325 = vunpack.c.l.b16 %v7487
      %v9326 = vunpack.c.l.b16 %v7488
      %v9327 = vunpack.c.l.b16 %v7489
      %v9328 = vunpack.c.l.b16 %v7490
      %v9329 = vunpack.c.l.b16 %v7491
      %v9330 = vunpack.c.l.b16 %v7492
      %v9331 = vunpack.c.l.b16 %v7493
      %v9332 = vunpack.c.l.b16 %v7494
      %v9333 = vunpack.c.l.b16 %v7495
      %v9334 = vunpack.c.l.b16 %v7496
      %v9335 = vunpack.c.l.b16 %v7497
      %v9336 = vunpack.c.l.b16 %v7498
      %v9337 = vunpack.c.l.b16 %v7499
      %v9338 = vunpack.c.l.b16 %v7500
      %v9339 = vunpack.c.l.b16 %v7501
      %v9340 = vunpack.c.l.b16 %v7502
      %v9341 = vunpack.c.l.b16 %v7503
      %v9342 = vunpack.c.l.b16 %v7504
      %v9343 = vunpack.c.l.b16 %v7505
      %v9344 = vunpack.c.l.b16 %v7506
      %v9345 = vunpack.c.l.b16 %v7507
      %v9346 = vunpack.c.l.b16 %v7508
      %v9347 = vunpack.c.l.b16 %v7509
      %v9348 = vunpack.c.l.b16 %v7510
      %v9349 = vunpack.c.l.b16 %v7511
      %v9350 = vunpack.c.l.b16 %v7512
      %v9351 = vunpack.c.l.b16 %v7513
      %v9352 = vunpack.c.l.b16 %v7514
      %v9353 = vunpack.c.l.b16 %v7515
      %v9354 = vunpack.c.l.b16 %v7516
      %v9355 = vunpack.c.l.b16 %v7517
      %v9356 = vunpack.c.l.b16 %v7518
      %v9357 = vunpack.c.l.b16 %v7519
      %v9358 = vunpack.c.l.b16 %v7520
      %v9359 = vunpack.c.l.b16 %v7521
      %v9360 = vunpack.c.l.b16 %v7522
      %v9361 = vunpack.c.l.b16 %v7523
      %v9362 = vunpack.c.l.b16 %v7524
      %v9363 = vunpack.c.l.b16 %v7525
      %v9364 = vunpack.c.l.b16 %v7526
      %v9365 = vunpack.c.l.b16 %v7527
      %v9366 = vunpack.c.l.b16 %v7528
      %v9367 = vunpack.c.l.b16 %v7529
      %v9368 = vunpack.c.l.b16 %v7530
      %v9369 = vunpack.c.l.b16 %v7531
      %v9370 = vunpack.c.l.b16 %v7532
      %v9371 = vunpack.c.l.b16 %v7533
      %v9372 = vunpack.c.l.b16 %v7534
      %v9373 = vunpack.c.l.b16 %v7535
      %v9374 = vunpack.c.l.b16 %v7536
      %v9375 = vunpack.c.l.b16 %v7537
      %v9376 = vunpack.c.l.b16 %v7538
      %v9377 = vrot.slane %v9314, 7
      %v9378 = vsel %vm5818, %v9377, %v9313
      %v9379 = vrot.slane %v9315, 6
      %v9380 = vsel %vm5820, %v9379, %v9378
      %v9381 = vrot.slane %v9316, 5
      %v9382 = vsel %vm5822, %v9381, %v9380
      %v9383 = vrot.slane %v9317, 4
      %v9384 = vsel %vm5824, %v9383, %v9382
      %v9385 = vrot.slane %v9318, 3
      %v9386 = vsel %vm5826, %v9385, %v9384
      %v9387 = vrot.slane %v9319, 2
      %v9388 = vsel %vm5828, %v9387, %v9386
      %v9389 = vrot.slane %v9320, 1
      %v9390 = vsel %vm5830, %v9389, %v9388
      %v9391 = vrot.slane %v9322, 7
      %v9392 = vsel %vm5818, %v9391, %v9321
      %v9393 = vrot.slane %v9323, 6
      %v9394 = vsel %vm5820, %v9393, %v9392
      %v9395 = vrot.slane %v9324, 5
      %v9396 = vsel %vm5822, %v9395, %v9394
      %v9397 = vrot.slane %v9325, 4
      %v9398 = vsel %vm5824, %v9397, %v9396
      %v9399 = vrot.slane %v9326, 3
      %v9400 = vsel %vm5826, %v9399, %v9398
      %v9401 = vrot.slane %v9327, 2
      %v9402 = vsel %vm5828, %v9401, %v9400
      %v9403 = vrot.slane %v9328, 1
      %v9404 = vsel %vm5830, %v9403, %v9402
      %v9405 = vrot.slane %v9330, 7
      %v9406 = vsel %vm5818, %v9405, %v9329
      %v9407 = vrot.slane %v9331, 6
      %v9408 = vsel %vm5820, %v9407, %v9406
      %v9409 = vrot.slane %v9332, 5
      %v9410 = vsel %vm5822, %v9409, %v9408
      %v9411 = vrot.slane %v9333, 4
      %v9412 = vsel %vm5824, %v9411, %v9410
      %v9413 = vrot.slane %v9334, 3
      %v9414 = vsel %vm5826, %v9413, %v9412
      %v9415 = vrot.slane %v9335, 2
      %v9416 = vsel %vm5828, %v9415, %v9414
      %v9417 = vrot.slane %v9336, 1
      %v9418 = vsel %vm5830, %v9417, %v9416
      %v9419 = vrot.slane %v9338, 7
      %v9420 = vsel %vm5818, %v9419, %v9337
      %v9421 = vrot.slane %v9339, 6
      %v9422 = vsel %vm5820, %v9421, %v9420
      %v9423 = vrot.slane %v9340, 5
      %v9424 = vsel %vm5822, %v9423, %v9422
      %v9425 = vrot.slane %v9341, 4
      %v9426 = vsel %vm5824, %v9425, %v9424
      %v9427 = vrot.slane %v9342, 3
      %v9428 = vsel %vm5826, %v9427, %v9426
      %v9429 = vrot.slane %v9343, 2
      %v9430 = vsel %vm5828, %v9429, %v9428
      %v9431 = vrot.slane %v9344, 1
      %v9432 = vsel %vm5830, %v9431, %v9430
      %v9433 = vrot.slane %v9346, 7
      %v9434 = vsel %vm5818, %v9433, %v9345
      %v9435 = vrot.slane %v9347, 6
      %v9436 = vsel %vm5820, %v9435, %v9434
      %v9437 = vrot.slane %v9348, 5
      %v9438 = vsel %vm5822, %v9437, %v9436
      %v9439 = vrot.slane %v9349, 4
      %v9440 = vsel %vm5824, %v9439, %v9438
      %v9441 = vrot.slane %v9350, 3
      %v9442 = vsel %vm5826, %v9441, %v9440
      %v9443 = vrot.slane %v9351, 2
      %v9444 = vsel %vm5828, %v9443, %v9442
      %v9445 = vrot.slane %v9352, 1
      %v9446 = vsel %vm5830, %v9445, %v9444
      %v9447 = vrot.slane %v9354, 7
      %v9448 = vsel %vm5818, %v9447, %v9353
      %v9449 = vrot.slane %v9355, 6
      %v9450 = vsel %vm5820, %v9449, %v9448
      %v9451 = vrot.slane %v9356, 5
      %v9452 = vsel %vm5822, %v9451, %v9450
      %v9453 = vrot.slane %v9357, 4
      %v9454 = vsel %vm5824, %v9453, %v9452
      %v9455 = vrot.slane %v9358, 3
      %v9456 = vsel %vm5826, %v9455, %v9454
      %v9457 = vrot.slane %v9359, 2
      %v9458 = vsel %vm5828, %v9457, %v9456
      %v9459 = vrot.slane %v9360, 1
      %v9460 = vsel %vm5830, %v9459, %v9458
      %v9461 = vrot.slane %v9362, 7
      %v9462 = vsel %vm5818, %v9461, %v9361
      %v9463 = vrot.slane %v9363, 6
      %v9464 = vsel %vm5820, %v9463, %v9462
      %v9465 = vrot.slane %v9364, 5
      %v9466 = vsel %vm5822, %v9465, %v9464
      %v9467 = vrot.slane %v9365, 4
      %v9468 = vsel %vm5824, %v9467, %v9466
      %v9469 = vrot.slane %v9366, 3
      %v9470 = vsel %vm5826, %v9469, %v9468
      %v9471 = vrot.slane %v9367, 2
      %v9472 = vsel %vm5828, %v9471, %v9470
      %v9473 = vrot.slane %v9368, 1
      %v9474 = vsel %vm5830, %v9473, %v9472
      %v9475 = vrot.slane %v9370, 7
      %v9476 = vsel %vm5818, %v9475, %v9369
      %v9477 = vrot.slane %v9371, 6
      %v9478 = vsel %vm5820, %v9477, %v9476
      %v9479 = vrot.slane %v9372, 5
      %v9480 = vsel %vm5822, %v9479, %v9478
      %v9481 = vrot.slane %v9373, 4
      %v9482 = vsel %vm5824, %v9481, %v9480
      %v9483 = vrot.slane %v9374, 3
      %v9484 = vsel %vm5826, %v9483, %v9482
      %v9485 = vrot.slane %v9375, 2
      %v9486 = vsel %vm5828, %v9485, %v9484
      %v9487 = vrot.slane %v9376, 1
      %v9488 = vsel %vm5830, %v9487, %v9486
      %v9489 = vpack.c.b16 %v9404, %v9390
      %v9490 = vpack.c.b16 %v9432, %v9418
      %v9491 = vpack.c.b16 %v9460, %v9446
      %v9492 = vpack.c.b16 %v9488, %v9474
      %v9513 = vunpack.c.l.b16 %v9233
      %v9514 = vunpack.c.l.b16 %v9234
      %v9515 = vunpack.c.l.b16 %v9235
      %v9516 = vunpack.c.l.b16 %v9236
      %v9517 = vunpack.c.l.b16 %v9237
      %v9518 = vunpack.c.l.b16 %v9238
      %v9519 = vunpack.c.l.b16 %v9239
      %v9520 = vunpack.c.l.b16 %v9240
      %v9521 = vunpack.c.l.b16 %v9241
      %v9522 = vunpack.c.l.b16 %v9242
      %v9523 = vunpack.c.l.b16 %v9243
      %v9524 = vunpack.c.l.b16 %v9244
      %v9525 = vunpack.c.l.b16 %v9245
      %v9526 = vunpack.c.l.b16 %v9246
      %v9527 = vunpack.c.l.b16 %v9247
      %v9528 = vunpack.c.l.b16 %v9248
      %v9529 = vpack.c.b16 %v9514, %v9513
      %v9530 = vpack.c.b16 %v9516, %v9515
      %v9531 = vpack.c.b16 %v9518, %v9517
      %v9532 = vpack.c.b16 %v9520, %v9519
      %v9533 = vpack.c.b16 %v9522, %v9521
      %v9534 = vpack.c.b16 %v9524, %v9523
      %v9535 = vpack.c.b16 %v9526, %v9525
      %v9536 = vpack.c.b16 %v9528, %v9527
      %9545 = vmatprep.subr.bf16.mxu0 0
      %9546 = vmatpush1.bf16.msra.mxu0 %v9536
      %9547 = vmatprep.subr.bf16.mxu0 0
      %9548 = vmatpush1.bf16.msra.mxu0 %v9535
      %9549 = vmatprep.subr.bf16.mxu0 0
      %9550 = vmatpush1.bf16.msra.mxu0 %v9534
      %9551 = vmatprep.subr.bf16.mxu0 0
      %9552 = vmatpush1.bf16.msra.mxu0 %v9533
      %9553 = vmatprep.subr.bf16.mxu0 0
      %9554 = vmatpush1.bf16.msra.mxu0 %v9532
      %9555 = vmatprep.subr.bf16.mxu0 0
      %9556 = vmatpush1.bf16.msra.mxu0 %v9531
      %9557 = vmatprep.subr.bf16.mxu0 0
      %9558 = vmatpush1.bf16.msra.mxu0 %v9530
      %9559 = vmatprep.subr.bf16.mxu0 0
      %9560 = vmatpush1.bf16.msra.mxu0 %v9529
      %9561 = vmatprep.subr.bf16.mxu0 0
      %9562 = vmatpush2.bf16.msra.mxu0 0
      %9563 = vmatprep.subr.bf16.mxu0 0
      %9564 = vmatpush2.bf16.msra.mxu0 0
      %9565 = vmatprep.subr.bf16.mxu0 0
      %9566 = vmatpush2.bf16.msra.mxu0 0
      %9567 = vmatprep.subr.bf16.mxu0 0
      %9568 = vmatpush2.bf16.msra.mxu0 0
      %9569 = vmatprep.subr.bf16.mxu0 0
      %9570 = vmatpush2.bf16.msra.mxu0 0
      %9571 = vmatprep.subr.bf16.mxu0 0
      %9572 = vmatpush2.bf16.msra.mxu0 0
      %9573 = vmatprep.subr.bf16.mxu0 0
      %9574 = vmatpush2.bf16.msra.mxu0 0
      %9575 = vmatprep.subr.bf16.mxu0 0
      %9576 = vmatpush2.bf16.msra.mxu0 0
      %9577 = vmatprep.mubr.bf16.mxu0 0
      %9578 = vmatmul.mubr.bf16.gmra.mxu0 %v9489
      %v9579 = vpop.f32.mrf.mxu0
      %v9580 = vadd.f32 0.0, %v9579
      %v9581 = vpop.f32.mrf.mxu0
      %v9582 = vpop.f32.mrf.mxu0
      %v9583 = vadd.f32 0.0, %v9582
      %v9584 = vpop.f32.mrf.mxu0
      %9585 = vmatprep.mubr.bf16.mxu0 0
      %9586 = vmatmul.mubr.bf16.gmra.mxu0 %v9490
      %v9587 = vpop.f32.mrf.mxu0
      %v9588 = vadd.f32 0.0, %v9587
      %v9589 = vpop.f32.mrf.mxu0
      %v9590 = vpop.f32.mrf.mxu0
      %v9591 = vadd.f32 0.0, %v9590
      %v9592 = vpop.f32.mrf.mxu0
      %9593 = vmatprep.mubr.bf16.mxu0 0
      %9594 = vmatmul.mubr.bf16.gmra.mxu0 %v9491
      %v9595 = vpop.f32.mrf.mxu0
      %v9596 = vadd.f32 0.0, %v9595
      %v9597 = vpop.f32.mrf.mxu0
      %v9598 = vpop.f32.mrf.mxu0
      %v9599 = vadd.f32 0.0, %v9598
      %v9600 = vpop.f32.mrf.mxu0
      %9601 = vmatprep.mubr.bf16.mxu0 0
      %9602 = vmatmul.mubr.bf16.gmra.mxu0 %v9492
      %v9603 = vpop.f32.mrf.mxu0
      %v9604 = vadd.f32 0.0, %v9603
      %v9605 = vpop.f32.mrf.mxu0
      %v9606 = vpop.f32.mrf.mxu0
      %v9607 = vadd.f32 0.0, %v9606
      %v9608 = vpop.f32.mrf.mxu0
      %9609 = vdwg.mxu0
      %v9610 = vmul.f32 %v9580, 1.4
      %v9611 = vmul.f32 %v9583, 1.4
      %v9612 = vmul.f32 %v9588, 1.4
      %v9613 = vmul.f32 %v9591, 1.4
      %v9614 = vmul.f32 %v9596, 1.4
      %v9615 = vmul.f32 %v9599, 1.4
      %v9616 = vmul.f32 %v9604, 1.4
      %v9617 = vmul.f32 %v9607, 1.4
      %v9626 = vcombine.high %v9610, %v9610
      %v9628 = vunpack.c.l.s4 1983009808
      %v9629 = vunpack.c.0.s8 %v9628
      %v9630 = vlaneseq
      %v9631 = vshrl.u32 %v9630, 7
      %v9632 = vsub.s32 %v9629, %v9631
      %v9633 = vrot.slane %v9610, %v9632
      %v9635 = vunpack.c.l.s4 1983009808
      %v9636 = vunpack.c.0.s8 %v9635
      %v9637 = vlaneseq
      %v9638 = vshrl.u32 %v9637, 7
      %v9639 = vsub.s32 %v9636, %v9638
      %v9640 = vrot.slane %v9626, %v9639
      %v9641 = vcombine.high %v9633, %v9633
      %v9642 = vcombine.high %v9640, %v9640
      %v9643 = vcombine.high %v9611, %v9611
      %v9645 = vunpack.c.l.s4 1983009808
      %v9646 = vunpack.c.0.s8 %v9645
      %v9647 = vlaneseq
      %v9648 = vshrl.u32 %v9647, 7
      %v9649 = vsub.s32 %v9646, %v9648
      %v9650 = vrot.slane %v9611, %v9649
      %v9652 = vunpack.c.l.s4 1983009808
      %v9653 = vunpack.c.0.s8 %v9652
      %v9654 = vlaneseq
      %v9655 = vshrl.u32 %v9654, 7
      %v9656 = vsub.s32 %v9653, %v9655
      %v9657 = vrot.slane %v9643, %v9656
      %v9658 = vcombine.high %v9650, %v9650
      %v9659 = vcombine.high %v9657, %v9657
      %v9660 = vcombine.high %v9612, %v9612
      %v9662 = vunpack.c.l.s4 1983009808
      %v9663 = vunpack.c.0.s8 %v9662
      %v9664 = vlaneseq
      %v9665 = vshrl.u32 %v9664, 7
      %v9666 = vsub.s32 %v9663, %v9665
      %v9667 = vrot.slane %v9612, %v9666
      %v9669 = vunpack.c.l.s4 1983009808
      %v9670 = vunpack.c.0.s8 %v9669
      %v9671 = vlaneseq
      %v9672 = vshrl.u32 %v9671, 7
      %v9673 = vsub.s32 %v9670, %v9672
      %v9674 = vrot.slane %v9660, %v9673
      %v9675 = vcombine.high %v9667, %v9667
      %v9676 = vcombine.high %v9674, %v9674
      %v9677 = vcombine.high %v9613, %v9613
      %v9679 = vunpack.c.l.s4 1983009808
      %v9680 = vunpack.c.0.s8 %v9679
      %v9681 = vlaneseq
      %v9682 = vshrl.u32 %v9681, 7
      %v9683 = vsub.s32 %v9680, %v9682
      %v9684 = vrot.slane %v9613, %v9683
      %v9686 = vunpack.c.l.s4 1983009808
      %v9687 = vunpack.c.0.s8 %v9686
      %v9688 = vlaneseq
      %v9689 = vshrl.u32 %v9688, 7
      %v9690 = vsub.s32 %v9687, %v9689
      %v9691 = vrot.slane %v9677, %v9690
      %v9692 = vcombine.high %v9684, %v9684
      %v9693 = vcombine.high %v9691, %v9691
      %v9694 = vcombine.high %v9614, %v9614
      %v9696 = vunpack.c.l.s4 1983009808
      %v9697 = vunpack.c.0.s8 %v9696
      %v9698 = vlaneseq
      %v9699 = vshrl.u32 %v9698, 7
      %v9700 = vsub.s32 %v9697, %v9699
      %v9701 = vrot.slane %v9614, %v9700
      %v9703 = vunpack.c.l.s4 1983009808
      %v9704 = vunpack.c.0.s8 %v9703
      %v9705 = vlaneseq
      %v9706 = vshrl.u32 %v9705, 7
      %v9707 = vsub.s32 %v9704, %v9706
      %v9708 = vrot.slane %v9694, %v9707
      %v9709 = vcombine.high %v9701, %v9701
      %v9710 = vcombine.high %v9708, %v9708
      %v9711 = vcombine.high %v9615, %v9615
      %v9713 = vunpack.c.l.s4 1983009808
      %v9714 = vunpack.c.0.s8 %v9713
      %v9715 = vlaneseq
      %v9716 = vshrl.u32 %v9715, 7
      %v9717 = vsub.s32 %v9714, %v9716
      %v9718 = vrot.slane %v9615, %v9717
      %v9720 = vunpack.c.l.s4 1983009808
      %v9721 = vunpack.c.0.s8 %v9720
      %v9722 = vlaneseq
      %v9723 = vshrl.u32 %v9722, 7
      %v9724 = vsub.s32 %v9721, %v9723
      %v9725 = vrot.slane %v9711, %v9724
      %v9726 = vcombine.high %v9718, %v9718
      %v9727 = vcombine.high %v9725, %v9725
      %v9728 = vcombine.high %v9616, %v9616
      %v9730 = vunpack.c.l.s4 1983009808
      %v9731 = vunpack.c.0.s8 %v9730
      %v9732 = vlaneseq
      %v9733 = vshrl.u32 %v9732, 7
      %v9734 = vsub.s32 %v9731, %v9733
      %v9735 = vrot.slane %v9616, %v9734
      %v9737 = vunpack.c.l.s4 1983009808
      %v9738 = vunpack.c.0.s8 %v9737
      %v9739 = vlaneseq
      %v9740 = vshrl.u32 %v9739, 7
      %v9741 = vsub.s32 %v9738, %v9740
      %v9742 = vrot.slane %v9728, %v9741
      %v9743 = vcombine.high %v9735, %v9735
      %v9744 = vcombine.high %v9742, %v9742
      %v9745 = vcombine.high %v9617, %v9617
      %v9747 = vunpack.c.l.s4 1983009808
      %v9748 = vunpack.c.0.s8 %v9747
      %v9749 = vlaneseq
      %v9750 = vshrl.u32 %v9749, 7
      %v9751 = vsub.s32 %v9748, %v9750
      %v9752 = vrot.slane %v9617, %v9751
      %v9754 = vunpack.c.l.s4 1983009808
      %v9755 = vunpack.c.0.s8 %v9754
      %v9756 = vlaneseq
      %v9757 = vshrl.u32 %v9756, 7
      %v9758 = vsub.s32 %v9755, %v9757
      %v9759 = vrot.slane %v9745, %v9758
      %v9760 = vcombine.high %v9752, %v9752
      %v9761 = vcombine.high %v9759, %v9759
      %v9794 = vadd.f32 %v9042, %v9633
      %v9795 = vadd.f32 %v9050, %v9641
      %v9796 = vadd.f32 %v9049, %v9640
      %v9797 = vadd.f32 %v9051, %v9642
      %v9798 = vadd.f32 %v9067, %v9650
      %v9799 = vadd.f32 %v9066, %v9658
      %v9800 = vadd.f32 %v9068, %v9657
      %v9801 = vadd.f32 %v9076, %v9659
      %v9802 = vadd.f32 %v9083, %v9667
      %v9803 = vadd.f32 %v9084, %v9675
      %v9804 = vadd.f32 %v9092, %v9674
      %v9805 = vadd.f32 %v9100, %v9676
      %v9806 = vadd.f32 %v9101, %v9684
      %v9807 = vadd.f32 %v9109, %v9692
      %v9808 = vadd.f32 %v9117, %v9691
      %v9809 = vadd.f32 %v9116, %v9693
      %v9810 = vadd.f32 %v9125, %v9701
      %v9811 = vadd.f32 %v9133, %v9709
      %v9812 = vadd.f32 %v9132, %v9708
      %v9813 = vadd.f32 %v9134, %v9710
      %v9814 = vadd.f32 %v9150, %v9718
      %v9815 = vadd.f32 %v9149, %v9726
      %v9816 = vadd.f32 %v9151, %v9725
      %v9817 = vadd.f32 %v9159, %v9727
      %v9818 = vadd.f32 %v9166, %v9735
      %v9819 = vadd.f32 %v9167, %v9743
      %v9820 = vadd.f32 %v9175, %v9742
      %v9821 = vadd.f32 %v9183, %v9744
      %v9822 = vadd.f32 %v9184, %v9752
      %v9823 = vadd.f32 %v9192, %v9760
      %v9824 = vadd.f32 %v9200, %v9759
      %v9825 = vadd.f32 %v9199, %v9761
      %v9826 = vmul.f32 %v9794, 0.70710677
      %v9827 = vmul.f32 %v9795, 0.70710677
      %v9828 = vmul.f32 %v9796, 0.70710677
      %v9829 = vmul.f32 %v9797, 0.70710677
      %v9830 = vmul.f32 %v9798, 0.70710677
      %v9831 = vmul.f32 %v9799, 0.70710677
      %v9832 = vmul.f32 %v9800, 0.70710677
      %v9833 = vmul.f32 %v9801, 0.70710677
      %v9834 = vmul.f32 %v9802, 0.70710677
      %v9835 = vmul.f32 %v9803, 0.70710677
      %v9836 = vmul.f32 %v9804, 0.70710677
      %v9837 = vmul.f32 %v9805, 0.70710677
      %v9838 = vmul.f32 %v9806, 0.70710677
      %v9839 = vmul.f32 %v9807, 0.70710677
      %v9840 = vmul.f32 %v9808, 0.70710677
      %v9841 = vmul.f32 %v9809, 0.70710677
      %v9842 = vmul.f32 %v9810, 0.70710677
      %v9843 = vmul.f32 %v9811, 0.70710677
      %v9844 = vmul.f32 %v9812, 0.70710677
      %v9845 = vmul.f32 %v9813, 0.70710677
      %v9846 = vmul.f32 %v9814, 0.70710677
      %v9847 = vmul.f32 %v9815, 0.70710677
      %v9848 = vmul.f32 %v9816, 0.70710677
      %v9849 = vmul.f32 %v9817, 0.70710677
      %v9850 = vmul.f32 %v9818, 0.70710677
      %v9851 = vmul.f32 %v9819, 0.70710677
      %v9852 = vmul.f32 %v9820, 0.70710677
      %v9853 = vmul.f32 %v9821, 0.70710677
      %v9854 = vmul.f32 %v9822, 0.70710677
      %v9855 = vmul.f32 %v9823, 0.70710677
      %v9856 = vmul.f32 %v9824, 0.70710677
      %v9857 = vmul.f32 %v9825, 0.70710677
      %v9890 = vcombine.low %v9826, %v9827
      %v9891 = vcombine.low %v9828, %v9829
      %v9893 = vunpack.c.l.s4 1983009808
      %v9894 = vunpack.c.0.s8 %v9893
      %v9895 = vlaneseq
      %v9896 = vshrl.u32 %v9895, 7
      %v9897 = vsub.s32 %v9894, %v9896
      %v9898 = vrot.slane %v9890, %v9897
      %v9900 = vunpack.c.l.s4 1983009808
      %v9901 = vunpack.c.0.s8 %v9900
      %v9902 = vlaneseq
      %v9903 = vshrl.u32 %v9902, 7
      %v9904 = vsub.s32 %v9901, %v9903
      %v9905 = vrot.slane %v9891, %v9904
      %v9906 = vcombine.low %v9898, %v9905
      %v9907 = vcombine.low %v9830, %v9831
      %v9908 = vcombine.low %v9832, %v9833
      %v9910 = vunpack.c.l.s4 1983009808
      %v9911 = vunpack.c.0.s8 %v9910
      %v9912 = vlaneseq
      %v9913 = vshrl.u32 %v9912, 7
      %v9914 = vsub.s32 %v9911, %v9913
      %v9915 = vrot.slane %v9907, %v9914
      %v9917 = vunpack.c.l.s4 1983009808
      %v9918 = vunpack.c.0.s8 %v9917
      %v9919 = vlaneseq
      %v9920 = vshrl.u32 %v9919, 7
      %v9921 = vsub.s32 %v9918, %v9920
      %v9922 = vrot.slane %v9908, %v9921
      %v9923 = vcombine.low %v9915, %v9922
      %v9924 = vcombine.low %v9834, %v9835
      %v9925 = vcombine.low %v9836, %v9837
      %v9927 = vunpack.c.l.s4 1983009808
      %v9928 = vunpack.c.0.s8 %v9927
      %v9929 = vlaneseq
      %v9930 = vshrl.u32 %v9929, 7
      %v9931 = vsub.s32 %v9928, %v9930
      %v9932 = vrot.slane %v9924, %v9931
      %v9934 = vunpack.c.l.s4 1983009808
      %v9935 = vunpack.c.0.s8 %v9934
      %v9936 = vlaneseq
      %v9937 = vshrl.u32 %v9936, 7
      %v9938 = vsub.s32 %v9935, %v9937
      %v9939 = vrot.slane %v9925, %v9938
      %v9940 = vcombine.low %v9932, %v9939
      %v9941 = vcombine.low %v9838, %v9839
      %v9942 = vcombine.low %v9840, %v9841
      %v9944 = vunpack.c.l.s4 1983009808
      %v9945 = vunpack.c.0.s8 %v9944
      %v9946 = vlaneseq
      %v9947 = vshrl.u32 %v9946, 7
      %v9948 = vsub.s32 %v9945, %v9947
      %v9949 = vrot.slane %v9941, %v9948
      %v9951 = vunpack.c.l.s4 1983009808
      %v9952 = vunpack.c.0.s8 %v9951
      %v9953 = vlaneseq
      %v9954 = vshrl.u32 %v9953, 7
      %v9955 = vsub.s32 %v9952, %v9954
      %v9956 = vrot.slane %v9942, %v9955
      %v9957 = vcombine.low %v9949, %v9956
      %v9958 = vcombine.low %v9842, %v9843
      %v9959 = vcombine.low %v9844, %v9845
      %v9961 = vunpack.c.l.s4 1983009808
      %v9962 = vunpack.c.0.s8 %v9961
      %v9963 = vlaneseq
      %v9964 = vshrl.u32 %v9963, 7
      %v9965 = vsub.s32 %v9962, %v9964
      %v9966 = vrot.slane %v9958, %v9965
      %v9968 = vunpack.c.l.s4 1983009808
      %v9969 = vunpack.c.0.s8 %v9968
      %v9970 = vlaneseq
      %v9971 = vshrl.u32 %v9970, 7
      %v9972 = vsub.s32 %v9969, %v9971
      %v9973 = vrot.slane %v9959, %v9972
      %v9974 = vcombine.low %v9966, %v9973
      %v9975 = vcombine.low %v9846, %v9847
      %v9976 = vcombine.low %v9848, %v9849
      %v9978 = vunpack.c.l.s4 1983009808
      %v9979 = vunpack.c.0.s8 %v9978
      %v9980 = vlaneseq
      %v9981 = vshrl.u32 %v9980, 7
      %v9982 = vsub.s32 %v9979, %v9981
      %v9983 = vrot.slane %v9975, %v9982
      %v9985 = vunpack.c.l.s4 1983009808
      %v9986 = vunpack.c.0.s8 %v9985
      %v9987 = vlaneseq
      %v9988 = vshrl.u32 %v9987, 7
      %v9989 = vsub.s32 %v9986, %v9988
      %v9990 = vrot.slane %v9976, %v9989
      %v9991 = vcombine.low %v9983, %v9990
      %v9992 = vcombine.low %v9850, %v9851
      %v9993 = vcombine.low %v9852, %v9853
      %v9995 = vunpack.c.l.s4 1983009808
      %v9996 = vunpack.c.0.s8 %v9995
      %v9997 = vlaneseq
      %v9998 = vshrl.u32 %v9997, 7
      %v9999 = vsub.s32 %v9996, %v9998
      %v10000 = vrot.slane %v9992, %v9999
      %v10002 = vunpack.c.l.s4 1983009808
      %v10003 = vunpack.c.0.s8 %v10002
      %v10004 = vlaneseq
      %v10005 = vshrl.u32 %v10004, 7
      %v10006 = vsub.s32 %v10003, %v10005
      %v10007 = vrot.slane %v9993, %v10006
      %v10008 = vcombine.low %v10000, %v10007
      %v10009 = vcombine.low %v9854, %v9855
      %v10010 = vcombine.low %v9856, %v9857
      %v10012 = vunpack.c.l.s4 1983009808
      %v10013 = vunpack.c.0.s8 %v10012
      %v10014 = vlaneseq
      %v10015 = vshrl.u32 %v10014, 7
      %v10016 = vsub.s32 %v10013, %v10015
      %v10017 = vrot.slane %v10009, %v10016
      %v10019 = vunpack.c.l.s4 1983009808
      %v10020 = vunpack.c.0.s8 %v10019
      %v10021 = vlaneseq
      %v10022 = vshrl.u32 %v10021, 7
      %v10023 = vsub.s32 %v10020, %v10022
      %v10024 = vrot.slane %v10010, %v10023
      %v10025 = vcombine.low %v10017, %v10024
      %v10034 = vpack.c.bf16 %v9923, %v9906
      %v10035 = vpack.c.bf16 %v9957, %v9940
      %v10036 = vpack.c.bf16 %v9991, %v9974
      %v10037 = vpack.c.bf16 %v10025, %v10008
      %v10042 = vunpack.c.l.b16 %v10034
      %v10043 = vunpack.c.h.b16 %v10034
      %v10044 = vunpack.c.l.b16 %v10035
      %v10045 = vunpack.c.h.b16 %v10035
      %v10046 = vunpack.c.l.b16 %v10036
      %v10047 = vunpack.c.h.b16 %v10036
      %v10048 = vunpack.c.l.b16 %v10037
      %v10049 = vunpack.c.h.b16 %v10037
      %v10050 = vpack.c.b16 %v10042, %v10042
      %v10051 = vpack.c.b16 %v10043, %v10043
      %v10052 = vpack.c.b16 %v10044, %v10044
      %v10053 = vpack.c.b16 %v10045, %v10045
      %v10054 = vpack.c.b16 %v10046, %v10046
      %v10055 = vpack.c.b16 %v10047, %v10047
      %v10056 = vpack.c.b16 %v10048, %v10048
      %v10057 = vpack.c.b16 %v10049, %v10049
      %10066 = vst [vmem:[%s197] sm:$0xf] %v10050
      %10067 = vst [vmem:[%s197 + $0x4] sm:$0xf] %v10051
      %10068 = vst [vmem:[%s197 + $0x8] sm:$0xf] %v10052
      %10069 = vst [vmem:[%s197 + $0xc] sm:$0xf] %v10053
      %10070 = vst [vmem:[%s197 + $0x10] sm:$0xf] %v10054
      %10071 = vst [vmem:[%s197 + $0x14] sm:$0xf] %v10055
      %10072 = vst [vmem:[%s197 + $0x18] sm:$0xf] %v10056
      %10073 = vst [vmem:[%s197 + $0x1c] sm:$0xf] %v10057
      %p10074 = scmp.lt.s32.totalorder %s15, 1
      %s10075 = scalar_select %p10074, %s15, 1
      %s10076 = smul.addr %s10075, 8
      %s10077 = smul.addr %s10076, 4
      %s10078 = scalar_lea.vmem %s4, %s10077
      // Predicated region
      $region37: #{resblock_forward.1} parent=35 // pred_check
        %p10079 = pneg %p122
      $region38: #{resblock_forward.1} parent=35 // pred_check_branch
        %10081 = sbr.rel (%p10079) target = $region40
      $region39: #{resblock_forward.1} parent=35 // pred_region
        _
      $region40: #{resblock_forward.1} parent=35 // pred_fallthru
        _
    $region36: #{resblock_forward.1} parent=5 // pred_fallthru
      _
    %p10082 = scmp.le.s32.totalorder 2, %s10
    // Predicated region
    $region41: #{resblock_forward.1} parent=5 // pred_check
      %p10083 = pneg %p10082
    $region42: #{resblock_forward.1} parent=5 // pred_check_branch
      %10085 = sbr.rel (%p10083) target = $region44
    $region43: #{resblock_forward.1} parent=5 // pred_region
      %s10086 = ssub.s32 %s10, 2
      // Predicated region
      $region45: #{resblock_forward.1} parent=43 // pred_check
        %p10087 = pneg %p128
      $region46: #{resblock_forward.1} parent=43 // pred_check_branch
        %10089 = sbr.rel (%p10087) target = $region48
      $region47: #{resblock_forward.1} parent=43 // pred_region
        %p10090 = scmp.lt.s32.totalorder %s16, 1
        %s10091 = scalar_select %p10090, %s16, 1
        %s10092 = smul.addr %s10091, 8
        %s10093 = smul.addr %s10092, 4
        %s10094 = scalar_lea.vmem %s4, %s10093
      $region48: #{resblock_forward.1} parent=43 // pred_fallthru
        _
    $region44: #{resblock_forward.1} parent=5 // pred_fallthru
      _
  $region6: #{resblock_forward.1} parent=0 // loop_footer
    %s14 = sadd.s32 1, %s10
  $region7: #{resblock_forward.1} parent=0 // loop_footer_branch
    %9 = sbr.rel target = $region3
  $region8: #{resblock_forward.1} parent=0 // loop_exit
    _

</llo_original>
